<compile_context>
chip_gen: v7x
topology: tpu7x:2x2x1
jax: 0.10.0
libtpu: 0.0.40
codegen_flags: <defaults>
</compile_context>

<pallas_src>
import functools
import math

import numpy as np
import jax
import jax.numpy as jnp
from jax.experimental import pallas as pl
from jax.experimental.pallas import tpu as pltpu

_INV_SQRT2 = 1.0 / math.sqrt(2.0)
# conv layers actually used by the reference forward(), in execution order.
_LAYERS = ('conv11', 'conv12', 'conv21', 'conv22', 'conv31', 'conv33',
           'convu21', 'convu22', 'convu11', 'convu12')
_LPAD = 128   # lane-aligned halo offset in the padded scratch (>= W_pad + 1)


def _round_up(x, m):
    return (x + m - 1) // m * m


# ------------------------------ Pallas kernel ------------------------------ #

def _unet_kernel(x_ref, w_ref, b_ref, wout_ref, bout_ref,
                 d1_ref, d2_ref, u2_ref, u1_ref,
                 m1_ref, m2_ref, m3_ref,
                 o_ref, xpad_ref,
                 *, B, dims, lpad, l1_blk):
    """Whole UNet forward for one group of B images (one grid step)."""
    (H1, W1), (H2, W2), (H3, W3) = dims
    Wp1, Wp2, Wp3 = W1 + 1, W2 + 1, W3 + 1
    Lp1, Lp2, Lp3 = (H1 + 1) * Wp1, (H2 + 1) * Wp2, (H3 + 1) * Wp3
    L1, L2, L3 = B * Lp1, B * Lp2, B * Lp3

    # Zero the halo/tail ONCE per grid step.  The gap rows/columns stay zero
    # afterwards because every conv output is multiplied by the 0/1 gap mask,
    # and all values read beyond the written region are finite (never NaN).
    xpad_ref[...] = jnp.zeros(xpad_ref.shape, xpad_ref.dtype)

    def conv3x3(x_val, idx, Wp, L, mask, relu_out):
        """'SAME' 3x3 conv on the gapped-row flat layout: stage the activation
        (bf16) behind the zero halo, then accumulate 9 (C,C)x(C,L) bf16 MXU
        matmuls on statically shifted views.  No im2col scratch, no per-tap
        masks; one gap-mask multiply on the output."""
        xpad_ref[:, lpad:lpad + L] = x_val.astype(jnp.bfloat16)
        acc = None
        for ky in range(3):
            for kx in range(3):
                start = lpad + (ky - 1) * Wp + (kx - 1)
                tap = xpad_ref[:, start:start + L]                 # (C, L) bf16
                part = jnp.dot(w_ref[idx, ky * 3 + kx], tap,
                               preferred_element_type=jnp.float32)
                acc = part if acc is None else acc + part
        out = (acc + b_ref[:, idx:idx + 1]) * mask     # re-zero gap rows/cols
        return jnp.maximum(out, 0.0) if relu_out else out

    def resample(x_val, mat, lin):
        """Nearest 2x down/up-sample as a per-image bf16 0/1 selection matmul
        (block-diagonal over images -> no B^2 matrix growth)."""
        xb = x_val.astype(jnp.bfloat16)
        outs = [jnp.dot(xb[:, i * lin:(i + 1) * lin], mat,
                        preferred_element_type=jnp.float32) for i in range(B)]
        return outs[0] if B == 1 else jnp.concatenate(outs, axis=1)

    m1, m2, m3 = m1_ref[...], m2_ref[...], m3_ref[...]
    x = x_ref[:, :L1]                                   # (C, L1) bf16, gapped

    x11 = conv3x3(x,    0, Wp1, L1, m1, True)
    x12 = conv3x3(x11,  1, Wp1, L1, m1, False).astype(jnp.bfloat16)   # skip 1
    x20 = resample(x12, d1_ref[...], Lp1)
    x21 = conv3x3(x20,  2, Wp2, L2, m2, True)
    x22 = conv3x3(x21,  3, Wp2, L2, m2, False).astype(jnp.bfloat16)   # skip 2
    x30 = resample(x22, d2_ref[...], Lp2)
    x31 = conv3x3(x30,  4, Wp3, L3, m3, True)
    # x32 = relu(conv32(x31)) is dead code in the reference forward; skipped.
    x33 = conv3x3(x31,  5, Wp3, L3, m3, False)
    xu21 = jnp.maximum(resample(x33, u2_ref[...], Lp3) + x22, 0.0)
    xu22 = conv3x3(xu21, 6, Wp2, L2, m2, True)    # 1/sqrt2 folded into weights
    xu23 = conv3x3(xu22, 7, Wp2, L2, m2, False)
    xu11 = jnp.maximum(resample(xu23, u1_ref[...], Lp2) + x12, 0.0)
    xu12 = conv3x3(xu11, 8, Wp1, L1, m1, True)    # 1/sqrt2 folded into weights
    xu13 = conv3x3(xu12, 9, Wp1, L1, m1, True)

    # 1x1 output conv; Cout is pre-padded to a full sublane group (8 rows).
    out = jnp.dot(wout_ref[...], xu13.astype(jnp.bfloat16),
                  preferred_element_type=jnp.float32) + bout_ref[...]
    o_ref[:, :L1] = out
    if l1_blk > L1:
        o_ref[:, L1:] = jnp.zeros((out.shape[0], l1_blk - L1), jnp.float32)


# -------------------- layout constants / parameter packing ----------------- #

def _gap_mask(B, H, W):
    """(1, B*(H+1)*(W+1)) f32 0/1 mask: 1 on real pixels of the gapped-row
    layout, 0 on the gap column of each row and the gap row of each image."""
    Hp, Wp = H + 1, W + 1
    p = np.arange(Hp * Wp)
    valid = (((p // Wp) < H) & ((p % Wp) < W)).astype(np.float32)
    return np.tile(valid, B).reshape(1, B * Hp * Wp)


def _down_matrix(H, W):
    """((H+1)(W+1), (H/2+1)(W/2+1)) 0/1 matrix: nearest 0.5x resize between
    the gapped-row layouts of one image (gap positions map to zero)."""
    Ho, Wo = H // 2, W // 2
    Wpi, Wpo = W + 1, Wo + 1
    m = np.zeros(((H + 1) * Wpi, (Ho + 1) * Wpo), np.float32)
    for ho in range(Ho):
        for wo in range(Wo):
            m[(2 * ho) * Wpi + 2 * wo, ho * Wpo + wo] = 1.0
    return m


def _up_matrix(H, W):
    """((H+1)(W+1), (2H+1)(2W+1)) 0/1 matrix: nearest 2x resize between the
    gapped-row layouts of one image."""
    Ho, Wo = 2 * H, 2 * W
    Wpi, Wpo = W + 1, Wo + 1
    m = np.zeros(((H + 1) * Wpi, (Ho + 1) * Wpo), np.float32)
    for ho in range(Ho):
        for wo in range(Wo):
            m[(ho // 2) * Wpi + (wo // 2), ho * Wpo + wo] = 1.0
    return m


def _pack_w3x3(w_oihw, cin_pad, scale=1.0):
    """OIHW (Cout, Cin, 3, 3) -> (9, Cout, cin_pad) bf16: one (Cout, Cin)
    matrix per tap t = ky*3 + kx; extra input channels zero-padded."""
    Cout, Cin = w_oihw.shape[0], w_oihw.shape[1]
    if Cin < cin_pad:
        w_oihw = jnp.pad(w_oihw, ((0, 0), (0, cin_pad - Cin), (0, 0), (0, 0)))
    w = jnp.transpose(w_oihw, (2, 3, 0, 1)).reshape(9, Cout, cin_pad) * scale
    return w.astype(jnp.bfloat16)


# ------------------------------- public API -------------------------------- #

def unet_forward(x_nchw, params, images_per_step=None):
    """UNet forward. x_nchw: (N, Cin, H, W) f32 -> (N, Cout, H, W) f32."""
    N, Cin, H, W = x_nchw.shape
    assert H % 4 == 0 and W % 4 == 0, "two 2x downsamples need H, W % 4 == 0"
    C = params['conv11'][0].shape[0]               # int_channels
    Cout = params['convout'][0].shape[0]
    assert Cin <= C
    H2, W2, H3, W3 = H // 2, W // 2, H // 4, W // 4
    Lp1 = (H + 1) * (W + 1)
    Lp2 = (H2 + 1) * (W2 + 1)
    Lp3 = (H3 + 1) * (W3 + 1)

    # Images per grid step: fill ~128 lanes at the coarsest level, divide N.
    if images_per_step is None:
        target = max(1, -(-128 // Lp3))
        cands = [b for b in range(1, N + 1)
                 if N % b == 0 and b <= target and b * Lp1 <= 4096]
        images_per_step = max(cands) if cands else 1
    B = images_per_step
    assert N % B == 0
    G = N // B
    L1, L2, L3 = B * Lp1, B * Lp2, B * Lp3
    l1_blk = _round_up(L1, 128)                    # lane-aligned block width
    lpad = _LPAD
    Cout_pad = _round_up(max(Cout, 8), 8)

    # Parameter packing.  1/sqrt(2) skip scale folded into convu* weights:
    # conv(relu((a+s)/sqrt2)) == (W/sqrt2)-conv(relu(a+s)) since relu(cx)=c*relu(x).
    scale = {'convu21': _INV_SQRT2, 'convu11': _INV_SQRT2}
    w_stack = jnp.stack([_pack_w3x3(params[n][0], C, scale.get(n, 1.0))
                         for n in _LAYERS])                      # (10,9,C,C) bf16
    b_all = jnp.stack([params[n][1] for n in _LAYERS], axis=1)   # (C,10) f32
    wout = params['convout'][0].reshape(Cout, C)
    wout = jnp.pad(wout, ((0, Cout_pad - Cout), (0, 0))).astype(jnp.bfloat16)
    bout = jnp.pad(params['convout'][1], (0, Cout_pad - Cout)).reshape(Cout_pad, 1)

    # Layout-only constants (trace-time numpy -> baked constants).
    m1 = jnp.asarray(_gap_mask(B, H, W))
    m2 = jnp.asarray(_gap_mask(B, H2, W2))
    m3 = jnp.asarray(_gap_mask(B, H3, W3))
    d1 = jnp.asarray(_down_matrix(H, W), dtype=jnp.bfloat16)     # (Lp1, Lp2)
    d2 = jnp.asarray(_down_matrix(H2, W2), dtype=jnp.bfloat16)   # (Lp2, Lp3)
    u2 = jnp.asarray(_up_matrix(H3, W3), dtype=jnp.bfloat16)     # (Lp3, Lp2)
    u1 = jnp.asarray(_up_matrix(H2, W2), dtype=jnp.bfloat16)     # (Lp2, Lp1)

    # Input: NCHW -> channel-major, gapped-row flat pixels, B images per block.
    x = jnp.transpose(x_nchw, (1, 0, 2, 3))                      # (Cin,N,H,W)
    x = jnp.pad(x, ((0, C - Cin), (0, 0), (0, 1), (0, 1)))       # gaps + chans
    x = x.reshape(C, G, L1)
    x = jnp.pad(x, ((0, 0), (0, 0), (0, l1_blk - L1)))
    x_flat = x.reshape(C, G * l1_blk).astype(jnp.bfloat16)

    # Cost estimate + explicit scoped-VMEM budget (with headroom).
    nbytes = lambda a: a.size * a.dtype.itemsize
    conv_flops = 2 * 9 * C * C * (4 * L1 + 4 * L2 + 2 * L3)
    res_flops = 2 * C * B * 2 * (Lp1 * Lp2 + Lp2 * Lp3)
    out_flops = 2 * Cout_pad * C * L1
    flops = int(G * (conv_flops + res_flops + out_flops))
    const_bytes = sum(nbytes(a) for a in (w_stack, b_all, wout, bout,
                                          d1, d2, u2, u1, m1, m2, m3))
    bytes_accessed = int(nbytes(x_flat) + const_bytes
                         + Cout_pad * G * l1_blk * 4)
    xpad_cols = _round_up(lpad + L1 + (W + 1) + 2, 128)
    working = (2 * const_bytes + 2 * (C + Cout_pad) * l1_blk * 4
               + C * xpad_cols * 2 + 8 * C * L1 * 4)
    vmem_limit = int(min(60 * 2**20, max(32 * 2**20, 3 * working)))

    out_flat = pl.pallas_call(
        functools.partial(_unet_kernel, B=B,
                          dims=((H, W), (H2, W2), (H3, W3)),
                          lpad=lpad, l1_blk=l1_blk),
        out_shape=jax.ShapeDtypeStruct((Cout_pad, G * l1_blk), jnp.float32),
        grid=(G,),
        in_specs=[
            pl.BlockSpec((C, l1_blk), lambda g: (0, g)),            # images
            pl.BlockSpec((len(_LAYERS), 9, C, C), lambda g: (0, 0, 0, 0)),
            pl.BlockSpec((C, len(_LAYERS)), lambda g: (0, 0)),      # biases
            pl.BlockSpec((Cout_pad, C), lambda g: (0, 0)),          # 1x1 conv W
            pl.BlockSpec((Cout_pad, 1), lambda g: (0, 0)),          # 1x1 conv b
            pl.BlockSpec((Lp1, Lp2), lambda g: (0, 0)),             # down 1->2
            pl.BlockSpec((Lp2, Lp3), lambda g: (0, 0)),             # down 2->3
            pl.BlockSpec((Lp3, Lp2), lambda g: (0, 0)),             # up   3->2
            pl.BlockSpec((Lp2, Lp1), lambda g: (0, 0)),             # up   2->1
            pl.BlockSpec((1, L1), lambda g: (0, 0)),                # gap mask L1
            pl.BlockSpec((1, L2), lambda g: (0, 0)),                # gap mask L2
            pl.BlockSpec((1, L3), lambda g: (0, 0)),                # gap mask L3
        ],
        out_specs=pl.BlockSpec((Cout_pad, l1_blk), lambda g: (0, g)),
        scratch_shapes=[pltpu.VMEM((C, xpad_cols), jnp.bfloat16)],  # halo'd act
        compiler_params=pltpu.CompilerParams(
            dimension_semantics=("parallel",),
            vmem_limit_bytes=vmem_limit),
        cost_estimate=pl.CostEstimate(flops=flops, transcendentals=0,
                                      bytes_accessed=bytes_accessed),
    )(x_flat, w_stack, b_all, wout, bout, d1, d2, u2, u1, m1, m2, m3)

    # Strip lane padding, gap rows/columns and channel padding; back to NCHW.
    out = out_flat.reshape(Cout_pad, G, l1_blk)[:Cout, :, :L1]
    out = out.reshape(Cout, N, H + 1, W + 1)[:, :, :H, :W]
    return jnp.transpose(out, (1, 0, 2, 3))


# ------------------------- pure-JAX reference check ------------------------ #

def unet_reference(x, params):
    def conv(v, p):
        return jax.lax.conv_general_dilated(
            v, p[0], (1, 1), 'SAME',
            dimension_numbers=('NCHW', 'OIHW', 'NCHW'),
            precision=jax.lax.Precision.HIGHEST) + p[1].reshape(1, -1, 1, 1)
    relu = lambda v: jnp.maximum(v, 0.0)
    down = lambda v: v[:, :, ::2, ::2]
    up = lambda v: jnp.repeat(jnp.repeat(v, 2, axis=2), 2, axis=3)

    x11 = relu(conv(x, params['conv11']))
    x12 = conv(x11, params['conv12'])
    x21 = relu(conv(down(x12), params['conv21']))
    x22 = conv(x21, params['conv22'])
    x31 = relu(conv(down(x22), params['conv31']))
    x33 = conv(x31, params['conv33'])
    xu21 = relu((up(x33) + x22) * _INV_SQRT2)
    xu22 = relu(conv(xu21, params['convu21']))
    xu23 = conv(xu22, params['convu22'])
    xu11 = relu((up(xu23) + x12) * _INV_SQRT2)
    xu12 = relu(conv(xu11, params['convu11']))
    xu13 = relu(conv(xu12, params['convu12']))
    return conv(xu13, params['convout'])


# ------------------------- deterministic parameters ------------------------ #

def init_params(key, input_channels, output_channels, int_channels=16):
    params = {}
    names3 = ['conv11', 'conv12', 'conv21', 'conv22', 'conv31', 'conv32',
              'conv33', 'convu21', 'convu22', 'convu11', 'convu12']
    for name in names3:
        cin = input_channels if name == 'conv11' else int_channels
        key, kw, kb = jax.random.split(key, 3)
        bound = 1.0 / math.sqrt(cin * 9)     # PyTorch Conv2d default init
        w = jax.random.uniform(kw, (int_channels, cin, 3, 3), jnp.float32,
                               -bound, bound)
        b = jax.random.uniform(kb, (int_channels,), jnp.float32, -bound, bound)
        params[name] = (w, b)                # OIHW, like nn.Conv2d
    key, kw, kb = jax.random.split(key, 3)
    std = 1.0 / math.sqrt(int_channels)      # kaiming_normal_, 'linear'
    w = jax.random.normal(kw, (output_channels, int_channels, 1, 1),
                          jnp.float32) * std
    bound = 1.0 / math.sqrt(int_channels)
    b = jax.random.uniform(kb, (output_channels,), jnp.float32, -bound, bound)
    params['convout'] = (w, b)
    return params


if __name__ == "__main__":
    key = jax.random.PRNGKey(0)
    kx, kp = jax.random.split(key)
    input_channels, output_channels = 4, 3
    x = jax.random.normal(kx, (2, input_channels, 16, 16), jnp.float32)  # NCHW
    params = init_params(kp, input_channels, output_channels, int_channels=16)

    fwd = jax.jit(lambda xx: unet_forward(xx, params))
    out = jax.block_until_ready(fwd(x))
    assert out.shape == (2, output_channels, 16, 16), out.shape
    assert out.dtype == jnp.float32

    ref = jax.block_until_ready(jax.jit(lambda xx: unet_reference(xx, params))(x))
    rel_err = float(jnp.max(jnp.abs(out - ref)) / (jnp.max(jnp.abs(ref)) + 1e-6))
    assert rel_err < 5e-2, f"numerical mismatch vs reference: rel_err={rel_err}"
    print("KERNEL_OK")
</pallas_src>

<mosaic_0001>
module attributes {stable_mosaic.version = 11 : i64} {
  func.func @_unet_kernel(%arg0: i32, %arg1: memref<16x640xbf16, #tpu.memory_space<vmem>>, %arg2: memref<10x9x16x16xbf16, #tpu.memory_space<vmem>>, %arg3: memref<16x10xf32, #tpu.memory_space<vmem>>, %arg4: memref<8x16xbf16, #tpu.memory_space<vmem>>, %arg5: memref<8x1xf32, #tpu.memory_space<vmem>>, %arg6: memref<289x81xbf16, #tpu.memory_space<vmem>>, %arg7: memref<81x25xbf16, #tpu.memory_space<vmem>>, %arg8: memref<25x81xbf16, #tpu.memory_space<vmem>>, %arg9: memref<81x289xbf16, #tpu.memory_space<vmem>>, %arg10: memref<1x578xf32, #tpu.memory_space<vmem>>, %arg11: memref<1x162xf32, #tpu.memory_space<vmem>>, %arg12: memref<1x50xf32, #tpu.memory_space<vmem>>, %arg13: memref<8x640xf32, #tpu.memory_space<vmem>>, %arg14: memref<16x768xbf16, #tpu.memory_space<vmem>>) attributes {dimension_semantics = [#tpu.dimension_semantics<parallel>], iteration_bounds = array<i64: 1>, scalar_prefetch = 0 : i64, scratch_operands = 1 : i64, tpu.core_type = #tpu.core_type<tc>, window_params = [{transform_indices = @transform_0, window_bounds = array<i64: 16, 640>}, {pipeline_mode = #tpu.pipeline_mode<synchronous>, transform_indices = @transform_1, window_bounds = array<i64: 10, 9, 16, 16>}, {pipeline_mode = #tpu.pipeline_mode<synchronous>, transform_indices = @transform_2, window_bounds = array<i64: 16, 10>}, {pipeline_mode = #tpu.pipeline_mode<synchronous>, transform_indices = @transform_3, window_bounds = array<i64: 8, 16>}, {pipeline_mode = #tpu.pipeline_mode<synchronous>, transform_indices = @transform_4, window_bounds = array<i64: 8, 1>}, {pipeline_mode = #tpu.pipeline_mode<synchronous>, transform_indices = @transform_5, window_bounds = array<i64: 289, 81>}, {pipeline_mode = #tpu.pipeline_mode<synchronous>, transform_indices = @transform_6, window_bounds = array<i64: 81, 25>}, {pipeline_mode = #tpu.pipeline_mode<synchronous>, transform_indices = @transform_7, window_bounds = array<i64: 25, 81>}, {pipeline_mode = #tpu.pipeline_mode<synchronous>, transform_indices = @transform_8, window_bounds = array<i64: 81, 289>}, {pipeline_mode = #tpu.pipeline_mode<synchronous>, transform_indices = @transform_9, window_bounds = array<i64: 1, 578>}, {pipeline_mode = #tpu.pipeline_mode<synchronous>, transform_indices = @transform_10, window_bounds = array<i64: 1, 162>}, {pipeline_mode = #tpu.pipeline_mode<synchronous>, transform_indices = @transform_11, window_bounds = array<i64: 1, 50>}, {transform_indices = @transform_12, window_bounds = array<i64: 8, 640>}]} {
    %cst = arith.constant 0.000000e+00 : bf16
    %0 = vector.broadcast %cst : bf16 to vector<16x768xbf16>
    %c0 = arith.constant 0 : index
    %c0_0 = arith.constant 0 : index
    %1 = vector.load %arg14[%c0, %c0_0] : memref<16x768xbf16, #tpu.memory_space<vmem>>, vector<16x768xbf16>
    tpu.vector_store %arg14[%c0, %c0_0], %0 {strides = array<i32>} : memref<16x768xbf16, #tpu.memory_space<vmem>>, vector<16x768xbf16>,
    %c0_1 = arith.constant 0 : index
    %c0_2 = arith.constant 0 : index
    %2 = vector.load %arg10[%c0_1, %c0_2] : memref<1x578xf32, #tpu.memory_space<vmem>>, vector<1x578xf32>
    %c0_3 = arith.constant 0 : index
    %c0_4 = arith.constant 0 : index
    %3 = vector.load %arg11[%c0_3, %c0_4] : memref<1x162xf32, #tpu.memory_space<vmem>>, vector<1x162xf32>
    %c0_5 = arith.constant 0 : index
    %c0_6 = arith.constant 0 : index
    %4 = vector.load %arg12[%c0_5, %c0_6] : memref<1x50xf32, #tpu.memory_space<vmem>>, vector<1x50xf32>
    %c0_7 = arith.constant 0 : index
    %c0_8 = arith.constant 0 : index
    %5 = vector.load %arg1[%c0_7, %c0_8] : memref<16x640xbf16, #tpu.memory_space<vmem>>, vector<16x578xbf16>
    %c0_9 = arith.constant 0 : index
    %c128 = arith.constant 128 : index
    %6 = vector.load %arg14[%c0_9, %c128] : memref<16x768xbf16, #tpu.memory_space<vmem>>, vector<16x578xbf16>
    tpu.vector_store %arg14[%c0_9, %c128], %5 {strides = array<i32>} : memref<16x768xbf16, #tpu.memory_space<vmem>>, vector<16x578xbf16>,
    %c0_10 = arith.constant 0 : index
    %c110 = arith.constant 110 : index
    %7 = vector.load %arg14[%c0_10, %c110] : memref<16x768xbf16, #tpu.memory_space<vmem>>, vector<16x578xbf16>
    %c0_11 = arith.constant 0 : index
    %c0_12 = arith.constant 0 : index
    %c0_13 = arith.constant 0 : index
    %c0_14 = arith.constant 0 : index
    %8 = vector.load %arg2[%c0_11, %c0_12, %c0_13, %c0_14] : memref<10x9x16x16xbf16, #tpu.memory_space<vmem>>, vector<1x1x16x16xbf16>
    %9 = vector.shape_cast %8 : vector<1x1x16x16xbf16> to vector<16x16xbf16>
    %cst_15 = arith.constant dense<0.000000e+00> : vector<16x578xf32>
    %10 = tpu.matmul %9, %7, %cst_15 {dimension_numbers = #tpu.dot_dimension_numbers<[1], [0], [0], [1], [0, 0, 1, 1], [], []>} : vector<16x16xbf16>, vector<16x578xbf16>, vector<16x578xf32> -> vector<16x578xf32>
    %c0_16 = arith.constant 0 : index
    %c111 = arith.constant 111 : index
    %11 = vector.load %arg14[%c0_16, %c111] : memref<16x768xbf16, #tpu.memory_space<vmem>>, vector<16x578xbf16>
    %c0_17 = arith.constant 0 : index
    %c1 = arith.constant 1 : index
    %c0_18 = arith.constant 0 : index
    %c0_19 = arith.constant 0 : index
    %12 = vector.load %arg2[%c0_17, %c1, %c0_18, %c0_19] : memref<10x9x16x16xbf16, #tpu.memory_space<vmem>>, vector<1x1x16x16xbf16>
    %13 = vector.shape_cast %12 : vector<1x1x16x16xbf16> to vector<16x16xbf16>
    %cst_20 = arith.constant dense<0.000000e+00> : vector<16x578xf32>
    %14 = tpu.matmul %13, %11, %cst_20 {dimension_numbers = #tpu.dot_dimension_numbers<[1], [0], [0], [1], [0, 0, 1, 1], [], []>} : vector<16x16xbf16>, vector<16x578xbf16>, vector<16x578xf32> -> vector<16x578xf32>
    %15 = arith.addf %10, %14 : vector<16x578xf32>
    %c0_21 = arith.constant 0 : index
    %c112 = arith.constant 112 : index
    %16 = vector.load %arg14[%c0_21, %c112] : memref<16x768xbf16, #tpu.memory_space<vmem>>, vector<16x578xbf16>
    %c0_22 = arith.constant 0 : index
    %c2 = arith.constant 2 : index
    %c0_23 = arith.constant 0 : index
    %c0_24 = arith.constant 0 : index
    %17 = vector.load %arg2[%c0_22, %c2, %c0_23, %c0_24] : memref<10x9x16x16xbf16, #tpu.memory_space<vmem>>, vector<1x1x16x16xbf16>
    %18 = vector.shape_cast %17 : vector<1x1x16x16xbf16> to vector<16x16xbf16>
    %cst_25 = arith.constant dense<0.000000e+00> : vector<16x578xf32>
    %19 = tpu.matmul %18, %16, %cst_25 {dimension_numbers = #tpu.dot_dimension_numbers<[1], [0], [0], [1], [0, 0, 1, 1], [], []>} : vector<16x16xbf16>, vector<16x578xbf16>, vector<16x578xf32> -> vector<16x578xf32>
    %20 = arith.addf %15, %19 : vector<16x578xf32>
    %c0_26 = arith.constant 0 : index
    %c127 = arith.constant 127 : index
    %21 = vector.load %arg14[%c0_26, %c127] : memref<16x768xbf16, #tpu.memory_space<vmem>>, vector<16x578xbf16>
    %c0_27 = arith.constant 0 : index
    %c3 = arith.constant 3 : index
    %c0_28 = arith.constant 0 : index
    %c0_29 = arith.constant 0 : index
    %22 = vector.load %arg2[%c0_27, %c3, %c0_28, %c0_29] : memref<10x9x16x16xbf16, #tpu.memory_space<vmem>>, vector<1x1x16x16xbf16>
    %23 = vector.shape_cast %22 : vector<1x1x16x16xbf16> to vector<16x16xbf16>
    %cst_30 = arith.constant dense<0.000000e+00> : vector<16x578xf32>
    %24 = tpu.matmul %23, %21, %cst_30 {dimension_numbers = #tpu.dot_dimension_numbers<[1], [0], [0], [1], [0, 0, 1, 1], [], []>} : vector<16x16xbf16>, vector<16x578xbf16>, vector<16x578xf32> -> vector<16x578xf32>
    %25 = arith.addf %20, %24 : vector<16x578xf32>
    %c0_31 = arith.constant 0 : index
    %c128_32 = arith.constant 128 : index
    %26 = vector.load %arg14[%c0_31, %c128_32] : memref<16x768xbf16, #tpu.memory_space<vmem>>, vector<16x578xbf16>
    %c0_33 = arith.constant 0 : index
    %c4 = arith.constant 4 : index
    %c0_34 = arith.constant 0 : index
    %c0_35 = arith.constant 0 : index
    %27 = vector.load %arg2[%c0_33, %c4, %c0_34, %c0_35] : memref<10x9x16x16xbf16, #tpu.memory_space<vmem>>, vector<1x1x16x16xbf16>
    %28 = vector.shape_cast %27 : vector<1x1x16x16xbf16> to vector<16x16xbf16>
    %cst_36 = arith.constant dense<0.000000e+00> : vector<16x578xf32>
    %29 = tpu.matmul %28, %26, %cst_36 {dimension_numbers = #tpu.dot_dimension_numbers<[1], [0], [0], [1], [0, 0, 1, 1], [], []>} : vector<16x16xbf16>, vector<16x578xbf16>, vector<16x578xf32> -> vector<16x578xf32>
    %30 = arith.addf %25, %29 : vector<16x578xf32>
    %c0_37 = arith.constant 0 : index
    %c129 = arith.constant 129 : index
    %31 = vector.load %arg14[%c0_37, %c129] : memref<16x768xbf16, #tpu.memory_space<vmem>>, vector<16x578xbf16>
    %c0_38 = arith.constant 0 : index
    %c5 = arith.constant 5 : index
    %c0_39 = arith.constant 0 : index
    %c0_40 = arith.constant 0 : index
    %32 = vector.load %arg2[%c0_38, %c5, %c0_39, %c0_40] : memref<10x9x16x16xbf16, #tpu.memory_space<vmem>>, vector<1x1x16x16xbf16>
    %33 = vector.shape_cast %32 : vector<1x1x16x16xbf16> to vector<16x16xbf16>
    %cst_41 = arith.constant dense<0.000000e+00> : vector<16x578xf32>
    %34 = tpu.matmul %33, %31, %cst_41 {dimension_numbers = #tpu.dot_dimension_numbers<[1], [0], [0], [1], [0, 0, 1, 1], [], []>} : vector<16x16xbf16>, vector<16x578xbf16>, vector<16x578xf32> -> vector<16x578xf32>
    %35 = arith.addf %30, %34 : vector<16x578xf32>
    %c0_42 = arith.constant 0 : index
    %c144 = arith.constant 144 : index
    %36 = vector.load %arg14[%c0_42, %c144] : memref<16x768xbf16, #tpu.memory_space<vmem>>, vector<16x578xbf16>
    %c0_43 = arith.constant 0 : index
    %c6 = arith.constant 6 : index
    %c0_44 = arith.constant 0 : index
    %c0_45 = arith.constant 0 : index
    %37 = vector.load %arg2[%c0_43, %c6, %c0_44, %c0_45] : memref<10x9x16x16xbf16, #tpu.memory_space<vmem>>, vector<1x1x16x16xbf16>
    %38 = vector.shape_cast %37 : vector<1x1x16x16xbf16> to vector<16x16xbf16>
    %cst_46 = arith.constant dense<0.000000e+00> : vector<16x578xf32>
    %39 = tpu.matmul %38, %36, %cst_46 {dimension_numbers = #tpu.dot_dimension_numbers<[1], [0], [0], [1], [0, 0, 1, 1], [], []>} : vector<16x16xbf16>, vector<16x578xbf16>, vector<16x578xf32> -> vector<16x578xf32>
    %40 = arith.addf %35, %39 : vector<16x578xf32>
    %c0_47 = arith.constant 0 : index
    %c145 = arith.constant 145 : index
    %41 = vector.load %arg14[%c0_47, %c145] : memref<16x768xbf16, #tpu.memory_space<vmem>>, vector<16x578xbf16>
    %c0_48 = arith.constant 0 : index
    %c7 = arith.constant 7 : index
    %c0_49 = arith.constant 0 : index
    %c0_50 = arith.constant 0 : index
    %42 = vector.load %arg2[%c0_48, %c7, %c0_49, %c0_50] : memref<10x9x16x16xbf16, #tpu.memory_space<vmem>>, vector<1x1x16x16xbf16>
    %43 = vector.shape_cast %42 : vector<1x1x16x16xbf16> to vector<16x16xbf16>
    %cst_51 = arith.constant dense<0.000000e+00> : vector<16x578xf32>
    %44 = tpu.matmul %43, %41, %cst_51 {dimension_numbers = #tpu.dot_dimension_numbers<[1], [0], [0], [1], [0, 0, 1, 1], [], []>} : vector<16x16xbf16>, vector<16x578xbf16>, vector<16x578xf32> -> vector<16x578xf32>
    %45 = arith.addf %40, %44 : vector<16x578xf32>
    %c0_52 = arith.constant 0 : index
    %c146 = arith.constant 146 : index
    %46 = vector.load %arg14[%c0_52, %c146] : memref<16x768xbf16, #tpu.memory_space<vmem>>, vector<16x578xbf16>
    %c0_53 = arith.constant 0 : index
    %c8 = arith.constant 8 : index
    %c0_54 = arith.constant 0 : index
    %c0_55 = arith.constant 0 : index
    %47 = vector.load %arg2[%c0_53, %c8, %c0_54, %c0_55] : memref<10x9x16x16xbf16, #tpu.memory_space<vmem>>, vector<1x1x16x16xbf16>
    %48 = vector.shape_cast %47 : vector<1x1x16x16xbf16> to vector<16x16xbf16>
    %cst_56 = arith.constant dense<0.000000e+00> : vector<16x578xf32>
    %49 = tpu.matmul %48, %46, %cst_56 {dimension_numbers = #tpu.dot_dimension_numbers<[1], [0], [0], [1], [0, 0, 1, 1], [], []>} : vector<16x16xbf16>, vector<16x578xbf16>, vector<16x578xf32> -> vector<16x578xf32>
    %50 = arith.addf %45, %49 : vector<16x578xf32>
    %c0_57 = arith.constant 0 : index
    %c0_58 = arith.constant 0 : index
    %51 = vector.load %arg3[%c0_57, %c0_58] : memref<16x10xf32, #tpu.memory_space<vmem>>, vector<16x1xf32>
    %52 = vector.broadcast %51 : vector<16x1xf32> to vector<16x578xf32>
    %53 = arith.addf %50, %52 : vector<16x578xf32>
    %54 = vector.broadcast %2 : vector<1x578xf32> to vector<16x578xf32>
    %55 = arith.mulf %53, %54 : vector<16x578xf32>
    %cst_59 = arith.constant 0.000000e+00 : f32
    %56 = vector.broadcast %cst_59 : f32 to vector<16x578xf32>
    %57 = arith.maximumf %55, %56 : vector<16x578xf32>
    %58 = arith.truncf %57 : vector<16x578xf32> to vector<16x578xbf16>
    %c0_60 = arith.constant 0 : index
    %c128_61 = arith.constant 128 : index
    %59 = vector.load %arg14[%c0_60, %c128_61] : memref<16x768xbf16, #tpu.memory_space<vmem>>, vector<16x578xbf16>
    tpu.vector_store %arg14[%c0_60, %c128_61], %58 {strides = array<i32>} : memref<16x768xbf16, #tpu.memory_space<vmem>>, vector<16x578xbf16>,
    %c0_62 = arith.constant 0 : index
    %c110_63 = arith.constant 110 : index
    %60 = vector.load %arg14[%c0_62, %c110_63] : memref<16x768xbf16, #tpu.memory_space<vmem>>, vector<16x578xbf16>
    %c1_64 = arith.constant 1 : index
    %c0_65 = arith.constant 0 : index
    %c0_66 = arith.constant 0 : index
    %c0_67 = arith.constant 0 : index
    %61 = vector.load %arg2[%c1_64, %c0_65, %c0_66, %c0_67] : memref<10x9x16x16xbf16, #tpu.memory_space<vmem>>, vector<1x1x16x16xbf16>
    %62 = vector.shape_cast %61 : vector<1x1x16x16xbf16> to vector<16x16xbf16>
    %cst_68 = arith.constant dense<0.000000e+00> : vector<16x578xf32>
    %63 = tpu.matmul %62, %60, %cst_68 {dimension_numbers = #tpu.dot_dimension_numbers<[1], [0], [0], [1], [0, 0, 1, 1], [], []>} : vector<16x16xbf16>, vector<16x578xbf16>, vector<16x578xf32> -> vector<16x578xf32>
    %c0_69 = arith.constant 0 : index
    %c111_70 = arith.constant 111 : index
    %64 = vector.load %arg14[%c0_69, %c111_70] : memref<16x768xbf16, #tpu.memory_space<vmem>>, vector<16x578xbf16>
    %c1_71 = arith.constant 1 : index
    %c1_72 = arith.constant 1 : index
    %c0_73 = arith.constant 0 : index
    %c0_74 = arith.constant 0 : index
    %65 = vector.load %arg2[%c1_71, %c1_72, %c0_73, %c0_74] : memref<10x9x16x16xbf16, #tpu.memory_space<vmem>>, vector<1x1x16x16xbf16>
    %66 = vector.shape_cast %65 : vector<1x1x16x16xbf16> to vector<16x16xbf16>
    %cst_75 = arith.constant dense<0.000000e+00> : vector<16x578xf32>
    %67 = tpu.matmul %66, %64, %cst_75 {dimension_numbers = #tpu.dot_dimension_numbers<[1], [0], [0], [1], [0, 0, 1, 1], [], []>} : vector<16x16xbf16>, vector<16x578xbf16>, vector<16x578xf32> -> vector<16x578xf32>
    %68 = arith.addf %63, %67 : vector<16x578xf32>
    %c0_76 = arith.constant 0 : index
    %c112_77 = arith.constant 112 : index
    %69 = vector.load %arg14[%c0_76, %c112_77] : memref<16x768xbf16, #tpu.memory_space<vmem>>, vector<16x578xbf16>
    %c1_78 = arith.constant 1 : index
    %c2_79 = arith.constant 2 : index
    %c0_80 = arith.constant 0 : index
    %c0_81 = arith.constant 0 : index
    %70 = vector.load %arg2[%c1_78, %c2_79, %c0_80, %c0_81] : memref<10x9x16x16xbf16, #tpu.memory_space<vmem>>, vector<1x1x16x16xbf16>
    %71 = vector.shape_cast %70 : vector<1x1x16x16xbf16> to vector<16x16xbf16>
    %cst_82 = arith.constant dense<0.000000e+00> : vector<16x578xf32>
    %72 = tpu.matmul %71, %69, %cst_82 {dimension_numbers = #tpu.dot_dimension_numbers<[1], [0], [0], [1], [0, 0, 1, 1], [], []>} : vector<16x16xbf16>, vector<16x578xbf16>, vector<16x578xf32> -> vector<16x578xf32>
    %73 = arith.addf %68, %72 : vector<16x578xf32>
    %c0_83 = arith.constant 0 : index
    %c127_84 = arith.constant 127 : index
    %74 = vector.load %arg14[%c0_83, %c127_84] : memref<16x768xbf16, #tpu.memory_space<vmem>>, vector<16x578xbf16>
    %c1_85 = arith.constant 1 : index
    %c3_86 = arith.constant 3 : index
    %c0_87 = arith.constant 0 : index
    %c0_88 = arith.constant 0 : index
    %75 = vector.load %arg2[%c1_85, %c3_86, %c0_87, %c0_88] : memref<10x9x16x16xbf16, #tpu.memory_space<vmem>>, vector<1x1x16x16xbf16>
    %76 = vector.shape_cast %75 : vector<1x1x16x16xbf16> to vector<16x16xbf16>
    %cst_89 = arith.constant dense<0.000000e+00> : vector<16x578xf32>
    %77 = tpu.matmul %76, %74, %cst_89 {dimension_numbers = #tpu.dot_dimension_numbers<[1], [0], [0], [1], [0, 0, 1, 1], [], []>} : vector<16x16xbf16>, vector<16x578xbf16>, vector<16x578xf32> -> vector<16x578xf32>
    %78 = arith.addf %73, %77 : vector<16x578xf32>
    %c0_90 = arith.constant 0 : index
    %c128_91 = arith.constant 128 : index
    %79 = vector.load %arg14[%c0_90, %c128_91] : memref<16x768xbf16, #tpu.memory_space<vmem>>, vector<16x578xbf16>
    %c1_92 = arith.constant 1 : index
    %c4_93 = arith.constant 4 : index
    %c0_94 = arith.constant 0 : index
    %c0_95 = arith.constant 0 : index
    %80 = vector.load %arg2[%c1_92, %c4_93, %c0_94, %c0_95] : memref<10x9x16x16xbf16, #tpu.memory_space<vmem>>, vector<1x1x16x16xbf16>
    %81 = vector.shape_cast %80 : vector<1x1x16x16xbf16> to vector<16x16xbf16>
    %cst_96 = arith.constant dense<0.000000e+00> : vector<16x578xf32>
    %82 = tpu.matmul %81, %79, %cst_96 {dimension_numbers = #tpu.dot_dimension_numbers<[1], [0], [0], [1], [0, 0, 1, 1], [], []>} : vector<16x16xbf16>, vector<16x578xbf16>, vector<16x578xf32> -> vector<16x578xf32>
    %83 = arith.addf %78, %82 : vector<16x578xf32>
    %c0_97 = arith.constant 0 : index
    %c129_98 = arith.constant 129 : index
    %84 = vector.load %arg14[%c0_97, %c129_98] : memref<16x768xbf16, #tpu.memory_space<vmem>>, vector<16x578xbf16>
    %c1_99 = arith.constant 1 : index
    %c5_100 = arith.constant 5 : index
    %c0_101 = arith.constant 0 : index
    %c0_102 = arith.constant 0 : index
    %85 = vector.load %arg2[%c1_99, %c5_100, %c0_101, %c0_102] : memref<10x9x16x16xbf16, #tpu.memory_space<vmem>>, vector<1x1x16x16xbf16>
    %86 = vector.shape_cast %85 : vector<1x1x16x16xbf16> to vector<16x16xbf16>
    %cst_103 = arith.constant dense<0.000000e+00> : vector<16x578xf32>
    %87 = tpu.matmul %86, %84, %cst_103 {dimension_numbers = #tpu.dot_dimension_numbers<[1], [0], [0], [1], [0, 0, 1, 1], [], []>} : vector<16x16xbf16>, vector<16x578xbf16>, vector<16x578xf32> -> vector<16x578xf32>
    %88 = arith.addf %83, %87 : vector<16x578xf32>
    %c0_104 = arith.constant 0 : index
    %c144_105 = arith.constant 144 : index
    %89 = vector.load %arg14[%c0_104, %c144_105] : memref<16x768xbf16, #tpu.memory_space<vmem>>, vector<16x578xbf16>
    %c1_106 = arith.constant 1 : index
    %c6_107 = arith.constant 6 : index
    %c0_108 = arith.constant 0 : index
    %c0_109 = arith.constant 0 : index
    %90 = vector.load %arg2[%c1_106, %c6_107, %c0_108, %c0_109] : memref<10x9x16x16xbf16, #tpu.memory_space<vmem>>, vector<1x1x16x16xbf16>
    %91 = vector.shape_cast %90 : vector<1x1x16x16xbf16> to vector<16x16xbf16>
    %cst_110 = arith.constant dense<0.000000e+00> : vector<16x578xf32>
    %92 = tpu.matmul %91, %89, %cst_110 {dimension_numbers = #tpu.dot_dimension_numbers<[1], [0], [0], [1], [0, 0, 1, 1], [], []>} : vector<16x16xbf16>, vector<16x578xbf16>, vector<16x578xf32> -> vector<16x578xf32>
    %93 = arith.addf %88, %92 : vector<16x578xf32>
    %c0_111 = arith.constant 0 : index
    %c145_112 = arith.constant 145 : index
    %94 = vector.load %arg14[%c0_111, %c145_112] : memref<16x768xbf16, #tpu.memory_space<vmem>>, vector<16x578xbf16>
    %c1_113 = arith.constant 1 : index
    %c7_114 = arith.constant 7 : index
    %c0_115 = arith.constant 0 : index
    %c0_116 = arith.constant 0 : index
    %95 = vector.load %arg2[%c1_113, %c7_114, %c0_115, %c0_116] : memref<10x9x16x16xbf16, #tpu.memory_space<vmem>>, vector<1x1x16x16xbf16>
    %96 = vector.shape_cast %95 : vector<1x1x16x16xbf16> to vector<16x16xbf16>
    %cst_117 = arith.constant dense<0.000000e+00> : vector<16x578xf32>
    %97 = tpu.matmul %96, %94, %cst_117 {dimension_numbers = #tpu.dot_dimension_numbers<[1], [0], [0], [1], [0, 0, 1, 1], [], []>} : vector<16x16xbf16>, vector<16x578xbf16>, vector<16x578xf32> -> vector<16x578xf32>
    %98 = arith.addf %93, %97 : vector<16x578xf32>
    %c0_118 = arith.constant 0 : index
    %c146_119 = arith.constant 146 : index
    %99 = vector.load %arg14[%c0_118, %c146_119] : memref<16x768xbf16, #tpu.memory_space<vmem>>, vector<16x578xbf16>
    %c1_120 = arith.constant 1 : index
    %c8_121 = arith.constant 8 : index
    %c0_122 = arith.constant 0 : index
    %c0_123 = arith.constant 0 : index
    %100 = vector.load %arg2[%c1_120, %c8_121, %c0_122, %c0_123] : memref<10x9x16x16xbf16, #tpu.memory_space<vmem>>, vector<1x1x16x16xbf16>
    %101 = vector.shape_cast %100 : vector<1x1x16x16xbf16> to vector<16x16xbf16>
    %cst_124 = arith.constant dense<0.000000e+00> : vector<16x578xf32>
    %102 = tpu.matmul %101, %99, %cst_124 {dimension_numbers = #tpu.dot_dimension_numbers<[1], [0], [0], [1], [0, 0, 1, 1], [], []>} : vector<16x16xbf16>, vector<16x578xbf16>, vector<16x578xf32> -> vector<16x578xf32>
    %103 = arith.addf %98, %102 : vector<16x578xf32>
    %c0_125 = arith.constant 0 : index
    %c1_126 = arith.constant 1 : index
    %104 = vector.load %arg3[%c0_125, %c1_126] : memref<16x10xf32, #tpu.memory_space<vmem>>, vector<16x1xf32>
    %105 = vector.broadcast %104 : vector<16x1xf32> to vector<16x578xf32>
    %106 = arith.addf %103, %105 : vector<16x578xf32>
    %107 = vector.broadcast %2 : vector<1x578xf32> to vector<16x578xf32>
    %108 = arith.mulf %106, %107 : vector<16x578xf32>
    %109 = arith.truncf %108 : vector<16x578xf32> to vector<16x578xbf16>
    %c0_127 = arith.constant 0 : index
    %c0_128 = arith.constant 0 : index
    %110 = vector.load %arg6[%c0_127, %c0_128] : memref<289x81xbf16, #tpu.memory_space<vmem>>, vector<289x81xbf16>
    %111 = vector.extract_strided_slice %109 {offsets = [0, 0], sizes = [16, 289], strides = [1, 1]} : vector<16x578xbf16> to vector<16x289xbf16>
    %cst_129 = arith.constant dense<0.000000e+00> : vector<16x81xf32>
    %112 = tpu.matmul %111, %110, %cst_129 {dimension_numbers = #tpu.dot_dimension_numbers<[1], [0], [0], [1], [0, 0, 1, 1], [], []>} : vector<16x289xbf16>, vector<289x81xbf16>, vector<16x81xf32> -> vector<16x81xf32>
    %113 = vector.extract_strided_slice %109 {offsets = [0, 289], sizes = [16, 289], strides = [1, 1]} : vector<16x578xbf16> to vector<16x289xbf16>
    %cst_130 = arith.constant dense<0.000000e+00> : vector<16x81xf32>
    %114 = tpu.matmul %113, %110, %cst_130 {dimension_numbers = #tpu.dot_dimension_numbers<[1], [0], [0], [1], [0, 0, 1, 1], [], []>} : vector<16x289xbf16>, vector<289x81xbf16>, vector<16x81xf32> -> vector<16x81xf32>
    %115 = tpu.concatenate %112, %114 in 1 : vector<16x81xf32>, vector<16x81xf32> -> vector<16x162xf32>
    %116 = arith.truncf %115 : vector<16x162xf32> to vector<16x162xbf16>
    %c0_131 = arith.constant 0 : index
    %c128_132 = arith.constant 128 : index
    %117 = vector.load %arg14[%c0_131, %c128_132] : memref<16x768xbf16, #tpu.memory_space<vmem>>, vector<16x162xbf16>
    tpu.vector_store %arg14[%c0_131, %c128_132], %116 {strides = array<i32>} : memref<16x768xbf16, #tpu.memory_space<vmem>>, vector<16x162xbf16>,
    %c0_133 = arith.constant 0 : index
    %c118 = arith.constant 118 : index
    %118 = vector.load %arg14[%c0_133, %c118] : memref<16x768xbf16, #tpu.memory_space<vmem>>, vector<16x162xbf16>
    %c2_134 = arith.constant 2 : index
    %c0_135 = arith.constant 0 : index
    %c0_136 = arith.constant 0 : index
    %c0_137 = arith.constant 0 : index
    %119 = vector.load %arg2[%c2_134, %c0_135, %c0_136, %c0_137] : memref<10x9x16x16xbf16, #tpu.memory_space<vmem>>, vector<1x1x16x16xbf16>
    %120 = vector.shape_cast %119 : vector<1x1x16x16xbf16> to vector<16x16xbf16>
    %cst_138 = arith.constant dense<0.000000e+00> : vector<16x162xf32>
    %121 = tpu.matmul %120, %118, %cst_138 {dimension_numbers = #tpu.dot_dimension_numbers<[1], [0], [0], [1], [0, 0, 1, 1], [], []>} : vector<16x16xbf16>, vector<16x162xbf16>, vector<16x162xf32> -> vector<16x162xf32>
    %c0_139 = arith.constant 0 : index
    %c119 = arith.constant 119 : index
    %122 = vector.load %arg14[%c0_139, %c119] : memref<16x768xbf16, #tpu.memory_space<vmem>>, vector<16x162xbf16>
    %c2_140 = arith.constant 2 : index
    %c1_141 = arith.constant 1 : index
    %c0_142 = arith.constant 0 : index
    %c0_143 = arith.constant 0 : index
    %123 = vector.load %arg2[%c2_140, %c1_141, %c0_142, %c0_143] : memref<10x9x16x16xbf16, #tpu.memory_space<vmem>>, vector<1x1x16x16xbf16>
    %124 = vector.shape_cast %123 : vector<1x1x16x16xbf16> to vector<16x16xbf16>
    %cst_144 = arith.constant dense<0.000000e+00> : vector<16x162xf32>
    %125 = tpu.matmul %124, %122, %cst_144 {dimension_numbers = #tpu.dot_dimension_numbers<[1], [0], [0], [1], [0, 0, 1, 1], [], []>} : vector<16x16xbf16>, vector<16x162xbf16>, vector<16x162xf32> -> vector<16x162xf32>
    %126 = arith.addf %121, %125 : vector<16x162xf32>
    %c0_145 = arith.constant 0 : index
    %c120 = arith.constant 120 : index
    %127 = vector.load %arg14[%c0_145, %c120] : memref<16x768xbf16, #tpu.memory_space<vmem>>, vector<16x162xbf16>
    %c2_146 = arith.constant 2 : index
    %c2_147 = arith.constant 2 : index
    %c0_148 = arith.constant 0 : index
    %c0_149 = arith.constant 0 : index
    %128 = vector.load %arg2[%c2_146, %c2_147, %c0_148, %c0_149] : memref<10x9x16x16xbf16, #tpu.memory_space<vmem>>, vector<1x1x16x16xbf16>
    %129 = vector.shape_cast %128 : vector<1x1x16x16xbf16> to vector<16x16xbf16>
    %cst_150 = arith.constant dense<0.000000e+00> : vector<16x162xf32>
    %130 = tpu.matmul %129, %127, %cst_150 {dimension_numbers = #tpu.dot_dimension_numbers<[1], [0], [0], [1], [0, 0, 1, 1], [], []>} : vector<16x16xbf16>, vector<16x162xbf16>, vector<16x162xf32> -> vector<16x162xf32>
    %131 = arith.addf %126, %130 : vector<16x162xf32>
    %c0_151 = arith.constant 0 : index
    %c127_152 = arith.constant 127 : index
    %132 = vector.load %arg14[%c0_151, %c127_152] : memref<16x768xbf16, #tpu.memory_space<vmem>>, vector<16x162xbf16>
    %c2_153 = arith.constant 2 : index
    %c3_154 = arith.constant 3 : index
    %c0_155 = arith.constant 0 : index
    %c0_156 = arith.constant 0 : index
    %133 = vector.load %arg2[%c2_153, %c3_154, %c0_155, %c0_156] : memref<10x9x16x16xbf16, #tpu.memory_space<vmem>>, vector<1x1x16x16xbf16>
    %134 = vector.shape_cast %133 : vector<1x1x16x16xbf16> to vector<16x16xbf16>
    %cst_157 = arith.constant dense<0.000000e+00> : vector<16x162xf32>
    %135 = tpu.matmul %134, %132, %cst_157 {dimension_numbers = #tpu.dot_dimension_numbers<[1], [0], [0], [1], [0, 0, 1, 1], [], []>} : vector<16x16xbf16>, vector<16x162xbf16>, vector<16x162xf32> -> vector<16x162xf32>
    %136 = arith.addf %131, %135 : vector<16x162xf32>
    %c0_158 = arith.constant 0 : index
    %c128_159 = arith.constant 128 : index
    %137 = vector.load %arg14[%c0_158, %c128_159] : memref<16x768xbf16, #tpu.memory_space<vmem>>, vector<16x162xbf16>
    %c2_160 = arith.constant 2 : index
    %c4_161 = arith.constant 4 : index
    %c0_162 = arith.constant 0 : index
    %c0_163 = arith.constant 0 : index
    %138 = vector.load %arg2[%c2_160, %c4_161, %c0_162, %c0_163] : memref<10x9x16x16xbf16, #tpu.memory_space<vmem>>, vector<1x1x16x16xbf16>
    %139 = vector.shape_cast %138 : vector<1x1x16x16xbf16> to vector<16x16xbf16>
    %cst_164 = arith.constant dense<0.000000e+00> : vector<16x162xf32>
    %140 = tpu.matmul %139, %137, %cst_164 {dimension_numbers = #tpu.dot_dimension_numbers<[1], [0], [0], [1], [0, 0, 1, 1], [], []>} : vector<16x16xbf16>, vector<16x162xbf16>, vector<16x162xf32> -> vector<16x162xf32>
    %141 = arith.addf %136, %140 : vector<16x162xf32>
    %c0_165 = arith.constant 0 : index
    %c129_166 = arith.constant 129 : index
    %142 = vector.load %arg14[%c0_165, %c129_166] : memref<16x768xbf16, #tpu.memory_space<vmem>>, vector<16x162xbf16>
    %c2_167 = arith.constant 2 : index
    %c5_168 = arith.constant 5 : index
    %c0_169 = arith.constant 0 : index
    %c0_170 = arith.constant 0 : index
    %143 = vector.load %arg2[%c2_167, %c5_168, %c0_169, %c0_170] : memref<10x9x16x16xbf16, #tpu.memory_space<vmem>>, vector<1x1x16x16xbf16>
    %144 = vector.shape_cast %143 : vector<1x1x16x16xbf16> to vector<16x16xbf16>
    %cst_171 = arith.constant dense<0.000000e+00> : vector<16x162xf32>
    %145 = tpu.matmul %144, %142, %cst_171 {dimension_numbers = #tpu.dot_dimension_numbers<[1], [0], [0], [1], [0, 0, 1, 1], [], []>} : vector<16x16xbf16>, vector<16x162xbf16>, vector<16x162xf32> -> vector<16x162xf32>
    %146 = arith.addf %141, %145 : vector<16x162xf32>
    %c0_172 = arith.constant 0 : index
    %c136 = arith.constant 136 : index
    %147 = vector.load %arg14[%c0_172, %c136] : memref<16x768xbf16, #tpu.memory_space<vmem>>, vector<16x162xbf16>
    %c2_173 = arith.constant 2 : index
    %c6_174 = arith.constant 6 : index
    %c0_175 = arith.constant 0 : index
    %c0_176 = arith.constant 0 : index
    %148 = vector.load %arg2[%c2_173, %c6_174, %c0_175, %c0_176] : memref<10x9x16x16xbf16, #tpu.memory_space<vmem>>, vector<1x1x16x16xbf16>
    %149 = vector.shape_cast %148 : vector<1x1x16x16xbf16> to vector<16x16xbf16>
    %cst_177 = arith.constant dense<0.000000e+00> : vector<16x162xf32>
    %150 = tpu.matmul %149, %147, %cst_177 {dimension_numbers = #tpu.dot_dimension_numbers<[1], [0], [0], [1], [0, 0, 1, 1], [], []>} : vector<16x16xbf16>, vector<16x162xbf16>, vector<16x162xf32> -> vector<16x162xf32>
    %151 = arith.addf %146, %150 : vector<16x162xf32>
    %c0_178 = arith.constant 0 : index
    %c137 = arith.constant 137 : index
    %152 = vector.load %arg14[%c0_178, %c137] : memref<16x768xbf16, #tpu.memory_space<vmem>>, vector<16x162xbf16>
    %c2_179 = arith.constant 2 : index
    %c7_180 = arith.constant 7 : index
    %c0_181 = arith.constant 0 : index
    %c0_182 = arith.constant 0 : index
    %153 = vector.load %arg2[%c2_179, %c7_180, %c0_181, %c0_182] : memref<10x9x16x16xbf16, #tpu.memory_space<vmem>>, vector<1x1x16x16xbf16>
    %154 = vector.shape_cast %153 : vector<1x1x16x16xbf16> to vector<16x16xbf16>
    %cst_183 = arith.constant dense<0.000000e+00> : vector<16x162xf32>
    %155 = tpu.matmul %154, %152, %cst_183 {dimension_numbers = #tpu.dot_dimension_numbers<[1], [0], [0], [1], [0, 0, 1, 1], [], []>} : vector<16x16xbf16>, vector<16x162xbf16>, vector<16x162xf32> -> vector<16x162xf32>
    %156 = arith.addf %151, %155 : vector<16x162xf32>
    %c0_184 = arith.constant 0 : index
    %c138 = arith.constant 138 : index
    %157 = vector.load %arg14[%c0_184, %c138] : memref<16x768xbf16, #tpu.memory_space<vmem>>, vector<16x162xbf16>
    %c2_185 = arith.constant 2 : index
    %c8_186 = arith.constant 8 : index
    %c0_187 = arith.constant 0 : index
    %c0_188 = arith.constant 0 : index
    %158 = vector.load %arg2[%c2_185, %c8_186, %c0_187, %c0_188] : memref<10x9x16x16xbf16, #tpu.memory_space<vmem>>, vector<1x1x16x16xbf16>
    %159 = vector.shape_cast %158 : vector<1x1x16x16xbf16> to vector<16x16xbf16>
    %cst_189 = arith.constant dense<0.000000e+00> : vector<16x162xf32>
    %160 = tpu.matmul %159, %157, %cst_189 {dimension_numbers = #tpu.dot_dimension_numbers<[1], [0], [0], [1], [0, 0, 1, 1], [], []>} : vector<16x16xbf16>, vector<16x162xbf16>, vector<16x162xf32> -> vector<16x162xf32>
    %161 = arith.addf %156, %160 : vector<16x162xf32>
    %c0_190 = arith.constant 0 : index
    %c2_191 = arith.constant 2 : index
    %162 = vector.load %arg3[%c0_190, %c2_191] : memref<16x10xf32, #tpu.memory_space<vmem>>, vector<16x1xf32>
    %163 = vector.broadcast %162 : vector<16x1xf32> to vector<16x162xf32>
    %164 = arith.addf %161, %163 : vector<16x162xf32>
    %165 = vector.broadcast %3 : vector<1x162xf32> to vector<16x162xf32>
    %166 = arith.mulf %164, %165 : vector<16x162xf32>
    %cst_192 = arith.constant 0.000000e+00 : f32
    %167 = vector.broadcast %cst_192 : f32 to vector<16x162xf32>
    %168 = arith.maximumf %166, %167 : vector<16x162xf32>
    %169 = arith.truncf %168 : vector<16x162xf32> to vector<16x162xbf16>
    %c0_193 = arith.constant 0 : index
    %c128_194 = arith.constant 128 : index
    %170 = vector.load %arg14[%c0_193, %c128_194] : memref<16x768xbf16, #tpu.memory_space<vmem>>, vector<16x162xbf16>
    tpu.vector_store %arg14[%c0_193, %c128_194], %169 {strides = array<i32>} : memref<16x768xbf16, #tpu.memory_space<vmem>>, vector<16x162xbf16>,
    %c0_195 = arith.constant 0 : index
    %c118_196 = arith.constant 118 : index
    %171 = vector.load %arg14[%c0_195, %c118_196] : memref<16x768xbf16, #tpu.memory_space<vmem>>, vector<16x162xbf16>
    %c3_197 = arith.constant 3 : index
    %c0_198 = arith.constant 0 : index
    %c0_199 = arith.constant 0 : index
    %c0_200 = arith.constant 0 : index
    %172 = vector.load %arg2[%c3_197, %c0_198, %c0_199, %c0_200] : memref<10x9x16x16xbf16, #tpu.memory_space<vmem>>, vector<1x1x16x16xbf16>
    %173 = vector.shape_cast %172 : vector<1x1x16x16xbf16> to vector<16x16xbf16>
    %cst_201 = arith.constant dense<0.000000e+00> : vector<16x162xf32>
    %174 = tpu.matmul %173, %171, %cst_201 {dimension_numbers = #tpu.dot_dimension_numbers<[1], [0], [0], [1], [0, 0, 1, 1], [], []>} : vector<16x16xbf16>, vector<16x162xbf16>, vector<16x162xf32> -> vector<16x162xf32>
    %c0_202 = arith.constant 0 : index
    %c119_203 = arith.constant 119 : index
    %175 = vector.load %arg14[%c0_202, %c119_203] : memref<16x768xbf16, #tpu.memory_space<vmem>>, vector<16x162xbf16>
    %c3_204 = arith.constant 3 : index
    %c1_205 = arith.constant 1 : index
    %c0_206 = arith.constant 0 : index
    %c0_207 = arith.constant 0 : index
    %176 = vector.load %arg2[%c3_204, %c1_205, %c0_206, %c0_207] : memref<10x9x16x16xbf16, #tpu.memory_space<vmem>>, vector<1x1x16x16xbf16>
    %177 = vector.shape_cast %176 : vector<1x1x16x16xbf16> to vector<16x16xbf16>
    %cst_208 = arith.constant dense<0.000000e+00> : vector<16x162xf32>
    %178 = tpu.matmul %177, %175, %cst_208 {dimension_numbers = #tpu.dot_dimension_numbers<[1], [0], [0], [1], [0, 0, 1, 1], [], []>} : vector<16x16xbf16>, vector<16x162xbf16>, vector<16x162xf32> -> vector<16x162xf32>
    %179 = arith.addf %174, %178 : vector<16x162xf32>
    %c0_209 = arith.constant 0 : index
    %c120_210 = arith.constant 120 : index
    %180 = vector.load %arg14[%c0_209, %c120_210] : memref<16x768xbf16, #tpu.memory_space<vmem>>, vector<16x162xbf16>
    %c3_211 = arith.constant 3 : index
    %c2_212 = arith.constant 2 : index
    %c0_213 = arith.constant 0 : index
    %c0_214 = arith.constant 0 : index
    %181 = vector.load %arg2[%c3_211, %c2_212, %c0_213, %c0_214] : memref<10x9x16x16xbf16, #tpu.memory_space<vmem>>, vector<1x1x16x16xbf16>
    %182 = vector.shape_cast %181 : vector<1x1x16x16xbf16> to vector<16x16xbf16>
    %cst_215 = arith.constant dense<0.000000e+00> : vector<16x162xf32>
    %183 = tpu.matmul %182, %180, %cst_215 {dimension_numbers = #tpu.dot_dimension_numbers<[1], [0], [0], [1], [0, 0, 1, 1], [], []>} : vector<16x16xbf16>, vector<16x162xbf16>, vector<16x162xf32> -> vector<16x162xf32>
    %184 = arith.addf %179, %183 : vector<16x162xf32>
    %c0_216 = arith.constant 0 : index
    %c127_217 = arith.constant 127 : index
    %185 = vector.load %arg14[%c0_216, %c127_217] : memref<16x768xbf16, #tpu.memory_space<vmem>>, vector<16x162xbf16>
    %c3_218 = arith.constant 3 : index
    %c3_219 = arith.constant 3 : index
    %c0_220 = arith.constant 0 : index
    %c0_221 = arith.constant 0 : index
    %186 = vector.load %arg2[%c3_218, %c3_219, %c0_220, %c0_221] : memref<10x9x16x16xbf16, #tpu.memory_space<vmem>>, vector<1x1x16x16xbf16>
    %187 = vector.shape_cast %186 : vector<1x1x16x16xbf16> to vector<16x16xbf16>
    %cst_222 = arith.constant dense<0.000000e+00> : vector<16x162xf32>
    %188 = tpu.matmul %187, %185, %cst_222 {dimension_numbers = #tpu.dot_dimension_numbers<[1], [0], [0], [1], [0, 0, 1, 1], [], []>} : vector<16x16xbf16>, vector<16x162xbf16>, vector<16x162xf32> -> vector<16x162xf32>
    %189 = arith.addf %184, %188 : vector<16x162xf32>
    %c0_223 = arith.constant 0 : index
    %c128_224 = arith.constant 128 : index
    %190 = vector.load %arg14[%c0_223, %c128_224] : memref<16x768xbf16, #tpu.memory_space<vmem>>, vector<16x162xbf16>
    %c3_225 = arith.constant 3 : index
    %c4_226 = arith.constant 4 : index
    %c0_227 = arith.constant 0 : index
    %c0_228 = arith.constant 0 : index
    %191 = vector.load %arg2[%c3_225, %c4_226, %c0_227, %c0_228] : memref<10x9x16x16xbf16, #tpu.memory_space<vmem>>, vector<1x1x16x16xbf16>
    %192 = vector.shape_cast %191 : vector<1x1x16x16xbf16> to vector<16x16xbf16>
    %cst_229 = arith.constant dense<0.000000e+00> : vector<16x162xf32>
    %193 = tpu.matmul %192, %190, %cst_229 {dimension_numbers = #tpu.dot_dimension_numbers<[1], [0], [0], [1], [0, 0, 1, 1], [], []>} : vector<16x16xbf16>, vector<16x162xbf16>, vector<16x162xf32> -> vector<16x162xf32>
    %194 = arith.addf %189, %193 : vector<16x162xf32>
    %c0_230 = arith.constant 0 : index
    %c129_231 = arith.constant 129 : index
    %195 = vector.load %arg14[%c0_230, %c129_231] : memref<16x768xbf16, #tpu.memory_space<vmem>>, vector<16x162xbf16>
    %c3_232 = arith.constant 3 : index
    %c5_233 = arith.constant 5 : index
    %c0_234 = arith.constant 0 : index
    %c0_235 = arith.constant 0 : index
    %196 = vector.load %arg2[%c3_232, %c5_233, %c0_234, %c0_235] : memref<10x9x16x16xbf16, #tpu.memory_space<vmem>>, vector<1x1x16x16xbf16>
    %197 = vector.shape_cast %196 : vector<1x1x16x16xbf16> to vector<16x16xbf16>
    %cst_236 = arith.constant dense<0.000000e+00> : vector<16x162xf32>
    %198 = tpu.matmul %197, %195, %cst_236 {dimension_numbers = #tpu.dot_dimension_numbers<[1], [0], [0], [1], [0, 0, 1, 1], [], []>} : vector<16x16xbf16>, vector<16x162xbf16>, vector<16x162xf32> -> vector<16x162xf32>
    %199 = arith.addf %194, %198 : vector<16x162xf32>
    %c0_237 = arith.constant 0 : index
    %c136_238 = arith.constant 136 : index
    %200 = vector.load %arg14[%c0_237, %c136_238] : memref<16x768xbf16, #tpu.memory_space<vmem>>, vector<16x162xbf16>
    %c3_239 = arith.constant 3 : index
    %c6_240 = arith.constant 6 : index
    %c0_241 = arith.constant 0 : index
    %c0_242 = arith.constant 0 : index
    %201 = vector.load %arg2[%c3_239, %c6_240, %c0_241, %c0_242] : memref<10x9x16x16xbf16, #tpu.memory_space<vmem>>, vector<1x1x16x16xbf16>
    %202 = vector.shape_cast %201 : vector<1x1x16x16xbf16> to vector<16x16xbf16>
    %cst_243 = arith.constant dense<0.000000e+00> : vector<16x162xf32>
    %203 = tpu.matmul %202, %200, %cst_243 {dimension_numbers = #tpu.dot_dimension_numbers<[1], [0], [0], [1], [0, 0, 1, 1], [], []>} : vector<16x16xbf16>, vector<16x162xbf16>, vector<16x162xf32> -> vector<16x162xf32>
    %204 = arith.addf %199, %203 : vector<16x162xf32>
    %c0_244 = arith.constant 0 : index
    %c137_245 = arith.constant 137 : index
    %205 = vector.load %arg14[%c0_244, %c137_245] : memref<16x768xbf16, #tpu.memory_space<vmem>>, vector<16x162xbf16>
    %c3_246 = arith.constant 3 : index
    %c7_247 = arith.constant 7 : index
    %c0_248 = arith.constant 0 : index
    %c0_249 = arith.constant 0 : index
    %206 = vector.load %arg2[%c3_246, %c7_247, %c0_248, %c0_249] : memref<10x9x16x16xbf16, #tpu.memory_space<vmem>>, vector<1x1x16x16xbf16>
    %207 = vector.shape_cast %206 : vector<1x1x16x16xbf16> to vector<16x16xbf16>
    %cst_250 = arith.constant dense<0.000000e+00> : vector<16x162xf32>
    %208 = tpu.matmul %207, %205, %cst_250 {dimension_numbers = #tpu.dot_dimension_numbers<[1], [0], [0], [1], [0, 0, 1, 1], [], []>} : vector<16x16xbf16>, vector<16x162xbf16>, vector<16x162xf32> -> vector<16x162xf32>
    %209 = arith.addf %204, %208 : vector<16x162xf32>
    %c0_251 = arith.constant 0 : index
    %c138_252 = arith.constant 138 : index
    %210 = vector.load %arg14[%c0_251, %c138_252] : memref<16x768xbf16, #tpu.memory_space<vmem>>, vector<16x162xbf16>
    %c3_253 = arith.constant 3 : index
    %c8_254 = arith.constant 8 : index
    %c0_255 = arith.constant 0 : index
    %c0_256 = arith.constant 0 : index
    %211 = vector.load %arg2[%c3_253, %c8_254, %c0_255, %c0_256] : memref<10x9x16x16xbf16, #tpu.memory_space<vmem>>, vector<1x1x16x16xbf16>
    %212 = vector.shape_cast %211 : vector<1x1x16x16xbf16> to vector<16x16xbf16>
    %cst_257 = arith.constant dense<0.000000e+00> : vector<16x162xf32>
    %213 = tpu.matmul %212, %210, %cst_257 {dimension_numbers = #tpu.dot_dimension_numbers<[1], [0], [0], [1], [0, 0, 1, 1], [], []>} : vector<16x16xbf16>, vector<16x162xbf16>, vector<16x162xf32> -> vector<16x162xf32>
    %214 = arith.addf %209, %213 : vector<16x162xf32>
    %c0_258 = arith.constant 0 : index
    %c3_259 = arith.constant 3 : index
    %215 = vector.load %arg3[%c0_258, %c3_259] : memref<16x10xf32, #tpu.memory_space<vmem>>, vector<16x1xf32>
    %216 = vector.broadcast %215 : vector<16x1xf32> to vector<16x162xf32>
    %217 = arith.addf %214, %216 : vector<16x162xf32>
    %218 = vector.broadcast %3 : vector<1x162xf32> to vector<16x162xf32>
    %219 = arith.mulf %217, %218 : vector<16x162xf32>
    %220 = arith.truncf %219 : vector<16x162xf32> to vector<16x162xbf16>
    %c0_260 = arith.constant 0 : index
    %c0_261 = arith.constant 0 : index
    %221 = vector.load %arg7[%c0_260, %c0_261] : memref<81x25xbf16, #tpu.memory_space<vmem>>, vector<81x25xbf16>
    %222 = vector.extract_strided_slice %220 {offsets = [0, 0], sizes = [16, 81], strides = [1, 1]} : vector<16x162xbf16> to vector<16x81xbf16>
    %cst_262 = arith.constant dense<0.000000e+00> : vector<16x25xf32>
    %223 = tpu.matmul %222, %221, %cst_262 {dimension_numbers = #tpu.dot_dimension_numbers<[1], [0], [0], [1], [0, 0, 1, 1], [], []>} : vector<16x81xbf16>, vector<81x25xbf16>, vector<16x25xf32> -> vector<16x25xf32>
    %224 = vector.extract_strided_slice %220 {offsets = [0, 81], sizes = [16, 81], strides = [1, 1]} : vector<16x162xbf16> to vector<16x81xbf16>
    %cst_263 = arith.constant dense<0.000000e+00> : vector<16x25xf32>
    %225 = tpu.matmul %224, %221, %cst_263 {dimension_numbers = #tpu.dot_dimension_numbers<[1], [0], [0], [1], [0, 0, 1, 1], [], []>} : vector<16x81xbf16>, vector<81x25xbf16>, vector<16x25xf32> -> vector<16x25xf32>
    %226 = tpu.concatenate %223, %225 in 1 : vector<16x25xf32>, vector<16x25xf32> -> vector<16x50xf32>
    %227 = arith.truncf %226 : vector<16x50xf32> to vector<16x50xbf16>
    %c0_264 = arith.constant 0 : index
    %c128_265 = arith.constant 128 : index
    %228 = vector.load %arg14[%c0_264, %c128_265] : memref<16x768xbf16, #tpu.memory_space<vmem>>, vector<16x50xbf16>
    tpu.vector_store %arg14[%c0_264, %c128_265], %227 {strides = array<i32>} : memref<16x768xbf16, #tpu.memory_space<vmem>>, vector<16x50xbf16>,
    %c0_266 = arith.constant 0 : index
    %c122 = arith.constant 122 : index
    %229 = vector.load %arg14[%c0_266, %c122] : memref<16x768xbf16, #tpu.memory_space<vmem>>, vector<16x50xbf16>
    %c4_267 = arith.constant 4 : index
    %c0_268 = arith.constant 0 : index
    %c0_269 = arith.constant 0 : index
    %c0_270 = arith.constant 0 : index
    %230 = vector.load %arg2[%c4_267, %c0_268, %c0_269, %c0_270] : memref<10x9x16x16xbf16, #tpu.memory_space<vmem>>, vector<1x1x16x16xbf16>
    %231 = vector.shape_cast %230 : vector<1x1x16x16xbf16> to vector<16x16xbf16>
    %cst_271 = arith.constant dense<0.000000e+00> : vector<16x50xf32>
    %232 = tpu.matmul %231, %229, %cst_271 {dimension_numbers = #tpu.dot_dimension_numbers<[1], [0], [0], [1], [0, 0, 1, 1], [], []>} : vector<16x16xbf16>, vector<16x50xbf16>, vector<16x50xf32> -> vector<16x50xf32>
    %c0_272 = arith.constant 0 : index
    %c123 = arith.constant 123 : index
    %233 = vector.load %arg14[%c0_272, %c123] : memref<16x768xbf16, #tpu.memory_space<vmem>>, vector<16x50xbf16>
    %c4_273 = arith.constant 4 : index
    %c1_274 = arith.constant 1 : index
    %c0_275 = arith.constant 0 : index
    %c0_276 = arith.constant 0 : index
    %234 = vector.load %arg2[%c4_273, %c1_274, %c0_275, %c0_276] : memref<10x9x16x16xbf16, #tpu.memory_space<vmem>>, vector<1x1x16x16xbf16>
    %235 = vector.shape_cast %234 : vector<1x1x16x16xbf16> to vector<16x16xbf16>
    %cst_277 = arith.constant dense<0.000000e+00> : vector<16x50xf32>
    %236 = tpu.matmul %235, %233, %cst_277 {dimension_numbers = #tpu.dot_dimension_numbers<[1], [0], [0], [1], [0, 0, 1, 1], [], []>} : vector<16x16xbf16>, vector<16x50xbf16>, vector<16x50xf32> -> vector<16x50xf32>
    %237 = arith.addf %232, %236 : vector<16x50xf32>
    %c0_278 = arith.constant 0 : index
    %c124 = arith.constant 124 : index
    %238 = vector.load %arg14[%c0_278, %c124] : memref<16x768xbf16, #tpu.memory_space<vmem>>, vector<16x50xbf16>
    %c4_279 = arith.constant 4 : index
    %c2_280 = arith.constant 2 : index
    %c0_281 = arith.constant 0 : index
    %c0_282 = arith.constant 0 : index
    %239 = vector.load %arg2[%c4_279, %c2_280, %c0_281, %c0_282] : memref<10x9x16x16xbf16, #tpu.memory_space<vmem>>, vector<1x1x16x16xbf16>
    %240 = vector.shape_cast %239 : vector<1x1x16x16xbf16> to vector<16x16xbf16>
    %cst_283 = arith.constant dense<0.000000e+00> : vector<16x50xf32>
    %241 = tpu.matmul %240, %238, %cst_283 {dimension_numbers = #tpu.dot_dimension_numbers<[1], [0], [0], [1], [0, 0, 1, 1], [], []>} : vector<16x16xbf16>, vector<16x50xbf16>, vector<16x50xf32> -> vector<16x50xf32>
    %242 = arith.addf %237, %241 : vector<16x50xf32>
    %c0_284 = arith.constant 0 : index
    %c127_285 = arith.constant 127 : index
    %243 = vector.load %arg14[%c0_284, %c127_285] : memref<16x768xbf16, #tpu.memory_space<vmem>>, vector<16x50xbf16>
    %c4_286 = arith.constant 4 : index
    %c3_287 = arith.constant 3 : index
    %c0_288 = arith.constant 0 : index
    %c0_289 = arith.constant 0 : index
    %244 = vector.load %arg2[%c4_286, %c3_287, %c0_288, %c0_289] : memref<10x9x16x16xbf16, #tpu.memory_space<vmem>>, vector<1x1x16x16xbf16>
    %245 = vector.shape_cast %244 : vector<1x1x16x16xbf16> to vector<16x16xbf16>
    %cst_290 = arith.constant dense<0.000000e+00> : vector<16x50xf32>
    %246 = tpu.matmul %245, %243, %cst_290 {dimension_numbers = #tpu.dot_dimension_numbers<[1], [0], [0], [1], [0, 0, 1, 1], [], []>} : vector<16x16xbf16>, vector<16x50xbf16>, vector<16x50xf32> -> vector<16x50xf32>
    %247 = arith.addf %242, %246 : vector<16x50xf32>
    %c0_291 = arith.constant 0 : index
    %c128_292 = arith.constant 128 : index
    %248 = vector.load %arg14[%c0_291, %c128_292] : memref<16x768xbf16, #tpu.memory_space<vmem>>, vector<16x50xbf16>
    %c4_293 = arith.constant 4 : index
    %c4_294 = arith.constant 4 : index
    %c0_295 = arith.constant 0 : index
    %c0_296 = arith.constant 0 : index
    %249 = vector.load %arg2[%c4_293, %c4_294, %c0_295, %c0_296] : memref<10x9x16x16xbf16, #tpu.memory_space<vmem>>, vector<1x1x16x16xbf16>
    %250 = vector.shape_cast %249 : vector<1x1x16x16xbf16> to vector<16x16xbf16>
    %cst_297 = arith.constant dense<0.000000e+00> : vector<16x50xf32>
    %251 = tpu.matmul %250, %248, %cst_297 {dimension_numbers = #tpu.dot_dimension_numbers<[1], [0], [0], [1], [0, 0, 1, 1], [], []>} : vector<16x16xbf16>, vector<16x50xbf16>, vector<16x50xf32> -> vector<16x50xf32>
    %252 = arith.addf %247, %251 : vector<16x50xf32>
    %c0_298 = arith.constant 0 : index
    %c129_299 = arith.constant 129 : index
    %253 = vector.load %arg14[%c0_298, %c129_299] : memref<16x768xbf16, #tpu.memory_space<vmem>>, vector<16x50xbf16>
    %c4_300 = arith.constant 4 : index
    %c5_301 = arith.constant 5 : index
    %c0_302 = arith.constant 0 : index
    %c0_303 = arith.constant 0 : index
    %254 = vector.load %arg2[%c4_300, %c5_301, %c0_302, %c0_303] : memref<10x9x16x16xbf16, #tpu.memory_space<vmem>>, vector<1x1x16x16xbf16>
    %255 = vector.shape_cast %254 : vector<1x1x16x16xbf16> to vector<16x16xbf16>
    %cst_304 = arith.constant dense<0.000000e+00> : vector<16x50xf32>
    %256 = tpu.matmul %255, %253, %cst_304 {dimension_numbers = #tpu.dot_dimension_numbers<[1], [0], [0], [1], [0, 0, 1, 1], [], []>} : vector<16x16xbf16>, vector<16x50xbf16>, vector<16x50xf32> -> vector<16x50xf32>
    %257 = arith.addf %252, %256 : vector<16x50xf32>
    %c0_305 = arith.constant 0 : index
    %c132 = arith.constant 132 : index
    %258 = vector.load %arg14[%c0_305, %c132] : memref<16x768xbf16, #tpu.memory_space<vmem>>, vector<16x50xbf16>
    %c4_306 = arith.constant 4 : index
    %c6_307 = arith.constant 6 : index
    %c0_308 = arith.constant 0 : index
    %c0_309 = arith.constant 0 : index
    %259 = vector.load %arg2[%c4_306, %c6_307, %c0_308, %c0_309] : memref<10x9x16x16xbf16, #tpu.memory_space<vmem>>, vector<1x1x16x16xbf16>
    %260 = vector.shape_cast %259 : vector<1x1x16x16xbf16> to vector<16x16xbf16>
    %cst_310 = arith.constant dense<0.000000e+00> : vector<16x50xf32>
    %261 = tpu.matmul %260, %258, %cst_310 {dimension_numbers = #tpu.dot_dimension_numbers<[1], [0], [0], [1], [0, 0, 1, 1], [], []>} : vector<16x16xbf16>, vector<16x50xbf16>, vector<16x50xf32> -> vector<16x50xf32>
    %262 = arith.addf %257, %261 : vector<16x50xf32>
    %c0_311 = arith.constant 0 : index
    %c133 = arith.constant 133 : index
    %263 = vector.load %arg14[%c0_311, %c133] : memref<16x768xbf16, #tpu.memory_space<vmem>>, vector<16x50xbf16>
    %c4_312 = arith.constant 4 : index
    %c7_313 = arith.constant 7 : index
    %c0_314 = arith.constant 0 : index
    %c0_315 = arith.constant 0 : index
    %264 = vector.load %arg2[%c4_312, %c7_313, %c0_314, %c0_315] : memref<10x9x16x16xbf16, #tpu.memory_space<vmem>>, vector<1x1x16x16xbf16>
    %265 = vector.shape_cast %264 : vector<1x1x16x16xbf16> to vector<16x16xbf16>
    %cst_316 = arith.constant dense<0.000000e+00> : vector<16x50xf32>
    %266 = tpu.matmul %265, %263, %cst_316 {dimension_numbers = #tpu.dot_dimension_numbers<[1], [0], [0], [1], [0, 0, 1, 1], [], []>} : vector<16x16xbf16>, vector<16x50xbf16>, vector<16x50xf32> -> vector<16x50xf32>
    %267 = arith.addf %262, %266 : vector<16x50xf32>
    %c0_317 = arith.constant 0 : index
    %c134 = arith.constant 134 : index
    %268 = vector.load %arg14[%c0_317, %c134] : memref<16x768xbf16, #tpu.memory_space<vmem>>, vector<16x50xbf16>
    %c4_318 = arith.constant 4 : index
    %c8_319 = arith.constant 8 : index
    %c0_320 = arith.constant 0 : index
    %c0_321 = arith.constant 0 : index
    %269 = vector.load %arg2[%c4_318, %c8_319, %c0_320, %c0_321] : memref<10x9x16x16xbf16, #tpu.memory_space<vmem>>, vector<1x1x16x16xbf16>
    %270 = vector.shape_cast %269 : vector<1x1x16x16xbf16> to vector<16x16xbf16>
    %cst_322 = arith.constant dense<0.000000e+00> : vector<16x50xf32>
    %271 = tpu.matmul %270, %268, %cst_322 {dimension_numbers = #tpu.dot_dimension_numbers<[1], [0], [0], [1], [0, 0, 1, 1], [], []>} : vector<16x16xbf16>, vector<16x50xbf16>, vector<16x50xf32> -> vector<16x50xf32>
    %272 = arith.addf %267, %271 : vector<16x50xf32>
    %c0_323 = arith.constant 0 : index
    %c4_324 = arith.constant 4 : index
    %273 = vector.load %arg3[%c0_323, %c4_324] : memref<16x10xf32, #tpu.memory_space<vmem>>, vector<16x1xf32>
    %274 = vector.broadcast %273 : vector<16x1xf32> to vector<16x50xf32>
    %275 = arith.addf %272, %274 : vector<16x50xf32>
    %276 = vector.broadcast %4 : vector<1x50xf32> to vector<16x50xf32>
    %277 = arith.mulf %275, %276 : vector<16x50xf32>
    %cst_325 = arith.constant 0.000000e+00 : f32
    %278 = vector.broadcast %cst_325 : f32 to vector<16x50xf32>
    %279 = arith.maximumf %277, %278 : vector<16x50xf32>
    %280 = arith.truncf %279 : vector<16x50xf32> to vector<16x50xbf16>
    %c0_326 = arith.constant 0 : index
    %c128_327 = arith.constant 128 : index
    %281 = vector.load %arg14[%c0_326, %c128_327] : memref<16x768xbf16, #tpu.memory_space<vmem>>, vector<16x50xbf16>
    tpu.vector_store %arg14[%c0_326, %c128_327], %280 {strides = array<i32>} : memref<16x768xbf16, #tpu.memory_space<vmem>>, vector<16x50xbf16>,
    %c0_328 = arith.constant 0 : index
    %c122_329 = arith.constant 122 : index
    %282 = vector.load %arg14[%c0_328, %c122_329] : memref<16x768xbf16, #tpu.memory_space<vmem>>, vector<16x50xbf16>
    %c5_330 = arith.constant 5 : index
    %c0_331 = arith.constant 0 : index
    %c0_332 = arith.constant 0 : index
    %c0_333 = arith.constant 0 : index
    %283 = vector.load %arg2[%c5_330, %c0_331, %c0_332, %c0_333] : memref<10x9x16x16xbf16, #tpu.memory_space<vmem>>, vector<1x1x16x16xbf16>
    %284 = vector.shape_cast %283 : vector<1x1x16x16xbf16> to vector<16x16xbf16>
    %cst_334 = arith.constant dense<0.000000e+00> : vector<16x50xf32>
    %285 = tpu.matmul %284, %282, %cst_334 {dimension_numbers = #tpu.dot_dimension_numbers<[1], [0], [0], [1], [0, 0, 1, 1], [], []>} : vector<16x16xbf16>, vector<16x50xbf16>, vector<16x50xf32> -> vector<16x50xf32>
    %c0_335 = arith.constant 0 : index
    %c123_336 = arith.constant 123 : index
    %286 = vector.load %arg14[%c0_335, %c123_336] : memref<16x768xbf16, #tpu.memory_space<vmem>>, vector<16x50xbf16>
    %c5_337 = arith.constant 5 : index
    %c1_338 = arith.constant 1 : index
    %c0_339 = arith.constant 0 : index
    %c0_340 = arith.constant 0 : index
    %287 = vector.load %arg2[%c5_337, %c1_338, %c0_339, %c0_340] : memref<10x9x16x16xbf16, #tpu.memory_space<vmem>>, vector<1x1x16x16xbf16>
    %288 = vector.shape_cast %287 : vector<1x1x16x16xbf16> to vector<16x16xbf16>
    %cst_341 = arith.constant dense<0.000000e+00> : vector<16x50xf32>
    %289 = tpu.matmul %288, %286, %cst_341 {dimension_numbers = #tpu.dot_dimension_numbers<[1], [0], [0], [1], [0, 0, 1, 1], [], []>} : vector<16x16xbf16>, vector<16x50xbf16>, vector<16x50xf32> -> vector<16x50xf32>
    %290 = arith.addf %285, %289 : vector<16x50xf32>
    %c0_342 = arith.constant 0 : index
    %c124_343 = arith.constant 124 : index
    %291 = vector.load %arg14[%c0_342, %c124_343] : memref<16x768xbf16, #tpu.memory_space<vmem>>, vector<16x50xbf16>
    %c5_344 = arith.constant 5 : index
    %c2_345 = arith.constant 2 : index
    %c0_346 = arith.constant 0 : index
    %c0_347 = arith.constant 0 : index
    %292 = vector.load %arg2[%c5_344, %c2_345, %c0_346, %c0_347] : memref<10x9x16x16xbf16, #tpu.memory_space<vmem>>, vector<1x1x16x16xbf16>
    %293 = vector.shape_cast %292 : vector<1x1x16x16xbf16> to vector<16x16xbf16>
    %cst_348 = arith.constant dense<0.000000e+00> : vector<16x50xf32>
    %294 = tpu.matmul %293, %291, %cst_348 {dimension_numbers = #tpu.dot_dimension_numbers<[1], [0], [0], [1], [0, 0, 1, 1], [], []>} : vector<16x16xbf16>, vector<16x50xbf16>, vector<16x50xf32> -> vector<16x50xf32>
    %295 = arith.addf %290, %294 : vector<16x50xf32>
    %c0_349 = arith.constant 0 : index
    %c127_350 = arith.constant 127 : index
    %296 = vector.load %arg14[%c0_349, %c127_350] : memref<16x768xbf16, #tpu.memory_space<vmem>>, vector<16x50xbf16>
    %c5_351 = arith.constant 5 : index
    %c3_352 = arith.constant 3 : index
    %c0_353 = arith.constant 0 : index
    %c0_354 = arith.constant 0 : index
    %297 = vector.load %arg2[%c5_351, %c3_352, %c0_353, %c0_354] : memref<10x9x16x16xbf16, #tpu.memory_space<vmem>>, vector<1x1x16x16xbf16>
    %298 = vector.shape_cast %297 : vector<1x1x16x16xbf16> to vector<16x16xbf16>
    %cst_355 = arith.constant dense<0.000000e+00> : vector<16x50xf32>
    %299 = tpu.matmul %298, %296, %cst_355 {dimension_numbers = #tpu.dot_dimension_numbers<[1], [0], [0], [1], [0, 0, 1, 1], [], []>} : vector<16x16xbf16>, vector<16x50xbf16>, vector<16x50xf32> -> vector<16x50xf32>
    %300 = arith.addf %295, %299 : vector<16x50xf32>
    %c0_356 = arith.constant 0 : index
    %c128_357 = arith.constant 128 : index
    %301 = vector.load %arg14[%c0_356, %c128_357] : memref<16x768xbf16, #tpu.memory_space<vmem>>, vector<16x50xbf16>
    %c5_358 = arith.constant 5 : index
    %c4_359 = arith.constant 4 : index
    %c0_360 = arith.constant 0 : index
    %c0_361 = arith.constant 0 : index
    %302 = vector.load %arg2[%c5_358, %c4_359, %c0_360, %c0_361] : memref<10x9x16x16xbf16, #tpu.memory_space<vmem>>, vector<1x1x16x16xbf16>
    %303 = vector.shape_cast %302 : vector<1x1x16x16xbf16> to vector<16x16xbf16>
    %cst_362 = arith.constant dense<0.000000e+00> : vector<16x50xf32>
    %304 = tpu.matmul %303, %301, %cst_362 {dimension_numbers = #tpu.dot_dimension_numbers<[1], [0], [0], [1], [0, 0, 1, 1], [], []>} : vector<16x16xbf16>, vector<16x50xbf16>, vector<16x50xf32> -> vector<16x50xf32>
    %305 = arith.addf %300, %304 : vector<16x50xf32>
    %c0_363 = arith.constant 0 : index
    %c129_364 = arith.constant 129 : index
    %306 = vector.load %arg14[%c0_363, %c129_364] : memref<16x768xbf16, #tpu.memory_space<vmem>>, vector<16x50xbf16>
    %c5_365 = arith.constant 5 : index
    %c5_366 = arith.constant 5 : index
    %c0_367 = arith.constant 0 : index
    %c0_368 = arith.constant 0 : index
    %307 = vector.load %arg2[%c5_365, %c5_366, %c0_367, %c0_368] : memref<10x9x16x16xbf16, #tpu.memory_space<vmem>>, vector<1x1x16x16xbf16>
    %308 = vector.shape_cast %307 : vector<1x1x16x16xbf16> to vector<16x16xbf16>
    %cst_369 = arith.constant dense<0.000000e+00> : vector<16x50xf32>
    %309 = tpu.matmul %308, %306, %cst_369 {dimension_numbers = #tpu.dot_dimension_numbers<[1], [0], [0], [1], [0, 0, 1, 1], [], []>} : vector<16x16xbf16>, vector<16x50xbf16>, vector<16x50xf32> -> vector<16x50xf32>
    %310 = arith.addf %305, %309 : vector<16x50xf32>
    %c0_370 = arith.constant 0 : index
    %c132_371 = arith.constant 132 : index
    %311 = vector.load %arg14[%c0_370, %c132_371] : memref<16x768xbf16, #tpu.memory_space<vmem>>, vector<16x50xbf16>
    %c5_372 = arith.constant 5 : index
    %c6_373 = arith.constant 6 : index
    %c0_374 = arith.constant 0 : index
    %c0_375 = arith.constant 0 : index
    %312 = vector.load %arg2[%c5_372, %c6_373, %c0_374, %c0_375] : memref<10x9x16x16xbf16, #tpu.memory_space<vmem>>, vector<1x1x16x16xbf16>
    %313 = vector.shape_cast %312 : vector<1x1x16x16xbf16> to vector<16x16xbf16>
    %cst_376 = arith.constant dense<0.000000e+00> : vector<16x50xf32>
    %314 = tpu.matmul %313, %311, %cst_376 {dimension_numbers = #tpu.dot_dimension_numbers<[1], [0], [0], [1], [0, 0, 1, 1], [], []>} : vector<16x16xbf16>, vector<16x50xbf16>, vector<16x50xf32> -> vector<16x50xf32>
    %315 = arith.addf %310, %314 : vector<16x50xf32>
    %c0_377 = arith.constant 0 : index
    %c133_378 = arith.constant 133 : index
    %316 = vector.load %arg14[%c0_377, %c133_378] : memref<16x768xbf16, #tpu.memory_space<vmem>>, vector<16x50xbf16>
    %c5_379 = arith.constant 5 : index
    %c7_380 = arith.constant 7 : index
    %c0_381 = arith.constant 0 : index
    %c0_382 = arith.constant 0 : index
    %317 = vector.load %arg2[%c5_379, %c7_380, %c0_381, %c0_382] : memref<10x9x16x16xbf16, #tpu.memory_space<vmem>>, vector<1x1x16x16xbf16>
    %318 = vector.shape_cast %317 : vector<1x1x16x16xbf16> to vector<16x16xbf16>
    %cst_383 = arith.constant dense<0.000000e+00> : vector<16x50xf32>
    %319 = tpu.matmul %318, %316, %cst_383 {dimension_numbers = #tpu.dot_dimension_numbers<[1], [0], [0], [1], [0, 0, 1, 1], [], []>} : vector<16x16xbf16>, vector<16x50xbf16>, vector<16x50xf32> -> vector<16x50xf32>
    %320 = arith.addf %315, %319 : vector<16x50xf32>
    %c0_384 = arith.constant 0 : index
    %c134_385 = arith.constant 134 : index
    %321 = vector.load %arg14[%c0_384, %c134_385] : memref<16x768xbf16, #tpu.memory_space<vmem>>, vector<16x50xbf16>
    %c5_386 = arith.constant 5 : index
    %c8_387 = arith.constant 8 : index
    %c0_388 = arith.constant 0 : index
    %c0_389 = arith.constant 0 : index
    %322 = vector.load %arg2[%c5_386, %c8_387, %c0_388, %c0_389] : memref<10x9x16x16xbf16, #tpu.memory_space<vmem>>, vector<1x1x16x16xbf16>
    %323 = vector.shape_cast %322 : vector<1x1x16x16xbf16> to vector<16x16xbf16>
    %cst_390 = arith.constant dense<0.000000e+00> : vector<16x50xf32>
    %324 = tpu.matmul %323, %321, %cst_390 {dimension_numbers = #tpu.dot_dimension_numbers<[1], [0], [0], [1], [0, 0, 1, 1], [], []>} : vector<16x16xbf16>, vector<16x50xbf16>, vector<16x50xf32> -> vector<16x50xf32>
    %325 = arith.addf %320, %324 : vector<16x50xf32>
    %c0_391 = arith.constant 0 : index
    %c5_392 = arith.constant 5 : index
    %326 = vector.load %arg3[%c0_391, %c5_392] : memref<16x10xf32, #tpu.memory_space<vmem>>, vector<16x1xf32>
    %327 = vector.broadcast %326 : vector<16x1xf32> to vector<16x50xf32>
    %328 = arith.addf %325, %327 : vector<16x50xf32>
    %329 = vector.broadcast %4 : vector<1x50xf32> to vector<16x50xf32>
    %330 = arith.mulf %328, %329 : vector<16x50xf32>
    %c0_393 = arith.constant 0 : index
    %c0_394 = arith.constant 0 : index
    %331 = vector.load %arg8[%c0_393, %c0_394] : memref<25x81xbf16, #tpu.memory_space<vmem>>, vector<25x81xbf16>
    %332 = arith.truncf %330 : vector<16x50xf32> to vector<16x50xbf16>
    %333 = vector.extract_strided_slice %332 {offsets = [0, 0], sizes = [16, 25], strides = [1, 1]} : vector<16x50xbf16> to vector<16x25xbf16>
    %cst_395 = arith.constant dense<0.000000e+00> : vector<16x81xf32>
    %334 = tpu.matmul %333, %331, %cst_395 {dimension_numbers = #tpu.dot_dimension_numbers<[1], [0], [0], [1], [0, 0, 1, 1], [], []>} : vector<16x25xbf16>, vector<25x81xbf16>, vector<16x81xf32> -> vector<16x81xf32>
    %335 = vector.extract_strided_slice %332 {offsets = [0, 25], sizes = [16, 25], strides = [1, 1]} : vector<16x50xbf16> to vector<16x25xbf16>
    %cst_396 = arith.constant dense<0.000000e+00> : vector<16x81xf32>
    %336 = tpu.matmul %335, %331, %cst_396 {dimension_numbers = #tpu.dot_dimension_numbers<[1], [0], [0], [1], [0, 0, 1, 1], [], []>} : vector<16x25xbf16>, vector<25x81xbf16>, vector<16x81xf32> -> vector<16x81xf32>
    %337 = tpu.concatenate %334, %336 in 1 : vector<16x81xf32>, vector<16x81xf32> -> vector<16x162xf32>
    %338 = arith.extf %220 : vector<16x162xbf16> to vector<16x162xf32>
    %339 = arith.addf %337, %338 : vector<16x162xf32>
    %cst_397 = arith.constant 0.000000e+00 : f32
    %340 = vector.broadcast %cst_397 : f32 to vector<16x162xf32>
    %341 = arith.maximumf %339, %340 : vector<16x162xf32>
    %342 = arith.truncf %341 : vector<16x162xf32> to vector<16x162xbf16>
    %c0_398 = arith.constant 0 : index
    %c128_399 = arith.constant 128 : index
    %343 = vector.load %arg14[%c0_398, %c128_399] : memref<16x768xbf16, #tpu.memory_space<vmem>>, vector<16x162xbf16>
    tpu.vector_store %arg14[%c0_398, %c128_399], %342 {strides = array<i32>} : memref<16x768xbf16, #tpu.memory_space<vmem>>, vector<16x162xbf16>,
    %c0_400 = arith.constant 0 : index
    %c118_401 = arith.constant 118 : index
    %344 = vector.load %arg14[%c0_400, %c118_401] : memref<16x768xbf16, #tpu.memory_space<vmem>>, vector<16x162xbf16>
    %c6_402 = arith.constant 6 : index
    %c0_403 = arith.constant 0 : index
    %c0_404 = arith.constant 0 : index
    %c0_405 = arith.constant 0 : index
    %345 = vector.load %arg2[%c6_402, %c0_403, %c0_404, %c0_405] : memref<10x9x16x16xbf16, #tpu.memory_space<vmem>>, vector<1x1x16x16xbf16>
    %346 = vector.shape_cast %345 : vector<1x1x16x16xbf16> to vector<16x16xbf16>
    %cst_406 = arith.constant dense<0.000000e+00> : vector<16x162xf32>
    %347 = tpu.matmul %346, %344, %cst_406 {dimension_numbers = #tpu.dot_dimension_numbers<[1], [0], [0], [1], [0, 0, 1, 1], [], []>} : vector<16x16xbf16>, vector<16x162xbf16>, vector<16x162xf32> -> vector<16x162xf32>
    %c0_407 = arith.constant 0 : index
    %c119_408 = arith.constant 119 : index
    %348 = vector.load %arg14[%c0_407, %c119_408] : memref<16x768xbf16, #tpu.memory_space<vmem>>, vector<16x162xbf16>
    %c6_409 = arith.constant 6 : index
    %c1_410 = arith.constant 1 : index
    %c0_411 = arith.constant 0 : index
    %c0_412 = arith.constant 0 : index
    %349 = vector.load %arg2[%c6_409, %c1_410, %c0_411, %c0_412] : memref<10x9x16x16xbf16, #tpu.memory_space<vmem>>, vector<1x1x16x16xbf16>
    %350 = vector.shape_cast %349 : vector<1x1x16x16xbf16> to vector<16x16xbf16>
    %cst_413 = arith.constant dense<0.000000e+00> : vector<16x162xf32>
    %351 = tpu.matmul %350, %348, %cst_413 {dimension_numbers = #tpu.dot_dimension_numbers<[1], [0], [0], [1], [0, 0, 1, 1], [], []>} : vector<16x16xbf16>, vector<16x162xbf16>, vector<16x162xf32> -> vector<16x162xf32>
    %352 = arith.addf %347, %351 : vector<16x162xf32>
    %c0_414 = arith.constant 0 : index
    %c120_415 = arith.constant 120 : index
    %353 = vector.load %arg14[%c0_414, %c120_415] : memref<16x768xbf16, #tpu.memory_space<vmem>>, vector<16x162xbf16>
    %c6_416 = arith.constant 6 : index
    %c2_417 = arith.constant 2 : index
    %c0_418 = arith.constant 0 : index
    %c0_419 = arith.constant 0 : index
    %354 = vector.load %arg2[%c6_416, %c2_417, %c0_418, %c0_419] : memref<10x9x16x16xbf16, #tpu.memory_space<vmem>>, vector<1x1x16x16xbf16>
    %355 = vector.shape_cast %354 : vector<1x1x16x16xbf16> to vector<16x16xbf16>
    %cst_420 = arith.constant dense<0.000000e+00> : vector<16x162xf32>
    %356 = tpu.matmul %355, %353, %cst_420 {dimension_numbers = #tpu.dot_dimension_numbers<[1], [0], [0], [1], [0, 0, 1, 1], [], []>} : vector<16x16xbf16>, vector<16x162xbf16>, vector<16x162xf32> -> vector<16x162xf32>
    %357 = arith.addf %352, %356 : vector<16x162xf32>
    %c0_421 = arith.constant 0 : index
    %c127_422 = arith.constant 127 : index
    %358 = vector.load %arg14[%c0_421, %c127_422] : memref<16x768xbf16, #tpu.memory_space<vmem>>, vector<16x162xbf16>
    %c6_423 = arith.constant 6 : index
    %c3_424 = arith.constant 3 : index
    %c0_425 = arith.constant 0 : index
    %c0_426 = arith.constant 0 : index
    %359 = vector.load %arg2[%c6_423, %c3_424, %c0_425, %c0_426] : memref<10x9x16x16xbf16, #tpu.memory_space<vmem>>, vector<1x1x16x16xbf16>
    %360 = vector.shape_cast %359 : vector<1x1x16x16xbf16> to vector<16x16xbf16>
    %cst_427 = arith.constant dense<0.000000e+00> : vector<16x162xf32>
    %361 = tpu.matmul %360, %358, %cst_427 {dimension_numbers = #tpu.dot_dimension_numbers<[1], [0], [0], [1], [0, 0, 1, 1], [], []>} : vector<16x16xbf16>, vector<16x162xbf16>, vector<16x162xf32> -> vector<16x162xf32>
    %362 = arith.addf %357, %361 : vector<16x162xf32>
    %c0_428 = arith.constant 0 : index
    %c128_429 = arith.constant 128 : index
    %363 = vector.load %arg14[%c0_428, %c128_429] : memref<16x768xbf16, #tpu.memory_space<vmem>>, vector<16x162xbf16>
    %c6_430 = arith.constant 6 : index
    %c4_431 = arith.constant 4 : index
    %c0_432 = arith.constant 0 : index
    %c0_433 = arith.constant 0 : index
    %364 = vector.load %arg2[%c6_430, %c4_431, %c0_432, %c0_433] : memref<10x9x16x16xbf16, #tpu.memory_space<vmem>>, vector<1x1x16x16xbf16>
    %365 = vector.shape_cast %364 : vector<1x1x16x16xbf16> to vector<16x16xbf16>
    %cst_434 = arith.constant dense<0.000000e+00> : vector<16x162xf32>
    %366 = tpu.matmul %365, %363, %cst_434 {dimension_numbers = #tpu.dot_dimension_numbers<[1], [0], [0], [1], [0, 0, 1, 1], [], []>} : vector<16x16xbf16>, vector<16x162xbf16>, vector<16x162xf32> -> vector<16x162xf32>
    %367 = arith.addf %362, %366 : vector<16x162xf32>
    %c0_435 = arith.constant 0 : index
    %c129_436 = arith.constant 129 : index
    %368 = vector.load %arg14[%c0_435, %c129_436] : memref<16x768xbf16, #tpu.memory_space<vmem>>, vector<16x162xbf16>
    %c6_437 = arith.constant 6 : index
    %c5_438 = arith.constant 5 : index
    %c0_439 = arith.constant 0 : index
    %c0_440 = arith.constant 0 : index
    %369 = vector.load %arg2[%c6_437, %c5_438, %c0_439, %c0_440] : memref<10x9x16x16xbf16, #tpu.memory_space<vmem>>, vector<1x1x16x16xbf16>
    %370 = vector.shape_cast %369 : vector<1x1x16x16xbf16> to vector<16x16xbf16>
    %cst_441 = arith.constant dense<0.000000e+00> : vector<16x162xf32>
    %371 = tpu.matmul %370, %368, %cst_441 {dimension_numbers = #tpu.dot_dimension_numbers<[1], [0], [0], [1], [0, 0, 1, 1], [], []>} : vector<16x16xbf16>, vector<16x162xbf16>, vector<16x162xf32> -> vector<16x162xf32>
    %372 = arith.addf %367, %371 : vector<16x162xf32>
    %c0_442 = arith.constant 0 : index
    %c136_443 = arith.constant 136 : index
    %373 = vector.load %arg14[%c0_442, %c136_443] : memref<16x768xbf16, #tpu.memory_space<vmem>>, vector<16x162xbf16>
    %c6_444 = arith.constant 6 : index
    %c6_445 = arith.constant 6 : index
    %c0_446 = arith.constant 0 : index
    %c0_447 = arith.constant 0 : index
    %374 = vector.load %arg2[%c6_444, %c6_445, %c0_446, %c0_447] : memref<10x9x16x16xbf16, #tpu.memory_space<vmem>>, vector<1x1x16x16xbf16>
    %375 = vector.shape_cast %374 : vector<1x1x16x16xbf16> to vector<16x16xbf16>
    %cst_448 = arith.constant dense<0.000000e+00> : vector<16x162xf32>
    %376 = tpu.matmul %375, %373, %cst_448 {dimension_numbers = #tpu.dot_dimension_numbers<[1], [0], [0], [1], [0, 0, 1, 1], [], []>} : vector<16x16xbf16>, vector<16x162xbf16>, vector<16x162xf32> -> vector<16x162xf32>
    %377 = arith.addf %372, %376 : vector<16x162xf32>
    %c0_449 = arith.constant 0 : index
    %c137_450 = arith.constant 137 : index
    %378 = vector.load %arg14[%c0_449, %c137_450] : memref<16x768xbf16, #tpu.memory_space<vmem>>, vector<16x162xbf16>
    %c6_451 = arith.constant 6 : index
    %c7_452 = arith.constant 7 : index
    %c0_453 = arith.constant 0 : index
    %c0_454 = arith.constant 0 : index
    %379 = vector.load %arg2[%c6_451, %c7_452, %c0_453, %c0_454] : memref<10x9x16x16xbf16, #tpu.memory_space<vmem>>, vector<1x1x16x16xbf16>
    %380 = vector.shape_cast %379 : vector<1x1x16x16xbf16> to vector<16x16xbf16>
    %cst_455 = arith.constant dense<0.000000e+00> : vector<16x162xf32>
    %381 = tpu.matmul %380, %378, %cst_455 {dimension_numbers = #tpu.dot_dimension_numbers<[1], [0], [0], [1], [0, 0, 1, 1], [], []>} : vector<16x16xbf16>, vector<16x162xbf16>, vector<16x162xf32> -> vector<16x162xf32>
    %382 = arith.addf %377, %381 : vector<16x162xf32>
    %c0_456 = arith.constant 0 : index
    %c138_457 = arith.constant 138 : index
    %383 = vector.load %arg14[%c0_456, %c138_457] : memref<16x768xbf16, #tpu.memory_space<vmem>>, vector<16x162xbf16>
    %c6_458 = arith.constant 6 : index
    %c8_459 = arith.constant 8 : index
    %c0_460 = arith.constant 0 : index
    %c0_461 = arith.constant 0 : index
    %384 = vector.load %arg2[%c6_458, %c8_459, %c0_460, %c0_461] : memref<10x9x16x16xbf16, #tpu.memory_space<vmem>>, vector<1x1x16x16xbf16>
    %385 = vector.shape_cast %384 : vector<1x1x16x16xbf16> to vector<16x16xbf16>
    %cst_462 = arith.constant dense<0.000000e+00> : vector<16x162xf32>
    %386 = tpu.matmul %385, %383, %cst_462 {dimension_numbers = #tpu.dot_dimension_numbers<[1], [0], [0], [1], [0, 0, 1, 1], [], []>} : vector<16x16xbf16>, vector<16x162xbf16>, vector<16x162xf32> -> vector<16x162xf32>
    %387 = arith.addf %382, %386 : vector<16x162xf32>
    %c0_463 = arith.constant 0 : index
    %c6_464 = arith.constant 6 : index
    %388 = vector.load %arg3[%c0_463, %c6_464] : memref<16x10xf32, #tpu.memory_space<vmem>>, vector<16x1xf32>
    %389 = vector.broadcast %388 : vector<16x1xf32> to vector<16x162xf32>
    %390 = arith.addf %387, %389 : vector<16x162xf32>
    %391 = vector.broadcast %3 : vector<1x162xf32> to vector<16x162xf32>
    %392 = arith.mulf %390, %391 : vector<16x162xf32>
    %cst_465 = arith.constant 0.000000e+00 : f32
    %393 = vector.broadcast %cst_465 : f32 to vector<16x162xf32>
    %394 = arith.maximumf %392, %393 : vector<16x162xf32>
    %395 = arith.truncf %394 : vector<16x162xf32> to vector<16x162xbf16>
    %c0_466 = arith.constant 0 : index
    %c128_467 = arith.constant 128 : index
    %396 = vector.load %arg14[%c0_466, %c128_467] : memref<16x768xbf16, #tpu.memory_space<vmem>>, vector<16x162xbf16>
    tpu.vector_store %arg14[%c0_466, %c128_467], %395 {strides = array<i32>} : memref<16x768xbf16, #tpu.memory_space<vmem>>, vector<16x162xbf16>,
    %c0_468 = arith.constant 0 : index
    %c118_469 = arith.constant 118 : index
    %397 = vector.load %arg14[%c0_468, %c118_469] : memref<16x768xbf16, #tpu.memory_space<vmem>>, vector<16x162xbf16>
    %c7_470 = arith.constant 7 : index
    %c0_471 = arith.constant 0 : index
    %c0_472 = arith.constant 0 : index
    %c0_473 = arith.constant 0 : index
    %398 = vector.load %arg2[%c7_470, %c0_471, %c0_472, %c0_473] : memref<10x9x16x16xbf16, #tpu.memory_space<vmem>>, vector<1x1x16x16xbf16>
    %399 = vector.shape_cast %398 : vector<1x1x16x16xbf16> to vector<16x16xbf16>
    %cst_474 = arith.constant dense<0.000000e+00> : vector<16x162xf32>
    %400 = tpu.matmul %399, %397, %cst_474 {dimension_numbers = #tpu.dot_dimension_numbers<[1], [0], [0], [1], [0, 0, 1, 1], [], []>} : vector<16x16xbf16>, vector<16x162xbf16>, vector<16x162xf32> -> vector<16x162xf32>
    %c0_475 = arith.constant 0 : index
    %c119_476 = arith.constant 119 : index
    %401 = vector.load %arg14[%c0_475, %c119_476] : memref<16x768xbf16, #tpu.memory_space<vmem>>, vector<16x162xbf16>
    %c7_477 = arith.constant 7 : index
    %c1_478 = arith.constant 1 : index
    %c0_479 = arith.constant 0 : index
    %c0_480 = arith.constant 0 : index
    %402 = vector.load %arg2[%c7_477, %c1_478, %c0_479, %c0_480] : memref<10x9x16x16xbf16, #tpu.memory_space<vmem>>, vector<1x1x16x16xbf16>
    %403 = vector.shape_cast %402 : vector<1x1x16x16xbf16> to vector<16x16xbf16>
    %cst_481 = arith.constant dense<0.000000e+00> : vector<16x162xf32>
    %404 = tpu.matmul %403, %401, %cst_481 {dimension_numbers = #tpu.dot_dimension_numbers<[1], [0], [0], [1], [0, 0, 1, 1], [], []>} : vector<16x16xbf16>, vector<16x162xbf16>, vector<16x162xf32> -> vector<16x162xf32>
    %405 = arith.addf %400, %404 : vector<16x162xf32>
    %c0_482 = arith.constant 0 : index
    %c120_483 = arith.constant 120 : index
    %406 = vector.load %arg14[%c0_482, %c120_483] : memref<16x768xbf16, #tpu.memory_space<vmem>>, vector<16x162xbf16>
    %c7_484 = arith.constant 7 : index
    %c2_485 = arith.constant 2 : index
    %c0_486 = arith.constant 0 : index
    %c0_487 = arith.constant 0 : index
    %407 = vector.load %arg2[%c7_484, %c2_485, %c0_486, %c0_487] : memref<10x9x16x16xbf16, #tpu.memory_space<vmem>>, vector<1x1x16x16xbf16>
    %408 = vector.shape_cast %407 : vector<1x1x16x16xbf16> to vector<16x16xbf16>
    %cst_488 = arith.constant dense<0.000000e+00> : vector<16x162xf32>
    %409 = tpu.matmul %408, %406, %cst_488 {dimension_numbers = #tpu.dot_dimension_numbers<[1], [0], [0], [1], [0, 0, 1, 1], [], []>} : vector<16x16xbf16>, vector<16x162xbf16>, vector<16x162xf32> -> vector<16x162xf32>
    %410 = arith.addf %405, %409 : vector<16x162xf32>
    %c0_489 = arith.constant 0 : index
    %c127_490 = arith.constant 127 : index
    %411 = vector.load %arg14[%c0_489, %c127_490] : memref<16x768xbf16, #tpu.memory_space<vmem>>, vector<16x162xbf16>
    %c7_491 = arith.constant 7 : index
    %c3_492 = arith.constant 3 : index
    %c0_493 = arith.constant 0 : index
    %c0_494 = arith.constant 0 : index
    %412 = vector.load %arg2[%c7_491, %c3_492, %c0_493, %c0_494] : memref<10x9x16x16xbf16, #tpu.memory_space<vmem>>, vector<1x1x16x16xbf16>
    %413 = vector.shape_cast %412 : vector<1x1x16x16xbf16> to vector<16x16xbf16>
    %cst_495 = arith.constant dense<0.000000e+00> : vector<16x162xf32>
    %414 = tpu.matmul %413, %411, %cst_495 {dimension_numbers = #tpu.dot_dimension_numbers<[1], [0], [0], [1], [0, 0, 1, 1], [], []>} : vector<16x16xbf16>, vector<16x162xbf16>, vector<16x162xf32> -> vector<16x162xf32>
    %415 = arith.addf %410, %414 : vector<16x162xf32>
    %c0_496 = arith.constant 0 : index
    %c128_497 = arith.constant 128 : index
    %416 = vector.load %arg14[%c0_496, %c128_497] : memref<16x768xbf16, #tpu.memory_space<vmem>>, vector<16x162xbf16>
    %c7_498 = arith.constant 7 : index
    %c4_499 = arith.constant 4 : index
    %c0_500 = arith.constant 0 : index
    %c0_501 = arith.constant 0 : index
    %417 = vector.load %arg2[%c7_498, %c4_499, %c0_500, %c0_501] : memref<10x9x16x16xbf16, #tpu.memory_space<vmem>>, vector<1x1x16x16xbf16>
    %418 = vector.shape_cast %417 : vector<1x1x16x16xbf16> to vector<16x16xbf16>
    %cst_502 = arith.constant dense<0.000000e+00> : vector<16x162xf32>
    %419 = tpu.matmul %418, %416, %cst_502 {dimension_numbers = #tpu.dot_dimension_numbers<[1], [0], [0], [1], [0, 0, 1, 1], [], []>} : vector<16x16xbf16>, vector<16x162xbf16>, vector<16x162xf32> -> vector<16x162xf32>
    %420 = arith.addf %415, %419 : vector<16x162xf32>
    %c0_503 = arith.constant 0 : index
    %c129_504 = arith.constant 129 : index
    %421 = vector.load %arg14[%c0_503, %c129_504] : memref<16x768xbf16, #tpu.memory_space<vmem>>, vector<16x162xbf16>
    %c7_505 = arith.constant 7 : index
    %c5_506 = arith.constant 5 : index
    %c0_507 = arith.constant 0 : index
    %c0_508 = arith.constant 0 : index
    %422 = vector.load %arg2[%c7_505, %c5_506, %c0_507, %c0_508] : memref<10x9x16x16xbf16, #tpu.memory_space<vmem>>, vector<1x1x16x16xbf16>
    %423 = vector.shape_cast %422 : vector<1x1x16x16xbf16> to vector<16x16xbf16>
    %cst_509 = arith.constant dense<0.000000e+00> : vector<16x162xf32>
    %424 = tpu.matmul %423, %421, %cst_509 {dimension_numbers = #tpu.dot_dimension_numbers<[1], [0], [0], [1], [0, 0, 1, 1], [], []>} : vector<16x16xbf16>, vector<16x162xbf16>, vector<16x162xf32> -> vector<16x162xf32>
    %425 = arith.addf %420, %424 : vector<16x162xf32>
    %c0_510 = arith.constant 0 : index
    %c136_511 = arith.constant 136 : index
    %426 = vector.load %arg14[%c0_510, %c136_511] : memref<16x768xbf16, #tpu.memory_space<vmem>>, vector<16x162xbf16>
    %c7_512 = arith.constant 7 : index
    %c6_513 = arith.constant 6 : index
    %c0_514 = arith.constant 0 : index
    %c0_515 = arith.constant 0 : index
    %427 = vector.load %arg2[%c7_512, %c6_513, %c0_514, %c0_515] : memref<10x9x16x16xbf16, #tpu.memory_space<vmem>>, vector<1x1x16x16xbf16>
    %428 = vector.shape_cast %427 : vector<1x1x16x16xbf16> to vector<16x16xbf16>
    %cst_516 = arith.constant dense<0.000000e+00> : vector<16x162xf32>
    %429 = tpu.matmul %428, %426, %cst_516 {dimension_numbers = #tpu.dot_dimension_numbers<[1], [0], [0], [1], [0, 0, 1, 1], [], []>} : vector<16x16xbf16>, vector<16x162xbf16>, vector<16x162xf32> -> vector<16x162xf32>
    %430 = arith.addf %425, %429 : vector<16x162xf32>
    %c0_517 = arith.constant 0 : index
    %c137_518 = arith.constant 137 : index
    %431 = vector.load %arg14[%c0_517, %c137_518] : memref<16x768xbf16, #tpu.memory_space<vmem>>, vector<16x162xbf16>
    %c7_519 = arith.constant 7 : index
    %c7_520 = arith.constant 7 : index
    %c0_521 = arith.constant 0 : index
    %c0_522 = arith.constant 0 : index
    %432 = vector.load %arg2[%c7_519, %c7_520, %c0_521, %c0_522] : memref<10x9x16x16xbf16, #tpu.memory_space<vmem>>, vector<1x1x16x16xbf16>
    %433 = vector.shape_cast %432 : vector<1x1x16x16xbf16> to vector<16x16xbf16>
    %cst_523 = arith.constant dense<0.000000e+00> : vector<16x162xf32>
    %434 = tpu.matmul %433, %431, %cst_523 {dimension_numbers = #tpu.dot_dimension_numbers<[1], [0], [0], [1], [0, 0, 1, 1], [], []>} : vector<16x16xbf16>, vector<16x162xbf16>, vector<16x162xf32> -> vector<16x162xf32>
    %435 = arith.addf %430, %434 : vector<16x162xf32>
    %c0_524 = arith.constant 0 : index
    %c138_525 = arith.constant 138 : index
    %436 = vector.load %arg14[%c0_524, %c138_525] : memref<16x768xbf16, #tpu.memory_space<vmem>>, vector<16x162xbf16>
    %c7_526 = arith.constant 7 : index
    %c8_527 = arith.constant 8 : index
    %c0_528 = arith.constant 0 : index
    %c0_529 = arith.constant 0 : index
    %437 = vector.load %arg2[%c7_526, %c8_527, %c0_528, %c0_529] : memref<10x9x16x16xbf16, #tpu.memory_space<vmem>>, vector<1x1x16x16xbf16>
    %438 = vector.shape_cast %437 : vector<1x1x16x16xbf16> to vector<16x16xbf16>
    %cst_530 = arith.constant dense<0.000000e+00> : vector<16x162xf32>
    %439 = tpu.matmul %438, %436, %cst_530 {dimension_numbers = #tpu.dot_dimension_numbers<[1], [0], [0], [1], [0, 0, 1, 1], [], []>} : vector<16x16xbf16>, vector<16x162xbf16>, vector<16x162xf32> -> vector<16x162xf32>
    %440 = arith.addf %435, %439 : vector<16x162xf32>
    %c0_531 = arith.constant 0 : index
    %c7_532 = arith.constant 7 : index
    %441 = vector.load %arg3[%c0_531, %c7_532] : memref<16x10xf32, #tpu.memory_space<vmem>>, vector<16x1xf32>
    %442 = vector.broadcast %441 : vector<16x1xf32> to vector<16x162xf32>
    %443 = arith.addf %440, %442 : vector<16x162xf32>
    %444 = vector.broadcast %3 : vector<1x162xf32> to vector<16x162xf32>
    %445 = arith.mulf %443, %444 : vector<16x162xf32>
    %c0_533 = arith.constant 0 : index
    %c0_534 = arith.constant 0 : index
    %446 = vector.load %arg9[%c0_533, %c0_534] : memref<81x289xbf16, #tpu.memory_space<vmem>>, vector<81x289xbf16>
    %447 = arith.truncf %445 : vector<16x162xf32> to vector<16x162xbf16>
    %448 = vector.extract_strided_slice %447 {offsets = [0, 0], sizes = [16, 81], strides = [1, 1]} : vector<16x162xbf16> to vector<16x81xbf16>
    %cst_535 = arith.constant dense<0.000000e+00> : vector<16x289xf32>
    %449 = tpu.matmul %448, %446, %cst_535 {dimension_numbers = #tpu.dot_dimension_numbers<[1], [0], [0], [1], [0, 0, 1, 1], [], []>} : vector<16x81xbf16>, vector<81x289xbf16>, vector<16x289xf32> -> vector<16x289xf32>
    %450 = vector.extract_strided_slice %447 {offsets = [0, 81], sizes = [16, 81], strides = [1, 1]} : vector<16x162xbf16> to vector<16x81xbf16>
    %cst_536 = arith.constant dense<0.000000e+00> : vector<16x289xf32>
    %451 = tpu.matmul %450, %446, %cst_536 {dimension_numbers = #tpu.dot_dimension_numbers<[1], [0], [0], [1], [0, 0, 1, 1], [], []>} : vector<16x81xbf16>, vector<81x289xbf16>, vector<16x289xf32> -> vector<16x289xf32>
    %452 = tpu.concatenate %449, %451 in 1 : vector<16x289xf32>, vector<16x289xf32> -> vector<16x578xf32>
    %453 = arith.extf %109 : vector<16x578xbf16> to vector<16x578xf32>
    %454 = arith.addf %452, %453 : vector<16x578xf32>
    %cst_537 = arith.constant 0.000000e+00 : f32
    %455 = vector.broadcast %cst_537 : f32 to vector<16x578xf32>
    %456 = arith.maximumf %454, %455 : vector<16x578xf32>
    %457 = arith.truncf %456 : vector<16x578xf32> to vector<16x578xbf16>
    %c0_538 = arith.constant 0 : index
    %c128_539 = arith.constant 128 : index
    %458 = vector.load %arg14[%c0_538, %c128_539] : memref<16x768xbf16, #tpu.memory_space<vmem>>, vector<16x578xbf16>
    tpu.vector_store %arg14[%c0_538, %c128_539], %457 {strides = array<i32>} : memref<16x768xbf16, #tpu.memory_space<vmem>>, vector<16x578xbf16>,
    %c0_540 = arith.constant 0 : index
    %c110_541 = arith.constant 110 : index
    %459 = vector.load %arg14[%c0_540, %c110_541] : memref<16x768xbf16, #tpu.memory_space<vmem>>, vector<16x578xbf16>
    %c8_542 = arith.constant 8 : index
    %c0_543 = arith.constant 0 : index
    %c0_544 = arith.constant 0 : index
    %c0_545 = arith.constant 0 : index
    %460 = vector.load %arg2[%c8_542, %c0_543, %c0_544, %c0_545] : memref<10x9x16x16xbf16, #tpu.memory_space<vmem>>, vector<1x1x16x16xbf16>
    %461 = vector.shape_cast %460 : vector<1x1x16x16xbf16> to vector<16x16xbf16>
    %cst_546 = arith.constant dense<0.000000e+00> : vector<16x578xf32>
    %462 = tpu.matmul %461, %459, %cst_546 {dimension_numbers = #tpu.dot_dimension_numbers<[1], [0], [0], [1], [0, 0, 1, 1], [], []>} : vector<16x16xbf16>, vector<16x578xbf16>, vector<16x578xf32> -> vector<16x578xf32>
    %c0_547 = arith.constant 0 : index
    %c111_548 = arith.constant 111 : index
    %463 = vector.load %arg14[%c0_547, %c111_548] : memref<16x768xbf16, #tpu.memory_space<vmem>>, vector<16x578xbf16>
    %c8_549 = arith.constant 8 : index
    %c1_550 = arith.constant 1 : index
    %c0_551 = arith.constant 0 : index
    %c0_552 = arith.constant 0 : index
    %464 = vector.load %arg2[%c8_549, %c1_550, %c0_551, %c0_552] : memref<10x9x16x16xbf16, #tpu.memory_space<vmem>>, vector<1x1x16x16xbf16>
    %465 = vector.shape_cast %464 : vector<1x1x16x16xbf16> to vector<16x16xbf16>
    %cst_553 = arith.constant dense<0.000000e+00> : vector<16x578xf32>
    %466 = tpu.matmul %465, %463, %cst_553 {dimension_numbers = #tpu.dot_dimension_numbers<[1], [0], [0], [1], [0, 0, 1, 1], [], []>} : vector<16x16xbf16>, vector<16x578xbf16>, vector<16x578xf32> -> vector<16x578xf32>
    %467 = arith.addf %462, %466 : vector<16x578xf32>
    %c0_554 = arith.constant 0 : index
    %c112_555 = arith.constant 112 : index
    %468 = vector.load %arg14[%c0_554, %c112_555] : memref<16x768xbf16, #tpu.memory_space<vmem>>, vector<16x578xbf16>
    %c8_556 = arith.constant 8 : index
    %c2_557 = arith.constant 2 : index
    %c0_558 = arith.constant 0 : index
    %c0_559 = arith.constant 0 : index
    %469 = vector.load %arg2[%c8_556, %c2_557, %c0_558, %c0_559] : memref<10x9x16x16xbf16, #tpu.memory_space<vmem>>, vector<1x1x16x16xbf16>
    %470 = vector.shape_cast %469 : vector<1x1x16x16xbf16> to vector<16x16xbf16>
    %cst_560 = arith.constant dense<0.000000e+00> : vector<16x578xf32>
    %471 = tpu.matmul %470, %468, %cst_560 {dimension_numbers = #tpu.dot_dimension_numbers<[1], [0], [0], [1], [0, 0, 1, 1], [], []>} : vector<16x16xbf16>, vector<16x578xbf16>, vector<16x578xf32> -> vector<16x578xf32>
    %472 = arith.addf %467, %471 : vector<16x578xf32>
    %c0_561 = arith.constant 0 : index
    %c127_562 = arith.constant 127 : index
    %473 = vector.load %arg14[%c0_561, %c127_562] : memref<16x768xbf16, #tpu.memory_space<vmem>>, vector<16x578xbf16>
    %c8_563 = arith.constant 8 : index
    %c3_564 = arith.constant 3 : index
    %c0_565 = arith.constant 0 : index
    %c0_566 = arith.constant 0 : index
    %474 = vector.load %arg2[%c8_563, %c3_564, %c0_565, %c0_566] : memref<10x9x16x16xbf16, #tpu.memory_space<vmem>>, vector<1x1x16x16xbf16>
    %475 = vector.shape_cast %474 : vector<1x1x16x16xbf16> to vector<16x16xbf16>
    %cst_567 = arith.constant dense<0.000000e+00> : vector<16x578xf32>
    %476 = tpu.matmul %475, %473, %cst_567 {dimension_numbers = #tpu.dot_dimension_numbers<[1], [0], [0], [1], [0, 0, 1, 1], [], []>} : vector<16x16xbf16>, vector<16x578xbf16>, vector<16x578xf32> -> vector<16x578xf32>
    %477 = arith.addf %472, %476 : vector<16x578xf32>
    %c0_568 = arith.constant 0 : index
    %c128_569 = arith.constant 128 : index
    %478 = vector.load %arg14[%c0_568, %c128_569] : memref<16x768xbf16, #tpu.memory_space<vmem>>, vector<16x578xbf16>
    %c8_570 = arith.constant 8 : index
    %c4_571 = arith.constant 4 : index
    %c0_572 = arith.constant 0 : index
    %c0_573 = arith.constant 0 : index
    %479 = vector.load %arg2[%c8_570, %c4_571, %c0_572, %c0_573] : memref<10x9x16x16xbf16, #tpu.memory_space<vmem>>, vector<1x1x16x16xbf16>
    %480 = vector.shape_cast %479 : vector<1x1x16x16xbf16> to vector<16x16xbf16>
    %cst_574 = arith.constant dense<0.000000e+00> : vector<16x578xf32>
    %481 = tpu.matmul %480, %478, %cst_574 {dimension_numbers = #tpu.dot_dimension_numbers<[1], [0], [0], [1], [0, 0, 1, 1], [], []>} : vector<16x16xbf16>, vector<16x578xbf16>, vector<16x578xf32> -> vector<16x578xf32>
    %482 = arith.addf %477, %481 : vector<16x578xf32>
    %c0_575 = arith.constant 0 : index
    %c129_576 = arith.constant 129 : index
    %483 = vector.load %arg14[%c0_575, %c129_576] : memref<16x768xbf16, #tpu.memory_space<vmem>>, vector<16x578xbf16>
    %c8_577 = arith.constant 8 : index
    %c5_578 = arith.constant 5 : index
    %c0_579 = arith.constant 0 : index
    %c0_580 = arith.constant 0 : index
    %484 = vector.load %arg2[%c8_577, %c5_578, %c0_579, %c0_580] : memref<10x9x16x16xbf16, #tpu.memory_space<vmem>>, vector<1x1x16x16xbf16>
    %485 = vector.shape_cast %484 : vector<1x1x16x16xbf16> to vector<16x16xbf16>
    %cst_581 = arith.constant dense<0.000000e+00> : vector<16x578xf32>
    %486 = tpu.matmul %485, %483, %cst_581 {dimension_numbers = #tpu.dot_dimension_numbers<[1], [0], [0], [1], [0, 0, 1, 1], [], []>} : vector<16x16xbf16>, vector<16x578xbf16>, vector<16x578xf32> -> vector<16x578xf32>
    %487 = arith.addf %482, %486 : vector<16x578xf32>
    %c0_582 = arith.constant 0 : index
    %c144_583 = arith.constant 144 : index
    %488 = vector.load %arg14[%c0_582, %c144_583] : memref<16x768xbf16, #tpu.memory_space<vmem>>, vector<16x578xbf16>
    %c8_584 = arith.constant 8 : index
    %c6_585 = arith.constant 6 : index
    %c0_586 = arith.constant 0 : index
    %c0_587 = arith.constant 0 : index
    %489 = vector.load %arg2[%c8_584, %c6_585, %c0_586, %c0_587] : memref<10x9x16x16xbf16, #tpu.memory_space<vmem>>, vector<1x1x16x16xbf16>
    %490 = vector.shape_cast %489 : vector<1x1x16x16xbf16> to vector<16x16xbf16>
    %cst_588 = arith.constant dense<0.000000e+00> : vector<16x578xf32>
    %491 = tpu.matmul %490, %488, %cst_588 {dimension_numbers = #tpu.dot_dimension_numbers<[1], [0], [0], [1], [0, 0, 1, 1], [], []>} : vector<16x16xbf16>, vector<16x578xbf16>, vector<16x578xf32> -> vector<16x578xf32>
    %492 = arith.addf %487, %491 : vector<16x578xf32>
    %c0_589 = arith.constant 0 : index
    %c145_590 = arith.constant 145 : index
    %493 = vector.load %arg14[%c0_589, %c145_590] : memref<16x768xbf16, #tpu.memory_space<vmem>>, vector<16x578xbf16>
    %c8_591 = arith.constant 8 : index
    %c7_592 = arith.constant 7 : index
    %c0_593 = arith.constant 0 : index
    %c0_594 = arith.constant 0 : index
    %494 = vector.load %arg2[%c8_591, %c7_592, %c0_593, %c0_594] : memref<10x9x16x16xbf16, #tpu.memory_space<vmem>>, vector<1x1x16x16xbf16>
    %495 = vector.shape_cast %494 : vector<1x1x16x16xbf16> to vector<16x16xbf16>
    %cst_595 = arith.constant dense<0.000000e+00> : vector<16x578xf32>
    %496 = tpu.matmul %495, %493, %cst_595 {dimension_numbers = #tpu.dot_dimension_numbers<[1], [0], [0], [1], [0, 0, 1, 1], [], []>} : vector<16x16xbf16>, vector<16x578xbf16>, vector<16x578xf32> -> vector<16x578xf32>
    %497 = arith.addf %492, %496 : vector<16x578xf32>
    %c0_596 = arith.constant 0 : index
    %c146_597 = arith.constant 146 : index
    %498 = vector.load %arg14[%c0_596, %c146_597] : memref<16x768xbf16, #tpu.memory_space<vmem>>, vector<16x578xbf16>
    %c8_598 = arith.constant 8 : index
    %c8_599 = arith.constant 8 : index
    %c0_600 = arith.constant 0 : index
    %c0_601 = arith.constant 0 : index
    %499 = vector.load %arg2[%c8_598, %c8_599, %c0_600, %c0_601] : memref<10x9x16x16xbf16, #tpu.memory_space<vmem>>, vector<1x1x16x16xbf16>
    %500 = vector.shape_cast %499 : vector<1x1x16x16xbf16> to vector<16x16xbf16>
    %cst_602 = arith.constant dense<0.000000e+00> : vector<16x578xf32>
    %501 = tpu.matmul %500, %498, %cst_602 {dimension_numbers = #tpu.dot_dimension_numbers<[1], [0], [0], [1], [0, 0, 1, 1], [], []>} : vector<16x16xbf16>, vector<16x578xbf16>, vector<16x578xf32> -> vector<16x578xf32>
    %502 = arith.addf %497, %501 : vector<16x578xf32>
    %c0_603 = arith.constant 0 : index
    %c8_604 = arith.constant 8 : index
    %503 = vector.load %arg3[%c0_603, %c8_604] : memref<16x10xf32, #tpu.memory_space<vmem>>, vector<16x1xf32>
    %504 = vector.broadcast %503 : vector<16x1xf32> to vector<16x578xf32>
    %505 = arith.addf %502, %504 : vector<16x578xf32>
    %506 = vector.broadcast %2 : vector<1x578xf32> to vector<16x578xf32>
    %507 = arith.mulf %505, %506 : vector<16x578xf32>
    %cst_605 = arith.constant 0.000000e+00 : f32
    %508 = vector.broadcast %cst_605 : f32 to vector<16x578xf32>
    %509 = arith.maximumf %507, %508 : vector<16x578xf32>
    %510 = arith.truncf %509 : vector<16x578xf32> to vector<16x578xbf16>
    %c0_606 = arith.constant 0 : index
    %c128_607 = arith.constant 128 : index
    %511 = vector.load %arg14[%c0_606, %c128_607] : memref<16x768xbf16, #tpu.memory_space<vmem>>, vector<16x578xbf16>
    tpu.vector_store %arg14[%c0_606, %c128_607], %510 {strides = array<i32>} : memref<16x768xbf16, #tpu.memory_space<vmem>>, vector<16x578xbf16>,
    %c0_608 = arith.constant 0 : index
    %c110_609 = arith.constant 110 : index
    %512 = vector.load %arg14[%c0_608, %c110_609] : memref<16x768xbf16, #tpu.memory_space<vmem>>, vector<16x578xbf16>
    %c9 = arith.constant 9 : index
    %c0_610 = arith.constant 0 : index
    %c0_611 = arith.constant 0 : index
    %c0_612 = arith.constant 0 : index
    %513 = vector.load %arg2[%c9, %c0_610, %c0_611, %c0_612] : memref<10x9x16x16xbf16, #tpu.memory_space<vmem>>, vector<1x1x16x16xbf16>
    %514 = vector.shape_cast %513 : vector<1x1x16x16xbf16> to vector<16x16xbf16>
    %cst_613 = arith.constant dense<0.000000e+00> : vector<16x578xf32>
    %515 = tpu.matmul %514, %512, %cst_613 {dimension_numbers = #tpu.dot_dimension_numbers<[1], [0], [0], [1], [0, 0, 1, 1], [], []>} : vector<16x16xbf16>, vector<16x578xbf16>, vector<16x578xf32> -> vector<16x578xf32>
    %c0_614 = arith.constant 0 : index
    %c111_615 = arith.constant 111 : index
    %516 = vector.load %arg14[%c0_614, %c111_615] : memref<16x768xbf16, #tpu.memory_space<vmem>>, vector<16x578xbf16>
    %c9_616 = arith.constant 9 : index
    %c1_617 = arith.constant 1 : index
    %c0_618 = arith.constant 0 : index
    %c0_619 = arith.constant 0 : index
    %517 = vector.load %arg2[%c9_616, %c1_617, %c0_618, %c0_619] : memref<10x9x16x16xbf16, #tpu.memory_space<vmem>>, vector<1x1x16x16xbf16>
    %518 = vector.shape_cast %517 : vector<1x1x16x16xbf16> to vector<16x16xbf16>
    %cst_620 = arith.constant dense<0.000000e+00> : vector<16x578xf32>
    %519 = tpu.matmul %518, %516, %cst_620 {dimension_numbers = #tpu.dot_dimension_numbers<[1], [0], [0], [1], [0, 0, 1, 1], [], []>} : vector<16x16xbf16>, vector<16x578xbf16>, vector<16x578xf32> -> vector<16x578xf32>
    %520 = arith.addf %515, %519 : vector<16x578xf32>
    %c0_621 = arith.constant 0 : index
    %c112_622 = arith.constant 112 : index
    %521 = vector.load %arg14[%c0_621, %c112_622] : memref<16x768xbf16, #tpu.memory_space<vmem>>, vector<16x578xbf16>
    %c9_623 = arith.constant 9 : index
    %c2_624 = arith.constant 2 : index
    %c0_625 = arith.constant 0 : index
    %c0_626 = arith.constant 0 : index
    %522 = vector.load %arg2[%c9_623, %c2_624, %c0_625, %c0_626] : memref<10x9x16x16xbf16, #tpu.memory_space<vmem>>, vector<1x1x16x16xbf16>
    %523 = vector.shape_cast %522 : vector<1x1x16x16xbf16> to vector<16x16xbf16>
    %cst_627 = arith.constant dense<0.000000e+00> : vector<16x578xf32>
    %524 = tpu.matmul %523, %521, %cst_627 {dimension_numbers = #tpu.dot_dimension_numbers<[1], [0], [0], [1], [0, 0, 1, 1], [], []>} : vector<16x16xbf16>, vector<16x578xbf16>, vector<16x578xf32> -> vector<16x578xf32>
    %525 = arith.addf %520, %524 : vector<16x578xf32>
    %c0_628 = arith.constant 0 : index
    %c127_629 = arith.constant 127 : index
    %526 = vector.load %arg14[%c0_628, %c127_629] : memref<16x768xbf16, #tpu.memory_space<vmem>>, vector<16x578xbf16>
    %c9_630 = arith.constant 9 : index
    %c3_631 = arith.constant 3 : index
    %c0_632 = arith.constant 0 : index
    %c0_633 = arith.constant 0 : index
    %527 = vector.load %arg2[%c9_630, %c3_631, %c0_632, %c0_633] : memref<10x9x16x16xbf16, #tpu.memory_space<vmem>>, vector<1x1x16x16xbf16>
    %528 = vector.shape_cast %527 : vector<1x1x16x16xbf16> to vector<16x16xbf16>
    %cst_634 = arith.constant dense<0.000000e+00> : vector<16x578xf32>
    %529 = tpu.matmul %528, %526, %cst_634 {dimension_numbers = #tpu.dot_dimension_numbers<[1], [0], [0], [1], [0, 0, 1, 1], [], []>} : vector<16x16xbf16>, vector<16x578xbf16>, vector<16x578xf32> -> vector<16x578xf32>
    %530 = arith.addf %525, %529 : vector<16x578xf32>
    %c0_635 = arith.constant 0 : index
    %c128_636 = arith.constant 128 : index
    %531 = vector.load %arg14[%c0_635, %c128_636] : memref<16x768xbf16, #tpu.memory_space<vmem>>, vector<16x578xbf16>
    %c9_637 = arith.constant 9 : index
    %c4_638 = arith.constant 4 : index
    %c0_639 = arith.constant 0 : index
    %c0_640 = arith.constant 0 : index
    %532 = vector.load %arg2[%c9_637, %c4_638, %c0_639, %c0_640] : memref<10x9x16x16xbf16, #tpu.memory_space<vmem>>, vector<1x1x16x16xbf16>
    %533 = vector.shape_cast %532 : vector<1x1x16x16xbf16> to vector<16x16xbf16>
    %cst_641 = arith.constant dense<0.000000e+00> : vector<16x578xf32>
    %534 = tpu.matmul %533, %531, %cst_641 {dimension_numbers = #tpu.dot_dimension_numbers<[1], [0], [0], [1], [0, 0, 1, 1], [], []>} : vector<16x16xbf16>, vector<16x578xbf16>, vector<16x578xf32> -> vector<16x578xf32>
    %535 = arith.addf %530, %534 : vector<16x578xf32>
    %c0_642 = arith.constant 0 : index
    %c129_643 = arith.constant 129 : index
    %536 = vector.load %arg14[%c0_642, %c129_643] : memref<16x768xbf16, #tpu.memory_space<vmem>>, vector<16x578xbf16>
    %c9_644 = arith.constant 9 : index
    %c5_645 = arith.constant 5 : index
    %c0_646 = arith.constant 0 : index
    %c0_647 = arith.constant 0 : index
    %537 = vector.load %arg2[%c9_644, %c5_645, %c0_646, %c0_647] : memref<10x9x16x16xbf16, #tpu.memory_space<vmem>>, vector<1x1x16x16xbf16>
    %538 = vector.shape_cast %537 : vector<1x1x16x16xbf16> to vector<16x16xbf16>
    %cst_648 = arith.constant dense<0.000000e+00> : vector<16x578xf32>
    %539 = tpu.matmul %538, %536, %cst_648 {dimension_numbers = #tpu.dot_dimension_numbers<[1], [0], [0], [1], [0, 0, 1, 1], [], []>} : vector<16x16xbf16>, vector<16x578xbf16>, vector<16x578xf32> -> vector<16x578xf32>
    %540 = arith.addf %535, %539 : vector<16x578xf32>
    %c0_649 = arith.constant 0 : index
    %c144_650 = arith.constant 144 : index
    %541 = vector.load %arg14[%c0_649, %c144_650] : memref<16x768xbf16, #tpu.memory_space<vmem>>, vector<16x578xbf16>
    %c9_651 = arith.constant 9 : index
    %c6_652 = arith.constant 6 : index
    %c0_653 = arith.constant 0 : index
    %c0_654 = arith.constant 0 : index
    %542 = vector.load %arg2[%c9_651, %c6_652, %c0_653, %c0_654] : memref<10x9x16x16xbf16, #tpu.memory_space<vmem>>, vector<1x1x16x16xbf16>
    %543 = vector.shape_cast %542 : vector<1x1x16x16xbf16> to vector<16x16xbf16>
    %cst_655 = arith.constant dense<0.000000e+00> : vector<16x578xf32>
    %544 = tpu.matmul %543, %541, %cst_655 {dimension_numbers = #tpu.dot_dimension_numbers<[1], [0], [0], [1], [0, 0, 1, 1], [], []>} : vector<16x16xbf16>, vector<16x578xbf16>, vector<16x578xf32> -> vector<16x578xf32>
    %545 = arith.addf %540, %544 : vector<16x578xf32>
    %c0_656 = arith.constant 0 : index
    %c145_657 = arith.constant 145 : index
    %546 = vector.load %arg14[%c0_656, %c145_657] : memref<16x768xbf16, #tpu.memory_space<vmem>>, vector<16x578xbf16>
    %c9_658 = arith.constant 9 : index
    %c7_659 = arith.constant 7 : index
    %c0_660 = arith.constant 0 : index
    %c0_661 = arith.constant 0 : index
    %547 = vector.load %arg2[%c9_658, %c7_659, %c0_660, %c0_661] : memref<10x9x16x16xbf16, #tpu.memory_space<vmem>>, vector<1x1x16x16xbf16>
    %548 = vector.shape_cast %547 : vector<1x1x16x16xbf16> to vector<16x16xbf16>
    %cst_662 = arith.constant dense<0.000000e+00> : vector<16x578xf32>
    %549 = tpu.matmul %548, %546, %cst_662 {dimension_numbers = #tpu.dot_dimension_numbers<[1], [0], [0], [1], [0, 0, 1, 1], [], []>} : vector<16x16xbf16>, vector<16x578xbf16>, vector<16x578xf32> -> vector<16x578xf32>
    %550 = arith.addf %545, %549 : vector<16x578xf32>
    %c0_663 = arith.constant 0 : index
    %c146_664 = arith.constant 146 : index
    %551 = vector.load %arg14[%c0_663, %c146_664] : memref<16x768xbf16, #tpu.memory_space<vmem>>, vector<16x578xbf16>
    %c9_665 = arith.constant 9 : index
    %c8_666 = arith.constant 8 : index
    %c0_667 = arith.constant 0 : index
    %c0_668 = arith.constant 0 : index
    %552 = vector.load %arg2[%c9_665, %c8_666, %c0_667, %c0_668] : memref<10x9x16x16xbf16, #tpu.memory_space<vmem>>, vector<1x1x16x16xbf16>
    %553 = vector.shape_cast %552 : vector<1x1x16x16xbf16> to vector<16x16xbf16>
    %cst_669 = arith.constant dense<0.000000e+00> : vector<16x578xf32>
    %554 = tpu.matmul %553, %551, %cst_669 {dimension_numbers = #tpu.dot_dimension_numbers<[1], [0], [0], [1], [0, 0, 1, 1], [], []>} : vector<16x16xbf16>, vector<16x578xbf16>, vector<16x578xf32> -> vector<16x578xf32>
    %555 = arith.addf %550, %554 : vector<16x578xf32>
    %c0_670 = arith.constant 0 : index
    %c9_671 = arith.constant 9 : index
    %556 = vector.load %arg3[%c0_670, %c9_671] : memref<16x10xf32, #tpu.memory_space<vmem>>, vector<16x1xf32>
    %557 = vector.broadcast %556 : vector<16x1xf32> to vector<16x578xf32>
    %558 = arith.addf %555, %557 : vector<16x578xf32>
    %559 = vector.broadcast %2 : vector<1x578xf32> to vector<16x578xf32>
    %560 = arith.mulf %558, %559 : vector<16x578xf32>
    %cst_672 = arith.constant 0.000000e+00 : f32
    %561 = vector.broadcast %cst_672 : f32 to vector<16x578xf32>
    %562 = arith.maximumf %560, %561 : vector<16x578xf32>
    %c0_673 = arith.constant 0 : index
    %c0_674 = arith.constant 0 : index
    %563 = vector.load %arg4[%c0_673, %c0_674] : memref<8x16xbf16, #tpu.memory_space<vmem>>, vector<8x16xbf16>
    %564 = arith.truncf %562 : vector<16x578xf32> to vector<16x578xbf16>
    %cst_675 = arith.constant dense<0.000000e+00> : vector<8x578xf32>
    %565 = tpu.matmul %563, %564, %cst_675 {dimension_numbers = #tpu.dot_dimension_numbers<[1], [0], [0], [1], [0, 0, 1, 1], [], []>} : vector<8x16xbf16>, vector<16x578xbf16>, vector<8x578xf32> -> vector<8x578xf32>
    %c0_676 = arith.constant 0 : index
    %c0_677 = arith.constant 0 : index
    %566 = vector.load %arg5[%c0_676, %c0_677] : memref<8x1xf32, #tpu.memory_space<vmem>>, vector<8x1xf32>
    %567 = vector.broadcast %566 : vector<8x1xf32> to vector<8x578xf32>
    %568 = arith.addf %565, %567 : vector<8x578xf32>
    %c0_678 = arith.constant 0 : index
    %c0_679 = arith.constant 0 : index
    %569 = vector.load %arg13[%c0_678, %c0_679] : memref<8x640xf32, #tpu.memory_space<vmem>>, vector<8x578xf32>
    tpu.vector_store %arg13[%c0_678, %c0_679], %568 {strides = array<i32>} : memref<8x640xf32, #tpu.memory_space<vmem>>, vector<8x578xf32>,
    %cst_680 = arith.constant 0.000000e+00 : f32
    %570 = vector.broadcast %cst_680 : f32 to vector<8x62xf32>
    %c0_681 = arith.constant 0 : index
    %c578 = arith.constant 578 : index
    %571 = vector.load %arg13[%c0_681, %c578] : memref<8x640xf32, #tpu.memory_space<vmem>>, vector<8x62xf32>
    tpu.vector_store %arg13[%c0_681, %c578], %570 {strides = array<i32>} : memref<8x640xf32, #tpu.memory_space<vmem>>, vector<8x62xf32>,
    return
  }
  func.func @transform_0(%arg0: i32) -> (i32, i32) {
    %c0_i32 = arith.constant 0 : i32
    %c0_i32_0 = arith.constant 0 : i32
    return %c0_i32, %arg0 : i32, i32
  }
  func.func @transform_1(%arg0: i32) -> (i32, i32, i32, i32) {
    %c0_i32 = arith.constant 0 : i32
    %c0_i32_0 = arith.constant 0 : i32
    %c0_i32_1 = arith.constant 0 : i32
    %c0_i32_2 = arith.constant 0 : i32
    %c0_i32_3 = arith.constant 0 : i32
    return %c0_i32, %c0_i32_0, %c0_i32_1, %c0_i32_2 : i32, i32, i32, i32
  }
  func.func @transform_2(%arg0: i32) -> (i32, i32) {
    %c0_i32 = arith.constant 0 : i32
    %c0_i32_0 = arith.constant 0 : i32
    %c0_i32_1 = arith.constant 0 : i32
    return %c0_i32, %c0_i32_0 : i32, i32
  }
  func.func @transform_3(%arg0: i32) -> (i32, i32) {
    %c0_i32 = arith.constant 0 : i32
    %c0_i32_0 = arith.constant 0 : i32
    %c0_i32_1 = arith.constant 0 : i32
    return %c0_i32, %c0_i32_0 : i32, i32
  }
  func.func @transform_4(%arg0: i32) -> (i32, i32) {
    %c0_i32 = arith.constant 0 : i32
    %c0_i32_0 = arith.constant 0 : i32
    %c0_i32_1 = arith.constant 0 : i32
    return %c0_i32, %c0_i32_0 : i32, i32
  }
  func.func @transform_5(%arg0: i32) -> (i32, i32) {
    %c0_i32 = arith.constant 0 : i32
    %c0_i32_0 = arith.constant 0 : i32
    %c0_i32_1 = arith.constant 0 : i32
    return %c0_i32, %c0_i32_0 : i32, i32
  }
  func.func @transform_6(%arg0: i32) -> (i32, i32) {
    %c0_i32 = arith.constant 0 : i32
    %c0_i32_0 = arith.constant 0 : i32
    %c0_i32_1 = arith.constant 0 : i32
    return %c0_i32, %c0_i32_0 : i32, i32
  }
  func.func @transform_7(%arg0: i32) -> (i32, i32) {
    %c0_i32 = arith.constant 0 : i32
    %c0_i32_0 = arith.constant 0 : i32
    %c0_i32_1 = arith.constant 0 : i32
    return %c0_i32, %c0_i32_0 : i32, i32
  }
  func.func @transform_8(%arg0: i32) -> (i32, i32) {
    %c0_i32 = arith.constant 0 : i32
    %c0_i32_0 = arith.constant 0 : i32
    %c0_i32_1 = arith.constant 0 : i32
    return %c0_i32, %c0_i32_0 : i32, i32
  }
  func.func @transform_9(%arg0: i32) -> (i32, i32) {
    %c0_i32 = arith.constant 0 : i32
    %c0_i32_0 = arith.constant 0 : i32
    %c0_i32_1 = arith.constant 0 : i32
    return %c0_i32, %c0_i32_0 : i32, i32
  }
  func.func @transform_10(%arg0: i32) -> (i32, i32) {
    %c0_i32 = arith.constant 0 : i32
    %c0_i32_0 = arith.constant 0 : i32
    %c0_i32_1 = arith.constant 0 : i32
    return %c0_i32, %c0_i32_0 : i32, i32
  }
  func.func @transform_11(%arg0: i32) -> (i32, i32) {
    %c0_i32 = arith.constant 0 : i32
    %c0_i32_0 = arith.constant 0 : i32
    %c0_i32_1 = arith.constant 0 : i32
    return %c0_i32, %c0_i32_0 : i32, i32
  }
  func.func @transform_12(%arg0: i32) -> (i32, i32) {
    %c0_i32 = arith.constant 0 : i32
    %c0_i32_0 = arith.constant 0 : i32
    return %c0_i32, %arg0 : i32, i32
  }
}

</mosaic_0001>

<llo_original>
// kernel: _lambda_.1
$region0: #{_lambda_.1}
  #allocation0 [shape = 'u32[]', space=smem, size = 0x4, offset = 0x4, fixed_abs, tag = 'smem constant byte address 0x4 - core index']
  #allocation1 [shape = 'u32[144,128]{1,0:T(1,128)}', space=vmem, size = 0x12000, scoped, tag = 'internal scratch']
  #allocation2 [shape = 'bf16[16,768]{1,0:T(16,128)(2,1)}', space=vmem, size = 0x6000, scoped, tag = 'scratch operand']
  %s0 = inlined_call_operand.vmem [shape: bf16[16,640], index: 0, kind: input, shape index: {}]
  %s1 = inlined_call_operand.vmem [shape: bf16[10,9,16,16], index: 1, kind: input, shape index: {}]
  %s2 = inlined_call_operand.vmem [shape: f32[16,10], index: 2, kind: input, shape index: {}]
  %s3 = inlined_call_operand.vmem [shape: bf16[8,16], index: 3, kind: input, shape index: {}]
  %s4 = inlined_call_operand.vmem [shape: f32[8,1], index: 4, kind: input, shape index: {}]
  %s5 = inlined_call_operand.vmem [shape: bf16[289,81], index: 5, kind: input, shape index: {}]
  %s6 = inlined_call_operand.vmem [shape: bf16[81,25], index: 6, kind: input, shape index: {}]
  %s7 = inlined_call_operand.vmem [shape: bf16[25,81], index: 7, kind: input, shape index: {}]
  %s8 = inlined_call_operand.vmem [shape: bf16[81,289], index: 8, kind: input, shape index: {}]
  %s9 = inlined_call_operand.vmem [shape: f32[1,578], index: 9, kind: input, shape index: {}]
  %s10 = inlined_call_operand.vmem [shape: f32[1,162], index: 10, kind: input, shape index: {}]
  %s11 = inlined_call_operand.vmem [shape: f32[1,50], index: 11, kind: input, shape index: {}]
  %s12 = inlined_call_operand.vmem [shape: f32[8,640], index: 12, kind: output, shape index: {}]
  %s13 = sld [smem:[#allocation0]]
  $region58: #{_lambda_.1} parent=0
    _
  %s15 = ssub.s32 1, %s13
  %s16 = scalar_select 0, %s15, %s13
  // Predicated region
  $region2: #{_lambda_.1} parent=0 // pred_check
    _
  $region3: #{_lambda_.1} parent=0 // pred_check_branch
    %18 = sbr.rel (0) target = $region5
  $region4: #{_lambda_.1} parent=0 // pred_region
    _
  $region5: #{_lambda_.1} parent=0 // pred_fallthru
    _
  // Predicated region
  $region6: #{_lambda_.1} parent=0 // pred_check
    _
  $region7: #{_lambda_.1} parent=0 // pred_check_branch
    %20 = sbr.rel (0) target = $region9
  $region8: #{_lambda_.1} parent=0 // pred_region
    _
  $region9: #{_lambda_.1} parent=0 // pred_fallthru
    _
  // Predicated region
  $region10: #{_lambda_.1} parent=0 // pred_check
    _
  $region11: #{_lambda_.1} parent=0 // pred_check_branch
    %22 = sbr.rel (0) target = $region13
  $region12: #{_lambda_.1} parent=0 // pred_region
    _
  $region13: #{_lambda_.1} parent=0 // pred_fallthru
    _
  // Predicated region
  $region14: #{_lambda_.1} parent=0 // pred_check
    _
  $region15: #{_lambda_.1} parent=0 // pred_check_branch
    %24 = sbr.rel (0) target = $region17
  $region16: #{_lambda_.1} parent=0 // pred_region
    _
  $region17: #{_lambda_.1} parent=0 // pred_fallthru
    _
  // Predicated region
  $region18: #{_lambda_.1} parent=0 // pred_check
    _
  $region19: #{_lambda_.1} parent=0 // pred_check_branch
    %26 = sbr.rel (0) target = $region21
  $region20: #{_lambda_.1} parent=0 // pred_region
    _
  $region21: #{_lambda_.1} parent=0 // pred_fallthru
    _
  // Predicated region
  $region22: #{_lambda_.1} parent=0 // pred_check
    _
  $region23: #{_lambda_.1} parent=0 // pred_check_branch
    %28 = sbr.rel (0) target = $region25
  $region24: #{_lambda_.1} parent=0 // pred_region
    _
  $region25: #{_lambda_.1} parent=0 // pred_fallthru
    _
  // Predicated region
  $region26: #{_lambda_.1} parent=0 // pred_check
    _
  $region27: #{_lambda_.1} parent=0 // pred_check_branch
    %30 = sbr.rel (0) target = $region29
  $region28: #{_lambda_.1} parent=0 // pred_region
    _
  $region29: #{_lambda_.1} parent=0 // pred_fallthru
    _
  // Predicated region
  $region30: #{_lambda_.1} parent=0 // pred_check
    _
  $region31: #{_lambda_.1} parent=0 // pred_check_branch
    %32 = sbr.rel (0) target = $region33
  $region32: #{_lambda_.1} parent=0 // pred_region
    _
  $region33: #{_lambda_.1} parent=0 // pred_fallthru
    _
  // Predicated region
  $region34: #{_lambda_.1} parent=0 // pred_check
    _
  $region35: #{_lambda_.1} parent=0 // pred_check_branch
    %34 = sbr.rel (0) target = $region37
  $region36: #{_lambda_.1} parent=0 // pred_region
    _
  $region37: #{_lambda_.1} parent=0 // pred_fallthru
    _
  // Predicated region
  $region38: #{_lambda_.1} parent=0 // pred_check
    _
  $region39: #{_lambda_.1} parent=0 // pred_check_branch
    %36 = sbr.rel (0) target = $region41
  $region40: #{_lambda_.1} parent=0 // pred_region
    _
  $region41: #{_lambda_.1} parent=0 // pred_fallthru
    _
  // Predicated region
  $region42: #{_lambda_.1} parent=0 // pred_check
    _
  $region43: #{_lambda_.1} parent=0 // pred_check_branch
    %38 = sbr.rel (0) target = $region45
  $region44: #{_lambda_.1} parent=0 // pred_region
    _
  $region45: #{_lambda_.1} parent=0 // pred_fallthru
    _
  // Predicated region
  $region46: #{_lambda_.1} parent=0 // pred_check
    _
  $region47: #{_lambda_.1} parent=0 // pred_check_branch
    %40 = sbr.rel (0) target = $region49
  $region48: #{_lambda_.1} parent=0 // pred_region
    _
  $region49: #{_lambda_.1} parent=0 // pred_fallthru
    _
  %42 = vst [vmem:[#allocation2] sm:$0xff] 0
  %43 = vst [vmem:[#allocation2 + $0x8] sm:$0xff] 0
  %44 = vst [vmem:[#allocation2 + $0x10] sm:$0xff] 0
  %45 = vst [vmem:[#allocation2 + $0x18] sm:$0xff] 0
  %46 = vst [vmem:[#allocation2 + $0x20] sm:$0xff] 0
  %47 = vst [vmem:[#allocation2 + $0x28] sm:$0xff] 0
  %v48 = vld [vmem:[%s9] sm:$0x1f]
  %v49 = vld [vmem:[%s10] sm:$0x3]
  %v50 = vld [vmem:[%s11] sm:$0x1]
  %v51 = vld [vmem:[%s0] sm:$0xff]
  %v52 = vld [vmem:[%s0 + $0x8] sm:$0xff]
  %v53 = vld [vmem:[%s0 + $0x10] sm:$0xf]
  %v54 = vld [vmem:[%s0 + $0x14] sm:$0xff]
  %v55 = vld [vmem:[%s0 + $0x1c] sm:$0xff]
  %v56 = vld [vmem:[%s0 + $0x24] sm:$0xf]
  %v63 = vunpack.c.l.b16 %v51
  %v64 = vunpack.c.h.b16 %v51
  %v65 = vunpack.c.l.b16 %v52
  %v66 = vunpack.c.h.b16 %v52
  %v67 = vunpack.c.l.b16 %v53
  %v68 = vunpack.c.l.b16 %v54
  %v69 = vunpack.c.h.b16 %v54
  %v70 = vunpack.c.l.b16 %v55
  %v71 = vunpack.c.h.b16 %v55
  %v72 = vunpack.c.l.b16 %v56
  %v73 = vpack.c.b16 %v68, %v63
  %v74 = vpack.c.b16 %v69, %v64
  %v75 = vpack.c.b16 %v70, %v65
  %v76 = vpack.c.b16 %v71, %v66
  %v77 = vpack.c.b16 %v72, %v67
  %83 = vst [vmem:[#allocation2 + $0x8] sm:$0xff] %v73
  %84 = vst [vmem:[#allocation2 + $0x10] sm:$0xff] %v74
  %85 = vst [vmem:[#allocation2 + $0x18] sm:$0xff] %v75
  %86 = vst [vmem:[#allocation2 + $0x20] sm:$0xff] %v76
  %vm87 = vcmask 539648
  %88 = vst.msk [vmem:[#allocation2 + $0x28] sm:$0xff] %vm87, %v77
  %v89 = vld [vmem:[#allocation2] sm:$0xff]
  %v90 = vld [vmem:[#allocation2 + $0x8] sm:$0xff]
  %v91 = vld [vmem:[#allocation2 + $0x10] sm:$0xff]
  %v92 = vld [vmem:[#allocation2 + $0x18] sm:$0xff]
  %v93 = vld [vmem:[#allocation2 + $0x20] sm:$0xff]
  %v94 = vld [vmem:[#allocation2 + $0x28] sm:$0xff]
  %v95 = vld [vmem:[%s1] sm:$0xf]
  %v96 = vld [vmem:[%s1 + $0x4] sm:$0xf]
  %s97 = scalar_lea.vmem %s1, 8
  %v98 = vld [vmem:[%s97] sm:$0xf]
  %v99 = vld [vmem:[%s97 + $0x4] sm:$0xf]
  %v102 = vunpack.c.l.b16 %v98
  %v103 = vunpack.c.l.b16 %v99
  %v104 = vpack.c.b16 %v103, %v102
  %111 = vrot.lane.b32.xlu0 %v89, 17
  %v112 = vpop.permute.xlu0 %111
  %113 = vrot.lane.b32.xlu0 %v90, 17
  %v114 = vpop.permute.xlu0 %113
  %115 = vrot.lane.b32.xlu0 %v91, 17
  %v116 = vpop.permute.xlu0 %115
  %117 = vrot.lane.b32.xlu0 %v92, 17
  %v118 = vpop.permute.xlu0 %117
  %119 = vrot.lane.b32.xlu0 %v93, 17
  %v120 = vpop.permute.xlu0 %119
  %121 = vrot.lane.b32.xlu0 %v94, 17
  %v122 = vpop.permute.xlu0 %121
  %vm123 = vcmask 138240
  %v124 = vsel %vm123, %v112, %v114
  %v125 = vsel %vm123, %v114, %v116
  %v126 = vsel %vm123, %v116, %v118
  %v127 = vsel %vm123, %v118, %v120
  %v128 = vsel %vm123, %v120, %v122
  %vm134 = vcmask 130048
  %v136 = vsel %vm134, %v104, 0
  %138 = vmatprep.subr.bf16.mxu0 %v125
  %139 = vmatpush1.bf16.msra.mxu0 %v124
  %140 = vmatprep.subr.bf16.mxu0 0
  %141 = vmatpush1.bf16.msra.mxu0 0
  %142 = vmatprep.subr.bf16.mxu0 0
  %143 = vmatpush1.bf16.msra.mxu0 0
  %144 = vmatprep.subr.bf16.mxu0 0
  %145 = vmatpush1.bf16.msra.mxu0 0
  %146 = vmatprep.subr.bf16.mxu0 0
  %147 = vmatpush1.bf16.msra.mxu0 0
  %148 = vmatprep.subr.bf16.mxu0 0
  %149 = vmatpush1.bf16.msra.mxu0 0
  %150 = vmatprep.subr.bf16.mxu0 0
  %151 = vmatpush1.bf16.msra.mxu0 0
  %152 = vmatprep.subr.bf16.mxu0 0
  %153 = vmatpush1.bf16.msra.mxu0 0
  %154 = vmatprep.subr.bf16.mxu0 0
  %155 = vmatpush1.bf16.msra.mxu0 0
  %156 = vmatprep.subr.bf16.mxu0 0
  %157 = vmatpush1.bf16.msra.mxu0 0
  %158 = vmatprep.subr.bf16.mxu0 0
  %159 = vmatpush1.bf16.msra.mxu0 0
  %160 = vmatprep.subr.bf16.mxu0 0
  %161 = vmatpush1.bf16.msra.mxu0 0
  %162 = vmatprep.subr.bf16.mxu0 0
  %163 = vmatpush1.bf16.msra.mxu0 0
  %164 = vmatprep.subr.bf16.mxu0 0
  %165 = vmatpush1.bf16.msra.mxu0 0
  %166 = vmatprep.subr.bf16.mxu0 0
  %167 = vmatpush1.bf16.msra.mxu0 0
  %168 = vmatprep.subr.bf16.mxu0 0
  %169 = vmatpush1.bf16.msra.mxu0 0
  %170 = vmatprep.mubr.bf16.mxu0 0
  %171 = vmatmul.mubr.bf16.gmra.mrb[0].mxu0 %v136
  %v172 = vpop.f32.mrb[0].mxu0
  %v173 = vadd.f32 0.0, %v172
  %v174 = vpop.f32.mrb[0].mxu0
  %v175 = vadd.f32 0.0, %v174
  %v176 = vpop.f32.mrb[0].mxu0
  %v177 = vadd.f32 0.0, %v176
  %v178 = vpop.f32.mrb[0].mxu0
  %v179 = vadd.f32 0.0, %v178
  %180 = vdwg.mxu0
  %181 = vmatprep.subr.bf16.mxu0 %v127
  %182 = vmatpush1.bf16.msra.mxu0 %v126
  %183 = vmatprep.subr.bf16.mxu0 0
  %184 = vmatpush1.bf16.msra.mxu0 0
  %185 = vmatprep.subr.bf16.mxu0 0
  %186 = vmatpush1.bf16.msra.mxu0 0
  %187 = vmatprep.subr.bf16.mxu0 0
  %188 = vmatpush1.bf16.msra.mxu0 0
  %189 = vmatprep.subr.bf16.mxu0 0
  %190 = vmatpush1.bf16.msra.mxu0 0
  %191 = vmatprep.subr.bf16.mxu0 0
  %192 = vmatpush1.bf16.msra.mxu0 0
  %193 = vmatprep.subr.bf16.mxu0 0
  %194 = vmatpush1.bf16.msra.mxu0 0
  %195 = vmatprep.subr.bf16.mxu0 0
  %196 = vmatpush1.bf16.msra.mxu0 0
  %197 = vmatprep.subr.bf16.mxu0 0
  %198 = vmatpush1.bf16.msra.mxu0 0
  %199 = vmatprep.subr.bf16.mxu0 0
  %200 = vmatpush1.bf16.msra.mxu0 0
  %201 = vmatprep.subr.bf16.mxu0 0
  %202 = vmatpush1.bf16.msra.mxu0 0
  %203 = vmatprep.subr.bf16.mxu0 0
  %204 = vmatpush1.bf16.msra.mxu0 0
  %205 = vmatprep.subr.bf16.mxu0 0
  %206 = vmatpush1.bf16.msra.mxu0 0
  %207 = vmatprep.subr.bf16.mxu0 0
  %208 = vmatpush1.bf16.msra.mxu0 0
  %209 = vmatprep.subr.bf16.mxu0 0
  %210 = vmatpush1.bf16.msra.mxu0 0
  %211 = vmatprep.subr.bf16.mxu0 0
  %212 = vmatpush1.bf16.msra.mxu0 0
  %213 = vmatprep.mubr.bf16.mxu0 0
  %214 = vmatmul.mubr.bf16.gmra.mrb[0].mxu0 %v136
  %v215 = vpop.f32.mrb[0].mxu0
  %v216 = vadd.f32 0.0, %v215
  %v217 = vpop.f32.mrb[0].mxu0
  %v218 = vadd.f32 0.0, %v217
  %v219 = vpop.f32.mrb[0].mxu0
  %v220 = vadd.f32 0.0, %v219
  %v221 = vpop.f32.mrb[0].mxu0
  %v222 = vadd.f32 0.0, %v221
  %223 = vdwg.mxu0
  %224 = vmatprep.subr.bf16.mxu0 0
  %225 = vmatpush1.bf16.msra.mxu0 %v128
  %226 = vmatprep.subr.bf16.mxu0 0
  %227 = vmatpush1.bf16.msra.mxu0 0
  %228 = vmatprep.subr.bf16.mxu0 0
  %229 = vmatpush1.bf16.msra.mxu0 0
  %230 = vmatprep.subr.bf16.mxu0 0
  %231 = vmatpush1.bf16.msra.mxu0 0
  %232 = vmatprep.subr.bf16.mxu0 0
  %233 = vmatpush1.bf16.msra.mxu0 0
  %234 = vmatprep.subr.bf16.mxu0 0
  %235 = vmatpush1.bf16.msra.mxu0 0
  %236 = vmatprep.subr.bf16.mxu0 0
  %237 = vmatpush1.bf16.msra.mxu0 0
  %238 = vmatprep.subr.bf16.mxu0 0
  %239 = vmatpush1.bf16.msra.mxu0 0
  %240 = vmatprep.subr.bf16.mxu0 0
  %241 = vmatpush1.bf16.msra.mxu0 0
  %242 = vmatprep.subr.bf16.mxu0 0
  %243 = vmatpush1.bf16.msra.mxu0 0
  %244 = vmatprep.subr.bf16.mxu0 0
  %245 = vmatpush1.bf16.msra.mxu0 0
  %246 = vmatprep.subr.bf16.mxu0 0
  %247 = vmatpush1.bf16.msra.mxu0 0
  %248 = vmatprep.subr.bf16.mxu0 0
  %249 = vmatpush1.bf16.msra.mxu0 0
  %250 = vmatprep.subr.bf16.mxu0 0
  %251 = vmatpush1.bf16.msra.mxu0 0
  %252 = vmatprep.subr.bf16.mxu0 0
  %253 = vmatpush1.bf16.msra.mxu0 0
  %254 = vmatprep.subr.bf16.mxu0 0
  %255 = vmatpush1.bf16.msra.mxu0 0
  %256 = vmatprep.mubr.bf16.mxu0 0
  %257 = vmatmul.mubr.bf16.gmra.mrb[0].mxu0 %v136
  %v258 = vpop.f32.mrb[0].mxu0
  %v259 = vadd.f32 0.0, %v258
  %v260 = vpop.f32.mrb[0].mxu0
  %v261 = vpop.f32.mrb[0].mxu0
  %v262 = vadd.f32 0.0, %v261
  %v263 = vpop.f32.mrb[0].mxu0
  %264 = vdwg.mxu0
  %v267 = vunpack.c.l.b16 %v95
  %v268 = vunpack.c.l.b16 %v96
  %v269 = vpack.c.b16 %v268, %v267
  %270 = vrot.lane.b32.xlu0 %v89, 18
  %v271 = vpop.permute.xlu0 %270
  %272 = vrot.lane.b32.xlu0 %v90, 18
  %v273 = vpop.permute.xlu0 %272
  %274 = vrot.lane.b32.xlu0 %v91, 18
  %v275 = vpop.permute.xlu0 %274
  %276 = vrot.lane.b32.xlu0 %v92, 18
  %v277 = vpop.permute.xlu0 %276
  %278 = vrot.lane.b32.xlu0 %v93, 18
  %v279 = vpop.permute.xlu0 %278
  %280 = vrot.lane.b32.xlu0 %v94, 18
  %v281 = vpop.permute.xlu0 %280
  %vm282 = vcmask 146432
  %v283 = vsel %vm282, %v271, %v273
  %v284 = vsel %vm282, %v273, %v275
  %v285 = vsel %vm282, %v275, %v277
  %v286 = vsel %vm282, %v277, %v279
  %v287 = vsel %vm282, %v279, %v281
  %v294 = vsel %vm134, %v269, 0
  %296 = vmatprep.subr.bf16.mxu0 %v284
  %297 = vmatpush1.bf16.msra.mxu0 %v283
  %298 = vmatprep.subr.bf16.mxu0 0
  %299 = vmatpush1.bf16.msra.mxu0 0
  %300 = vmatprep.subr.bf16.mxu0 0
  %301 = vmatpush1.bf16.msra.mxu0 0
  %302 = vmatprep.subr.bf16.mxu0 0
  %303 = vmatpush1.bf16.msra.mxu0 0
  %304 = vmatprep.subr.bf16.mxu0 0
  %305 = vmatpush1.bf16.msra.mxu0 0
  %306 = vmatprep.subr.bf16.mxu0 0
  %307 = vmatpush1.bf16.msra.mxu0 0
  %308 = vmatprep.subr.bf16.mxu0 0
  %309 = vmatpush1.bf16.msra.mxu0 0
  %310 = vmatprep.subr.bf16.mxu0 0
  %311 = vmatpush1.bf16.msra.mxu0 0
  %312 = vmatprep.subr.bf16.mxu0 0
  %313 = vmatpush1.bf16.msra.mxu0 0
  %314 = vmatprep.subr.bf16.mxu0 0
  %315 = vmatpush1.bf16.msra.mxu0 0
  %316 = vmatprep.subr.bf16.mxu0 0
  %317 = vmatpush1.bf16.msra.mxu0 0
  %318 = vmatprep.subr.bf16.mxu0 0
  %319 = vmatpush1.bf16.msra.mxu0 0
  %320 = vmatprep.subr.bf16.mxu0 0
  %321 = vmatpush1.bf16.msra.mxu0 0
  %322 = vmatprep.subr.bf16.mxu0 0
  %323 = vmatpush1.bf16.msra.mxu0 0
  %324 = vmatprep.subr.bf16.mxu0 0
  %325 = vmatpush1.bf16.msra.mxu0 0
  %326 = vmatprep.subr.bf16.mxu0 0
  %327 = vmatpush1.bf16.msra.mxu0 0
  %328 = vmatprep.mubr.bf16.mxu0 0
  %329 = vmatmul.mubr.bf16.gmra.mrb[0].mxu0 %v294
  %v330 = vpop.f32.mrb[0].mxu0
  %v331 = vadd.f32 %v173, %v330
  %v332 = vpop.f32.mrb[0].mxu0
  %v333 = vadd.f32 %v175, %v332
  %v334 = vpop.f32.mrb[0].mxu0
  %v335 = vadd.f32 %v177, %v334
  %v336 = vpop.f32.mrb[0].mxu0
  %v337 = vadd.f32 %v179, %v336
  %338 = vdwg.mxu0
  %339 = vmatprep.subr.bf16.mxu0 %v286
  %340 = vmatpush1.bf16.msra.mxu0 %v285
  %341 = vmatprep.subr.bf16.mxu0 0
  %342 = vmatpush1.bf16.msra.mxu0 0
  %343 = vmatprep.subr.bf16.mxu0 0
  %344 = vmatpush1.bf16.msra.mxu0 0
  %345 = vmatprep.subr.bf16.mxu0 0
  %346 = vmatpush1.bf16.msra.mxu0 0
  %347 = vmatprep.subr.bf16.mxu0 0
  %348 = vmatpush1.bf16.msra.mxu0 0
  %349 = vmatprep.subr.bf16.mxu0 0
  %350 = vmatpush1.bf16.msra.mxu0 0
  %351 = vmatprep.subr.bf16.mxu0 0
  %352 = vmatpush1.bf16.msra.mxu0 0
  %353 = vmatprep.subr.bf16.mxu0 0
  %354 = vmatpush1.bf16.msra.mxu0 0
  %355 = vmatprep.subr.bf16.mxu0 0
  %356 = vmatpush1.bf16.msra.mxu0 0
  %357 = vmatprep.subr.bf16.mxu0 0
  %358 = vmatpush1.bf16.msra.mxu0 0
  %359 = vmatprep.subr.bf16.mxu0 0
  %360 = vmatpush1.bf16.msra.mxu0 0
  %361 = vmatprep.subr.bf16.mxu0 0
  %362 = vmatpush1.bf16.msra.mxu0 0
  %363 = vmatprep.subr.bf16.mxu0 0
  %364 = vmatpush1.bf16.msra.mxu0 0
  %365 = vmatprep.subr.bf16.mxu0 0
  %366 = vmatpush1.bf16.msra.mxu0 0
  %367 = vmatprep.subr.bf16.mxu0 0
  %368 = vmatpush1.bf16.msra.mxu0 0
  %369 = vmatprep.subr.bf16.mxu0 0
  %370 = vmatpush1.bf16.msra.mxu0 0
  %371 = vmatprep.mubr.bf16.mxu0 0
  %372 = vmatmul.mubr.bf16.gmra.mrb[0].mxu0 %v294
  %v373 = vpop.f32.mrb[0].mxu0
  %v374 = vadd.f32 %v216, %v373
  %v375 = vpop.f32.mrb[0].mxu0
  %v376 = vadd.f32 %v218, %v375
  %v377 = vpop.f32.mrb[0].mxu0
  %v378 = vadd.f32 %v220, %v377
  %v379 = vpop.f32.mrb[0].mxu0
  %v380 = vadd.f32 %v222, %v379
  %381 = vdwg.mxu0
  %382 = vmatprep.subr.bf16.mxu0 0
  %383 = vmatpush1.bf16.msra.mxu0 %v287
  %384 = vmatprep.subr.bf16.mxu0 0
  %385 = vmatpush1.bf16.msra.mxu0 0
  %386 = vmatprep.subr.bf16.mxu0 0
  %387 = vmatpush1.bf16.msra.mxu0 0
  %388 = vmatprep.subr.bf16.mxu0 0
  %389 = vmatpush1.bf16.msra.mxu0 0
  %390 = vmatprep.subr.bf16.mxu0 0
  %391 = vmatpush1.bf16.msra.mxu0 0
  %392 = vmatprep.subr.bf16.mxu0 0
  %393 = vmatpush1.bf16.msra.mxu0 0
  %394 = vmatprep.subr.bf16.mxu0 0
  %395 = vmatpush1.bf16.msra.mxu0 0
  %396 = vmatprep.subr.bf16.mxu0 0
  %397 = vmatpush1.bf16.msra.mxu0 0
  %398 = vmatprep.subr.bf16.mxu0 0
  %399 = vmatpush1.bf16.msra.mxu0 0
  %400 = vmatprep.subr.bf16.mxu0 0
  %401 = vmatpush1.bf16.msra.mxu0 0
  %402 = vmatprep.subr.bf16.mxu0 0
  %403 = vmatpush1.bf16.msra.mxu0 0
  %404 = vmatprep.subr.bf16.mxu0 0
  %405 = vmatpush1.bf16.msra.mxu0 0
  %406 = vmatprep.subr.bf16.mxu0 0
  %407 = vmatpush1.bf16.msra.mxu0 0
  %408 = vmatprep.subr.bf16.mxu0 0
  %409 = vmatpush1.bf16.msra.mxu0 0
  %410 = vmatprep.subr.bf16.mxu0 0
  %411 = vmatpush1.bf16.msra.mxu0 0
  %412 = vmatprep.subr.bf16.mxu0 0
  %413 = vmatpush1.bf16.msra.mxu0 0
  %414 = vmatprep.mubr.bf16.mxu0 0
  %415 = vmatmul.mubr.bf16.gmra.mrb[0].mxu0 %v294
  %v416 = vpop.f32.mrb[0].mxu0
  %v417 = vadd.f32 %v259, %v416
  %v418 = vpop.f32.mrb[0].mxu0
  %v419 = vpop.f32.mrb[0].mxu0
  %v420 = vadd.f32 %v262, %v419
  %v421 = vpop.f32.mrb[0].mxu0
  %422 = vdwg.mxu0
  %s423 = scalar_lea.vmem %s1, 16
  %v424 = vld [vmem:[%s423] sm:$0xf]
  %v425 = vld [vmem:[%s423 + $0x4] sm:$0xf]
  %v428 = vunpack.c.l.b16 %v424
  %v429 = vunpack.c.l.b16 %v425
  %v430 = vpack.c.b16 %v429, %v428
  %431 = vrot.lane.b32.xlu0 %v89, 16
  %v432 = vpop.permute.xlu0 %431
  %433 = vrot.lane.b32.xlu0 %v90, 16
  %v434 = vpop.permute.xlu0 %433
  %435 = vrot.lane.b32.xlu0 %v91, 16
  %v436 = vpop.permute.xlu0 %435
  %437 = vrot.lane.b32.xlu0 %v92, 16
  %v438 = vpop.permute.xlu0 %437
  %439 = vrot.lane.b32.xlu0 %v93, 16
  %v440 = vpop.permute.xlu0 %439
  %441 = vrot.lane.b32.xlu0 %v94, 16
  %v442 = vpop.permute.xlu0 %441
  %vm443 = vcmask 130048
  %v444 = vsel %vm443, %v432, %v434
  %v445 = vsel %vm443, %v434, %v436
  %v446 = vsel %vm443, %v436, %v438
  %v447 = vsel %vm443, %v438, %v440
  %v448 = vsel %vm443, %v440, %v442
  %v455 = vsel %vm134, %v430, 0
  %457 = vmatprep.subr.bf16.mxu0 %v445
  %458 = vmatpush1.bf16.msra.mxu0 %v444
  %459 = vmatprep.subr.bf16.mxu0 0
  %460 = vmatpush1.bf16.msra.mxu0 0
  %461 = vmatprep.subr.bf16.mxu0 0
  %462 = vmatpush1.bf16.msra.mxu0 0
  %463 = vmatprep.subr.bf16.mxu0 0
  %464 = vmatpush1.bf16.msra.mxu0 0
  %465 = vmatprep.subr.bf16.mxu0 0
  %466 = vmatpush1.bf16.msra.mxu0 0
  %467 = vmatprep.subr.bf16.mxu0 0
  %468 = vmatpush1.bf16.msra.mxu0 0
  %469 = vmatprep.subr.bf16.mxu0 0
  %470 = vmatpush1.bf16.msra.mxu0 0
  %471 = vmatprep.subr.bf16.mxu0 0
  %472 = vmatpush1.bf16.msra.mxu0 0
  %473 = vmatprep.subr.bf16.mxu0 0
  %474 = vmatpush1.bf16.msra.mxu0 0
  %475 = vmatprep.subr.bf16.mxu0 0
  %476 = vmatpush1.bf16.msra.mxu0 0
  %477 = vmatprep.subr.bf16.mxu0 0
  %478 = vmatpush1.bf16.msra.mxu0 0
  %479 = vmatprep.subr.bf16.mxu0 0
  %480 = vmatpush1.bf16.msra.mxu0 0
  %481 = vmatprep.subr.bf16.mxu0 0
  %482 = vmatpush1.bf16.msra.mxu0 0
  %483 = vmatprep.subr.bf16.mxu0 0
  %484 = vmatpush1.bf16.msra.mxu0 0
  %485 = vmatprep.subr.bf16.mxu0 0
  %486 = vmatpush1.bf16.msra.mxu0 0
  %487 = vmatprep.subr.bf16.mxu0 0
  %488 = vmatpush1.bf16.msra.mxu0 0
  %489 = vmatprep.mubr.bf16.mxu0 0
  %490 = vmatmul.mubr.bf16.gmra.mrb[0].mxu0 %v455
  %v491 = vpop.f32.mrb[0].mxu0
  %v492 = vadd.f32 0.0, %v491
  %v493 = vpop.f32.mrb[0].mxu0
  %v494 = vadd.f32 0.0, %v493
  %v495 = vpop.f32.mrb[0].mxu0
  %v496 = vadd.f32 0.0, %v495
  %v497 = vpop.f32.mrb[0].mxu0
  %v498 = vadd.f32 0.0, %v497
  %499 = vdwg.mxu0
  %500 = vmatprep.subr.bf16.mxu0 %v447
  %501 = vmatpush1.bf16.msra.mxu0 %v446
  %502 = vmatprep.subr.bf16.mxu0 0
  %503 = vmatpush1.bf16.msra.mxu0 0
  %504 = vmatprep.subr.bf16.mxu0 0
  %505 = vmatpush1.bf16.msra.mxu0 0
  %506 = vmatprep.subr.bf16.mxu0 0
  %507 = vmatpush1.bf16.msra.mxu0 0
  %508 = vmatprep.subr.bf16.mxu0 0
  %509 = vmatpush1.bf16.msra.mxu0 0
  %510 = vmatprep.subr.bf16.mxu0 0
  %511 = vmatpush1.bf16.msra.mxu0 0
  %512 = vmatprep.subr.bf16.mxu0 0
  %513 = vmatpush1.bf16.msra.mxu0 0
  %514 = vmatprep.subr.bf16.mxu0 0
  %515 = vmatpush1.bf16.msra.mxu0 0
  %516 = vmatprep.subr.bf16.mxu0 0
  %517 = vmatpush1.bf16.msra.mxu0 0
  %518 = vmatprep.subr.bf16.mxu0 0
  %519 = vmatpush1.bf16.msra.mxu0 0
  %520 = vmatprep.subr.bf16.mxu0 0
  %521 = vmatpush1.bf16.msra.mxu0 0
  %522 = vmatprep.subr.bf16.mxu0 0
  %523 = vmatpush1.bf16.msra.mxu0 0
  %524 = vmatprep.subr.bf16.mxu0 0
  %525 = vmatpush1.bf16.msra.mxu0 0
  %526 = vmatprep.subr.bf16.mxu0 0
  %527 = vmatpush1.bf16.msra.mxu0 0
  %528 = vmatprep.subr.bf16.mxu0 0
  %529 = vmatpush1.bf16.msra.mxu0 0
  %530 = vmatprep.subr.bf16.mxu0 0
  %531 = vmatpush1.bf16.msra.mxu0 0
  %532 = vmatprep.mubr.bf16.mxu0 0
  %533 = vmatmul.mubr.bf16.gmra.mrb[0].mxu0 %v455
  %v534 = vpop.f32.mrb[0].mxu0
  %v535 = vadd.f32 0.0, %v534
  %v536 = vpop.f32.mrb[0].mxu0
  %v537 = vadd.f32 0.0, %v536
  %v538 = vpop.f32.mrb[0].mxu0
  %v539 = vadd.f32 0.0, %v538
  %v540 = vpop.f32.mrb[0].mxu0
  %v541 = vadd.f32 0.0, %v540
  %542 = vdwg.mxu0
  %543 = vmatprep.subr.bf16.mxu0 0
  %544 = vmatpush1.bf16.msra.mxu0 %v448
  %545 = vmatprep.subr.bf16.mxu0 0
  %546 = vmatpush1.bf16.msra.mxu0 0
  %547 = vmatprep.subr.bf16.mxu0 0
  %548 = vmatpush1.bf16.msra.mxu0 0
  %549 = vmatprep.subr.bf16.mxu0 0
  %550 = vmatpush1.bf16.msra.mxu0 0
  %551 = vmatprep.subr.bf16.mxu0 0
  %552 = vmatpush1.bf16.msra.mxu0 0
  %553 = vmatprep.subr.bf16.mxu0 0
  %554 = vmatpush1.bf16.msra.mxu0 0
  %555 = vmatprep.subr.bf16.mxu0 0
  %556 = vmatpush1.bf16.msra.mxu0 0
  %557 = vmatprep.subr.bf16.mxu0 0
  %558 = vmatpush1.bf16.msra.mxu0 0
  %559 = vmatprep.subr.bf16.mxu0 0
  %560 = vmatpush1.bf16.msra.mxu0 0
  %561 = vmatprep.subr.bf16.mxu0 0
  %562 = vmatpush1.bf16.msra.mxu0 0
  %563 = vmatprep.subr.bf16.mxu0 0
  %564 = vmatpush1.bf16.msra.mxu0 0
  %565 = vmatprep.subr.bf16.mxu0 0
  %566 = vmatpush1.bf16.msra.mxu0 0
  %567 = vmatprep.subr.bf16.mxu0 0
  %568 = vmatpush1.bf16.msra.mxu0 0
  %569 = vmatprep.subr.bf16.mxu0 0
  %570 = vmatpush1.bf16.msra.mxu0 0
  %571 = vmatprep.subr.bf16.mxu0 0
  %572 = vmatpush1.bf16.msra.mxu0 0
  %573 = vmatprep.subr.bf16.mxu0 0
  %574 = vmatpush1.bf16.msra.mxu0 0
  %575 = vmatprep.mubr.bf16.mxu0 0
  %576 = vmatmul.mubr.bf16.gmra.mrb[0].mxu0 %v455
  %v577 = vpop.f32.mrb[0].mxu0
  %v578 = vadd.f32 0.0, %v577
  %v579 = vpop.f32.mrb[0].mxu0
  %v580 = vpop.f32.mrb[0].mxu0
  %v581 = vadd.f32 0.0, %v580
  %v582 = vpop.f32.mrb[0].mxu0
  %583 = vdwg.mxu0
  %v584 = vadd.f32 %v331, %v492
  %v585 = vadd.f32 %v333, %v494
  %v586 = vadd.f32 %v374, %v535
  %v587 = vadd.f32 %v376, %v537
  %v588 = vadd.f32 %v417, %v578
  %v589 = vadd.f32 %v335, %v496
  %v590 = vadd.f32 %v337, %v498
  %v591 = vadd.f32 %v378, %v539
  %v592 = vadd.f32 %v380, %v541
  %v593 = vadd.f32 %v420, %v581
  %s594 = scalar_lea.vmem %s1, 24
  %v595 = vld [vmem:[%s594] sm:$0xf]
  %v596 = vld [vmem:[%s594 + $0x4] sm:$0xf]
  %v599 = vunpack.c.l.b16 %v595
  %v600 = vunpack.c.l.b16 %v596
  %v601 = vpack.c.b16 %v600, %v599
  %602 = vrot.lane.b32.xlu0 %v89, 1
  %v603 = vpop.permute.xlu0 %602
  %604 = vrot.lane.b32.xlu0 %v90, 1
  %v605 = vpop.permute.xlu0 %604
  %606 = vrot.lane.b32.xlu0 %v91, 1
  %v607 = vpop.permute.xlu0 %606
  %608 = vrot.lane.b32.xlu0 %v92, 1
  %v609 = vpop.permute.xlu0 %608
  %610 = vrot.lane.b32.xlu0 %v93, 1
  %v611 = vpop.permute.xlu0 %610
  %612 = vrot.lane.b32.xlu0 %v94, 1
  %v613 = vpop.permute.xlu0 %612
  %vm614 = vcmask 7168
  %v615 = vsel %vm614, %v603, %v605
  %v616 = vsel %vm614, %v605, %v607
  %v617 = vsel %vm614, %v607, %v609
  %v618 = vsel %vm614, %v609, %v611
  %v619 = vsel %vm614, %v611, %v613
  %v626 = vsel %vm134, %v601, 0
  %628 = vmatprep.subr.bf16.mxu0 %v616
  %629 = vmatpush1.bf16.msra.mxu0 %v615
  %630 = vmatprep.subr.bf16.mxu0 0
  %631 = vmatpush1.bf16.msra.mxu0 0
  %632 = vmatprep.subr.bf16.mxu0 0
  %633 = vmatpush1.bf16.msra.mxu0 0
  %634 = vmatprep.subr.bf16.mxu0 0
  %635 = vmatpush1.bf16.msra.mxu0 0
  %636 = vmatprep.subr.bf16.mxu0 0
  %637 = vmatpush1.bf16.msra.mxu0 0
  %638 = vmatprep.subr.bf16.mxu0 0
  %639 = vmatpush1.bf16.msra.mxu0 0
  %640 = vmatprep.subr.bf16.mxu0 0
  %641 = vmatpush1.bf16.msra.mxu0 0
  %642 = vmatprep.subr.bf16.mxu0 0
  %643 = vmatpush1.bf16.msra.mxu0 0
  %644 = vmatprep.subr.bf16.mxu0 0
  %645 = vmatpush1.bf16.msra.mxu0 0
  %646 = vmatprep.subr.bf16.mxu0 0
  %647 = vmatpush1.bf16.msra.mxu0 0
  %648 = vmatprep.subr.bf16.mxu0 0
  %649 = vmatpush1.bf16.msra.mxu0 0
  %650 = vmatprep.subr.bf16.mxu0 0
  %651 = vmatpush1.bf16.msra.mxu0 0
  %652 = vmatprep.subr.bf16.mxu0 0
  %653 = vmatpush1.bf16.msra.mxu0 0
  %654 = vmatprep.subr.bf16.mxu0 0
  %655 = vmatpush1.bf16.msra.mxu0 0
  %656 = vmatprep.subr.bf16.mxu0 0
  %657 = vmatpush1.bf16.msra.mxu0 0
  %658 = vmatprep.subr.bf16.mxu0 0
  %659 = vmatpush1.bf16.msra.mxu0 0
  %660 = vmatprep.mubr.bf16.mxu0 0
  %661 = vmatmul.mubr.bf16.gmra.mrb[0].mxu0 %v626
  %v662 = vpop.f32.mrb[0].mxu0
  %v663 = vadd.f32 0.0, %v662
  %v664 = vpop.f32.mrb[0].mxu0
  %v665 = vadd.f32 0.0, %v664
  %v666 = vpop.f32.mrb[0].mxu0
  %v667 = vadd.f32 0.0, %v666
  %v668 = vpop.f32.mrb[0].mxu0
  %v669 = vadd.f32 0.0, %v668
  %670 = vdwg.mxu0
  %671 = vmatprep.subr.bf16.mxu0 %v618
  %672 = vmatpush1.bf16.msra.mxu0 %v617
  %673 = vmatprep.subr.bf16.mxu0 0
  %674 = vmatpush1.bf16.msra.mxu0 0
  %675 = vmatprep.subr.bf16.mxu0 0
  %676 = vmatpush1.bf16.msra.mxu0 0
  %677 = vmatprep.subr.bf16.mxu0 0
  %678 = vmatpush1.bf16.msra.mxu0 0
  %679 = vmatprep.subr.bf16.mxu0 0
  %680 = vmatpush1.bf16.msra.mxu0 0
  %681 = vmatprep.subr.bf16.mxu0 0
  %682 = vmatpush1.bf16.msra.mxu0 0
  %683 = vmatprep.subr.bf16.mxu0 0
  %684 = vmatpush1.bf16.msra.mxu0 0
  %685 = vmatprep.subr.bf16.mxu0 0
  %686 = vmatpush1.bf16.msra.mxu0 0
  %687 = vmatprep.subr.bf16.mxu0 0
  %688 = vmatpush1.bf16.msra.mxu0 0
  %689 = vmatprep.subr.bf16.mxu0 0
  %690 = vmatpush1.bf16.msra.mxu0 0
  %691 = vmatprep.subr.bf16.mxu0 0
  %692 = vmatpush1.bf16.msra.mxu0 0
  %693 = vmatprep.subr.bf16.mxu0 0
  %694 = vmatpush1.bf16.msra.mxu0 0
  %695 = vmatprep.subr.bf16.mxu0 0
  %696 = vmatpush1.bf16.msra.mxu0 0
  %697 = vmatprep.subr.bf16.mxu0 0
  %698 = vmatpush1.bf16.msra.mxu0 0
  %699 = vmatprep.subr.bf16.mxu0 0
  %700 = vmatpush1.bf16.msra.mxu0 0
  %701 = vmatprep.subr.bf16.mxu0 0
  %702 = vmatpush1.bf16.msra.mxu0 0
  %703 = vmatprep.mubr.bf16.mxu0 0
  %704 = vmatmul.mubr.bf16.gmra.mrb[0].mxu0 %v626
  %v705 = vpop.f32.mrb[0].mxu0
  %v706 = vadd.f32 0.0, %v705
  %v707 = vpop.f32.mrb[0].mxu0
  %v708 = vadd.f32 0.0, %v707
  %v709 = vpop.f32.mrb[0].mxu0
  %v710 = vadd.f32 0.0, %v709
  %v711 = vpop.f32.mrb[0].mxu0
  %v712 = vadd.f32 0.0, %v711
  %713 = vdwg.mxu0
  %714 = vmatprep.subr.bf16.mxu0 0
  %715 = vmatpush1.bf16.msra.mxu0 %v619
  %716 = vmatprep.subr.bf16.mxu0 0
  %717 = vmatpush1.bf16.msra.mxu0 0
  %718 = vmatprep.subr.bf16.mxu0 0
  %719 = vmatpush1.bf16.msra.mxu0 0
  %720 = vmatprep.subr.bf16.mxu0 0
  %721 = vmatpush1.bf16.msra.mxu0 0
  %722 = vmatprep.subr.bf16.mxu0 0
  %723 = vmatpush1.bf16.msra.mxu0 0
  %724 = vmatprep.subr.bf16.mxu0 0
  %725 = vmatpush1.bf16.msra.mxu0 0
  %726 = vmatprep.subr.bf16.mxu0 0
  %727 = vmatpush1.bf16.msra.mxu0 0
  %728 = vmatprep.subr.bf16.mxu0 0
  %729 = vmatpush1.bf16.msra.mxu0 0
  %730 = vmatprep.subr.bf16.mxu0 0
  %731 = vmatpush1.bf16.msra.mxu0 0
  %732 = vmatprep.subr.bf16.mxu0 0
  %733 = vmatpush1.bf16.msra.mxu0 0
  %734 = vmatprep.subr.bf16.mxu0 0
  %735 = vmatpush1.bf16.msra.mxu0 0
  %736 = vmatprep.subr.bf16.mxu0 0
  %737 = vmatpush1.bf16.msra.mxu0 0
  %738 = vmatprep.subr.bf16.mxu0 0
  %739 = vmatpush1.bf16.msra.mxu0 0
  %740 = vmatprep.subr.bf16.mxu0 0
  %741 = vmatpush1.bf16.msra.mxu0 0
  %742 = vmatprep.subr.bf16.mxu0 0
  %743 = vmatpush1.bf16.msra.mxu0 0
  %744 = vmatprep.subr.bf16.mxu0 0
  %745 = vmatpush1.bf16.msra.mxu0 0
  %746 = vmatprep.mubr.bf16.mxu0 0
  %747 = vmatmul.mubr.bf16.gmra.mrb[0].mxu0 %v626
  %v748 = vpop.f32.mrb[0].mxu0
  %v749 = vadd.f32 0.0, %v748
  %v750 = vpop.f32.mrb[0].mxu0
  %v751 = vpop.f32.mrb[0].mxu0
  %v752 = vadd.f32 0.0, %v751
  %v753 = vpop.f32.mrb[0].mxu0
  %754 = vdwg.mxu0
  %v755 = vadd.f32 %v584, %v663
  %v756 = vadd.f32 %v585, %v665
  %v757 = vadd.f32 %v586, %v706
  %v758 = vadd.f32 %v587, %v708
  %v759 = vadd.f32 %v588, %v749
  %v760 = vadd.f32 %v589, %v667
  %v761 = vadd.f32 %v590, %v669
  %v762 = vadd.f32 %v591, %v710
  %v763 = vadd.f32 %v592, %v712
  %v764 = vadd.f32 %v593, %v752
  %s765 = scalar_lea.vmem %s1, 32
  %v766 = vld [vmem:[%s765] sm:$0xf]
  %v767 = vld [vmem:[%s765 + $0x4] sm:$0xf]
  %v770 = vunpack.c.l.b16 %v766
  %v771 = vunpack.c.l.b16 %v767
  %v772 = vpack.c.b16 %v771, %v770
  %v774 = vsel %vm134, %v772, 0
  %776 = vmatprep.subr.bf16.mxu0 %v91
  %777 = vmatpush1.bf16.msra.mxu0 %v90
  %778 = vmatprep.subr.bf16.mxu0 0
  %779 = vmatpush1.bf16.msra.mxu0 0
  %780 = vmatprep.subr.bf16.mxu0 0
  %781 = vmatpush1.bf16.msra.mxu0 0
  %782 = vmatprep.subr.bf16.mxu0 0
  %783 = vmatpush1.bf16.msra.mxu0 0
  %784 = vmatprep.subr.bf16.mxu0 0
  %785 = vmatpush1.bf16.msra.mxu0 0
  %786 = vmatprep.subr.bf16.mxu0 0
  %787 = vmatpush1.bf16.msra.mxu0 0
  %788 = vmatprep.subr.bf16.mxu0 0
  %789 = vmatpush1.bf16.msra.mxu0 0
  %790 = vmatprep.subr.bf16.mxu0 0
  %791 = vmatpush1.bf16.msra.mxu0 0
  %792 = vmatprep.subr.bf16.mxu0 0
  %793 = vmatpush1.bf16.msra.mxu0 0
  %794 = vmatprep.subr.bf16.mxu0 0
  %795 = vmatpush1.bf16.msra.mxu0 0
  %796 = vmatprep.subr.bf16.mxu0 0
  %797 = vmatpush1.bf16.msra.mxu0 0
  %798 = vmatprep.subr.bf16.mxu0 0
  %799 = vmatpush1.bf16.msra.mxu0 0
  %800 = vmatprep.subr.bf16.mxu0 0
  %801 = vmatpush1.bf16.msra.mxu0 0
  %802 = vmatprep.subr.bf16.mxu0 0
  %803 = vmatpush1.bf16.msra.mxu0 0
  %804 = vmatprep.subr.bf16.mxu0 0
  %805 = vmatpush1.bf16.msra.mxu0 0
  %806 = vmatprep.subr.bf16.mxu0 0
  %807 = vmatpush1.bf16.msra.mxu0 0
  %808 = vmatprep.mubr.bf16.mxu0 0
  %809 = vmatmul.mubr.bf16.gmra.mrb[0].mxu0 %v774
  %v810 = vpop.f32.mrb[0].mxu0
  %v811 = vadd.f32 0.0, %v810
  %v812 = vpop.f32.mrb[0].mxu0
  %v813 = vadd.f32 0.0, %v812
  %v814 = vpop.f32.mrb[0].mxu0
  %v815 = vadd.f32 0.0, %v814
  %v816 = vpop.f32.mrb[0].mxu0
  %v817 = vadd.f32 0.0, %v816
  %818 = vdwg.mxu0
  %819 = vmatprep.subr.bf16.mxu0 %v93
  %820 = vmatpush1.bf16.msra.mxu0 %v92
  %821 = vmatprep.subr.bf16.mxu0 0
  %822 = vmatpush1.bf16.msra.mxu0 0
  %823 = vmatprep.subr.bf16.mxu0 0
  %824 = vmatpush1.bf16.msra.mxu0 0
  %825 = vmatprep.subr.bf16.mxu0 0
  %826 = vmatpush1.bf16.msra.mxu0 0
  %827 = vmatprep.subr.bf16.mxu0 0
  %828 = vmatpush1.bf16.msra.mxu0 0
  %829 = vmatprep.subr.bf16.mxu0 0
  %830 = vmatpush1.bf16.msra.mxu0 0
  %831 = vmatprep.subr.bf16.mxu0 0
  %832 = vmatpush1.bf16.msra.mxu0 0
  %833 = vmatprep.subr.bf16.mxu0 0
  %834 = vmatpush1.bf16.msra.mxu0 0
  %835 = vmatprep.subr.bf16.mxu0 0
  %836 = vmatpush1.bf16.msra.mxu0 0
  %837 = vmatprep.subr.bf16.mxu0 0
  %838 = vmatpush1.bf16.msra.mxu0 0
  %839 = vmatprep.subr.bf16.mxu0 0
  %840 = vmatpush1.bf16.msra.mxu0 0
  %841 = vmatprep.subr.bf16.mxu0 0
  %842 = vmatpush1.bf16.msra.mxu0 0
  %843 = vmatprep.subr.bf16.mxu0 0
  %844 = vmatpush1.bf16.msra.mxu0 0
  %845 = vmatprep.subr.bf16.mxu0 0
  %846 = vmatpush1.bf16.msra.mxu0 0
  %847 = vmatprep.subr.bf16.mxu0 0
  %848 = vmatpush1.bf16.msra.mxu0 0
  %849 = vmatprep.subr.bf16.mxu0 0
  %850 = vmatpush1.bf16.msra.mxu0 0
  %851 = vmatprep.mubr.bf16.mxu0 0
  %852 = vmatmul.mubr.bf16.gmra.mrb[0].mxu0 %v774
  %v853 = vpop.f32.mrb[0].mxu0
  %v854 = vadd.f32 0.0, %v853
  %v855 = vpop.f32.mrb[0].mxu0
  %v856 = vadd.f32 0.0, %v855
  %v857 = vpop.f32.mrb[0].mxu0
  %v858 = vadd.f32 0.0, %v857
  %v859 = vpop.f32.mrb[0].mxu0
  %v860 = vadd.f32 0.0, %v859
  %861 = vdwg.mxu0
  %862 = vmatprep.subr.bf16.mxu0 0
  %863 = vmatpush1.bf16.msra.mxu0 %v94
  %864 = vmatprep.subr.bf16.mxu0 0
  %865 = vmatpush1.bf16.msra.mxu0 0
  %866 = vmatprep.subr.bf16.mxu0 0
  %867 = vmatpush1.bf16.msra.mxu0 0
  %868 = vmatprep.subr.bf16.mxu0 0
  %869 = vmatpush1.bf16.msra.mxu0 0
  %870 = vmatprep.subr.bf16.mxu0 0
  %871 = vmatpush1.bf16.msra.mxu0 0
  %872 = vmatprep.subr.bf16.mxu0 0
  %873 = vmatpush1.bf16.msra.mxu0 0
  %874 = vmatprep.subr.bf16.mxu0 0
  %875 = vmatpush1.bf16.msra.mxu0 0
  %876 = vmatprep.subr.bf16.mxu0 0
  %877 = vmatpush1.bf16.msra.mxu0 0
  %878 = vmatprep.subr.bf16.mxu0 0
  %879 = vmatpush1.bf16.msra.mxu0 0
  %880 = vmatprep.subr.bf16.mxu0 0
  %881 = vmatpush1.bf16.msra.mxu0 0
  %882 = vmatprep.subr.bf16.mxu0 0
  %883 = vmatpush1.bf16.msra.mxu0 0
  %884 = vmatprep.subr.bf16.mxu0 0
  %885 = vmatpush1.bf16.msra.mxu0 0
  %886 = vmatprep.subr.bf16.mxu0 0
  %887 = vmatpush1.bf16.msra.mxu0 0
  %888 = vmatprep.subr.bf16.mxu0 0
  %889 = vmatpush1.bf16.msra.mxu0 0
  %890 = vmatprep.subr.bf16.mxu0 0
  %891 = vmatpush1.bf16.msra.mxu0 0
  %892 = vmatprep.subr.bf16.mxu0 0
  %893 = vmatpush1.bf16.msra.mxu0 0
  %894 = vmatprep.mubr.bf16.mxu0 0
  %895 = vmatmul.mubr.bf16.gmra.mrb[0].mxu0 %v774
  %v896 = vpop.f32.mrb[0].mxu0
  %v897 = vadd.f32 0.0, %v896
  %v898 = vpop.f32.mrb[0].mxu0
  %v899 = vpop.f32.mrb[0].mxu0
  %v900 = vadd.f32 0.0, %v899
  %v901 = vpop.f32.mrb[0].mxu0
  %902 = vdwg.mxu0
  %v903 = vadd.f32 %v755, %v811
  %v904 = vadd.f32 %v756, %v813
  %v905 = vadd.f32 %v757, %v854
  %v906 = vadd.f32 %v758, %v856
  %v907 = vadd.f32 %v759, %v897
  %v908 = vadd.f32 %v760, %v815
  %v909 = vadd.f32 %v761, %v817
  %v910 = vadd.f32 %v762, %v858
  %v911 = vadd.f32 %v763, %v860
  %v912 = vadd.f32 %v764, %v900
  %s913 = scalar_lea.vmem %s1, 40
  %v914 = vld [vmem:[%s913] sm:$0xf]
  %v915 = vld [vmem:[%s913 + $0x4] sm:$0xf]
  %v918 = vunpack.c.l.b16 %v914
  %v919 = vunpack.c.l.b16 %v915
  %v920 = vpack.c.b16 %v919, %v918
  %921 = vrot.lane.b32.xlu0 %v90, 127
  %v922 = vpop.permute.xlu0 %921
  %923 = vrot.lane.b32.xlu0 %v91, 127
  %v924 = vpop.permute.xlu0 %923
  %925 = vrot.lane.b32.xlu0 %v92, 127
  %v926 = vpop.permute.xlu0 %925
  %927 = vrot.lane.b32.xlu0 %v93, 127
  %v928 = vpop.permute.xlu0 %927
  %929 = vrot.lane.b32.xlu0 %v94, 127
  %v930 = vpop.permute.xlu0 %929
  %vm931 = vcmask 1039360
  %v932 = vsel %vm931, %v922, %v924
  %v933 = vsel %vm931, %v924, %v926
  %v934 = vsel %vm931, %v926, %v928
  %v935 = vsel %vm931, %v928, %v930
  %v942 = vsel %vm134, %v920, 0
  %944 = vmatprep.subr.bf16.mxu0 %v933
  %945 = vmatpush1.bf16.msra.mxu0 %v932
  %946 = vmatprep.subr.bf16.mxu0 0
  %947 = vmatpush1.bf16.msra.mxu0 0
  %948 = vmatprep.subr.bf16.mxu0 0
  %949 = vmatpush1.bf16.msra.mxu0 0
  %950 = vmatprep.subr.bf16.mxu0 0
  %951 = vmatpush1.bf16.msra.mxu0 0
  %952 = vmatprep.subr.bf16.mxu0 0
  %953 = vmatpush1.bf16.msra.mxu0 0
  %954 = vmatprep.subr.bf16.mxu0 0
  %955 = vmatpush1.bf16.msra.mxu0 0
  %956 = vmatprep.subr.bf16.mxu0 0
  %957 = vmatpush1.bf16.msra.mxu0 0
  %958 = vmatprep.subr.bf16.mxu0 0
  %959 = vmatpush1.bf16.msra.mxu0 0
  %960 = vmatprep.subr.bf16.mxu0 0
  %961 = vmatpush1.bf16.msra.mxu0 0
  %962 = vmatprep.subr.bf16.mxu0 0
  %963 = vmatpush1.bf16.msra.mxu0 0
  %964 = vmatprep.subr.bf16.mxu0 0
  %965 = vmatpush1.bf16.msra.mxu0 0
  %966 = vmatprep.subr.bf16.mxu0 0
  %967 = vmatpush1.bf16.msra.mxu0 0
  %968 = vmatprep.subr.bf16.mxu0 0
  %969 = vmatpush1.bf16.msra.mxu0 0
  %970 = vmatprep.subr.bf16.mxu0 0
  %971 = vmatpush1.bf16.msra.mxu0 0
  %972 = vmatprep.subr.bf16.mxu0 0
  %973 = vmatpush1.bf16.msra.mxu0 0
  %974 = vmatprep.subr.bf16.mxu0 0
  %975 = vmatpush1.bf16.msra.mxu0 0
  %976 = vmatprep.mubr.bf16.mxu0 0
  %977 = vmatmul.mubr.bf16.gmra.mrb[0].mxu0 %v942
  %v978 = vpop.f32.mrb[0].mxu0
  %v979 = vadd.f32 0.0, %v978
  %v980 = vpop.f32.mrb[0].mxu0
  %v981 = vadd.f32 0.0, %v980
  %v982 = vpop.f32.mrb[0].mxu0
  %v983 = vadd.f32 0.0, %v982
  %v984 = vpop.f32.mrb[0].mxu0
  %v985 = vadd.f32 0.0, %v984
  %986 = vdwg.mxu0
  %987 = vmatprep.subr.bf16.mxu0 %v935
  %988 = vmatpush1.bf16.msra.mxu0 %v934
  %989 = vmatprep.subr.bf16.mxu0 0
  %990 = vmatpush1.bf16.msra.mxu0 0
  %991 = vmatprep.subr.bf16.mxu0 0
  %992 = vmatpush1.bf16.msra.mxu0 0
  %993 = vmatprep.subr.bf16.mxu0 0
  %994 = vmatpush1.bf16.msra.mxu0 0
  %995 = vmatprep.subr.bf16.mxu0 0
  %996 = vmatpush1.bf16.msra.mxu0 0
  %997 = vmatprep.subr.bf16.mxu0 0
  %998 = vmatpush1.bf16.msra.mxu0 0
  %999 = vmatprep.subr.bf16.mxu0 0
  %1000 = vmatpush1.bf16.msra.mxu0 0
  %1001 = vmatprep.subr.bf16.mxu0 0
  %1002 = vmatpush1.bf16.msra.mxu0 0
  %1003 = vmatprep.subr.bf16.mxu0 0
  %1004 = vmatpush1.bf16.msra.mxu0 0
  %1005 = vmatprep.subr.bf16.mxu0 0
  %1006 = vmatpush1.bf16.msra.mxu0 0
  %1007 = vmatprep.subr.bf16.mxu0 0
  %1008 = vmatpush1.bf16.msra.mxu0 0
  %1009 = vmatprep.subr.bf16.mxu0 0
  %1010 = vmatpush1.bf16.msra.mxu0 0
  %1011 = vmatprep.subr.bf16.mxu0 0
  %1012 = vmatpush1.bf16.msra.mxu0 0
  %1013 = vmatprep.subr.bf16.mxu0 0
  %1014 = vmatpush1.bf16.msra.mxu0 0
  %1015 = vmatprep.subr.bf16.mxu0 0
  %1016 = vmatpush1.bf16.msra.mxu0 0
  %1017 = vmatprep.subr.bf16.mxu0 0
  %1018 = vmatpush1.bf16.msra.mxu0 0
  %1019 = vmatprep.mubr.bf16.mxu0 0
  %1020 = vmatmul.mubr.bf16.gmra.mrb[0].mxu0 %v942
  %v1021 = vpop.f32.mrb[0].mxu0
  %v1022 = vadd.f32 0.0, %v1021
  %v1023 = vpop.f32.mrb[0].mxu0
  %v1024 = vadd.f32 0.0, %v1023
  %v1025 = vpop.f32.mrb[0].mxu0
  %v1026 = vadd.f32 0.0, %v1025
  %v1027 = vpop.f32.mrb[0].mxu0
  %v1028 = vadd.f32 0.0, %v1027
  %1029 = vdwg.mxu0
  %1030 = vmatprep.subr.bf16.mxu0 0
  %1031 = vmatpush1.bf16.msra.mxu0 %v930
  %1032 = vmatprep.subr.bf16.mxu0 0
  %1033 = vmatpush1.bf16.msra.mxu0 0
  %1034 = vmatprep.subr.bf16.mxu0 0
  %1035 = vmatpush1.bf16.msra.mxu0 0
  %1036 = vmatprep.subr.bf16.mxu0 0
  %1037 = vmatpush1.bf16.msra.mxu0 0
  %1038 = vmatprep.subr.bf16.mxu0 0
  %1039 = vmatpush1.bf16.msra.mxu0 0
  %1040 = vmatprep.subr.bf16.mxu0 0
  %1041 = vmatpush1.bf16.msra.mxu0 0
  %1042 = vmatprep.subr.bf16.mxu0 0
  %1043 = vmatpush1.bf16.msra.mxu0 0
  %1044 = vmatprep.subr.bf16.mxu0 0
  %1045 = vmatpush1.bf16.msra.mxu0 0
  %1046 = vmatprep.subr.bf16.mxu0 0
  %1047 = vmatpush1.bf16.msra.mxu0 0
  %1048 = vmatprep.subr.bf16.mxu0 0
  %1049 = vmatpush1.bf16.msra.mxu0 0
  %1050 = vmatprep.subr.bf16.mxu0 0
  %1051 = vmatpush1.bf16.msra.mxu0 0
  %1052 = vmatprep.subr.bf16.mxu0 0
  %1053 = vmatpush1.bf16.msra.mxu0 0
  %1054 = vmatprep.subr.bf16.mxu0 0
  %1055 = vmatpush1.bf16.msra.mxu0 0
  %1056 = vmatprep.subr.bf16.mxu0 0
  %1057 = vmatpush1.bf16.msra.mxu0 0
  %1058 = vmatprep.subr.bf16.mxu0 0
  %1059 = vmatpush1.bf16.msra.mxu0 0
  %1060 = vmatprep.subr.bf16.mxu0 0
  %1061 = vmatpush1.bf16.msra.mxu0 0
  %1062 = vmatprep.mubr.bf16.mxu0 0
  %1063 = vmatmul.mubr.bf16.gmra.mrb[0].mxu0 %v942
  %v1064 = vpop.f32.mrb[0].mxu0
  %v1065 = vadd.f32 0.0, %v1064
  %v1066 = vpop.f32.mrb[0].mxu0
  %v1067 = vpop.f32.mrb[0].mxu0
  %v1068 = vadd.f32 0.0, %v1067
  %v1069 = vpop.f32.mrb[0].mxu0
  %1070 = vdwg.mxu0
  %v1071 = vadd.f32 %v903, %v979
  %v1072 = vadd.f32 %v904, %v981
  %v1073 = vadd.f32 %v905, %v1022
  %v1074 = vadd.f32 %v906, %v1024
  %v1075 = vadd.f32 %v907, %v1065
  %v1076 = vadd.f32 %v908, %v983
  %v1077 = vadd.f32 %v909, %v985
  %v1078 = vadd.f32 %v910, %v1026
  %v1079 = vadd.f32 %v911, %v1028
  %v1080 = vadd.f32 %v912, %v1068
  %s1081 = scalar_lea.vmem %s1, 48
  %v1082 = vld [vmem:[%s1081] sm:$0xf]
  %v1083 = vld [vmem:[%s1081 + $0x4] sm:$0xf]
  %v1086 = vunpack.c.l.b16 %v1082
  %v1087 = vunpack.c.l.b16 %v1083
  %v1088 = vpack.c.b16 %v1087, %v1086
  %1089 = vrot.lane.b32.xlu0 %v90, 112
  %v1090 = vpop.permute.xlu0 %1089
  %1091 = vrot.lane.b32.xlu0 %v91, 112
  %v1092 = vpop.permute.xlu0 %1091
  %1093 = vrot.lane.b32.xlu0 %v92, 112
  %v1094 = vpop.permute.xlu0 %1093
  %1095 = vrot.lane.b32.xlu0 %v93, 112
  %v1096 = vpop.permute.xlu0 %1095
  %1097 = vrot.lane.b32.xlu0 %v94, 112
  %v1098 = vpop.permute.xlu0 %1097
  %vm1099 = vcmask 916480
  %v1100 = vsel %vm1099, %v1090, %v1092
  %v1101 = vsel %vm1099, %v1092, %v1094
  %v1102 = vsel %vm1099, %v1094, %v1096
  %v1103 = vsel %vm1099, %v1096, %v1098
  %v1110 = vsel %vm134, %v1088, 0
  %1112 = vmatprep.subr.bf16.mxu0 %v1101
  %1113 = vmatpush1.bf16.msra.mxu0 %v1100
  %1114 = vmatprep.subr.bf16.mxu0 0
  %1115 = vmatpush1.bf16.msra.mxu0 0
  %1116 = vmatprep.subr.bf16.mxu0 0
  %1117 = vmatpush1.bf16.msra.mxu0 0
  %1118 = vmatprep.subr.bf16.mxu0 0
  %1119 = vmatpush1.bf16.msra.mxu0 0
  %1120 = vmatprep.subr.bf16.mxu0 0
  %1121 = vmatpush1.bf16.msra.mxu0 0
  %1122 = vmatprep.subr.bf16.mxu0 0
  %1123 = vmatpush1.bf16.msra.mxu0 0
  %1124 = vmatprep.subr.bf16.mxu0 0
  %1125 = vmatpush1.bf16.msra.mxu0 0
  %1126 = vmatprep.subr.bf16.mxu0 0
  %1127 = vmatpush1.bf16.msra.mxu0 0
  %1128 = vmatprep.subr.bf16.mxu0 0
  %1129 = vmatpush1.bf16.msra.mxu0 0
  %1130 = vmatprep.subr.bf16.mxu0 0
  %1131 = vmatpush1.bf16.msra.mxu0 0
  %1132 = vmatprep.subr.bf16.mxu0 0
  %1133 = vmatpush1.bf16.msra.mxu0 0
  %1134 = vmatprep.subr.bf16.mxu0 0
  %1135 = vmatpush1.bf16.msra.mxu0 0
  %1136 = vmatprep.subr.bf16.mxu0 0
  %1137 = vmatpush1.bf16.msra.mxu0 0
  %1138 = vmatprep.subr.bf16.mxu0 0
  %1139 = vmatpush1.bf16.msra.mxu0 0
  %1140 = vmatprep.subr.bf16.mxu0 0
  %1141 = vmatpush1.bf16.msra.mxu0 0
  %1142 = vmatprep.subr.bf16.mxu0 0
  %1143 = vmatpush1.bf16.msra.mxu0 0
  %1144 = vmatprep.mubr.bf16.mxu0 0
  %1145 = vmatmul.mubr.bf16.gmra.mrb[0].mxu0 %v1110
  %v1146 = vpop.f32.mrb[0].mxu0
  %v1147 = vadd.f32 0.0, %v1146
  %v1148 = vpop.f32.mrb[0].mxu0
  %v1149 = vadd.f32 0.0, %v1148
  %v1150 = vpop.f32.mrb[0].mxu0
  %v1151 = vadd.f32 0.0, %v1150
  %v1152 = vpop.f32.mrb[0].mxu0
  %v1153 = vadd.f32 0.0, %v1152
  %1154 = vdwg.mxu0
  %1155 = vmatprep.subr.bf16.mxu0 %v1103
  %1156 = vmatpush1.bf16.msra.mxu0 %v1102
  %1157 = vmatprep.subr.bf16.mxu0 0
  %1158 = vmatpush1.bf16.msra.mxu0 0
  %1159 = vmatprep.subr.bf16.mxu0 0
  %1160 = vmatpush1.bf16.msra.mxu0 0
  %1161 = vmatprep.subr.bf16.mxu0 0
  %1162 = vmatpush1.bf16.msra.mxu0 0
  %1163 = vmatprep.subr.bf16.mxu0 0
  %1164 = vmatpush1.bf16.msra.mxu0 0
  %1165 = vmatprep.subr.bf16.mxu0 0
  %1166 = vmatpush1.bf16.msra.mxu0 0
  %1167 = vmatprep.subr.bf16.mxu0 0
  %1168 = vmatpush1.bf16.msra.mxu0 0
  %1169 = vmatprep.subr.bf16.mxu0 0
  %1170 = vmatpush1.bf16.msra.mxu0 0
  %1171 = vmatprep.subr.bf16.mxu0 0
  %1172 = vmatpush1.bf16.msra.mxu0 0
  %1173 = vmatprep.subr.bf16.mxu0 0
  %1174 = vmatpush1.bf16.msra.mxu0 0
  %1175 = vmatprep.subr.bf16.mxu0 0
  %1176 = vmatpush1.bf16.msra.mxu0 0
  %1177 = vmatprep.subr.bf16.mxu0 0
  %1178 = vmatpush1.bf16.msra.mxu0 0
  %1179 = vmatprep.subr.bf16.mxu0 0
  %1180 = vmatpush1.bf16.msra.mxu0 0
  %1181 = vmatprep.subr.bf16.mxu0 0
  %1182 = vmatpush1.bf16.msra.mxu0 0
  %1183 = vmatprep.subr.bf16.mxu0 0
  %1184 = vmatpush1.bf16.msra.mxu0 0
  %1185 = vmatprep.subr.bf16.mxu0 0
  %1186 = vmatpush1.bf16.msra.mxu0 0
  %1187 = vmatprep.mubr.bf16.mxu0 0
  %1188 = vmatmul.mubr.bf16.gmra.mrb[0].mxu0 %v1110
  %v1189 = vpop.f32.mrb[0].mxu0
  %v1190 = vadd.f32 0.0, %v1189
  %v1191 = vpop.f32.mrb[0].mxu0
  %v1192 = vadd.f32 0.0, %v1191
  %v1193 = vpop.f32.mrb[0].mxu0
  %v1194 = vadd.f32 0.0, %v1193
  %v1195 = vpop.f32.mrb[0].mxu0
  %v1196 = vadd.f32 0.0, %v1195
  %1197 = vdwg.mxu0
  %1198 = vmatprep.subr.bf16.mxu0 0
  %1199 = vmatpush1.bf16.msra.mxu0 %v1098
  %1200 = vmatprep.subr.bf16.mxu0 0
  %1201 = vmatpush1.bf16.msra.mxu0 0
  %1202 = vmatprep.subr.bf16.mxu0 0
  %1203 = vmatpush1.bf16.msra.mxu0 0
  %1204 = vmatprep.subr.bf16.mxu0 0
  %1205 = vmatpush1.bf16.msra.mxu0 0
  %1206 = vmatprep.subr.bf16.mxu0 0
  %1207 = vmatpush1.bf16.msra.mxu0 0
  %1208 = vmatprep.subr.bf16.mxu0 0
  %1209 = vmatpush1.bf16.msra.mxu0 0
  %1210 = vmatprep.subr.bf16.mxu0 0
  %1211 = vmatpush1.bf16.msra.mxu0 0
  %1212 = vmatprep.subr.bf16.mxu0 0
  %1213 = vmatpush1.bf16.msra.mxu0 0
  %1214 = vmatprep.subr.bf16.mxu0 0
  %1215 = vmatpush1.bf16.msra.mxu0 0
  %1216 = vmatprep.subr.bf16.mxu0 0
  %1217 = vmatpush1.bf16.msra.mxu0 0
  %1218 = vmatprep.subr.bf16.mxu0 0
  %1219 = vmatpush1.bf16.msra.mxu0 0
  %1220 = vmatprep.subr.bf16.mxu0 0
  %1221 = vmatpush1.bf16.msra.mxu0 0
  %1222 = vmatprep.subr.bf16.mxu0 0
  %1223 = vmatpush1.bf16.msra.mxu0 0
  %1224 = vmatprep.subr.bf16.mxu0 0
  %1225 = vmatpush1.bf16.msra.mxu0 0
  %1226 = vmatprep.subr.bf16.mxu0 0
  %1227 = vmatpush1.bf16.msra.mxu0 0
  %1228 = vmatprep.subr.bf16.mxu0 0
  %1229 = vmatpush1.bf16.msra.mxu0 0
  %1230 = vmatprep.mubr.bf16.mxu0 0
  %1231 = vmatmul.mubr.bf16.gmra.mrb[0].mxu0 %v1110
  %v1232 = vpop.f32.mrb[0].mxu0
  %v1233 = vadd.f32 0.0, %v1232
  %v1234 = vpop.f32.mrb[0].mxu0
  %v1235 = vpop.f32.mrb[0].mxu0
  %v1236 = vadd.f32 0.0, %v1235
  %v1237 = vpop.f32.mrb[0].mxu0
  %1238 = vdwg.mxu0
  %v1239 = vadd.f32 %v1071, %v1147
  %v1240 = vadd.f32 %v1072, %v1149
  %v1241 = vadd.f32 %v1073, %v1190
  %v1242 = vadd.f32 %v1074, %v1192
  %v1243 = vadd.f32 %v1075, %v1233
  %v1244 = vadd.f32 %v1076, %v1151
  %v1245 = vadd.f32 %v1077, %v1153
  %v1246 = vadd.f32 %v1078, %v1194
  %v1247 = vadd.f32 %v1079, %v1196
  %v1248 = vadd.f32 %v1080, %v1236
  %s1249 = scalar_lea.vmem %s1, 56
  %v1250 = vld [vmem:[%s1249] sm:$0xf]
  %v1251 = vld [vmem:[%s1249 + $0x4] sm:$0xf]
  %v1254 = vunpack.c.l.b16 %v1250
  %v1255 = vunpack.c.l.b16 %v1251
  %v1256 = vpack.c.b16 %v1255, %v1254
  %1257 = vrot.lane.b32.xlu0 %v90, 111
  %v1258 = vpop.permute.xlu0 %1257
  %1259 = vrot.lane.b32.xlu0 %v91, 111
  %v1260 = vpop.permute.xlu0 %1259
  %1261 = vrot.lane.b32.xlu0 %v92, 111
  %v1262 = vpop.permute.xlu0 %1261
  %1263 = vrot.lane.b32.xlu0 %v93, 111
  %v1264 = vpop.permute.xlu0 %1263
  %1265 = vrot.lane.b32.xlu0 %v94, 111
  %v1266 = vpop.permute.xlu0 %1265
  %vm1267 = vcmask 908288
  %v1268 = vsel %vm1267, %v1258, %v1260
  %v1269 = vsel %vm1267, %v1260, %v1262
  %v1270 = vsel %vm1267, %v1262, %v1264
  %v1271 = vsel %vm1267, %v1264, %v1266
  %v1278 = vsel %vm134, %v1256, 0
  %1280 = vmatprep.subr.bf16.mxu0 %v1269
  %1281 = vmatpush1.bf16.msra.mxu0 %v1268
  %1282 = vmatprep.subr.bf16.mxu0 0
  %1283 = vmatpush1.bf16.msra.mxu0 0
  %1284 = vmatprep.subr.bf16.mxu0 0
  %1285 = vmatpush1.bf16.msra.mxu0 0
  %1286 = vmatprep.subr.bf16.mxu0 0
  %1287 = vmatpush1.bf16.msra.mxu0 0
  %1288 = vmatprep.subr.bf16.mxu0 0
  %1289 = vmatpush1.bf16.msra.mxu0 0
  %1290 = vmatprep.subr.bf16.mxu0 0
  %1291 = vmatpush1.bf16.msra.mxu0 0
  %1292 = vmatprep.subr.bf16.mxu0 0
  %1293 = vmatpush1.bf16.msra.mxu0 0
  %1294 = vmatprep.subr.bf16.mxu0 0
  %1295 = vmatpush1.bf16.msra.mxu0 0
  %1296 = vmatprep.subr.bf16.mxu0 0
  %1297 = vmatpush1.bf16.msra.mxu0 0
  %1298 = vmatprep.subr.bf16.mxu0 0
  %1299 = vmatpush1.bf16.msra.mxu0 0
  %1300 = vmatprep.subr.bf16.mxu0 0
  %1301 = vmatpush1.bf16.msra.mxu0 0
  %1302 = vmatprep.subr.bf16.mxu0 0
  %1303 = vmatpush1.bf16.msra.mxu0 0
  %1304 = vmatprep.subr.bf16.mxu0 0
  %1305 = vmatpush1.bf16.msra.mxu0 0
  %1306 = vmatprep.subr.bf16.mxu0 0
  %1307 = vmatpush1.bf16.msra.mxu0 0
  %1308 = vmatprep.subr.bf16.mxu0 0
  %1309 = vmatpush1.bf16.msra.mxu0 0
  %1310 = vmatprep.subr.bf16.mxu0 0
  %1311 = vmatpush1.bf16.msra.mxu0 0
  %1312 = vmatprep.mubr.bf16.mxu0 0
  %1313 = vmatmul.mubr.bf16.gmra.mrb[0].mxu0 %v1278
  %v1314 = vpop.f32.mrb[0].mxu0
  %v1315 = vadd.f32 0.0, %v1314
  %v1316 = vpop.f32.mrb[0].mxu0
  %v1317 = vadd.f32 0.0, %v1316
  %v1318 = vpop.f32.mrb[0].mxu0
  %v1319 = vadd.f32 0.0, %v1318
  %v1320 = vpop.f32.mrb[0].mxu0
  %v1321 = vadd.f32 0.0, %v1320
  %1322 = vdwg.mxu0
  %1323 = vmatprep.subr.bf16.mxu0 %v1271
  %1324 = vmatpush1.bf16.msra.mxu0 %v1270
  %1325 = vmatprep.subr.bf16.mxu0 0
  %1326 = vmatpush1.bf16.msra.mxu0 0
  %1327 = vmatprep.subr.bf16.mxu0 0
  %1328 = vmatpush1.bf16.msra.mxu0 0
  %1329 = vmatprep.subr.bf16.mxu0 0
  %1330 = vmatpush1.bf16.msra.mxu0 0
  %1331 = vmatprep.subr.bf16.mxu0 0
  %1332 = vmatpush1.bf16.msra.mxu0 0
  %1333 = vmatprep.subr.bf16.mxu0 0
  %1334 = vmatpush1.bf16.msra.mxu0 0
  %1335 = vmatprep.subr.bf16.mxu0 0
  %1336 = vmatpush1.bf16.msra.mxu0 0
  %1337 = vmatprep.subr.bf16.mxu0 0
  %1338 = vmatpush1.bf16.msra.mxu0 0
  %1339 = vmatprep.subr.bf16.mxu0 0
  %1340 = vmatpush1.bf16.msra.mxu0 0
  %1341 = vmatprep.subr.bf16.mxu0 0
  %1342 = vmatpush1.bf16.msra.mxu0 0
  %1343 = vmatprep.subr.bf16.mxu0 0
  %1344 = vmatpush1.bf16.msra.mxu0 0
  %1345 = vmatprep.subr.bf16.mxu0 0
  %1346 = vmatpush1.bf16.msra.mxu0 0
  %1347 = vmatprep.subr.bf16.mxu0 0
  %1348 = vmatpush1.bf16.msra.mxu0 0
  %1349 = vmatprep.subr.bf16.mxu0 0
  %1350 = vmatpush1.bf16.msra.mxu0 0
  %1351 = vmatprep.subr.bf16.mxu0 0
  %1352 = vmatpush1.bf16.msra.mxu0 0
  %1353 = vmatprep.subr.bf16.mxu0 0
  %1354 = vmatpush1.bf16.msra.mxu0 0
  %1355 = vmatprep.mubr.bf16.mxu0 0
  %1356 = vmatmul.mubr.bf16.gmra.mrb[0].mxu0 %v1278
  %v1357 = vpop.f32.mrb[0].mxu0
  %v1358 = vadd.f32 0.0, %v1357
  %v1359 = vpop.f32.mrb[0].mxu0
  %v1360 = vadd.f32 0.0, %v1359
  %v1361 = vpop.f32.mrb[0].mxu0
  %v1362 = vadd.f32 0.0, %v1361
  %v1363 = vpop.f32.mrb[0].mxu0
  %v1364 = vadd.f32 0.0, %v1363
  %1365 = vdwg.mxu0
  %1366 = vmatprep.subr.bf16.mxu0 0
  %1367 = vmatpush1.bf16.msra.mxu0 %v1266
  %1368 = vmatprep.subr.bf16.mxu0 0
  %1369 = vmatpush1.bf16.msra.mxu0 0
  %1370 = vmatprep.subr.bf16.mxu0 0
  %1371 = vmatpush1.bf16.msra.mxu0 0
  %1372 = vmatprep.subr.bf16.mxu0 0
  %1373 = vmatpush1.bf16.msra.mxu0 0
  %1374 = vmatprep.subr.bf16.mxu0 0
  %1375 = vmatpush1.bf16.msra.mxu0 0
  %1376 = vmatprep.subr.bf16.mxu0 0
  %1377 = vmatpush1.bf16.msra.mxu0 0
  %1378 = vmatprep.subr.bf16.mxu0 0
  %1379 = vmatpush1.bf16.msra.mxu0 0
  %1380 = vmatprep.subr.bf16.mxu0 0
  %1381 = vmatpush1.bf16.msra.mxu0 0
  %1382 = vmatprep.subr.bf16.mxu0 0
  %1383 = vmatpush1.bf16.msra.mxu0 0
  %1384 = vmatprep.subr.bf16.mxu0 0
  %1385 = vmatpush1.bf16.msra.mxu0 0
  %1386 = vmatprep.subr.bf16.mxu0 0
  %1387 = vmatpush1.bf16.msra.mxu0 0
  %1388 = vmatprep.subr.bf16.mxu0 0
  %1389 = vmatpush1.bf16.msra.mxu0 0
  %1390 = vmatprep.subr.bf16.mxu0 0
  %1391 = vmatpush1.bf16.msra.mxu0 0
  %1392 = vmatprep.subr.bf16.mxu0 0
  %1393 = vmatpush1.bf16.msra.mxu0 0
  %1394 = vmatprep.subr.bf16.mxu0 0
  %1395 = vmatpush1.bf16.msra.mxu0 0
  %1396 = vmatprep.subr.bf16.mxu0 0
  %1397 = vmatpush1.bf16.msra.mxu0 0
  %1398 = vmatprep.mubr.bf16.mxu0 0
  %1399 = vmatmul.mubr.bf16.gmra.mrb[0].mxu0 %v1278
  %v1400 = vpop.f32.mrb[0].mxu0
  %v1401 = vadd.f32 0.0, %v1400
  %v1402 = vpop.f32.mrb[0].mxu0
  %v1403 = vpop.f32.mrb[0].mxu0
  %v1404 = vadd.f32 0.0, %v1403
  %v1405 = vpop.f32.mrb[0].mxu0
  %1406 = vdwg.mxu0
  %v1407 = vadd.f32 %v1239, %v1315
  %v1408 = vadd.f32 %v1240, %v1317
  %v1409 = vadd.f32 %v1241, %v1358
  %v1410 = vadd.f32 %v1242, %v1360
  %v1411 = vadd.f32 %v1243, %v1401
  %v1412 = vadd.f32 %v1244, %v1319
  %v1413 = vadd.f32 %v1245, %v1321
  %v1414 = vadd.f32 %v1246, %v1362
  %v1415 = vadd.f32 %v1247, %v1364
  %v1416 = vadd.f32 %v1248, %v1404
  %s1417 = scalar_lea.vmem %s1, 64
  %v1418 = vld [vmem:[%s1417] sm:$0xf]
  %v1419 = vld [vmem:[%s1417 + $0x4] sm:$0xf]
  %v1422 = vunpack.c.l.b16 %v1418
  %v1423 = vunpack.c.l.b16 %v1419
  %v1424 = vpack.c.b16 %v1423, %v1422
  %1425 = vrot.lane.b32.xlu0 %v90, 110
  %v1426 = vpop.permute.xlu0 %1425
  %1427 = vrot.lane.b32.xlu0 %v91, 110
  %v1428 = vpop.permute.xlu0 %1427
  %1429 = vrot.lane.b32.xlu0 %v92, 110
  %v1430 = vpop.permute.xlu0 %1429
  %1431 = vrot.lane.b32.xlu0 %v93, 110
  %v1432 = vpop.permute.xlu0 %1431
  %1433 = vrot.lane.b32.xlu0 %v94, 110
  %v1434 = vpop.permute.xlu0 %1433
  %vm1435 = vcmask 900096
  %v1436 = vsel %vm1435, %v1426, %v1428
  %v1437 = vsel %vm1435, %v1428, %v1430
  %v1438 = vsel %vm1435, %v1430, %v1432
  %v1439 = vsel %vm1435, %v1432, %v1434
  %v1446 = vsel %vm134, %v1424, 0
  %1448 = vmatprep.subr.bf16.mxu0 %v1437
  %1449 = vmatpush1.bf16.msra.mxu0 %v1436
  %1450 = vmatprep.subr.bf16.mxu0 0
  %1451 = vmatpush1.bf16.msra.mxu0 0
  %1452 = vmatprep.subr.bf16.mxu0 0
  %1453 = vmatpush1.bf16.msra.mxu0 0
  %1454 = vmatprep.subr.bf16.mxu0 0
  %1455 = vmatpush1.bf16.msra.mxu0 0
  %1456 = vmatprep.subr.bf16.mxu0 0
  %1457 = vmatpush1.bf16.msra.mxu0 0
  %1458 = vmatprep.subr.bf16.mxu0 0
  %1459 = vmatpush1.bf16.msra.mxu0 0
  %1460 = vmatprep.subr.bf16.mxu0 0
  %1461 = vmatpush1.bf16.msra.mxu0 0
  %1462 = vmatprep.subr.bf16.mxu0 0
  %1463 = vmatpush1.bf16.msra.mxu0 0
  %1464 = vmatprep.subr.bf16.mxu0 0
  %1465 = vmatpush1.bf16.msra.mxu0 0
  %1466 = vmatprep.subr.bf16.mxu0 0
  %1467 = vmatpush1.bf16.msra.mxu0 0
  %1468 = vmatprep.subr.bf16.mxu0 0
  %1469 = vmatpush1.bf16.msra.mxu0 0
  %1470 = vmatprep.subr.bf16.mxu0 0
  %1471 = vmatpush1.bf16.msra.mxu0 0
  %1472 = vmatprep.subr.bf16.mxu0 0
  %1473 = vmatpush1.bf16.msra.mxu0 0
  %1474 = vmatprep.subr.bf16.mxu0 0
  %1475 = vmatpush1.bf16.msra.mxu0 0
  %1476 = vmatprep.subr.bf16.mxu0 0
  %1477 = vmatpush1.bf16.msra.mxu0 0
  %1478 = vmatprep.subr.bf16.mxu0 0
  %1479 = vmatpush1.bf16.msra.mxu0 0
  %1480 = vmatprep.mubr.bf16.mxu0 0
  %1481 = vmatmul.mubr.bf16.gmra.mrb[0].mxu0 %v1446
  %v1482 = vpop.f32.mrb[0].mxu0
  %v1483 = vadd.f32 0.0, %v1482
  %v1484 = vpop.f32.mrb[0].mxu0
  %v1485 = vadd.f32 0.0, %v1484
  %v1486 = vpop.f32.mrb[0].mxu0
  %v1487 = vadd.f32 0.0, %v1486
  %v1488 = vpop.f32.mrb[0].mxu0
  %v1489 = vadd.f32 0.0, %v1488
  %1490 = vdwg.mxu0
  %1491 = vmatprep.subr.bf16.mxu0 %v1439
  %1492 = vmatpush1.bf16.msra.mxu0 %v1438
  %1493 = vmatprep.subr.bf16.mxu0 0
  %1494 = vmatpush1.bf16.msra.mxu0 0
  %1495 = vmatprep.subr.bf16.mxu0 0
  %1496 = vmatpush1.bf16.msra.mxu0 0
  %1497 = vmatprep.subr.bf16.mxu0 0
  %1498 = vmatpush1.bf16.msra.mxu0 0
  %1499 = vmatprep.subr.bf16.mxu0 0
  %1500 = vmatpush1.bf16.msra.mxu0 0
  %1501 = vmatprep.subr.bf16.mxu0 0
  %1502 = vmatpush1.bf16.msra.mxu0 0
  %1503 = vmatprep.subr.bf16.mxu0 0
  %1504 = vmatpush1.bf16.msra.mxu0 0
  %1505 = vmatprep.subr.bf16.mxu0 0
  %1506 = vmatpush1.bf16.msra.mxu0 0
  %1507 = vmatprep.subr.bf16.mxu0 0
  %1508 = vmatpush1.bf16.msra.mxu0 0
  %1509 = vmatprep.subr.bf16.mxu0 0
  %1510 = vmatpush1.bf16.msra.mxu0 0
  %1511 = vmatprep.subr.bf16.mxu0 0
  %1512 = vmatpush1.bf16.msra.mxu0 0
  %1513 = vmatprep.subr.bf16.mxu0 0
  %1514 = vmatpush1.bf16.msra.mxu0 0
  %1515 = vmatprep.subr.bf16.mxu0 0
  %1516 = vmatpush1.bf16.msra.mxu0 0
  %1517 = vmatprep.subr.bf16.mxu0 0
  %1518 = vmatpush1.bf16.msra.mxu0 0
  %1519 = vmatprep.subr.bf16.mxu0 0
  %1520 = vmatpush1.bf16.msra.mxu0 0
  %1521 = vmatprep.subr.bf16.mxu0 0
  %1522 = vmatpush1.bf16.msra.mxu0 0
  %1523 = vmatprep.mubr.bf16.mxu0 0
  %1524 = vmatmul.mubr.bf16.gmra.mrb[0].mxu0 %v1446
  %v1525 = vpop.f32.mrb[0].mxu0
  %v1526 = vadd.f32 0.0, %v1525
  %v1527 = vpop.f32.mrb[0].mxu0
  %v1528 = vadd.f32 0.0, %v1527
  %v1529 = vpop.f32.mrb[0].mxu0
  %v1530 = vadd.f32 0.0, %v1529
  %v1531 = vpop.f32.mrb[0].mxu0
  %v1532 = vadd.f32 0.0, %v1531
  %1533 = vdwg.mxu0
  %1534 = vmatprep.subr.bf16.mxu0 0
  %1535 = vmatpush1.bf16.msra.mxu0 %v1434
  %1536 = vmatprep.subr.bf16.mxu0 0
  %1537 = vmatpush1.bf16.msra.mxu0 0
  %1538 = vmatprep.subr.bf16.mxu0 0
  %1539 = vmatpush1.bf16.msra.mxu0 0
  %1540 = vmatprep.subr.bf16.mxu0 0
  %1541 = vmatpush1.bf16.msra.mxu0 0
  %1542 = vmatprep.subr.bf16.mxu0 0
  %1543 = vmatpush1.bf16.msra.mxu0 0
  %1544 = vmatprep.subr.bf16.mxu0 0
  %1545 = vmatpush1.bf16.msra.mxu0 0
  %1546 = vmatprep.subr.bf16.mxu0 0
  %1547 = vmatpush1.bf16.msra.mxu0 0
  %1548 = vmatprep.subr.bf16.mxu0 0
  %1549 = vmatpush1.bf16.msra.mxu0 0
  %1550 = vmatprep.subr.bf16.mxu0 0
  %1551 = vmatpush1.bf16.msra.mxu0 0
  %1552 = vmatprep.subr.bf16.mxu0 0
  %1553 = vmatpush1.bf16.msra.mxu0 0
  %1554 = vmatprep.subr.bf16.mxu0 0
  %1555 = vmatpush1.bf16.msra.mxu0 0
  %1556 = vmatprep.subr.bf16.mxu0 0
  %1557 = vmatpush1.bf16.msra.mxu0 0
  %1558 = vmatprep.subr.bf16.mxu0 0
  %1559 = vmatpush1.bf16.msra.mxu0 0
  %1560 = vmatprep.subr.bf16.mxu0 0
  %1561 = vmatpush1.bf16.msra.mxu0 0
  %1562 = vmatprep.subr.bf16.mxu0 0
  %1563 = vmatpush1.bf16.msra.mxu0 0
  %1564 = vmatprep.subr.bf16.mxu0 0
  %1565 = vmatpush1.bf16.msra.mxu0 0
  %1566 = vmatprep.mubr.bf16.mxu0 0
  %1567 = vmatmul.mubr.bf16.gmra.mrb[0].mxu0 %v1446
  %v1568 = vpop.f32.mrb[0].mxu0
  %v1569 = vadd.f32 0.0, %v1568
  %v1570 = vpop.f32.mrb[0].mxu0
  %v1571 = vpop.f32.mrb[0].mxu0
  %v1572 = vadd.f32 0.0, %v1571
  %v1573 = vpop.f32.mrb[0].mxu0
  %1574 = vdwg.mxu0
  %v1575 = vadd.f32 %v1407, %v1483
  %v1576 = vadd.f32 %v1408, %v1485
  %v1577 = vadd.f32 %v1409, %v1526
  %v1578 = vadd.f32 %v1410, %v1528
  %v1579 = vadd.f32 %v1411, %v1569
  %v1580 = vadd.f32 %v1412, %v1487
  %v1581 = vadd.f32 %v1413, %v1489
  %v1582 = vadd.f32 %v1414, %v1530
  %v1583 = vadd.f32 %v1415, %v1532
  %v1584 = vadd.f32 %v1416, %v1572
  %v1585 = vld [vmem:[%s2] sm:$0xff]
  %v1586 = vld [vmem:[%s2 + $0x8] sm:$0xff]
  %1588 = vset.pattern.permute.xlu0 0
  %1589 = vperm.xlu0 %1588, %v1585
  %v1590 = vpop.permute.xlu0 %1589
  %1593 = vset.pattern.permute.xlu0 0
  %1594 = vperm.xlu0 %1593, %v1586
  %v1595 = vpop.permute.xlu0 %1594
  %v1597 = vadd.f32 %v1575, %v1590
  %v1598 = vadd.f32 %v1576, %v1590
  %v1599 = vadd.f32 %v1577, %v1590
  %v1600 = vadd.f32 %v1578, %v1590
  %v1601 = vadd.f32 %v1579, %v1590
  %v1602 = vadd.f32 %v1580, %v1595
  %v1603 = vadd.f32 %v1581, %v1595
  %v1604 = vadd.f32 %v1582, %v1595
  %v1605 = vadd.f32 %v1583, %v1595
  %v1606 = vadd.f32 %v1584, %v1595
  %v1608 = vlaneseq
  %v1609 = vshrl.u32 %v1608, 7
  %v1610 = vsub.s32 0, %v1609
  %v1611 = vrot.slane %v48, %v1610
  %v1612 = vlaneseq
  %v1613 = vshrl.u32 %v1612, 7
  %v1614 = vsub.s32 1, %v1613
  %v1615 = vrot.slane %v48, %v1614
  %v1616 = vlaneseq
  %v1617 = vshrl.u32 %v1616, 7
  %v1618 = vsub.s32 2, %v1617
  %v1619 = vrot.slane %v48, %v1618
  %v1620 = vlaneseq
  %v1621 = vshrl.u32 %v1620, 7
  %v1622 = vsub.s32 3, %v1621
  %v1623 = vrot.slane %v48, %v1622
  %v1624 = vlaneseq
  %v1625 = vshrl.u32 %v1624, 7
  %v1626 = vsub.s32 4, %v1625
  %v1627 = vrot.slane %v48, %v1626
  %v1633 = vmul.f32 %v1597, %v1611
  %v1634 = vmul.f32 %v1598, %v1615
  %v1635 = vmul.f32 %v1599, %v1619
  %v1636 = vmul.f32 %v1600, %v1623
  %v1637 = vmul.f32 %v1601, %v1627
  %v1638 = vmul.f32 %v1602, %v1611
  %v1639 = vmul.f32 %v1603, %v1615
  %v1640 = vmul.f32 %v1604, %v1619
  %v1641 = vmul.f32 %v1605, %v1623
  %v1642 = vmul.f32 %v1606, %v1627
  %v1643 = vmax.f32 %v1633, 0.0
  %v1644 = vmax.f32 %v1634, 0.0
  %v1645 = vmax.f32 %v1635, 0.0
  %v1646 = vmax.f32 %v1636, 0.0
  %v1647 = vmax.f32 %v1637, 0.0
  %v1648 = vmax.f32 %v1638, 0.0
  %v1649 = vmax.f32 %v1639, 0.0
  %v1650 = vmax.f32 %v1640, 0.0
  %v1651 = vmax.f32 %v1641, 0.0
  %v1652 = vmax.f32 %v1642, 0.0
  %v1653 = vpack.c.bf16 %v1648, %v1643
  %v1654 = vpack.c.bf16 %v1649, %v1644
  %v1655 = vpack.c.bf16 %v1650, %v1645
  %v1656 = vpack.c.bf16 %v1651, %v1646
  %v1657 = vpack.c.bf16 %v1652, %v1647
  %1658 = vst [vmem:[#allocation2 + $0x8] sm:$0xff] %v1653
  %1659 = vst [vmem:[#allocation2 + $0x10] sm:$0xff] %v1654
  %1660 = vst [vmem:[#allocation2 + $0x18] sm:$0xff] %v1655
  %1661 = vst [vmem:[#allocation2 + $0x20] sm:$0xff] %v1656
  %1662 = vst.msk [vmem:[#allocation2 + $0x28] sm:$0xff] %vm87, %v1657
  %v1663 = vld [vmem:[#allocation2] sm:$0xff]
  %v1664 = vld [vmem:[#allocation2 + $0x8] sm:$0xff]
  %v1665 = vld [vmem:[#allocation2 + $0x10] sm:$0xff]
  %v1666 = vld [vmem:[#allocation2 + $0x18] sm:$0xff]
  %v1667 = vld [vmem:[#allocation2 + $0x20] sm:$0xff]
  %v1668 = vld [vmem:[#allocation2 + $0x28] sm:$0xff]
  %s1669 = scalar_lea.vmem %s1, 72
  %v1670 = vld [vmem:[%s1669] sm:$0xf]
  %v1671 = vld [vmem:[%s1669 + $0x4] sm:$0xf]
  %s1672 = scalar_lea.vmem %s1, 80
  %v1673 = vld [vmem:[%s1672] sm:$0xf]
  %v1674 = vld [vmem:[%s1672 + $0x4] sm:$0xf]
  %v1677 = vunpack.c.l.b16 %v1673
  %v1678 = vunpack.c.l.b16 %v1674
  %v1679 = vpack.c.b16 %v1678, %v1677
  %1686 = vrot.lane.b32.xlu0 %v1663, 17
  %v1687 = vpop.permute.xlu0 %1686
  %1688 = vrot.lane.b32.xlu0 %v1664, 17
  %v1689 = vpop.permute.xlu0 %1688
  %1690 = vrot.lane.b32.xlu0 %v1665, 17
  %v1691 = vpop.permute.xlu0 %1690
  %1692 = vrot.lane.b32.xlu0 %v1666, 17
  %v1693 = vpop.permute.xlu0 %1692
  %1694 = vrot.lane.b32.xlu0 %v1667, 17
  %v1695 = vpop.permute.xlu0 %1694
  %1696 = vrot.lane.b32.xlu0 %v1668, 17
  %v1697 = vpop.permute.xlu0 %1696
  %v1698 = vsel %vm123, %v1687, %v1689
  %v1699 = vsel %vm123, %v1689, %v1691
  %v1700 = vsel %vm123, %v1691, %v1693
  %v1701 = vsel %vm123, %v1693, %v1695
  %v1702 = vsel %vm123, %v1695, %v1697
  %v1709 = vsel %vm134, %v1679, 0
  %1711 = vmatprep.subr.bf16.mxu0 %v1699
  %1712 = vmatpush1.bf16.msra.mxu0 %v1698
  %1713 = vmatprep.subr.bf16.mxu0 0
  %1714 = vmatpush1.bf16.msra.mxu0 0
  %1715 = vmatprep.subr.bf16.mxu0 0
  %1716 = vmatpush1.bf16.msra.mxu0 0
  %1717 = vmatprep.subr.bf16.mxu0 0
  %1718 = vmatpush1.bf16.msra.mxu0 0
  %1719 = vmatprep.subr.bf16.mxu0 0
  %1720 = vmatpush1.bf16.msra.mxu0 0
  %1721 = vmatprep.subr.bf16.mxu0 0
  %1722 = vmatpush1.bf16.msra.mxu0 0
  %1723 = vmatprep.subr.bf16.mxu0 0
  %1724 = vmatpush1.bf16.msra.mxu0 0
  %1725 = vmatprep.subr.bf16.mxu0 0
  %1726 = vmatpush1.bf16.msra.mxu0 0
  %1727 = vmatprep.subr.bf16.mxu0 0
  %1728 = vmatpush1.bf16.msra.mxu0 0
  %1729 = vmatprep.subr.bf16.mxu0 0
  %1730 = vmatpush1.bf16.msra.mxu0 0
  %1731 = vmatprep.subr.bf16.mxu0 0
  %1732 = vmatpush1.bf16.msra.mxu0 0
  %1733 = vmatprep.subr.bf16.mxu0 0
  %1734 = vmatpush1.bf16.msra.mxu0 0
  %1735 = vmatprep.subr.bf16.mxu0 0
  %1736 = vmatpush1.bf16.msra.mxu0 0
  %1737 = vmatprep.subr.bf16.mxu0 0
  %1738 = vmatpush1.bf16.msra.mxu0 0
  %1739 = vmatprep.subr.bf16.mxu0 0
  %1740 = vmatpush1.bf16.msra.mxu0 0
  %1741 = vmatprep.subr.bf16.mxu0 0
  %1742 = vmatpush1.bf16.msra.mxu0 0
  %1743 = vmatprep.mubr.bf16.mxu0 0
  %1744 = vmatmul.mubr.bf16.gmra.mrb[0].mxu0 %v1709
  %v1745 = vpop.f32.mrb[0].mxu0
  %v1746 = vadd.f32 0.0, %v1745
  %v1747 = vpop.f32.mrb[0].mxu0
  %v1748 = vadd.f32 0.0, %v1747
  %v1749 = vpop.f32.mrb[0].mxu0
  %v1750 = vadd.f32 0.0, %v1749
  %v1751 = vpop.f32.mrb[0].mxu0
  %v1752 = vadd.f32 0.0, %v1751
  %1753 = vdwg.mxu0
  %1754 = vmatprep.subr.bf16.mxu0 %v1701
  %1755 = vmatpush1.bf16.msra.mxu0 %v1700
  %1756 = vmatprep.subr.bf16.mxu0 0
  %1757 = vmatpush1.bf16.msra.mxu0 0
  %1758 = vmatprep.subr.bf16.mxu0 0
  %1759 = vmatpush1.bf16.msra.mxu0 0
  %1760 = vmatprep.subr.bf16.mxu0 0
  %1761 = vmatpush1.bf16.msra.mxu0 0
  %1762 = vmatprep.subr.bf16.mxu0 0
  %1763 = vmatpush1.bf16.msra.mxu0 0
  %1764 = vmatprep.subr.bf16.mxu0 0
  %1765 = vmatpush1.bf16.msra.mxu0 0
  %1766 = vmatprep.subr.bf16.mxu0 0
  %1767 = vmatpush1.bf16.msra.mxu0 0
  %1768 = vmatprep.subr.bf16.mxu0 0
  %1769 = vmatpush1.bf16.msra.mxu0 0
  %1770 = vmatprep.subr.bf16.mxu0 0
  %1771 = vmatpush1.bf16.msra.mxu0 0
  %1772 = vmatprep.subr.bf16.mxu0 0
  %1773 = vmatpush1.bf16.msra.mxu0 0
  %1774 = vmatprep.subr.bf16.mxu0 0
  %1775 = vmatpush1.bf16.msra.mxu0 0
  %1776 = vmatprep.subr.bf16.mxu0 0
  %1777 = vmatpush1.bf16.msra.mxu0 0
  %1778 = vmatprep.subr.bf16.mxu0 0
  %1779 = vmatpush1.bf16.msra.mxu0 0
  %1780 = vmatprep.subr.bf16.mxu0 0
  %1781 = vmatpush1.bf16.msra.mxu0 0
  %1782 = vmatprep.subr.bf16.mxu0 0
  %1783 = vmatpush1.bf16.msra.mxu0 0
  %1784 = vmatprep.subr.bf16.mxu0 0
  %1785 = vmatpush1.bf16.msra.mxu0 0
  %1786 = vmatprep.mubr.bf16.mxu0 0
  %1787 = vmatmul.mubr.bf16.gmra.mrb[0].mxu0 %v1709
  %v1788 = vpop.f32.mrb[0].mxu0
  %v1789 = vadd.f32 0.0, %v1788
  %v1790 = vpop.f32.mrb[0].mxu0
  %v1791 = vadd.f32 0.0, %v1790
  %v1792 = vpop.f32.mrb[0].mxu0
  %v1793 = vadd.f32 0.0, %v1792
  %v1794 = vpop.f32.mrb[0].mxu0
  %v1795 = vadd.f32 0.0, %v1794
  %1796 = vdwg.mxu0
  %1797 = vmatprep.subr.bf16.mxu0 0
  %1798 = vmatpush1.bf16.msra.mxu0 %v1702
  %1799 = vmatprep.subr.bf16.mxu0 0
  %1800 = vmatpush1.bf16.msra.mxu0 0
  %1801 = vmatprep.subr.bf16.mxu0 0
  %1802 = vmatpush1.bf16.msra.mxu0 0
  %1803 = vmatprep.subr.bf16.mxu0 0
  %1804 = vmatpush1.bf16.msra.mxu0 0
  %1805 = vmatprep.subr.bf16.mxu0 0
  %1806 = vmatpush1.bf16.msra.mxu0 0
  %1807 = vmatprep.subr.bf16.mxu0 0
  %1808 = vmatpush1.bf16.msra.mxu0 0
  %1809 = vmatprep.subr.bf16.mxu0 0
  %1810 = vmatpush1.bf16.msra.mxu0 0
  %1811 = vmatprep.subr.bf16.mxu0 0
  %1812 = vmatpush1.bf16.msra.mxu0 0
  %1813 = vmatprep.subr.bf16.mxu0 0
  %1814 = vmatpush1.bf16.msra.mxu0 0
  %1815 = vmatprep.subr.bf16.mxu0 0
  %1816 = vmatpush1.bf16.msra.mxu0 0
  %1817 = vmatprep.subr.bf16.mxu0 0
  %1818 = vmatpush1.bf16.msra.mxu0 0
  %1819 = vmatprep.subr.bf16.mxu0 0
  %1820 = vmatpush1.bf16.msra.mxu0 0
  %1821 = vmatprep.subr.bf16.mxu0 0
  %1822 = vmatpush1.bf16.msra.mxu0 0
  %1823 = vmatprep.subr.bf16.mxu0 0
  %1824 = vmatpush1.bf16.msra.mxu0 0
  %1825 = vmatprep.subr.bf16.mxu0 0
  %1826 = vmatpush1.bf16.msra.mxu0 0
  %1827 = vmatprep.subr.bf16.mxu0 0
  %1828 = vmatpush1.bf16.msra.mxu0 0
  %1829 = vmatprep.mubr.bf16.mxu0 0
  %1830 = vmatmul.mubr.bf16.gmra.mrb[0].mxu0 %v1709
  %v1831 = vpop.f32.mrb[0].mxu0
  %v1832 = vadd.f32 0.0, %v1831
  %v1833 = vpop.f32.mrb[0].mxu0
  %v1834 = vpop.f32.mrb[0].mxu0
  %v1835 = vadd.f32 0.0, %v1834
  %v1836 = vpop.f32.mrb[0].mxu0
  %1837 = vdwg.mxu0
  %v1840 = vunpack.c.l.b16 %v1670
  %v1841 = vunpack.c.l.b16 %v1671
  %v1842 = vpack.c.b16 %v1841, %v1840
  %1843 = vrot.lane.b32.xlu0 %v1663, 18
  %v1844 = vpop.permute.xlu0 %1843
  %1845 = vrot.lane.b32.xlu0 %v1664, 18
  %v1846 = vpop.permute.xlu0 %1845
  %1847 = vrot.lane.b32.xlu0 %v1665, 18
  %v1848 = vpop.permute.xlu0 %1847
  %1849 = vrot.lane.b32.xlu0 %v1666, 18
  %v1850 = vpop.permute.xlu0 %1849
  %1851 = vrot.lane.b32.xlu0 %v1667, 18
  %v1852 = vpop.permute.xlu0 %1851
  %1853 = vrot.lane.b32.xlu0 %v1668, 18
  %v1854 = vpop.permute.xlu0 %1853
  %v1855 = vsel %vm282, %v1844, %v1846
  %v1856 = vsel %vm282, %v1846, %v1848
  %v1857 = vsel %vm282, %v1848, %v1850
  %v1858 = vsel %vm282, %v1850, %v1852
  %v1859 = vsel %vm282, %v1852, %v1854
  %v1866 = vsel %vm134, %v1842, 0
  %1868 = vmatprep.subr.bf16.mxu0 %v1856
  %1869 = vmatpush1.bf16.msra.mxu0 %v1855
  %1870 = vmatprep.subr.bf16.mxu0 0
  %1871 = vmatpush1.bf16.msra.mxu0 0
  %1872 = vmatprep.subr.bf16.mxu0 0
  %1873 = vmatpush1.bf16.msra.mxu0 0
  %1874 = vmatprep.subr.bf16.mxu0 0
  %1875 = vmatpush1.bf16.msra.mxu0 0
  %1876 = vmatprep.subr.bf16.mxu0 0
  %1877 = vmatpush1.bf16.msra.mxu0 0
  %1878 = vmatprep.subr.bf16.mxu0 0
  %1879 = vmatpush1.bf16.msra.mxu0 0
  %1880 = vmatprep.subr.bf16.mxu0 0
  %1881 = vmatpush1.bf16.msra.mxu0 0
  %1882 = vmatprep.subr.bf16.mxu0 0
  %1883 = vmatpush1.bf16.msra.mxu0 0
  %1884 = vmatprep.subr.bf16.mxu0 0
  %1885 = vmatpush1.bf16.msra.mxu0 0
  %1886 = vmatprep.subr.bf16.mxu0 0
  %1887 = vmatpush1.bf16.msra.mxu0 0
  %1888 = vmatprep.subr.bf16.mxu0 0
  %1889 = vmatpush1.bf16.msra.mxu0 0
  %1890 = vmatprep.subr.bf16.mxu0 0
  %1891 = vmatpush1.bf16.msra.mxu0 0
  %1892 = vmatprep.subr.bf16.mxu0 0
  %1893 = vmatpush1.bf16.msra.mxu0 0
  %1894 = vmatprep.subr.bf16.mxu0 0
  %1895 = vmatpush1.bf16.msra.mxu0 0
  %1896 = vmatprep.subr.bf16.mxu0 0
  %1897 = vmatpush1.bf16.msra.mxu0 0
  %1898 = vmatprep.subr.bf16.mxu0 0
  %1899 = vmatpush1.bf16.msra.mxu0 0
  %1900 = vmatprep.mubr.bf16.mxu0 0
  %1901 = vmatmul.mubr.bf16.gmra.mrb[0].mxu0 %v1866
  %v1902 = vpop.f32.mrb[0].mxu0
  %v1903 = vadd.f32 %v1746, %v1902
  %v1904 = vpop.f32.mrb[0].mxu0
  %v1905 = vadd.f32 %v1748, %v1904
  %v1906 = vpop.f32.mrb[0].mxu0
  %v1907 = vadd.f32 %v1750, %v1906
  %v1908 = vpop.f32.mrb[0].mxu0
  %v1909 = vadd.f32 %v1752, %v1908
  %1910 = vdwg.mxu0
  %1911 = vmatprep.subr.bf16.mxu0 %v1858
  %1912 = vmatpush1.bf16.msra.mxu0 %v1857
  %1913 = vmatprep.subr.bf16.mxu0 0
  %1914 = vmatpush1.bf16.msra.mxu0 0
  %1915 = vmatprep.subr.bf16.mxu0 0
  %1916 = vmatpush1.bf16.msra.mxu0 0
  %1917 = vmatprep.subr.bf16.mxu0 0
  %1918 = vmatpush1.bf16.msra.mxu0 0
  %1919 = vmatprep.subr.bf16.mxu0 0
  %1920 = vmatpush1.bf16.msra.mxu0 0
  %1921 = vmatprep.subr.bf16.mxu0 0
  %1922 = vmatpush1.bf16.msra.mxu0 0
  %1923 = vmatprep.subr.bf16.mxu0 0
  %1924 = vmatpush1.bf16.msra.mxu0 0
  %1925 = vmatprep.subr.bf16.mxu0 0
  %1926 = vmatpush1.bf16.msra.mxu0 0
  %1927 = vmatprep.subr.bf16.mxu0 0
  %1928 = vmatpush1.bf16.msra.mxu0 0
  %1929 = vmatprep.subr.bf16.mxu0 0
  %1930 = vmatpush1.bf16.msra.mxu0 0
  %1931 = vmatprep.subr.bf16.mxu0 0
  %1932 = vmatpush1.bf16.msra.mxu0 0
  %1933 = vmatprep.subr.bf16.mxu0 0
  %1934 = vmatpush1.bf16.msra.mxu0 0
  %1935 = vmatprep.subr.bf16.mxu0 0
  %1936 = vmatpush1.bf16.msra.mxu0 0
  %1937 = vmatprep.subr.bf16.mxu0 0
  %1938 = vmatpush1.bf16.msra.mxu0 0
  %1939 = vmatprep.subr.bf16.mxu0 0
  %1940 = vmatpush1.bf16.msra.mxu0 0
  %1941 = vmatprep.subr.bf16.mxu0 0
  %1942 = vmatpush1.bf16.msra.mxu0 0
  %1943 = vmatprep.mubr.bf16.mxu0 0
  %1944 = vmatmul.mubr.bf16.gmra.mrb[0].mxu0 %v1866
  %v1945 = vpop.f32.mrb[0].mxu0
  %v1946 = vadd.f32 %v1789, %v1945
  %v1947 = vpop.f32.mrb[0].mxu0
  %v1948 = vadd.f32 %v1791, %v1947
  %v1949 = vpop.f32.mrb[0].mxu0
  %v1950 = vadd.f32 %v1793, %v1949
  %v1951 = vpop.f32.mrb[0].mxu0
  %v1952 = vadd.f32 %v1795, %v1951
  %1953 = vdwg.mxu0
  %1954 = vmatprep.subr.bf16.mxu0 0
  %1955 = vmatpush1.bf16.msra.mxu0 %v1859
  %1956 = vmatprep.subr.bf16.mxu0 0
  %1957 = vmatpush1.bf16.msra.mxu0 0
  %1958 = vmatprep.subr.bf16.mxu0 0
  %1959 = vmatpush1.bf16.msra.mxu0 0
  %1960 = vmatprep.subr.bf16.mxu0 0
  %1961 = vmatpush1.bf16.msra.mxu0 0
  %1962 = vmatprep.subr.bf16.mxu0 0
  %1963 = vmatpush1.bf16.msra.mxu0 0
  %1964 = vmatprep.subr.bf16.mxu0 0
  %1965 = vmatpush1.bf16.msra.mxu0 0
  %1966 = vmatprep.subr.bf16.mxu0 0
  %1967 = vmatpush1.bf16.msra.mxu0 0
  %1968 = vmatprep.subr.bf16.mxu0 0
  %1969 = vmatpush1.bf16.msra.mxu0 0
  %1970 = vmatprep.subr.bf16.mxu0 0
  %1971 = vmatpush1.bf16.msra.mxu0 0
  %1972 = vmatprep.subr.bf16.mxu0 0
  %1973 = vmatpush1.bf16.msra.mxu0 0
  %1974 = vmatprep.subr.bf16.mxu0 0
  %1975 = vmatpush1.bf16.msra.mxu0 0
  %1976 = vmatprep.subr.bf16.mxu0 0
  %1977 = vmatpush1.bf16.msra.mxu0 0
  %1978 = vmatprep.subr.bf16.mxu0 0
  %1979 = vmatpush1.bf16.msra.mxu0 0
  %1980 = vmatprep.subr.bf16.mxu0 0
  %1981 = vmatpush1.bf16.msra.mxu0 0
  %1982 = vmatprep.subr.bf16.mxu0 0
  %1983 = vmatpush1.bf16.msra.mxu0 0
  %1984 = vmatprep.subr.bf16.mxu0 0
  %1985 = vmatpush1.bf16.msra.mxu0 0
  %1986 = vmatprep.mubr.bf16.mxu0 0
  %1987 = vmatmul.mubr.bf16.gmra.mrb[0].mxu0 %v1866
  %v1988 = vpop.f32.mrb[0].mxu0
  %v1989 = vadd.f32 %v1832, %v1988
  %v1990 = vpop.f32.mrb[0].mxu0
  %v1991 = vpop.f32.mrb[0].mxu0
  %v1992 = vadd.f32 %v1835, %v1991
  %v1993 = vpop.f32.mrb[0].mxu0
  %1994 = vdwg.mxu0
  %s1995 = scalar_lea.vmem %s1, 88
  %v1996 = vld [vmem:[%s1995] sm:$0xf]
  %v1997 = vld [vmem:[%s1995 + $0x4] sm:$0xf]
  %v2000 = vunpack.c.l.b16 %v1996
  %v2001 = vunpack.c.l.b16 %v1997
  %v2002 = vpack.c.b16 %v2001, %v2000
  %2003 = vrot.lane.b32.xlu0 %v1663, 16
  %v2004 = vpop.permute.xlu0 %2003
  %2005 = vrot.lane.b32.xlu0 %v1664, 16
  %v2006 = vpop.permute.xlu0 %2005
  %2007 = vrot.lane.b32.xlu0 %v1665, 16
  %v2008 = vpop.permute.xlu0 %2007
  %2009 = vrot.lane.b32.xlu0 %v1666, 16
  %v2010 = vpop.permute.xlu0 %2009
  %2011 = vrot.lane.b32.xlu0 %v1667, 16
  %v2012 = vpop.permute.xlu0 %2011
  %2013 = vrot.lane.b32.xlu0 %v1668, 16
  %v2014 = vpop.permute.xlu0 %2013
  %v2015 = vsel %vm443, %v2004, %v2006
  %v2016 = vsel %vm443, %v2006, %v2008
  %v2017 = vsel %vm443, %v2008, %v2010
  %v2018 = vsel %vm443, %v2010, %v2012
  %v2019 = vsel %vm443, %v2012, %v2014
  %v2026 = vsel %vm134, %v2002, 0
  %2028 = vmatprep.subr.bf16.mxu0 %v2016
  %2029 = vmatpush1.bf16.msra.mxu0 %v2015
  %2030 = vmatprep.subr.bf16.mxu0 0
  %2031 = vmatpush1.bf16.msra.mxu0 0
  %2032 = vmatprep.subr.bf16.mxu0 0
  %2033 = vmatpush1.bf16.msra.mxu0 0
  %2034 = vmatprep.subr.bf16.mxu0 0
  %2035 = vmatpush1.bf16.msra.mxu0 0
  %2036 = vmatprep.subr.bf16.mxu0 0
  %2037 = vmatpush1.bf16.msra.mxu0 0
  %2038 = vmatprep.subr.bf16.mxu0 0
  %2039 = vmatpush1.bf16.msra.mxu0 0
  %2040 = vmatprep.subr.bf16.mxu0 0
  %2041 = vmatpush1.bf16.msra.mxu0 0
  %2042 = vmatprep.subr.bf16.mxu0 0
  %2043 = vmatpush1.bf16.msra.mxu0 0
  %2044 = vmatprep.subr.bf16.mxu0 0
  %2045 = vmatpush1.bf16.msra.mxu0 0
  %2046 = vmatprep.subr.bf16.mxu0 0
  %2047 = vmatpush1.bf16.msra.mxu0 0
  %2048 = vmatprep.subr.bf16.mxu0 0
  %2049 = vmatpush1.bf16.msra.mxu0 0
  %2050 = vmatprep.subr.bf16.mxu0 0
  %2051 = vmatpush1.bf16.msra.mxu0 0
  %2052 = vmatprep.subr.bf16.mxu0 0
  %2053 = vmatpush1.bf16.msra.mxu0 0
  %2054 = vmatprep.subr.bf16.mxu0 0
  %2055 = vmatpush1.bf16.msra.mxu0 0
  %2056 = vmatprep.subr.bf16.mxu0 0
  %2057 = vmatpush1.bf16.msra.mxu0 0
  %2058 = vmatprep.subr.bf16.mxu0 0
  %2059 = vmatpush1.bf16.msra.mxu0 0
  %2060 = vmatprep.mubr.bf16.mxu0 0
  %2061 = vmatmul.mubr.bf16.gmra.mrb[0].mxu0 %v2026
  %v2062 = vpop.f32.mrb[0].mxu0
  %v2063 = vadd.f32 0.0, %v2062
  %v2064 = vpop.f32.mrb[0].mxu0
  %v2065 = vadd.f32 0.0, %v2064
  %v2066 = vpop.f32.mrb[0].mxu0
  %v2067 = vadd.f32 0.0, %v2066
  %v2068 = vpop.f32.mrb[0].mxu0
  %v2069 = vadd.f32 0.0, %v2068
  %2070 = vdwg.mxu0
  %2071 = vmatprep.subr.bf16.mxu0 %v2018
  %2072 = vmatpush1.bf16.msra.mxu0 %v2017
  %2073 = vmatprep.subr.bf16.mxu0 0
  %2074 = vmatpush1.bf16.msra.mxu0 0
  %2075 = vmatprep.subr.bf16.mxu0 0
  %2076 = vmatpush1.bf16.msra.mxu0 0
  %2077 = vmatprep.subr.bf16.mxu0 0
  %2078 = vmatpush1.bf16.msra.mxu0 0
  %2079 = vmatprep.subr.bf16.mxu0 0
  %2080 = vmatpush1.bf16.msra.mxu0 0
  %2081 = vmatprep.subr.bf16.mxu0 0
  %2082 = vmatpush1.bf16.msra.mxu0 0
  %2083 = vmatprep.subr.bf16.mxu0 0
  %2084 = vmatpush1.bf16.msra.mxu0 0
  %2085 = vmatprep.subr.bf16.mxu0 0
  %2086 = vmatpush1.bf16.msra.mxu0 0
  %2087 = vmatprep.subr.bf16.mxu0 0
  %2088 = vmatpush1.bf16.msra.mxu0 0
  %2089 = vmatprep.subr.bf16.mxu0 0
  %2090 = vmatpush1.bf16.msra.mxu0 0
  %2091 = vmatprep.subr.bf16.mxu0 0
  %2092 = vmatpush1.bf16.msra.mxu0 0
  %2093 = vmatprep.subr.bf16.mxu0 0
  %2094 = vmatpush1.bf16.msra.mxu0 0
  %2095 = vmatprep.subr.bf16.mxu0 0
  %2096 = vmatpush1.bf16.msra.mxu0 0
  %2097 = vmatprep.subr.bf16.mxu0 0
  %2098 = vmatpush1.bf16.msra.mxu0 0
  %2099 = vmatprep.subr.bf16.mxu0 0
  %2100 = vmatpush1.bf16.msra.mxu0 0
  %2101 = vmatprep.subr.bf16.mxu0 0
  %2102 = vmatpush1.bf16.msra.mxu0 0
  %2103 = vmatprep.mubr.bf16.mxu0 0
  %2104 = vmatmul.mubr.bf16.gmra.mrb[0].mxu0 %v2026
  %v2105 = vpop.f32.mrb[0].mxu0
  %v2106 = vadd.f32 0.0, %v2105
  %v2107 = vpop.f32.mrb[0].mxu0
  %v2108 = vadd.f32 0.0, %v2107
  %v2109 = vpop.f32.mrb[0].mxu0
  %v2110 = vadd.f32 0.0, %v2109
  %v2111 = vpop.f32.mrb[0].mxu0
  %v2112 = vadd.f32 0.0, %v2111
  %2113 = vdwg.mxu0
  %2114 = vmatprep.subr.bf16.mxu0 0
  %2115 = vmatpush1.bf16.msra.mxu0 %v2019
  %2116 = vmatprep.subr.bf16.mxu0 0
  %2117 = vmatpush1.bf16.msra.mxu0 0
  %2118 = vmatprep.subr.bf16.mxu0 0
  %2119 = vmatpush1.bf16.msra.mxu0 0
  %2120 = vmatprep.subr.bf16.mxu0 0
  %2121 = vmatpush1.bf16.msra.mxu0 0
  %2122 = vmatprep.subr.bf16.mxu0 0
  %2123 = vmatpush1.bf16.msra.mxu0 0
  %2124 = vmatprep.subr.bf16.mxu0 0
  %2125 = vmatpush1.bf16.msra.mxu0 0
  %2126 = vmatprep.subr.bf16.mxu0 0
  %2127 = vmatpush1.bf16.msra.mxu0 0
  %2128 = vmatprep.subr.bf16.mxu0 0
  %2129 = vmatpush1.bf16.msra.mxu0 0
  %2130 = vmatprep.subr.bf16.mxu0 0
  %2131 = vmatpush1.bf16.msra.mxu0 0
  %2132 = vmatprep.subr.bf16.mxu0 0
  %2133 = vmatpush1.bf16.msra.mxu0 0
  %2134 = vmatprep.subr.bf16.mxu0 0
  %2135 = vmatpush1.bf16.msra.mxu0 0
  %2136 = vmatprep.subr.bf16.mxu0 0
  %2137 = vmatpush1.bf16.msra.mxu0 0
  %2138 = vmatprep.subr.bf16.mxu0 0
  %2139 = vmatpush1.bf16.msra.mxu0 0
  %2140 = vmatprep.subr.bf16.mxu0 0
  %2141 = vmatpush1.bf16.msra.mxu0 0
  %2142 = vmatprep.subr.bf16.mxu0 0
  %2143 = vmatpush1.bf16.msra.mxu0 0
  %2144 = vmatprep.subr.bf16.mxu0 0
  %2145 = vmatpush1.bf16.msra.mxu0 0
  %2146 = vmatprep.mubr.bf16.mxu0 0
  %2147 = vmatmul.mubr.bf16.gmra.mrb[0].mxu0 %v2026
  %v2148 = vpop.f32.mrb[0].mxu0
  %v2149 = vadd.f32 0.0, %v2148
  %v2150 = vpop.f32.mrb[0].mxu0
  %v2151 = vpop.f32.mrb[0].mxu0
  %v2152 = vadd.f32 0.0, %v2151
  %v2153 = vpop.f32.mrb[0].mxu0
  %2154 = vdwg.mxu0
  %v2155 = vadd.f32 %v1903, %v2063
  %v2156 = vadd.f32 %v1905, %v2065
  %v2157 = vadd.f32 %v1946, %v2106
  %v2158 = vadd.f32 %v1948, %v2108
  %v2159 = vadd.f32 %v1989, %v2149
  %v2160 = vadd.f32 %v1907, %v2067
  %v2161 = vadd.f32 %v1909, %v2069
  %v2162 = vadd.f32 %v1950, %v2110
  %v2163 = vadd.f32 %v1952, %v2112
  %v2164 = vadd.f32 %v1992, %v2152
  %s2165 = scalar_lea.vmem %s1, 96
  %v2166 = vld [vmem:[%s2165] sm:$0xf]
  %v2167 = vld [vmem:[%s2165 + $0x4] sm:$0xf]
  %v2170 = vunpack.c.l.b16 %v2166
  %v2171 = vunpack.c.l.b16 %v2167
  %v2172 = vpack.c.b16 %v2171, %v2170
  %2173 = vrot.lane.b32.xlu0 %v1663, 1
  %v2174 = vpop.permute.xlu0 %2173
  %2175 = vrot.lane.b32.xlu0 %v1664, 1
  %v2176 = vpop.permute.xlu0 %2175
  %2177 = vrot.lane.b32.xlu0 %v1665, 1
  %v2178 = vpop.permute.xlu0 %2177
  %2179 = vrot.lane.b32.xlu0 %v1666, 1
  %v2180 = vpop.permute.xlu0 %2179
  %2181 = vrot.lane.b32.xlu0 %v1667, 1
  %v2182 = vpop.permute.xlu0 %2181
  %2183 = vrot.lane.b32.xlu0 %v1668, 1
  %v2184 = vpop.permute.xlu0 %2183
  %v2185 = vsel %vm614, %v2174, %v2176
  %v2186 = vsel %vm614, %v2176, %v2178
  %v2187 = vsel %vm614, %v2178, %v2180
  %v2188 = vsel %vm614, %v2180, %v2182
  %v2189 = vsel %vm614, %v2182, %v2184
  %v2196 = vsel %vm134, %v2172, 0
  %2198 = vmatprep.subr.bf16.mxu0 %v2186
  %2199 = vmatpush1.bf16.msra.mxu0 %v2185
  %2200 = vmatprep.subr.bf16.mxu0 0
  %2201 = vmatpush1.bf16.msra.mxu0 0
  %2202 = vmatprep.subr.bf16.mxu0 0
  %2203 = vmatpush1.bf16.msra.mxu0 0
  %2204 = vmatprep.subr.bf16.mxu0 0
  %2205 = vmatpush1.bf16.msra.mxu0 0
  %2206 = vmatprep.subr.bf16.mxu0 0
  %2207 = vmatpush1.bf16.msra.mxu0 0
  %2208 = vmatprep.subr.bf16.mxu0 0
  %2209 = vmatpush1.bf16.msra.mxu0 0
  %2210 = vmatprep.subr.bf16.mxu0 0
  %2211 = vmatpush1.bf16.msra.mxu0 0
  %2212 = vmatprep.subr.bf16.mxu0 0
  %2213 = vmatpush1.bf16.msra.mxu0 0
  %2214 = vmatprep.subr.bf16.mxu0 0
  %2215 = vmatpush1.bf16.msra.mxu0 0
  %2216 = vmatprep.subr.bf16.mxu0 0
  %2217 = vmatpush1.bf16.msra.mxu0 0
  %2218 = vmatprep.subr.bf16.mxu0 0
  %2219 = vmatpush1.bf16.msra.mxu0 0
  %2220 = vmatprep.subr.bf16.mxu0 0
  %2221 = vmatpush1.bf16.msra.mxu0 0
  %2222 = vmatprep.subr.bf16.mxu0 0
  %2223 = vmatpush1.bf16.msra.mxu0 0
  %2224 = vmatprep.subr.bf16.mxu0 0
  %2225 = vmatpush1.bf16.msra.mxu0 0
  %2226 = vmatprep.subr.bf16.mxu0 0
  %2227 = vmatpush1.bf16.msra.mxu0 0
  %2228 = vmatprep.subr.bf16.mxu0 0
  %2229 = vmatpush1.bf16.msra.mxu0 0
  %2230 = vmatprep.mubr.bf16.mxu0 0
  %2231 = vmatmul.mubr.bf16.gmra.mrb[0].mxu0 %v2196
  %v2232 = vpop.f32.mrb[0].mxu0
  %v2233 = vadd.f32 0.0, %v2232
  %v2234 = vpop.f32.mrb[0].mxu0
  %v2235 = vadd.f32 0.0, %v2234
  %v2236 = vpop.f32.mrb[0].mxu0
  %v2237 = vadd.f32 0.0, %v2236
  %v2238 = vpop.f32.mrb[0].mxu0
  %v2239 = vadd.f32 0.0, %v2238
  %2240 = vdwg.mxu0
  %2241 = vmatprep.subr.bf16.mxu0 %v2188
  %2242 = vmatpush1.bf16.msra.mxu0 %v2187
  %2243 = vmatprep.subr.bf16.mxu0 0
  %2244 = vmatpush1.bf16.msra.mxu0 0
  %2245 = vmatprep.subr.bf16.mxu0 0
  %2246 = vmatpush1.bf16.msra.mxu0 0
  %2247 = vmatprep.subr.bf16.mxu0 0
  %2248 = vmatpush1.bf16.msra.mxu0 0
  %2249 = vmatprep.subr.bf16.mxu0 0
  %2250 = vmatpush1.bf16.msra.mxu0 0
  %2251 = vmatprep.subr.bf16.mxu0 0
  %2252 = vmatpush1.bf16.msra.mxu0 0
  %2253 = vmatprep.subr.bf16.mxu0 0
  %2254 = vmatpush1.bf16.msra.mxu0 0
  %2255 = vmatprep.subr.bf16.mxu0 0
  %2256 = vmatpush1.bf16.msra.mxu0 0
  %2257 = vmatprep.subr.bf16.mxu0 0
  %2258 = vmatpush1.bf16.msra.mxu0 0
  %2259 = vmatprep.subr.bf16.mxu0 0
  %2260 = vmatpush1.bf16.msra.mxu0 0
  %2261 = vmatprep.subr.bf16.mxu0 0
  %2262 = vmatpush1.bf16.msra.mxu0 0
  %2263 = vmatprep.subr.bf16.mxu0 0
  %2264 = vmatpush1.bf16.msra.mxu0 0
  %2265 = vmatprep.subr.bf16.mxu0 0
  %2266 = vmatpush1.bf16.msra.mxu0 0
  %2267 = vmatprep.subr.bf16.mxu0 0
  %2268 = vmatpush1.bf16.msra.mxu0 0
  %2269 = vmatprep.subr.bf16.mxu0 0
  %2270 = vmatpush1.bf16.msra.mxu0 0
  %2271 = vmatprep.subr.bf16.mxu0 0
  %2272 = vmatpush1.bf16.msra.mxu0 0
  %2273 = vmatprep.mubr.bf16.mxu0 0
  %2274 = vmatmul.mubr.bf16.gmra.mrb[0].mxu0 %v2196
  %v2275 = vpop.f32.mrb[0].mxu0
  %v2276 = vadd.f32 0.0, %v2275
  %v2277 = vpop.f32.mrb[0].mxu0
  %v2278 = vadd.f32 0.0, %v2277
  %v2279 = vpop.f32.mrb[0].mxu0
  %v2280 = vadd.f32 0.0, %v2279
  %v2281 = vpop.f32.mrb[0].mxu0
  %v2282 = vadd.f32 0.0, %v2281
  %2283 = vdwg.mxu0
  %2284 = vmatprep.subr.bf16.mxu0 0
  %2285 = vmatpush1.bf16.msra.mxu0 %v2189
  %2286 = vmatprep.subr.bf16.mxu0 0
  %2287 = vmatpush1.bf16.msra.mxu0 0
  %2288 = vmatprep.subr.bf16.mxu0 0
  %2289 = vmatpush1.bf16.msra.mxu0 0
  %2290 = vmatprep.subr.bf16.mxu0 0
  %2291 = vmatpush1.bf16.msra.mxu0 0
  %2292 = vmatprep.subr.bf16.mxu0 0
  %2293 = vmatpush1.bf16.msra.mxu0 0
  %2294 = vmatprep.subr.bf16.mxu0 0
  %2295 = vmatpush1.bf16.msra.mxu0 0
  %2296 = vmatprep.subr.bf16.mxu0 0
  %2297 = vmatpush1.bf16.msra.mxu0 0
  %2298 = vmatprep.subr.bf16.mxu0 0
  %2299 = vmatpush1.bf16.msra.mxu0 0
  %2300 = vmatprep.subr.bf16.mxu0 0
  %2301 = vmatpush1.bf16.msra.mxu0 0
  %2302 = vmatprep.subr.bf16.mxu0 0
  %2303 = vmatpush1.bf16.msra.mxu0 0
  %2304 = vmatprep.subr.bf16.mxu0 0
  %2305 = vmatpush1.bf16.msra.mxu0 0
  %2306 = vmatprep.subr.bf16.mxu0 0
  %2307 = vmatpush1.bf16.msra.mxu0 0
  %2308 = vmatprep.subr.bf16.mxu0 0
  %2309 = vmatpush1.bf16.msra.mxu0 0
  %2310 = vmatprep.subr.bf16.mxu0 0
  %2311 = vmatpush1.bf16.msra.mxu0 0
  %2312 = vmatprep.subr.bf16.mxu0 0
  %2313 = vmatpush1.bf16.msra.mxu0 0
  %2314 = vmatprep.subr.bf16.mxu0 0
  %2315 = vmatpush1.bf16.msra.mxu0 0
  %2316 = vmatprep.mubr.bf16.mxu0 0
  %2317 = vmatmul.mubr.bf16.gmra.mrb[0].mxu0 %v2196
  %v2318 = vpop.f32.mrb[0].mxu0
  %v2319 = vadd.f32 0.0, %v2318
  %v2320 = vpop.f32.mrb[0].mxu0
  %v2321 = vpop.f32.mrb[0].mxu0
  %v2322 = vadd.f32 0.0, %v2321
  %v2323 = vpop.f32.mrb[0].mxu0
  %2324 = vdwg.mxu0
  %v2325 = vadd.f32 %v2155, %v2233
  %v2326 = vadd.f32 %v2156, %v2235
  %v2327 = vadd.f32 %v2157, %v2276
  %v2328 = vadd.f32 %v2158, %v2278
  %v2329 = vadd.f32 %v2159, %v2319
  %v2330 = vadd.f32 %v2160, %v2237
  %v2331 = vadd.f32 %v2161, %v2239
  %v2332 = vadd.f32 %v2162, %v2280
  %v2333 = vadd.f32 %v2163, %v2282
  %v2334 = vadd.f32 %v2164, %v2322
  %s2335 = scalar_lea.vmem %s1, 104
  %v2336 = vld [vmem:[%s2335] sm:$0xf]
  %v2337 = vld [vmem:[%s2335 + $0x4] sm:$0xf]
  %v2340 = vunpack.c.l.b16 %v2336
  %v2341 = vunpack.c.l.b16 %v2337
  %v2342 = vpack.c.b16 %v2341, %v2340
  %v2344 = vsel %vm134, %v2342, 0
  %2346 = vmatprep.subr.bf16.mxu0 %v1665
  %2347 = vmatpush1.bf16.msra.mxu0 %v1664
  %2348 = vmatprep.subr.bf16.mxu0 0
  %2349 = vmatpush1.bf16.msra.mxu0 0
  %2350 = vmatprep.subr.bf16.mxu0 0
  %2351 = vmatpush1.bf16.msra.mxu0 0
  %2352 = vmatprep.subr.bf16.mxu0 0
  %2353 = vmatpush1.bf16.msra.mxu0 0
  %2354 = vmatprep.subr.bf16.mxu0 0
  %2355 = vmatpush1.bf16.msra.mxu0 0
  %2356 = vmatprep.subr.bf16.mxu0 0
  %2357 = vmatpush1.bf16.msra.mxu0 0
  %2358 = vmatprep.subr.bf16.mxu0 0
  %2359 = vmatpush1.bf16.msra.mxu0 0
  %2360 = vmatprep.subr.bf16.mxu0 0
  %2361 = vmatpush1.bf16.msra.mxu0 0
  %2362 = vmatprep.subr.bf16.mxu0 0
  %2363 = vmatpush1.bf16.msra.mxu0 0
  %2364 = vmatprep.subr.bf16.mxu0 0
  %2365 = vmatpush1.bf16.msra.mxu0 0
  %2366 = vmatprep.subr.bf16.mxu0 0
  %2367 = vmatpush1.bf16.msra.mxu0 0
  %2368 = vmatprep.subr.bf16.mxu0 0
  %2369 = vmatpush1.bf16.msra.mxu0 0
  %2370 = vmatprep.subr.bf16.mxu0 0
  %2371 = vmatpush1.bf16.msra.mxu0 0
  %2372 = vmatprep.subr.bf16.mxu0 0
  %2373 = vmatpush1.bf16.msra.mxu0 0
  %2374 = vmatprep.subr.bf16.mxu0 0
  %2375 = vmatpush1.bf16.msra.mxu0 0
  %2376 = vmatprep.subr.bf16.mxu0 0
  %2377 = vmatpush1.bf16.msra.mxu0 0
  %2378 = vmatprep.mubr.bf16.mxu0 0
  %2379 = vmatmul.mubr.bf16.gmra.mrb[0].mxu0 %v2344
  %v2380 = vpop.f32.mrb[0].mxu0
  %v2381 = vadd.f32 0.0, %v2380
  %v2382 = vpop.f32.mrb[0].mxu0
  %v2383 = vadd.f32 0.0, %v2382
  %v2384 = vpop.f32.mrb[0].mxu0
  %v2385 = vadd.f32 0.0, %v2384
  %v2386 = vpop.f32.mrb[0].mxu0
  %v2387 = vadd.f32 0.0, %v2386
  %2388 = vdwg.mxu0
  %2389 = vmatprep.subr.bf16.mxu0 %v1667
  %2390 = vmatpush1.bf16.msra.mxu0 %v1666
  %2391 = vmatprep.subr.bf16.mxu0 0
  %2392 = vmatpush1.bf16.msra.mxu0 0
  %2393 = vmatprep.subr.bf16.mxu0 0
  %2394 = vmatpush1.bf16.msra.mxu0 0
  %2395 = vmatprep.subr.bf16.mxu0 0
  %2396 = vmatpush1.bf16.msra.mxu0 0
  %2397 = vmatprep.subr.bf16.mxu0 0
  %2398 = vmatpush1.bf16.msra.mxu0 0
  %2399 = vmatprep.subr.bf16.mxu0 0
  %2400 = vmatpush1.bf16.msra.mxu0 0
  %2401 = vmatprep.subr.bf16.mxu0 0
  %2402 = vmatpush1.bf16.msra.mxu0 0
  %2403 = vmatprep.subr.bf16.mxu0 0
  %2404 = vmatpush1.bf16.msra.mxu0 0
  %2405 = vmatprep.subr.bf16.mxu0 0
  %2406 = vmatpush1.bf16.msra.mxu0 0
  %2407 = vmatprep.subr.bf16.mxu0 0
  %2408 = vmatpush1.bf16.msra.mxu0 0
  %2409 = vmatprep.subr.bf16.mxu0 0
  %2410 = vmatpush1.bf16.msra.mxu0 0
  %2411 = vmatprep.subr.bf16.mxu0 0
  %2412 = vmatpush1.bf16.msra.mxu0 0
  %2413 = vmatprep.subr.bf16.mxu0 0
  %2414 = vmatpush1.bf16.msra.mxu0 0
  %2415 = vmatprep.subr.bf16.mxu0 0
  %2416 = vmatpush1.bf16.msra.mxu0 0
  %2417 = vmatprep.subr.bf16.mxu0 0
  %2418 = vmatpush1.bf16.msra.mxu0 0
  %2419 = vmatprep.subr.bf16.mxu0 0
  %2420 = vmatpush1.bf16.msra.mxu0 0
  %2421 = vmatprep.mubr.bf16.mxu0 0
  %2422 = vmatmul.mubr.bf16.gmra.mrb[0].mxu0 %v2344
  %v2423 = vpop.f32.mrb[0].mxu0
  %v2424 = vadd.f32 0.0, %v2423
  %v2425 = vpop.f32.mrb[0].mxu0
  %v2426 = vadd.f32 0.0, %v2425
  %v2427 = vpop.f32.mrb[0].mxu0
  %v2428 = vadd.f32 0.0, %v2427
  %v2429 = vpop.f32.mrb[0].mxu0
  %v2430 = vadd.f32 0.0, %v2429
  %2431 = vdwg.mxu0
  %2432 = vmatprep.subr.bf16.mxu0 0
  %2433 = vmatpush1.bf16.msra.mxu0 %v1668
  %2434 = vmatprep.subr.bf16.mxu0 0
  %2435 = vmatpush1.bf16.msra.mxu0 0
  %2436 = vmatprep.subr.bf16.mxu0 0
  %2437 = vmatpush1.bf16.msra.mxu0 0
  %2438 = vmatprep.subr.bf16.mxu0 0
  %2439 = vmatpush1.bf16.msra.mxu0 0
  %2440 = vmatprep.subr.bf16.mxu0 0
  %2441 = vmatpush1.bf16.msra.mxu0 0
  %2442 = vmatprep.subr.bf16.mxu0 0
  %2443 = vmatpush1.bf16.msra.mxu0 0
  %2444 = vmatprep.subr.bf16.mxu0 0
  %2445 = vmatpush1.bf16.msra.mxu0 0
  %2446 = vmatprep.subr.bf16.mxu0 0
  %2447 = vmatpush1.bf16.msra.mxu0 0
  %2448 = vmatprep.subr.bf16.mxu0 0
  %2449 = vmatpush1.bf16.msra.mxu0 0
  %2450 = vmatprep.subr.bf16.mxu0 0
  %2451 = vmatpush1.bf16.msra.mxu0 0
  %2452 = vmatprep.subr.bf16.mxu0 0
  %2453 = vmatpush1.bf16.msra.mxu0 0
  %2454 = vmatprep.subr.bf16.mxu0 0
  %2455 = vmatpush1.bf16.msra.mxu0 0
  %2456 = vmatprep.subr.bf16.mxu0 0
  %2457 = vmatpush1.bf16.msra.mxu0 0
  %2458 = vmatprep.subr.bf16.mxu0 0
  %2459 = vmatpush1.bf16.msra.mxu0 0
  %2460 = vmatprep.subr.bf16.mxu0 0
  %2461 = vmatpush1.bf16.msra.mxu0 0
  %2462 = vmatprep.subr.bf16.mxu0 0
  %2463 = vmatpush1.bf16.msra.mxu0 0
  %2464 = vmatprep.mubr.bf16.mxu0 0
  %2465 = vmatmul.mubr.bf16.gmra.mrb[0].mxu0 %v2344
  %v2466 = vpop.f32.mrb[0].mxu0
  %v2467 = vadd.f32 0.0, %v2466
  %v2468 = vpop.f32.mrb[0].mxu0
  %v2469 = vpop.f32.mrb[0].mxu0
  %v2470 = vadd.f32 0.0, %v2469
  %v2471 = vpop.f32.mrb[0].mxu0
  %2472 = vdwg.mxu0
  %v2473 = vadd.f32 %v2325, %v2381
  %v2474 = vadd.f32 %v2326, %v2383
  %v2475 = vadd.f32 %v2327, %v2424
  %v2476 = vadd.f32 %v2328, %v2426
  %v2477 = vadd.f32 %v2329, %v2467
  %v2478 = vadd.f32 %v2330, %v2385
  %v2479 = vadd.f32 %v2331, %v2387
  %v2480 = vadd.f32 %v2332, %v2428
  %v2481 = vadd.f32 %v2333, %v2430
  %v2482 = vadd.f32 %v2334, %v2470
  %s2483 = scalar_lea.vmem %s1, 112
  %v2484 = vld [vmem:[%s2483] sm:$0xf]
  %v2485 = vld [vmem:[%s2483 + $0x4] sm:$0xf]
  %v2488 = vunpack.c.l.b16 %v2484
  %v2489 = vunpack.c.l.b16 %v2485
  %v2490 = vpack.c.b16 %v2489, %v2488
  %2491 = vrot.lane.b32.xlu0 %v1664, 127
  %v2492 = vpop.permute.xlu0 %2491
  %2493 = vrot.lane.b32.xlu0 %v1665, 127
  %v2494 = vpop.permute.xlu0 %2493
  %2495 = vrot.lane.b32.xlu0 %v1666, 127
  %v2496 = vpop.permute.xlu0 %2495
  %2497 = vrot.lane.b32.xlu0 %v1667, 127
  %v2498 = vpop.permute.xlu0 %2497
  %2499 = vrot.lane.b32.xlu0 %v1668, 127
  %v2500 = vpop.permute.xlu0 %2499
  %v2501 = vsel %vm931, %v2492, %v2494
  %v2502 = vsel %vm931, %v2494, %v2496
  %v2503 = vsel %vm931, %v2496, %v2498
  %v2504 = vsel %vm931, %v2498, %v2500
  %v2511 = vsel %vm134, %v2490, 0
  %2513 = vmatprep.subr.bf16.mxu0 %v2502
  %2514 = vmatpush1.bf16.msra.mxu0 %v2501
  %2515 = vmatprep.subr.bf16.mxu0 0
  %2516 = vmatpush1.bf16.msra.mxu0 0
  %2517 = vmatprep.subr.bf16.mxu0 0
  %2518 = vmatpush1.bf16.msra.mxu0 0
  %2519 = vmatprep.subr.bf16.mxu0 0
  %2520 = vmatpush1.bf16.msra.mxu0 0
  %2521 = vmatprep.subr.bf16.mxu0 0
  %2522 = vmatpush1.bf16.msra.mxu0 0
  %2523 = vmatprep.subr.bf16.mxu0 0
  %2524 = vmatpush1.bf16.msra.mxu0 0
  %2525 = vmatprep.subr.bf16.mxu0 0
  %2526 = vmatpush1.bf16.msra.mxu0 0
  %2527 = vmatprep.subr.bf16.mxu0 0
  %2528 = vmatpush1.bf16.msra.mxu0 0
  %2529 = vmatprep.subr.bf16.mxu0 0
  %2530 = vmatpush1.bf16.msra.mxu0 0
  %2531 = vmatprep.subr.bf16.mxu0 0
  %2532 = vmatpush1.bf16.msra.mxu0 0
  %2533 = vmatprep.subr.bf16.mxu0 0
  %2534 = vmatpush1.bf16.msra.mxu0 0
  %2535 = vmatprep.subr.bf16.mxu0 0
  %2536 = vmatpush1.bf16.msra.mxu0 0
  %2537 = vmatprep.subr.bf16.mxu0 0
  %2538 = vmatpush1.bf16.msra.mxu0 0
  %2539 = vmatprep.subr.bf16.mxu0 0
  %2540 = vmatpush1.bf16.msra.mxu0 0
  %2541 = vmatprep.subr.bf16.mxu0 0
  %2542 = vmatpush1.bf16.msra.mxu0 0
  %2543 = vmatprep.subr.bf16.mxu0 0
  %2544 = vmatpush1.bf16.msra.mxu0 0
  %2545 = vmatprep.mubr.bf16.mxu0 0
  %2546 = vmatmul.mubr.bf16.gmra.mrb[0].mxu0 %v2511
  %v2547 = vpop.f32.mrb[0].mxu0
  %v2548 = vadd.f32 0.0, %v2547
  %v2549 = vpop.f32.mrb[0].mxu0
  %v2550 = vadd.f32 0.0, %v2549
  %v2551 = vpop.f32.mrb[0].mxu0
  %v2552 = vadd.f32 0.0, %v2551
  %v2553 = vpop.f32.mrb[0].mxu0
  %v2554 = vadd.f32 0.0, %v2553
  %2555 = vdwg.mxu0
  %2556 = vmatprep.subr.bf16.mxu0 %v2504
  %2557 = vmatpush1.bf16.msra.mxu0 %v2503
  %2558 = vmatprep.subr.bf16.mxu0 0
  %2559 = vmatpush1.bf16.msra.mxu0 0
  %2560 = vmatprep.subr.bf16.mxu0 0
  %2561 = vmatpush1.bf16.msra.mxu0 0
  %2562 = vmatprep.subr.bf16.mxu0 0
  %2563 = vmatpush1.bf16.msra.mxu0 0
  %2564 = vmatprep.subr.bf16.mxu0 0
  %2565 = vmatpush1.bf16.msra.mxu0 0
  %2566 = vmatprep.subr.bf16.mxu0 0
  %2567 = vmatpush1.bf16.msra.mxu0 0
  %2568 = vmatprep.subr.bf16.mxu0 0
  %2569 = vmatpush1.bf16.msra.mxu0 0
  %2570 = vmatprep.subr.bf16.mxu0 0
  %2571 = vmatpush1.bf16.msra.mxu0 0
  %2572 = vmatprep.subr.bf16.mxu0 0
  %2573 = vmatpush1.bf16.msra.mxu0 0
  %2574 = vmatprep.subr.bf16.mxu0 0
  %2575 = vmatpush1.bf16.msra.mxu0 0
  %2576 = vmatprep.subr.bf16.mxu0 0
  %2577 = vmatpush1.bf16.msra.mxu0 0
  %2578 = vmatprep.subr.bf16.mxu0 0
  %2579 = vmatpush1.bf16.msra.mxu0 0
  %2580 = vmatprep.subr.bf16.mxu0 0
  %2581 = vmatpush1.bf16.msra.mxu0 0
  %2582 = vmatprep.subr.bf16.mxu0 0
  %2583 = vmatpush1.bf16.msra.mxu0 0
  %2584 = vmatprep.subr.bf16.mxu0 0
  %2585 = vmatpush1.bf16.msra.mxu0 0
  %2586 = vmatprep.subr.bf16.mxu0 0
  %2587 = vmatpush1.bf16.msra.mxu0 0
  %2588 = vmatprep.mubr.bf16.mxu0 0
  %2589 = vmatmul.mubr.bf16.gmra.mrb[0].mxu0 %v2511
  %v2590 = vpop.f32.mrb[0].mxu0
  %v2591 = vadd.f32 0.0, %v2590
  %v2592 = vpop.f32.mrb[0].mxu0
  %v2593 = vadd.f32 0.0, %v2592
  %v2594 = vpop.f32.mrb[0].mxu0
  %v2595 = vadd.f32 0.0, %v2594
  %v2596 = vpop.f32.mrb[0].mxu0
  %v2597 = vadd.f32 0.0, %v2596
  %2598 = vdwg.mxu0
  %2599 = vmatprep.subr.bf16.mxu0 0
  %2600 = vmatpush1.bf16.msra.mxu0 %v2500
  %2601 = vmatprep.subr.bf16.mxu0 0
  %2602 = vmatpush1.bf16.msra.mxu0 0
  %2603 = vmatprep.subr.bf16.mxu0 0
  %2604 = vmatpush1.bf16.msra.mxu0 0
  %2605 = vmatprep.subr.bf16.mxu0 0
  %2606 = vmatpush1.bf16.msra.mxu0 0
  %2607 = vmatprep.subr.bf16.mxu0 0
  %2608 = vmatpush1.bf16.msra.mxu0 0
  %2609 = vmatprep.subr.bf16.mxu0 0
  %2610 = vmatpush1.bf16.msra.mxu0 0
  %2611 = vmatprep.subr.bf16.mxu0 0
  %2612 = vmatpush1.bf16.msra.mxu0 0
  %2613 = vmatprep.subr.bf16.mxu0 0
  %2614 = vmatpush1.bf16.msra.mxu0 0
  %2615 = vmatprep.subr.bf16.mxu0 0
  %2616 = vmatpush1.bf16.msra.mxu0 0
  %2617 = vmatprep.subr.bf16.mxu0 0
  %2618 = vmatpush1.bf16.msra.mxu0 0
  %2619 = vmatprep.subr.bf16.mxu0 0
  %2620 = vmatpush1.bf16.msra.mxu0 0
  %2621 = vmatprep.subr.bf16.mxu0 0
  %2622 = vmatpush1.bf16.msra.mxu0 0
  %2623 = vmatprep.subr.bf16.mxu0 0
  %2624 = vmatpush1.bf16.msra.mxu0 0
  %2625 = vmatprep.subr.bf16.mxu0 0
  %2626 = vmatpush1.bf16.msra.mxu0 0
  %2627 = vmatprep.subr.bf16.mxu0 0
  %2628 = vmatpush1.bf16.msra.mxu0 0
  %2629 = vmatprep.subr.bf16.mxu0 0
  %2630 = vmatpush1.bf16.msra.mxu0 0
  %2631 = vmatprep.mubr.bf16.mxu0 0
  %2632 = vmatmul.mubr.bf16.gmra.mrb[0].mxu0 %v2511
  %v2633 = vpop.f32.mrb[0].mxu0
  %v2634 = vadd.f32 0.0, %v2633
  %v2635 = vpop.f32.mrb[0].mxu0
  %v2636 = vpop.f32.mrb[0].mxu0
  %v2637 = vadd.f32 0.0, %v2636
  %v2638 = vpop.f32.mrb[0].mxu0
  %2639 = vdwg.mxu0
  %v2640 = vadd.f32 %v2473, %v2548
  %v2641 = vadd.f32 %v2474, %v2550
  %v2642 = vadd.f32 %v2475, %v2591
  %v2643 = vadd.f32 %v2476, %v2593
  %v2644 = vadd.f32 %v2477, %v2634
  %v2645 = vadd.f32 %v2478, %v2552
  %v2646 = vadd.f32 %v2479, %v2554
  %v2647 = vadd.f32 %v2480, %v2595
  %v2648 = vadd.f32 %v2481, %v2597
  %v2649 = vadd.f32 %v2482, %v2637
  %s2650 = scalar_lea.vmem %s1, 120
  %v2651 = vld [vmem:[%s2650] sm:$0xf]
  %v2652 = vld [vmem:[%s2650 + $0x4] sm:$0xf]
  %v2655 = vunpack.c.l.b16 %v2651
  %v2656 = vunpack.c.l.b16 %v2652
  %v2657 = vpack.c.b16 %v2656, %v2655
  %2658 = vrot.lane.b32.xlu0 %v1664, 112
  %v2659 = vpop.permute.xlu0 %2658
  %2660 = vrot.lane.b32.xlu0 %v1665, 112
  %v2661 = vpop.permute.xlu0 %2660
  %2662 = vrot.lane.b32.xlu0 %v1666, 112
  %v2663 = vpop.permute.xlu0 %2662
  %2664 = vrot.lane.b32.xlu0 %v1667, 112
  %v2665 = vpop.permute.xlu0 %2664
  %2666 = vrot.lane.b32.xlu0 %v1668, 112
  %v2667 = vpop.permute.xlu0 %2666
  %v2668 = vsel %vm1099, %v2659, %v2661
  %v2669 = vsel %vm1099, %v2661, %v2663
  %v2670 = vsel %vm1099, %v2663, %v2665
  %v2671 = vsel %vm1099, %v2665, %v2667
  %v2678 = vsel %vm134, %v2657, 0
  %2680 = vmatprep.subr.bf16.mxu0 %v2669
  %2681 = vmatpush1.bf16.msra.mxu0 %v2668
  %2682 = vmatprep.subr.bf16.mxu0 0
  %2683 = vmatpush1.bf16.msra.mxu0 0
  %2684 = vmatprep.subr.bf16.mxu0 0
  %2685 = vmatpush1.bf16.msra.mxu0 0
  %2686 = vmatprep.subr.bf16.mxu0 0
  %2687 = vmatpush1.bf16.msra.mxu0 0
  %2688 = vmatprep.subr.bf16.mxu0 0
  %2689 = vmatpush1.bf16.msra.mxu0 0
  %2690 = vmatprep.subr.bf16.mxu0 0
  %2691 = vmatpush1.bf16.msra.mxu0 0
  %2692 = vmatprep.subr.bf16.mxu0 0
  %2693 = vmatpush1.bf16.msra.mxu0 0
  %2694 = vmatprep.subr.bf16.mxu0 0
  %2695 = vmatpush1.bf16.msra.mxu0 0
  %2696 = vmatprep.subr.bf16.mxu0 0
  %2697 = vmatpush1.bf16.msra.mxu0 0
  %2698 = vmatprep.subr.bf16.mxu0 0
  %2699 = vmatpush1.bf16.msra.mxu0 0
  %2700 = vmatprep.subr.bf16.mxu0 0
  %2701 = vmatpush1.bf16.msra.mxu0 0
  %2702 = vmatprep.subr.bf16.mxu0 0
  %2703 = vmatpush1.bf16.msra.mxu0 0
  %2704 = vmatprep.subr.bf16.mxu0 0
  %2705 = vmatpush1.bf16.msra.mxu0 0
  %2706 = vmatprep.subr.bf16.mxu0 0
  %2707 = vmatpush1.bf16.msra.mxu0 0
  %2708 = vmatprep.subr.bf16.mxu0 0
  %2709 = vmatpush1.bf16.msra.mxu0 0
  %2710 = vmatprep.subr.bf16.mxu0 0
  %2711 = vmatpush1.bf16.msra.mxu0 0
  %2712 = vmatprep.mubr.bf16.mxu0 0
  %2713 = vmatmul.mubr.bf16.gmra.mrb[0].mxu0 %v2678
  %v2714 = vpop.f32.mrb[0].mxu0
  %v2715 = vadd.f32 0.0, %v2714
  %v2716 = vpop.f32.mrb[0].mxu0
  %v2717 = vadd.f32 0.0, %v2716
  %v2718 = vpop.f32.mrb[0].mxu0
  %v2719 = vadd.f32 0.0, %v2718
  %v2720 = vpop.f32.mrb[0].mxu0
  %v2721 = vadd.f32 0.0, %v2720
  %2722 = vdwg.mxu0
  %2723 = vmatprep.subr.bf16.mxu0 %v2671
  %2724 = vmatpush1.bf16.msra.mxu0 %v2670
  %2725 = vmatprep.subr.bf16.mxu0 0
  %2726 = vmatpush1.bf16.msra.mxu0 0
  %2727 = vmatprep.subr.bf16.mxu0 0
  %2728 = vmatpush1.bf16.msra.mxu0 0
  %2729 = vmatprep.subr.bf16.mxu0 0
  %2730 = vmatpush1.bf16.msra.mxu0 0
  %2731 = vmatprep.subr.bf16.mxu0 0
  %2732 = vmatpush1.bf16.msra.mxu0 0
  %2733 = vmatprep.subr.bf16.mxu0 0
  %2734 = vmatpush1.bf16.msra.mxu0 0
  %2735 = vmatprep.subr.bf16.mxu0 0
  %2736 = vmatpush1.bf16.msra.mxu0 0
  %2737 = vmatprep.subr.bf16.mxu0 0
  %2738 = vmatpush1.bf16.msra.mxu0 0
  %2739 = vmatprep.subr.bf16.mxu0 0
  %2740 = vmatpush1.bf16.msra.mxu0 0
  %2741 = vmatprep.subr.bf16.mxu0 0
  %2742 = vmatpush1.bf16.msra.mxu0 0
  %2743 = vmatprep.subr.bf16.mxu0 0
  %2744 = vmatpush1.bf16.msra.mxu0 0
  %2745 = vmatprep.subr.bf16.mxu0 0
  %2746 = vmatpush1.bf16.msra.mxu0 0
  %2747 = vmatprep.subr.bf16.mxu0 0
  %2748 = vmatpush1.bf16.msra.mxu0 0
  %2749 = vmatprep.subr.bf16.mxu0 0
  %2750 = vmatpush1.bf16.msra.mxu0 0
  %2751 = vmatprep.subr.bf16.mxu0 0
  %2752 = vmatpush1.bf16.msra.mxu0 0
  %2753 = vmatprep.subr.bf16.mxu0 0
  %2754 = vmatpush1.bf16.msra.mxu0 0
  %2755 = vmatprep.mubr.bf16.mxu0 0
  %2756 = vmatmul.mubr.bf16.gmra.mrb[0].mxu0 %v2678
  %v2757 = vpop.f32.mrb[0].mxu0
  %v2758 = vadd.f32 0.0, %v2757
  %v2759 = vpop.f32.mrb[0].mxu0
  %v2760 = vadd.f32 0.0, %v2759
  %v2761 = vpop.f32.mrb[0].mxu0
  %v2762 = vadd.f32 0.0, %v2761
  %v2763 = vpop.f32.mrb[0].mxu0
  %v2764 = vadd.f32 0.0, %v2763
  %2765 = vdwg.mxu0
  %2766 = vmatprep.subr.bf16.mxu0 0
  %2767 = vmatpush1.bf16.msra.mxu0 %v2667
  %2768 = vmatprep.subr.bf16.mxu0 0
  %2769 = vmatpush1.bf16.msra.mxu0 0
  %2770 = vmatprep.subr.bf16.mxu0 0
  %2771 = vmatpush1.bf16.msra.mxu0 0
  %2772 = vmatprep.subr.bf16.mxu0 0
  %2773 = vmatpush1.bf16.msra.mxu0 0
  %2774 = vmatprep.subr.bf16.mxu0 0
  %2775 = vmatpush1.bf16.msra.mxu0 0
  %2776 = vmatprep.subr.bf16.mxu0 0
  %2777 = vmatpush1.bf16.msra.mxu0 0
  %2778 = vmatprep.subr.bf16.mxu0 0
  %2779 = vmatpush1.bf16.msra.mxu0 0
  %2780 = vmatprep.subr.bf16.mxu0 0
  %2781 = vmatpush1.bf16.msra.mxu0 0
  %2782 = vmatprep.subr.bf16.mxu0 0
  %2783 = vmatpush1.bf16.msra.mxu0 0
  %2784 = vmatprep.subr.bf16.mxu0 0
  %2785 = vmatpush1.bf16.msra.mxu0 0
  %2786 = vmatprep.subr.bf16.mxu0 0
  %2787 = vmatpush1.bf16.msra.mxu0 0
  %2788 = vmatprep.subr.bf16.mxu0 0
  %2789 = vmatpush1.bf16.msra.mxu0 0
  %2790 = vmatprep.subr.bf16.mxu0 0
  %2791 = vmatpush1.bf16.msra.mxu0 0
  %2792 = vmatprep.subr.bf16.mxu0 0
  %2793 = vmatpush1.bf16.msra.mxu0 0
  %2794 = vmatprep.subr.bf16.mxu0 0
  %2795 = vmatpush1.bf16.msra.mxu0 0
  %2796 = vmatprep.subr.bf16.mxu0 0
  %2797 = vmatpush1.bf16.msra.mxu0 0
  %2798 = vmatprep.mubr.bf16.mxu0 0
  %2799 = vmatmul.mubr.bf16.gmra.mrb[0].mxu0 %v2678
  %v2800 = vpop.f32.mrb[0].mxu0
  %v2801 = vadd.f32 0.0, %v2800
  %v2802 = vpop.f32.mrb[0].mxu0
  %v2803 = vpop.f32.mrb[0].mxu0
  %v2804 = vadd.f32 0.0, %v2803
  %v2805 = vpop.f32.mrb[0].mxu0
  %2806 = vdwg.mxu0
  %v2807 = vadd.f32 %v2640, %v2715
  %v2808 = vadd.f32 %v2641, %v2717
  %v2809 = vadd.f32 %v2642, %v2758
  %v2810 = vadd.f32 %v2643, %v2760
  %v2811 = vadd.f32 %v2644, %v2801
  %v2812 = vadd.f32 %v2645, %v2719
  %v2813 = vadd.f32 %v2646, %v2721
  %v2814 = vadd.f32 %v2647, %v2762
  %v2815 = vadd.f32 %v2648, %v2764
  %v2816 = vadd.f32 %v2649, %v2804
  %s2817 = scalar_lea.vmem %s1, 128
  %v2818 = vld [vmem:[%s2817] sm:$0xf]
  %v2819 = vld [vmem:[%s2817 + $0x4] sm:$0xf]
  %v2822 = vunpack.c.l.b16 %v2818
  %v2823 = vunpack.c.l.b16 %v2819
  %v2824 = vpack.c.b16 %v2823, %v2822
  %2825 = vrot.lane.b32.xlu0 %v1664, 111
  %v2826 = vpop.permute.xlu0 %2825
  %2827 = vrot.lane.b32.xlu0 %v1665, 111
  %v2828 = vpop.permute.xlu0 %2827
  %2829 = vrot.lane.b32.xlu0 %v1666, 111
  %v2830 = vpop.permute.xlu0 %2829
  %2831 = vrot.lane.b32.xlu0 %v1667, 111
  %v2832 = vpop.permute.xlu0 %2831
  %2833 = vrot.lane.b32.xlu0 %v1668, 111
  %v2834 = vpop.permute.xlu0 %2833
  %v2835 = vsel %vm1267, %v2826, %v2828
  %v2836 = vsel %vm1267, %v2828, %v2830
  %v2837 = vsel %vm1267, %v2830, %v2832
  %v2838 = vsel %vm1267, %v2832, %v2834
  %v2845 = vsel %vm134, %v2824, 0
  %2847 = vmatprep.subr.bf16.mxu0 %v2836
  %2848 = vmatpush1.bf16.msra.mxu0 %v2835
  %2849 = vmatprep.subr.bf16.mxu0 0
  %2850 = vmatpush1.bf16.msra.mxu0 0
  %2851 = vmatprep.subr.bf16.mxu0 0
  %2852 = vmatpush1.bf16.msra.mxu0 0
  %2853 = vmatprep.subr.bf16.mxu0 0
  %2854 = vmatpush1.bf16.msra.mxu0 0
  %2855 = vmatprep.subr.bf16.mxu0 0
  %2856 = vmatpush1.bf16.msra.mxu0 0
  %2857 = vmatprep.subr.bf16.mxu0 0
  %2858 = vmatpush1.bf16.msra.mxu0 0
  %2859 = vmatprep.subr.bf16.mxu0 0
  %2860 = vmatpush1.bf16.msra.mxu0 0
  %2861 = vmatprep.subr.bf16.mxu0 0
  %2862 = vmatpush1.bf16.msra.mxu0 0
  %2863 = vmatprep.subr.bf16.mxu0 0
  %2864 = vmatpush1.bf16.msra.mxu0 0
  %2865 = vmatprep.subr.bf16.mxu0 0
  %2866 = vmatpush1.bf16.msra.mxu0 0
  %2867 = vmatprep.subr.bf16.mxu0 0
  %2868 = vmatpush1.bf16.msra.mxu0 0
  %2869 = vmatprep.subr.bf16.mxu0 0
  %2870 = vmatpush1.bf16.msra.mxu0 0
  %2871 = vmatprep.subr.bf16.mxu0 0
  %2872 = vmatpush1.bf16.msra.mxu0 0
  %2873 = vmatprep.subr.bf16.mxu0 0
  %2874 = vmatpush1.bf16.msra.mxu0 0
  %2875 = vmatprep.subr.bf16.mxu0 0
  %2876 = vmatpush1.bf16.msra.mxu0 0
  %2877 = vmatprep.subr.bf16.mxu0 0
  %2878 = vmatpush1.bf16.msra.mxu0 0
  %2879 = vmatprep.mubr.bf16.mxu0 0
  %2880 = vmatmul.mubr.bf16.gmra.mrb[0].mxu0 %v2845
  %v2881 = vpop.f32.mrb[0].mxu0
  %v2882 = vadd.f32 0.0, %v2881
  %v2883 = vpop.f32.mrb[0].mxu0
  %v2884 = vadd.f32 0.0, %v2883
  %v2885 = vpop.f32.mrb[0].mxu0
  %v2886 = vadd.f32 0.0, %v2885
  %v2887 = vpop.f32.mrb[0].mxu0
  %v2888 = vadd.f32 0.0, %v2887
  %2889 = vdwg.mxu0
  %2890 = vmatprep.subr.bf16.mxu0 %v2838
  %2891 = vmatpush1.bf16.msra.mxu0 %v2837
  %2892 = vmatprep.subr.bf16.mxu0 0
  %2893 = vmatpush1.bf16.msra.mxu0 0
  %2894 = vmatprep.subr.bf16.mxu0 0
  %2895 = vmatpush1.bf16.msra.mxu0 0
  %2896 = vmatprep.subr.bf16.mxu0 0
  %2897 = vmatpush1.bf16.msra.mxu0 0
  %2898 = vmatprep.subr.bf16.mxu0 0
  %2899 = vmatpush1.bf16.msra.mxu0 0
  %2900 = vmatprep.subr.bf16.mxu0 0
  %2901 = vmatpush1.bf16.msra.mxu0 0
  %2902 = vmatprep.subr.bf16.mxu0 0
  %2903 = vmatpush1.bf16.msra.mxu0 0
  %2904 = vmatprep.subr.bf16.mxu0 0
  %2905 = vmatpush1.bf16.msra.mxu0 0
  %2906 = vmatprep.subr.bf16.mxu0 0
  %2907 = vmatpush1.bf16.msra.mxu0 0
  %2908 = vmatprep.subr.bf16.mxu0 0
  %2909 = vmatpush1.bf16.msra.mxu0 0
  %2910 = vmatprep.subr.bf16.mxu0 0
  %2911 = vmatpush1.bf16.msra.mxu0 0
  %2912 = vmatprep.subr.bf16.mxu0 0
  %2913 = vmatpush1.bf16.msra.mxu0 0
  %2914 = vmatprep.subr.bf16.mxu0 0
  %2915 = vmatpush1.bf16.msra.mxu0 0
  %2916 = vmatprep.subr.bf16.mxu0 0
  %2917 = vmatpush1.bf16.msra.mxu0 0
  %2918 = vmatprep.subr.bf16.mxu0 0
  %2919 = vmatpush1.bf16.msra.mxu0 0
  %2920 = vmatprep.subr.bf16.mxu0 0
  %2921 = vmatpush1.bf16.msra.mxu0 0
  %2922 = vmatprep.mubr.bf16.mxu0 0
  %2923 = vmatmul.mubr.bf16.gmra.mrb[0].mxu0 %v2845
  %v2924 = vpop.f32.mrb[0].mxu0
  %v2925 = vadd.f32 0.0, %v2924
  %v2926 = vpop.f32.mrb[0].mxu0
  %v2927 = vadd.f32 0.0, %v2926
  %v2928 = vpop.f32.mrb[0].mxu0
  %v2929 = vadd.f32 0.0, %v2928
  %v2930 = vpop.f32.mrb[0].mxu0
  %v2931 = vadd.f32 0.0, %v2930
  %2932 = vdwg.mxu0
  %2933 = vmatprep.subr.bf16.mxu0 0
  %2934 = vmatpush1.bf16.msra.mxu0 %v2834
  %2935 = vmatprep.subr.bf16.mxu0 0
  %2936 = vmatpush1.bf16.msra.mxu0 0
  %2937 = vmatprep.subr.bf16.mxu0 0
  %2938 = vmatpush1.bf16.msra.mxu0 0
  %2939 = vmatprep.subr.bf16.mxu0 0
  %2940 = vmatpush1.bf16.msra.mxu0 0
  %2941 = vmatprep.subr.bf16.mxu0 0
  %2942 = vmatpush1.bf16.msra.mxu0 0
  %2943 = vmatprep.subr.bf16.mxu0 0
  %2944 = vmatpush1.bf16.msra.mxu0 0
  %2945 = vmatprep.subr.bf16.mxu0 0
  %2946 = vmatpush1.bf16.msra.mxu0 0
  %2947 = vmatprep.subr.bf16.mxu0 0
  %2948 = vmatpush1.bf16.msra.mxu0 0
  %2949 = vmatprep.subr.bf16.mxu0 0
  %2950 = vmatpush1.bf16.msra.mxu0 0
  %2951 = vmatprep.subr.bf16.mxu0 0
  %2952 = vmatpush1.bf16.msra.mxu0 0
  %2953 = vmatprep.subr.bf16.mxu0 0
  %2954 = vmatpush1.bf16.msra.mxu0 0
  %2955 = vmatprep.subr.bf16.mxu0 0
  %2956 = vmatpush1.bf16.msra.mxu0 0
  %2957 = vmatprep.subr.bf16.mxu0 0
  %2958 = vmatpush1.bf16.msra.mxu0 0
  %2959 = vmatprep.subr.bf16.mxu0 0
  %2960 = vmatpush1.bf16.msra.mxu0 0
  %2961 = vmatprep.subr.bf16.mxu0 0
  %2962 = vmatpush1.bf16.msra.mxu0 0
  %2963 = vmatprep.subr.bf16.mxu0 0
  %2964 = vmatpush1.bf16.msra.mxu0 0
  %2965 = vmatprep.mubr.bf16.mxu0 0
  %2966 = vmatmul.mubr.bf16.gmra.mrb[0].mxu0 %v2845
  %v2967 = vpop.f32.mrb[0].mxu0
  %v2968 = vadd.f32 0.0, %v2967
  %v2969 = vpop.f32.mrb[0].mxu0
  %v2970 = vpop.f32.mrb[0].mxu0
  %v2971 = vadd.f32 0.0, %v2970
  %v2972 = vpop.f32.mrb[0].mxu0
  %2973 = vdwg.mxu0
  %v2974 = vadd.f32 %v2807, %v2882
  %v2975 = vadd.f32 %v2808, %v2884
  %v2976 = vadd.f32 %v2809, %v2925
  %v2977 = vadd.f32 %v2810, %v2927
  %v2978 = vadd.f32 %v2811, %v2968
  %v2979 = vadd.f32 %v2812, %v2886
  %v2980 = vadd.f32 %v2813, %v2888
  %v2981 = vadd.f32 %v2814, %v2929
  %v2982 = vadd.f32 %v2815, %v2931
  %v2983 = vadd.f32 %v2816, %v2971
  %s2984 = scalar_lea.vmem %s1, 136
  %v2985 = vld [vmem:[%s2984] sm:$0xf]
  %v2986 = vld [vmem:[%s2984 + $0x4] sm:$0xf]
  %v2989 = vunpack.c.l.b16 %v2985
  %v2990 = vunpack.c.l.b16 %v2986
  %v2991 = vpack.c.b16 %v2990, %v2989
  %2992 = vrot.lane.b32.xlu0 %v1664, 110
  %v2993 = vpop.permute.xlu0 %2992
  %2994 = vrot.lane.b32.xlu0 %v1665, 110
  %v2995 = vpop.permute.xlu0 %2994
  %2996 = vrot.lane.b32.xlu0 %v1666, 110
  %v2997 = vpop.permute.xlu0 %2996
  %2998 = vrot.lane.b32.xlu0 %v1667, 110
  %v2999 = vpop.permute.xlu0 %2998
  %3000 = vrot.lane.b32.xlu0 %v1668, 110
  %v3001 = vpop.permute.xlu0 %3000
  %v3002 = vsel %vm1435, %v2993, %v2995
  %v3003 = vsel %vm1435, %v2995, %v2997
  %v3004 = vsel %vm1435, %v2997, %v2999
  %v3005 = vsel %vm1435, %v2999, %v3001
  %v3012 = vsel %vm134, %v2991, 0
  %3014 = vmatprep.subr.bf16.mxu0 %v3003
  %3015 = vmatpush1.bf16.msra.mxu0 %v3002
  %3016 = vmatprep.subr.bf16.mxu0 0
  %3017 = vmatpush1.bf16.msra.mxu0 0
  %3018 = vmatprep.subr.bf16.mxu0 0
  %3019 = vmatpush1.bf16.msra.mxu0 0
  %3020 = vmatprep.subr.bf16.mxu0 0
  %3021 = vmatpush1.bf16.msra.mxu0 0
  %3022 = vmatprep.subr.bf16.mxu0 0
  %3023 = vmatpush1.bf16.msra.mxu0 0
  %3024 = vmatprep.subr.bf16.mxu0 0
  %3025 = vmatpush1.bf16.msra.mxu0 0
  %3026 = vmatprep.subr.bf16.mxu0 0
  %3027 = vmatpush1.bf16.msra.mxu0 0
  %3028 = vmatprep.subr.bf16.mxu0 0
  %3029 = vmatpush1.bf16.msra.mxu0 0
  %3030 = vmatprep.subr.bf16.mxu0 0
  %3031 = vmatpush1.bf16.msra.mxu0 0
  %3032 = vmatprep.subr.bf16.mxu0 0
  %3033 = vmatpush1.bf16.msra.mxu0 0
  %3034 = vmatprep.subr.bf16.mxu0 0
  %3035 = vmatpush1.bf16.msra.mxu0 0
  %3036 = vmatprep.subr.bf16.mxu0 0
  %3037 = vmatpush1.bf16.msra.mxu0 0
  %3038 = vmatprep.subr.bf16.mxu0 0
  %3039 = vmatpush1.bf16.msra.mxu0 0
  %3040 = vmatprep.subr.bf16.mxu0 0
  %3041 = vmatpush1.bf16.msra.mxu0 0
  %3042 = vmatprep.subr.bf16.mxu0 0
  %3043 = vmatpush1.bf16.msra.mxu0 0
  %3044 = vmatprep.subr.bf16.mxu0 0
  %3045 = vmatpush1.bf16.msra.mxu0 0
  %3046 = vmatprep.mubr.bf16.mxu0 0
  %3047 = vmatmul.mubr.bf16.gmra.mrb[0].mxu0 %v3012
  %v3048 = vpop.f32.mrb[0].mxu0
  %v3049 = vadd.f32 0.0, %v3048
  %v3050 = vpop.f32.mrb[0].mxu0
  %v3051 = vadd.f32 0.0, %v3050
  %v3052 = vpop.f32.mrb[0].mxu0
  %v3053 = vadd.f32 0.0, %v3052
  %v3054 = vpop.f32.mrb[0].mxu0
  %v3055 = vadd.f32 0.0, %v3054
  %3056 = vdwg.mxu0
  %3057 = vmatprep.subr.bf16.mxu0 %v3005
  %3058 = vmatpush1.bf16.msra.mxu0 %v3004
  %3059 = vmatprep.subr.bf16.mxu0 0
  %3060 = vmatpush1.bf16.msra.mxu0 0
  %3061 = vmatprep.subr.bf16.mxu0 0
  %3062 = vmatpush1.bf16.msra.mxu0 0
  %3063 = vmatprep.subr.bf16.mxu0 0
  %3064 = vmatpush1.bf16.msra.mxu0 0
  %3065 = vmatprep.subr.bf16.mxu0 0
  %3066 = vmatpush1.bf16.msra.mxu0 0
  %3067 = vmatprep.subr.bf16.mxu0 0
  %3068 = vmatpush1.bf16.msra.mxu0 0
  %3069 = vmatprep.subr.bf16.mxu0 0
  %3070 = vmatpush1.bf16.msra.mxu0 0
  %3071 = vmatprep.subr.bf16.mxu0 0
  %3072 = vmatpush1.bf16.msra.mxu0 0
  %3073 = vmatprep.subr.bf16.mxu0 0
  %3074 = vmatpush1.bf16.msra.mxu0 0
  %3075 = vmatprep.subr.bf16.mxu0 0
  %3076 = vmatpush1.bf16.msra.mxu0 0
  %3077 = vmatprep.subr.bf16.mxu0 0
  %3078 = vmatpush1.bf16.msra.mxu0 0
  %3079 = vmatprep.subr.bf16.mxu0 0
  %3080 = vmatpush1.bf16.msra.mxu0 0
  %3081 = vmatprep.subr.bf16.mxu0 0
  %3082 = vmatpush1.bf16.msra.mxu0 0
  %3083 = vmatprep.subr.bf16.mxu0 0
  %3084 = vmatpush1.bf16.msra.mxu0 0
  %3085 = vmatprep.subr.bf16.mxu0 0
  %3086 = vmatpush1.bf16.msra.mxu0 0
  %3087 = vmatprep.subr.bf16.mxu0 0
  %3088 = vmatpush1.bf16.msra.mxu0 0
  %3089 = vmatprep.mubr.bf16.mxu0 0
  %3090 = vmatmul.mubr.bf16.gmra.mrb[0].mxu0 %v3012
  %v3091 = vpop.f32.mrb[0].mxu0
  %v3092 = vadd.f32 0.0, %v3091
  %v3093 = vpop.f32.mrb[0].mxu0
  %v3094 = vadd.f32 0.0, %v3093
  %v3095 = vpop.f32.mrb[0].mxu0
  %v3096 = vadd.f32 0.0, %v3095
  %v3097 = vpop.f32.mrb[0].mxu0
  %v3098 = vadd.f32 0.0, %v3097
  %3099 = vdwg.mxu0
  %3100 = vmatprep.subr.bf16.mxu0 0
  %3101 = vmatpush1.bf16.msra.mxu0 %v3001
  %3102 = vmatprep.subr.bf16.mxu0 0
  %3103 = vmatpush1.bf16.msra.mxu0 0
  %3104 = vmatprep.subr.bf16.mxu0 0
  %3105 = vmatpush1.bf16.msra.mxu0 0
  %3106 = vmatprep.subr.bf16.mxu0 0
  %3107 = vmatpush1.bf16.msra.mxu0 0
  %3108 = vmatprep.subr.bf16.mxu0 0
  %3109 = vmatpush1.bf16.msra.mxu0 0
  %3110 = vmatprep.subr.bf16.mxu0 0
  %3111 = vmatpush1.bf16.msra.mxu0 0
  %3112 = vmatprep.subr.bf16.mxu0 0
  %3113 = vmatpush1.bf16.msra.mxu0 0
  %3114 = vmatprep.subr.bf16.mxu0 0
  %3115 = vmatpush1.bf16.msra.mxu0 0
  %3116 = vmatprep.subr.bf16.mxu0 0
  %3117 = vmatpush1.bf16.msra.mxu0 0
  %3118 = vmatprep.subr.bf16.mxu0 0
  %3119 = vmatpush1.bf16.msra.mxu0 0
  %3120 = vmatprep.subr.bf16.mxu0 0
  %3121 = vmatpush1.bf16.msra.mxu0 0
  %3122 = vmatprep.subr.bf16.mxu0 0
  %3123 = vmatpush1.bf16.msra.mxu0 0
  %3124 = vmatprep.subr.bf16.mxu0 0
  %3125 = vmatpush1.bf16.msra.mxu0 0
  %3126 = vmatprep.subr.bf16.mxu0 0
  %3127 = vmatpush1.bf16.msra.mxu0 0
  %3128 = vmatprep.subr.bf16.mxu0 0
  %3129 = vmatpush1.bf16.msra.mxu0 0
  %3130 = vmatprep.subr.bf16.mxu0 0
  %3131 = vmatpush1.bf16.msra.mxu0 0
  %3132 = vmatprep.mubr.bf16.mxu0 0
  %3133 = vmatmul.mubr.bf16.gmra.mrb[0].mxu0 %v3012
  %v3134 = vpop.f32.mrb[0].mxu0
  %v3135 = vadd.f32 0.0, %v3134
  %v3136 = vpop.f32.mrb[0].mxu0
  %v3137 = vpop.f32.mrb[0].mxu0
  %v3138 = vadd.f32 0.0, %v3137
  %v3139 = vpop.f32.mrb[0].mxu0
  %3140 = vdwg.mxu0
  %v3141 = vadd.f32 %v2974, %v3049
  %v3142 = vadd.f32 %v2975, %v3051
  %v3143 = vadd.f32 %v2976, %v3092
  %v3144 = vadd.f32 %v2977, %v3094
  %v3145 = vadd.f32 %v2978, %v3135
  %v3146 = vadd.f32 %v2979, %v3053
  %v3147 = vadd.f32 %v2980, %v3055
  %v3148 = vadd.f32 %v2981, %v3096
  %v3149 = vadd.f32 %v2982, %v3098
  %v3150 = vadd.f32 %v2983, %v3138
  %v3151 = vld [vmem:[%s2] sm:$0xff]
  %v3152 = vld [vmem:[%s2 + $0x8] sm:$0xff]
  %3154 = vset.pattern.permute.xlu0 1
  %3155 = vperm.xlu0 %3154, %v3151
  %v3156 = vpop.permute.xlu0 %3155
  %3159 = vset.pattern.permute.xlu0 1
  %3160 = vperm.xlu0 %3159, %v3152
  %v3161 = vpop.permute.xlu0 %3160
  %v3163 = vadd.f32 %v3141, %v3156
  %v3164 = vadd.f32 %v3142, %v3156
  %v3165 = vadd.f32 %v3143, %v3156
  %v3166 = vadd.f32 %v3144, %v3156
  %v3167 = vadd.f32 %v3145, %v3156
  %v3168 = vadd.f32 %v3146, %v3161
  %v3169 = vadd.f32 %v3147, %v3161
  %v3170 = vadd.f32 %v3148, %v3161
  %v3171 = vadd.f32 %v3149, %v3161
  %v3172 = vadd.f32 %v3150, %v3161
  %v3173 = vmul.f32 %v3163, %v1611
  %v3174 = vmul.f32 %v3164, %v1615
  %v3175 = vmul.f32 %v3165, %v1619
  %v3176 = vmul.f32 %v3166, %v1623
  %v3177 = vmul.f32 %v3167, %v1627
  %v3178 = vmul.f32 %v3168, %v1611
  %v3179 = vmul.f32 %v3169, %v1615
  %v3180 = vmul.f32 %v3170, %v1619
  %v3181 = vmul.f32 %v3171, %v1623
  %v3182 = vmul.f32 %v3172, %v1627
  %v3183 = vpack.c.bf16 %v3178, %v3173
  %v3184 = vpack.c.bf16 %v3179, %v3174
  %v3185 = vpack.c.bf16 %v3180, %v3175
  %v3186 = vpack.c.bf16 %v3181, %v3176
  %v3187 = vpack.c.bf16 %v3182, %v3177
  %v3188 = vld [vmem:[%s5] sm:$0xf]
  %v3189 = vld [vmem:[%s5 + $0x4] sm:$0xf]
  %v3190 = vld [vmem:[%s5 + $0x8] sm:$0xf]
  %v3191 = vld [vmem:[%s5 + $0xc] sm:$0xf]
  %v3192 = vld [vmem:[%s5 + $0x10] sm:$0xf]
  %v3193 = vld [vmem:[%s5 + $0x14] sm:$0xf]
  %v3194 = vld [vmem:[%s5 + $0x18] sm:$0xf]
  %v3195 = vld [vmem:[%s5 + $0x1c] sm:$0xf]
  %v3196 = vld [vmem:[%s5 + $0x20] sm:$0xf]
  %v3197 = vld [vmem:[%s5 + $0x24] sm:$0xf]
  %v3198 = vld [vmem:[%s5 + $0x28] sm:$0xf]
  %v3199 = vld [vmem:[%s5 + $0x2c] sm:$0xf]
  %v3200 = vld [vmem:[%s5 + $0x30] sm:$0xf]
  %v3201 = vld [vmem:[%s5 + $0x34] sm:$0xf]
  %v3202 = vld [vmem:[%s5 + $0x38] sm:$0xf]
  %v3203 = vld [vmem:[%s5 + $0x3c] sm:$0xf]
  %v3204 = vld [vmem:[%s5 + $0x40] sm:$0xf]
  %v3205 = vld [vmem:[%s5 + $0x44] sm:$0xf]
  %v3206 = vld [vmem:[%s5 + $0x48] sm:$0xf]
  %v3207 = vld [vmem:[%s5 + $0x4c] sm:$0xf]
  %v3208 = vld [vmem:[%s5 + $0x50] sm:$0xf]
  %v3209 = vld [vmem:[%s5 + $0x54] sm:$0xf]
  %v3210 = vld [vmem:[%s5 + $0x58] sm:$0xf]
  %v3211 = vld [vmem:[%s5 + $0x5c] sm:$0xf]
  %v3212 = vld [vmem:[%s5 + $0x60] sm:$0xf]
  %v3213 = vld [vmem:[%s5 + $0x64] sm:$0xf]
  %v3214 = vld [vmem:[%s5 + $0x68] sm:$0xf]
  %v3215 = vld [vmem:[%s5 + $0x6c] sm:$0xf]
  %v3216 = vld [vmem:[%s5 + $0x70] sm:$0xf]
  %v3217 = vld [vmem:[%s5 + $0x74] sm:$0xf]
  %v3218 = vld [vmem:[%s5 + $0x78] sm:$0xf]
  %v3219 = vld [vmem:[%s5 + $0x7c] sm:$0xf]
  %v3220 = vld [vmem:[%s5 + $0x80] sm:$0xf]
  %v3221 = vld [vmem:[%s5 + $0x84] sm:$0xf]
  %v3222 = vld [vmem:[%s5 + $0x88] sm:$0xf]
  %v3223 = vld [vmem:[%s5 + $0x8c] sm:$0xf]
  %v3224 = vld [vmem:[%s5 + $0x90] sm:$0x1]
  %v3262 = vunpack.c.l.b16 %v3188
  %v3263 = vunpack.c.l.b16 %v3189
  %v3264 = vunpack.c.l.b16 %v3190
  %v3265 = vunpack.c.l.b16 %v3191
  %v3266 = vunpack.c.l.b16 %v3192
  %v3267 = vunpack.c.l.b16 %v3193
  %v3268 = vunpack.c.l.b16 %v3194
  %v3269 = vunpack.c.l.b16 %v3195
  %v3270 = vunpack.c.l.b16 %v3196
  %v3271 = vunpack.c.l.b16 %v3197
  %v3272 = vunpack.c.l.b16 %v3198
  %v3273 = vunpack.c.l.b16 %v3199
  %v3274 = vunpack.c.l.b16 %v3200
  %v3275 = vunpack.c.l.b16 %v3201
  %v3276 = vunpack.c.l.b16 %v3202
  %v3277 = vunpack.c.l.b16 %v3203
  %v3278 = vunpack.c.l.b16 %v3204
  %v3279 = vunpack.c.l.b16 %v3205
  %v3280 = vunpack.c.l.b16 %v3206
  %v3281 = vunpack.c.l.b16 %v3207
  %v3282 = vunpack.c.l.b16 %v3208
  %v3283 = vunpack.c.l.b16 %v3209
  %v3284 = vunpack.c.l.b16 %v3210
  %v3285 = vunpack.c.l.b16 %v3211
  %v3286 = vunpack.c.l.b16 %v3212
  %v3287 = vunpack.c.l.b16 %v3213
  %v3288 = vunpack.c.l.b16 %v3214
  %v3289 = vunpack.c.l.b16 %v3215
  %v3290 = vunpack.c.l.b16 %v3216
  %v3291 = vunpack.c.l.b16 %v3217
  %v3292 = vunpack.c.l.b16 %v3218
  %v3293 = vunpack.c.l.b16 %v3219
  %v3294 = vunpack.c.l.b16 %v3220
  %v3295 = vunpack.c.l.b16 %v3221
  %v3296 = vunpack.c.l.b16 %v3222
  %v3297 = vunpack.c.l.b16 %v3223
  %v3298 = vunpack.c.l.b16 %v3224
  %v3299 = vpack.c.b16 %v3263, %v3262
  %v3300 = vpack.c.b16 %v3265, %v3264
  %v3301 = vpack.c.b16 %v3267, %v3266
  %v3302 = vpack.c.b16 %v3269, %v3268
  %v3303 = vpack.c.b16 %v3271, %v3270
  %v3304 = vpack.c.b16 %v3273, %v3272
  %v3305 = vpack.c.b16 %v3275, %v3274
  %v3306 = vpack.c.b16 %v3277, %v3276
  %v3307 = vpack.c.b16 %v3279, %v3278
  %v3308 = vpack.c.b16 %v3281, %v3280
  %v3309 = vpack.c.b16 %v3283, %v3282
  %v3310 = vpack.c.b16 %v3285, %v3284
  %v3311 = vpack.c.b16 %v3287, %v3286
  %v3312 = vpack.c.b16 %v3289, %v3288
  %v3313 = vpack.c.b16 %v3291, %v3290
  %v3314 = vpack.c.b16 %v3293, %v3292
  %v3315 = vpack.c.b16 %v3295, %v3294
  %v3316 = vpack.c.b16 %v3297, %v3296
  %v3317 = vpack.c.b16 %v3298, %v3298
  %vm3336 = vcmask 269312
  %v3338 = vsel %vm3336, %v3185, 0
  %vm3340 = vcmask 1040384
  %v3341 = vsel 0, 4294967295, 65535
  %v3342 = vsel %vm3340, %v3341, 0
  %v3344 = vand.u32 %v3317, %v3342
  %3346 = vmatprep.subr.bf16.mxu0 0
  %3347 = vmatpush1.bf16.msra.mxu0 %v3299
  %3348 = vmatprep.subr.bf16.mxu0 0
  %3349 = vmatpush1.bf16.msra.mxu0 %v3300
  %3350 = vmatprep.subr.bf16.mxu0 0
  %3351 = vmatpush1.bf16.msra.mxu0 %v3301
  %3352 = vmatprep.subr.bf16.mxu0 0
  %3353 = vmatpush1.bf16.msra.mxu0 %v3302
  %3354 = vmatprep.subr.bf16.mxu0 0
  %3355 = vmatpush1.bf16.msra.mxu0 %v3303
  %3356 = vmatprep.subr.bf16.mxu0 0
  %3357 = vmatpush1.bf16.msra.mxu0 %v3304
  %3358 = vmatprep.subr.bf16.mxu0 0
  %3359 = vmatpush1.bf16.msra.mxu0 %v3305
  %3360 = vmatprep.subr.bf16.mxu0 0
  %3361 = vmatpush1.bf16.msra.mxu0 %v3306
  %3362 = vmatprep.subr.bf16.mxu0 0
  %3363 = vmatpush1.bf16.msra.mxu0 %v3307
  %3364 = vmatprep.subr.bf16.mxu0 0
  %3365 = vmatpush1.bf16.msra.mxu0 %v3308
  %3366 = vmatprep.subr.bf16.mxu0 0
  %3367 = vmatpush1.bf16.msra.mxu0 %v3309
  %3368 = vmatprep.subr.bf16.mxu0 0
  %3369 = vmatpush1.bf16.msra.mxu0 %v3310
  %3370 = vmatprep.subr.bf16.mxu0 0
  %3371 = vmatpush1.bf16.msra.mxu0 %v3311
  %3372 = vmatprep.subr.bf16.mxu0 0
  %3373 = vmatpush1.bf16.msra.mxu0 %v3312
  %3374 = vmatprep.subr.bf16.mxu0 0
  %3375 = vmatpush1.bf16.msra.mxu0 %v3313
  %3376 = vmatprep.subr.bf16.mxu0 0
  %3377 = vmatpush1.bf16.msra.mxu0 %v3314
  %3378 = vmatprep.mubr.bf16.mxu0 %v3184
  %3379 = vmatmul.mubr.bf16.gmra.mrb[0].mxu0 %v3183
  %v3380 = vpop.f32.mrb[0].mxu0
  %v3381 = vadd.f32 0.0, %v3380
  %v3382 = vpop.f32.mrb[0].mxu0
  %v3383 = vpop.f32.mrb[0].mxu0
  %v3384 = vadd.f32 0.0, %v3383
  %v3385 = vpop.f32.mrb[0].mxu0
  %3386 = vdwg.mxu0
  %3387 = vmatprep.subr.bf16.mxu0 0
  %3388 = vmatpush1.bf16.msra.mxu0 %v3315
  %3389 = vmatprep.subr.bf16.mxu0 0
  %3390 = vmatpush1.bf16.msra.mxu0 %v3316
  %3391 = vmatprep.subr.bf16.mxu0 0
  %3392 = vmatpush1.bf16.msra.mxu0 %v3344
  %3393 = vmatprep.subr.bf16.mxu0 0
  %3394 = vmatpush1.bf16.msra.mxu0 0
  %3395 = vmatprep.subr.bf16.mxu0 0
  %3396 = vmatpush1.bf16.msra.mxu0 0
  %3397 = vmatprep.subr.bf16.mxu0 0
  %3398 = vmatpush1.bf16.msra.mxu0 0
  %3399 = vmatprep.subr.bf16.mxu0 0
  %3400 = vmatpush1.bf16.msra.mxu0 0
  %3401 = vmatprep.subr.bf16.mxu0 0
  %3402 = vmatpush1.bf16.msra.mxu0 0
  %3403 = vmatprep.subr.bf16.mxu0 0
  %3404 = vmatpush1.bf16.msra.mxu0 0
  %3405 = vmatprep.subr.bf16.mxu0 0
  %3406 = vmatpush1.bf16.msra.mxu0 0
  %3407 = vmatprep.subr.bf16.mxu0 0
  %3408 = vmatpush1.bf16.msra.mxu0 0
  %3409 = vmatprep.subr.bf16.mxu0 0
  %3410 = vmatpush1.bf16.msra.mxu0 0
  %3411 = vmatprep.subr.bf16.mxu0 0
  %3412 = vmatpush1.bf16.msra.mxu0 0
  %3413 = vmatprep.subr.bf16.mxu0 0
  %3414 = vmatpush1.bf16.msra.mxu0 0
  %3415 = vmatprep.subr.bf16.mxu0 0
  %3416 = vmatpush1.bf16.msra.mxu0 0
  %3417 = vmatprep.subr.bf16.mxu0 0
  %3418 = vmatpush1.bf16.msra.mxu0 0
  %3419 = vmatprep.mubr.bf16.mxu0 0
  %3420 = vmatmul.mubr.bf16.gmra.mrb[0].mxu0 %v3338
  %v3421 = vpop.f32.mrb[0].mxu0
  %v3422 = vadd.f32 %v3381, %v3421
  %v3423 = vpop.f32.mrb[0].mxu0
  %v3424 = vpop.f32.mrb[0].mxu0
  %v3425 = vadd.f32 %v3384, %v3424
  %v3426 = vpop.f32.mrb[0].mxu0
  %3427 = vdwg.mxu0
  %3431 = vrot.lane.b32.xlu0 %v3185, 95
  %v3432 = vpop.permute.xlu0 %3431
  %3433 = vrot.lane.b32.xlu0 %v3186, 95
  %v3434 = vpop.permute.xlu0 %3433
  %3435 = vrot.lane.b32.xlu0 %v3187, 95
  %v3436 = vpop.permute.xlu0 %3435
  %vm3437 = vcmask 777216
  %v3438 = vsel %vm3437, %v3432, %v3434
  %v3439 = vsel %vm3437, %v3434, %v3436
  %v3443 = vsel %vm3336, %v3436, 0
  %3445 = vmatprep.subr.bf16.mxu0 0
  %3446 = vmatpush1.bf16.msra.mxu0 %v3299
  %3447 = vmatprep.subr.bf16.mxu0 0
  %3448 = vmatpush1.bf16.msra.mxu0 %v3300
  %3449 = vmatprep.subr.bf16.mxu0 0
  %3450 = vmatpush1.bf16.msra.mxu0 %v3301
  %3451 = vmatprep.subr.bf16.mxu0 0
  %3452 = vmatpush1.bf16.msra.mxu0 %v3302
  %3453 = vmatprep.subr.bf16.mxu0 0
  %3454 = vmatpush1.bf16.msra.mxu0 %v3303
  %3455 = vmatprep.subr.bf16.mxu0 0
  %3456 = vmatpush1.bf16.msra.mxu0 %v3304
  %3457 = vmatprep.subr.bf16.mxu0 0
  %3458 = vmatpush1.bf16.msra.mxu0 %v3305
  %3459 = vmatprep.subr.bf16.mxu0 0
  %3460 = vmatpush1.bf16.msra.mxu0 %v3306
  %3461 = vmatprep.subr.bf16.mxu0 0
  %3462 = vmatpush1.bf16.msra.mxu0 %v3307
  %3463 = vmatprep.subr.bf16.mxu0 0
  %3464 = vmatpush1.bf16.msra.mxu0 %v3308
  %3465 = vmatprep.subr.bf16.mxu0 0
  %3466 = vmatpush1.bf16.msra.mxu0 %v3309
  %3467 = vmatprep.subr.bf16.mxu0 0
  %3468 = vmatpush1.bf16.msra.mxu0 %v3310
  %3469 = vmatprep.subr.bf16.mxu0 0
  %3470 = vmatpush1.bf16.msra.mxu0 %v3311
  %3471 = vmatprep.subr.bf16.mxu0 0
  %3472 = vmatpush1.bf16.msra.mxu0 %v3312
  %3473 = vmatprep.subr.bf16.mxu0 0
  %3474 = vmatpush1.bf16.msra.mxu0 %v3313
  %3475 = vmatprep.subr.bf16.mxu0 0
  %3476 = vmatpush1.bf16.msra.mxu0 %v3314
  %3477 = vmatprep.mubr.bf16.mxu0 %v3439
  %3478 = vmatmul.mubr.bf16.gmra.mrb[0].mxu0 %v3438
  %v3479 = vpop.f32.mrb[0].mxu0
  %v3480 = vadd.f32 0.0, %v3479
  %v3481 = vpop.f32.mrb[0].mxu0
  %v3482 = vpop.f32.mrb[0].mxu0
  %v3483 = vadd.f32 0.0, %v3482
  %v3484 = vpop.f32.mrb[0].mxu0
  %3485 = vdwg.mxu0
  %3486 = vmatprep.subr.bf16.mxu0 0
  %3487 = vmatpush1.bf16.msra.mxu0 %v3315
  %3488 = vmatprep.subr.bf16.mxu0 0
  %3489 = vmatpush1.bf16.msra.mxu0 %v3316
  %3490 = vmatprep.subr.bf16.mxu0 0
  %3491 = vmatpush1.bf16.msra.mxu0 %v3344
  %3492 = vmatprep.subr.bf16.mxu0 0
  %3493 = vmatpush1.bf16.msra.mxu0 0
  %3494 = vmatprep.subr.bf16.mxu0 0
  %3495 = vmatpush1.bf16.msra.mxu0 0
  %3496 = vmatprep.subr.bf16.mxu0 0
  %3497 = vmatpush1.bf16.msra.mxu0 0
  %3498 = vmatprep.subr.bf16.mxu0 0
  %3499 = vmatpush1.bf16.msra.mxu0 0
  %3500 = vmatprep.subr.bf16.mxu0 0
  %3501 = vmatpush1.bf16.msra.mxu0 0
  %3502 = vmatprep.subr.bf16.mxu0 0
  %3503 = vmatpush1.bf16.msra.mxu0 0
  %3504 = vmatprep.subr.bf16.mxu0 0
  %3505 = vmatpush1.bf16.msra.mxu0 0
  %3506 = vmatprep.subr.bf16.mxu0 0
  %3507 = vmatpush1.bf16.msra.mxu0 0
  %3508 = vmatprep.subr.bf16.mxu0 0
  %3509 = vmatpush1.bf16.msra.mxu0 0
  %3510 = vmatprep.subr.bf16.mxu0 0
  %3511 = vmatpush1.bf16.msra.mxu0 0
  %3512 = vmatprep.subr.bf16.mxu0 0
  %3513 = vmatpush1.bf16.msra.mxu0 0
  %3514 = vmatprep.subr.bf16.mxu0 0
  %3515 = vmatpush1.bf16.msra.mxu0 0
  %3516 = vmatprep.subr.bf16.mxu0 0
  %3517 = vmatpush1.bf16.msra.mxu0 0
  %3518 = vmatprep.mubr.bf16.mxu0 0
  %3519 = vmatmul.mubr.bf16.gmra.mrb[0].mxu0 %v3443
  %v3520 = vpop.f32.mrb[0].mxu0
  %v3521 = vadd.f32 %v3480, %v3520
  %v3522 = vpop.f32.mrb[0].mxu0
  %v3523 = vpop.f32.mrb[0].mxu0
  %v3524 = vadd.f32 %v3483, %v3523
  %v3525 = vpop.f32.mrb[0].mxu0
  %3526 = vdwg.mxu0
  %3529 = vrot.lane.b32.xlu0 %v3521, 81
  %v3530 = vpop.permute.xlu0 %3529
  %3531 = vrot.lane.b32.xlu0 %v3524, 81
  %v3532 = vpop.permute.xlu0 %3531
  %vm3535 = vcmask 662528
  %v3536 = vsel %vm3535, %v3422, %v3530
  %v3537 = vsel %vm3535, %v3425, %v3532
  %v3538 = vpack.c.bf16 %v3537, %v3536
  %v3539 = vpack.c.bf16 %v3532, %v3530
  %3540 = vst [vmem:[#allocation2 + $0x8] sm:$0xff] %v3538
  %vm3541 = vcmask 277504
  %3542 = vst.msk [vmem:[#allocation2 + $0x10] sm:$0xff] %vm3541, %v3539
  %v3543 = vld [vmem:[#allocation2] sm:$0xff]
  %v3544 = vld [vmem:[#allocation2 + $0x8] sm:$0xff]
  %v3545 = vld [vmem:[#allocation2 + $0x10] sm:$0xff]
  %s3546 = scalar_lea.vmem %s1, 144
  %v3547 = vld [vmem:[%s3546] sm:$0xf]
  %v3548 = vld [vmem:[%s3546 + $0x4] sm:$0xf]
  %s3549 = scalar_lea.vmem %s1, 152
  %v3550 = vld [vmem:[%s3549] sm:$0xf]
  %v3551 = vld [vmem:[%s3549 + $0x4] sm:$0xf]
  %v3554 = vunpack.c.l.b16 %v3550
  %v3555 = vunpack.c.l.b16 %v3551
  %v3556 = vpack.c.b16 %v3555, %v3554
  %3560 = vrot.lane.b32.xlu0 %v3543, 9
  %v3561 = vpop.permute.xlu0 %3560
  %3562 = vrot.lane.b32.xlu0 %v3544, 9
  %v3563 = vpop.permute.xlu0 %3562
  %3564 = vrot.lane.b32.xlu0 %v3545, 9
  %v3565 = vpop.permute.xlu0 %3564
  %vm3566 = vcmask 72704
  %v3567 = vsel %vm3566, %v3561, %v3563
  %v3568 = vsel %vm3566, %v3563, %v3565
  %v3572 = vsel %vm134, %v3556, 0
  %3574 = vmatprep.subr.bf16.mxu0 %v3568
  %3575 = vmatpush1.bf16.msra.mxu0 %v3567
  %3576 = vmatprep.subr.bf16.mxu0 0
  %3577 = vmatpush1.bf16.msra.mxu0 0
  %3578 = vmatprep.subr.bf16.mxu0 0
  %3579 = vmatpush1.bf16.msra.mxu0 0
  %3580 = vmatprep.subr.bf16.mxu0 0
  %3581 = vmatpush1.bf16.msra.mxu0 0
  %3582 = vmatprep.subr.bf16.mxu0 0
  %3583 = vmatpush1.bf16.msra.mxu0 0
  %3584 = vmatprep.subr.bf16.mxu0 0
  %3585 = vmatpush1.bf16.msra.mxu0 0
  %3586 = vmatprep.subr.bf16.mxu0 0
  %3587 = vmatpush1.bf16.msra.mxu0 0
  %3588 = vmatprep.subr.bf16.mxu0 0
  %3589 = vmatpush1.bf16.msra.mxu0 0
  %3590 = vmatprep.subr.bf16.mxu0 0
  %3591 = vmatpush1.bf16.msra.mxu0 0
  %3592 = vmatprep.subr.bf16.mxu0 0
  %3593 = vmatpush1.bf16.msra.mxu0 0
  %3594 = vmatprep.subr.bf16.mxu0 0
  %3595 = vmatpush1.bf16.msra.mxu0 0
  %3596 = vmatprep.subr.bf16.mxu0 0
  %3597 = vmatpush1.bf16.msra.mxu0 0
  %3598 = vmatprep.subr.bf16.mxu0 0
  %3599 = vmatpush1.bf16.msra.mxu0 0
  %3600 = vmatprep.subr.bf16.mxu0 0
  %3601 = vmatpush1.bf16.msra.mxu0 0
  %3602 = vmatprep.subr.bf16.mxu0 0
  %3603 = vmatpush1.bf16.msra.mxu0 0
  %3604 = vmatprep.subr.bf16.mxu0 0
  %3605 = vmatpush1.bf16.msra.mxu0 0
  %3606 = vmatprep.mubr.bf16.mxu0 0
  %3607 = vmatmul.mubr.bf16.gmra.mrb[0].mxu0 %v3572
  %v3608 = vpop.f32.mrb[0].mxu0
  %v3609 = vadd.f32 0.0, %v3608
  %v3610 = vpop.f32.mrb[0].mxu0
  %v3611 = vadd.f32 0.0, %v3610
  %v3612 = vpop.f32.mrb[0].mxu0
  %v3613 = vadd.f32 0.0, %v3612
  %v3614 = vpop.f32.mrb[0].mxu0
  %v3615 = vadd.f32 0.0, %v3614
  %3616 = vdwg.mxu0
  %v3619 = vunpack.c.l.b16 %v3547
  %v3620 = vunpack.c.l.b16 %v3548
  %v3621 = vpack.c.b16 %v3620, %v3619
  %3622 = vrot.lane.b32.xlu0 %v3543, 10
  %v3623 = vpop.permute.xlu0 %3622
  %3624 = vrot.lane.b32.xlu0 %v3544, 10
  %v3625 = vpop.permute.xlu0 %3624
  %3626 = vrot.lane.b32.xlu0 %v3545, 10
  %v3627 = vpop.permute.xlu0 %3626
  %vm3628 = vcmask 80896
  %v3629 = vsel %vm3628, %v3623, %v3625
  %v3630 = vsel %vm3628, %v3625, %v3627
  %v3634 = vsel %vm134, %v3621, 0
  %3636 = vmatprep.subr.bf16.mxu0 %v3630
  %3637 = vmatpush1.bf16.msra.mxu0 %v3629
  %3638 = vmatprep.subr.bf16.mxu0 0
  %3639 = vmatpush1.bf16.msra.mxu0 0
  %3640 = vmatprep.subr.bf16.mxu0 0
  %3641 = vmatpush1.bf16.msra.mxu0 0
  %3642 = vmatprep.subr.bf16.mxu0 0
  %3643 = vmatpush1.bf16.msra.mxu0 0
  %3644 = vmatprep.subr.bf16.mxu0 0
  %3645 = vmatpush1.bf16.msra.mxu0 0
  %3646 = vmatprep.subr.bf16.mxu0 0
  %3647 = vmatpush1.bf16.msra.mxu0 0
  %3648 = vmatprep.subr.bf16.mxu0 0
  %3649 = vmatpush1.bf16.msra.mxu0 0
  %3650 = vmatprep.subr.bf16.mxu0 0
  %3651 = vmatpush1.bf16.msra.mxu0 0
  %3652 = vmatprep.subr.bf16.mxu0 0
  %3653 = vmatpush1.bf16.msra.mxu0 0
  %3654 = vmatprep.subr.bf16.mxu0 0
  %3655 = vmatpush1.bf16.msra.mxu0 0
  %3656 = vmatprep.subr.bf16.mxu0 0
  %3657 = vmatpush1.bf16.msra.mxu0 0
  %3658 = vmatprep.subr.bf16.mxu0 0
  %3659 = vmatpush1.bf16.msra.mxu0 0
  %3660 = vmatprep.subr.bf16.mxu0 0
  %3661 = vmatpush1.bf16.msra.mxu0 0
  %3662 = vmatprep.subr.bf16.mxu0 0
  %3663 = vmatpush1.bf16.msra.mxu0 0
  %3664 = vmatprep.subr.bf16.mxu0 0
  %3665 = vmatpush1.bf16.msra.mxu0 0
  %3666 = vmatprep.subr.bf16.mxu0 0
  %3667 = vmatpush1.bf16.msra.mxu0 0
  %3668 = vmatprep.mubr.bf16.mxu0 0
  %3669 = vmatmul.mubr.bf16.gmra.mrb[0].mxu0 %v3634
  %v3670 = vpop.f32.mrb[0].mxu0
  %v3671 = vadd.f32 %v3609, %v3670
  %v3672 = vpop.f32.mrb[0].mxu0
  %v3673 = vadd.f32 %v3611, %v3672
  %v3674 = vpop.f32.mrb[0].mxu0
  %v3675 = vadd.f32 %v3613, %v3674
  %v3676 = vpop.f32.mrb[0].mxu0
  %v3677 = vadd.f32 %v3615, %v3676
  %3678 = vdwg.mxu0
  %s3679 = scalar_lea.vmem %s1, 160
  %v3680 = vld [vmem:[%s3679] sm:$0xf]
  %v3681 = vld [vmem:[%s3679 + $0x4] sm:$0xf]
  %v3684 = vunpack.c.l.b16 %v3680
  %v3685 = vunpack.c.l.b16 %v3681
  %v3686 = vpack.c.b16 %v3685, %v3684
  %3687 = vrot.lane.b32.xlu0 %v3543, 8
  %v3688 = vpop.permute.xlu0 %3687
  %3689 = vrot.lane.b32.xlu0 %v3544, 8
  %v3690 = vpop.permute.xlu0 %3689
  %3691 = vrot.lane.b32.xlu0 %v3545, 8
  %v3692 = vpop.permute.xlu0 %3691
  %vm3693 = vcmask 64512
  %v3694 = vsel %vm3693, %v3688, %v3690
  %v3695 = vsel %vm3693, %v3690, %v3692
  %v3699 = vsel %vm134, %v3686, 0
  %3701 = vmatprep.subr.bf16.mxu0 %v3695
  %3702 = vmatpush1.bf16.msra.mxu0 %v3694
  %3703 = vmatprep.subr.bf16.mxu0 0
  %3704 = vmatpush1.bf16.msra.mxu0 0
  %3705 = vmatprep.subr.bf16.mxu0 0
  %3706 = vmatpush1.bf16.msra.mxu0 0
  %3707 = vmatprep.subr.bf16.mxu0 0
  %3708 = vmatpush1.bf16.msra.mxu0 0
  %3709 = vmatprep.subr.bf16.mxu0 0
  %3710 = vmatpush1.bf16.msra.mxu0 0
  %3711 = vmatprep.subr.bf16.mxu0 0
  %3712 = vmatpush1.bf16.msra.mxu0 0
  %3713 = vmatprep.subr.bf16.mxu0 0
  %3714 = vmatpush1.bf16.msra.mxu0 0
  %3715 = vmatprep.subr.bf16.mxu0 0
  %3716 = vmatpush1.bf16.msra.mxu0 0
  %3717 = vmatprep.subr.bf16.mxu0 0
  %3718 = vmatpush1.bf16.msra.mxu0 0
  %3719 = vmatprep.subr.bf16.mxu0 0
  %3720 = vmatpush1.bf16.msra.mxu0 0
  %3721 = vmatprep.subr.bf16.mxu0 0
  %3722 = vmatpush1.bf16.msra.mxu0 0
  %3723 = vmatprep.subr.bf16.mxu0 0
  %3724 = vmatpush1.bf16.msra.mxu0 0
  %3725 = vmatprep.subr.bf16.mxu0 0
  %3726 = vmatpush1.bf16.msra.mxu0 0
  %3727 = vmatprep.subr.bf16.mxu0 0
  %3728 = vmatpush1.bf16.msra.mxu0 0
  %3729 = vmatprep.subr.bf16.mxu0 0
  %3730 = vmatpush1.bf16.msra.mxu0 0
  %3731 = vmatprep.subr.bf16.mxu0 0
  %3732 = vmatpush1.bf16.msra.mxu0 0
  %3733 = vmatprep.mubr.bf16.mxu0 0
  %3734 = vmatmul.mubr.bf16.gmra.mrb[0].mxu0 %v3699
  %v3735 = vpop.f32.mrb[0].mxu0
  %v3736 = vadd.f32 0.0, %v3735
  %v3737 = vpop.f32.mrb[0].mxu0
  %v3738 = vadd.f32 0.0, %v3737
  %v3739 = vpop.f32.mrb[0].mxu0
  %v3740 = vadd.f32 0.0, %v3739
  %v3741 = vpop.f32.mrb[0].mxu0
  %v3742 = vadd.f32 0.0, %v3741
  %3743 = vdwg.mxu0
  %v3744 = vadd.f32 %v3671, %v3736
  %v3745 = vadd.f32 %v3673, %v3738
  %v3746 = vadd.f32 %v3675, %v3740
  %v3747 = vadd.f32 %v3677, %v3742
  %s3748 = scalar_lea.vmem %s1, 168
  %v3749 = vld [vmem:[%s3748] sm:$0xf]
  %v3750 = vld [vmem:[%s3748 + $0x4] sm:$0xf]
  %v3753 = vunpack.c.l.b16 %v3749
  %v3754 = vunpack.c.l.b16 %v3750
  %v3755 = vpack.c.b16 %v3754, %v3753
  %3756 = vrot.lane.b32.xlu0 %v3543, 1
  %v3757 = vpop.permute.xlu0 %3756
  %3758 = vrot.lane.b32.xlu0 %v3544, 1
  %v3759 = vpop.permute.xlu0 %3758
  %3760 = vrot.lane.b32.xlu0 %v3545, 1
  %v3761 = vpop.permute.xlu0 %3760
  %v3762 = vsel %vm614, %v3757, %v3759
  %v3763 = vsel %vm614, %v3759, %v3761
  %v3767 = vsel %vm134, %v3755, 0
  %3769 = vmatprep.subr.bf16.mxu0 %v3763
  %3770 = vmatpush1.bf16.msra.mxu0 %v3762
  %3771 = vmatprep.subr.bf16.mxu0 0
  %3772 = vmatpush1.bf16.msra.mxu0 0
  %3773 = vmatprep.subr.bf16.mxu0 0
  %3774 = vmatpush1.bf16.msra.mxu0 0
  %3775 = vmatprep.subr.bf16.mxu0 0
  %3776 = vmatpush1.bf16.msra.mxu0 0
  %3777 = vmatprep.subr.bf16.mxu0 0
  %3778 = vmatpush1.bf16.msra.mxu0 0
  %3779 = vmatprep.subr.bf16.mxu0 0
  %3780 = vmatpush1.bf16.msra.mxu0 0
  %3781 = vmatprep.subr.bf16.mxu0 0
  %3782 = vmatpush1.bf16.msra.mxu0 0
  %3783 = vmatprep.subr.bf16.mxu0 0
  %3784 = vmatpush1.bf16.msra.mxu0 0
  %3785 = vmatprep.subr.bf16.mxu0 0
  %3786 = vmatpush1.bf16.msra.mxu0 0
  %3787 = vmatprep.subr.bf16.mxu0 0
  %3788 = vmatpush1.bf16.msra.mxu0 0
  %3789 = vmatprep.subr.bf16.mxu0 0
  %3790 = vmatpush1.bf16.msra.mxu0 0
  %3791 = vmatprep.subr.bf16.mxu0 0
  %3792 = vmatpush1.bf16.msra.mxu0 0
  %3793 = vmatprep.subr.bf16.mxu0 0
  %3794 = vmatpush1.bf16.msra.mxu0 0
  %3795 = vmatprep.subr.bf16.mxu0 0
  %3796 = vmatpush1.bf16.msra.mxu0 0
  %3797 = vmatprep.subr.bf16.mxu0 0
  %3798 = vmatpush1.bf16.msra.mxu0 0
  %3799 = vmatprep.subr.bf16.mxu0 0
  %3800 = vmatpush1.bf16.msra.mxu0 0
  %3801 = vmatprep.mubr.bf16.mxu0 0
  %3802 = vmatmul.mubr.bf16.gmra.mrb[0].mxu0 %v3767
  %v3803 = vpop.f32.mrb[0].mxu0
  %v3804 = vadd.f32 0.0, %v3803
  %v3805 = vpop.f32.mrb[0].mxu0
  %v3806 = vadd.f32 0.0, %v3805
  %v3807 = vpop.f32.mrb[0].mxu0
  %v3808 = vadd.f32 0.0, %v3807
  %v3809 = vpop.f32.mrb[0].mxu0
  %v3810 = vadd.f32 0.0, %v3809
  %3811 = vdwg.mxu0
  %v3812 = vadd.f32 %v3744, %v3804
  %v3813 = vadd.f32 %v3745, %v3806
  %v3814 = vadd.f32 %v3746, %v3808
  %v3815 = vadd.f32 %v3747, %v3810
  %s3816 = scalar_lea.vmem %s1, 176
  %v3817 = vld [vmem:[%s3816] sm:$0xf]
  %v3818 = vld [vmem:[%s3816 + $0x4] sm:$0xf]
  %v3821 = vunpack.c.l.b16 %v3817
  %v3822 = vunpack.c.l.b16 %v3818
  %v3823 = vpack.c.b16 %v3822, %v3821
  %v3825 = vsel %vm134, %v3823, 0
  %3827 = vmatprep.subr.bf16.mxu0 %v3545
  %3828 = vmatpush1.bf16.msra.mxu0 %v3544
  %3829 = vmatprep.subr.bf16.mxu0 0
  %3830 = vmatpush1.bf16.msra.mxu0 0
  %3831 = vmatprep.subr.bf16.mxu0 0
  %3832 = vmatpush1.bf16.msra.mxu0 0
  %3833 = vmatprep.subr.bf16.mxu0 0
  %3834 = vmatpush1.bf16.msra.mxu0 0
  %3835 = vmatprep.subr.bf16.mxu0 0
  %3836 = vmatpush1.bf16.msra.mxu0 0
  %3837 = vmatprep.subr.bf16.mxu0 0
  %3838 = vmatpush1.bf16.msra.mxu0 0
  %3839 = vmatprep.subr.bf16.mxu0 0
  %3840 = vmatpush1.bf16.msra.mxu0 0
  %3841 = vmatprep.subr.bf16.mxu0 0
  %3842 = vmatpush1.bf16.msra.mxu0 0
  %3843 = vmatprep.subr.bf16.mxu0 0
  %3844 = vmatpush1.bf16.msra.mxu0 0
  %3845 = vmatprep.subr.bf16.mxu0 0
  %3846 = vmatpush1.bf16.msra.mxu0 0
  %3847 = vmatprep.subr.bf16.mxu0 0
  %3848 = vmatpush1.bf16.msra.mxu0 0
  %3849 = vmatprep.subr.bf16.mxu0 0
  %3850 = vmatpush1.bf16.msra.mxu0 0
  %3851 = vmatprep.subr.bf16.mxu0 0
  %3852 = vmatpush1.bf16.msra.mxu0 0
  %3853 = vmatprep.subr.bf16.mxu0 0
  %3854 = vmatpush1.bf16.msra.mxu0 0
  %3855 = vmatprep.subr.bf16.mxu0 0
  %3856 = vmatpush1.bf16.msra.mxu0 0
  %3857 = vmatprep.subr.bf16.mxu0 0
  %3858 = vmatpush1.bf16.msra.mxu0 0
  %3859 = vmatprep.mubr.bf16.mxu0 0
  %3860 = vmatmul.mubr.bf16.gmra.mrb[0].mxu0 %v3825
  %v3861 = vpop.f32.mrb[0].mxu0
  %v3862 = vadd.f32 0.0, %v3861
  %v3863 = vpop.f32.mrb[0].mxu0
  %v3864 = vadd.f32 0.0, %v3863
  %v3865 = vpop.f32.mrb[0].mxu0
  %v3866 = vadd.f32 0.0, %v3865
  %v3867 = vpop.f32.mrb[0].mxu0
  %v3868 = vadd.f32 0.0, %v3867
  %3869 = vdwg.mxu0
  %v3870 = vadd.f32 %v3812, %v3862
  %v3871 = vadd.f32 %v3813, %v3864
  %v3872 = vadd.f32 %v3814, %v3866
  %v3873 = vadd.f32 %v3815, %v3868
  %s3874 = scalar_lea.vmem %s1, 184
  %v3875 = vld [vmem:[%s3874] sm:$0xf]
  %v3876 = vld [vmem:[%s3874 + $0x4] sm:$0xf]
  %v3879 = vunpack.c.l.b16 %v3875
  %v3880 = vunpack.c.l.b16 %v3876
  %v3881 = vpack.c.b16 %v3880, %v3879
  %3882 = vrot.lane.b32.xlu0 %v3544, 127
  %v3883 = vpop.permute.xlu0 %3882
  %3884 = vrot.lane.b32.xlu0 %v3545, 127
  %v3885 = vpop.permute.xlu0 %3884
  %v3886 = vsel %vm931, %v3883, %v3885
  %v3890 = vsel %vm134, %v3881, 0
  %3892 = vmatprep.subr.bf16.mxu0 %v3885
  %3893 = vmatpush1.bf16.msra.mxu0 %v3886
  %3894 = vmatprep.subr.bf16.mxu0 0
  %3895 = vmatpush1.bf16.msra.mxu0 0
  %3896 = vmatprep.subr.bf16.mxu0 0
  %3897 = vmatpush1.bf16.msra.mxu0 0
  %3898 = vmatprep.subr.bf16.mxu0 0
  %3899 = vmatpush1.bf16.msra.mxu0 0
  %3900 = vmatprep.subr.bf16.mxu0 0
  %3901 = vmatpush1.bf16.msra.mxu0 0
  %3902 = vmatprep.subr.bf16.mxu0 0
  %3903 = vmatpush1.bf16.msra.mxu0 0
  %3904 = vmatprep.subr.bf16.mxu0 0
  %3905 = vmatpush1.bf16.msra.mxu0 0
  %3906 = vmatprep.subr.bf16.mxu0 0
  %3907 = vmatpush1.bf16.msra.mxu0 0
  %3908 = vmatprep.subr.bf16.mxu0 0
  %3909 = vmatpush1.bf16.msra.mxu0 0
  %3910 = vmatprep.subr.bf16.mxu0 0
  %3911 = vmatpush1.bf16.msra.mxu0 0
  %3912 = vmatprep.subr.bf16.mxu0 0
  %3913 = vmatpush1.bf16.msra.mxu0 0
  %3914 = vmatprep.subr.bf16.mxu0 0
  %3915 = vmatpush1.bf16.msra.mxu0 0
  %3916 = vmatprep.subr.bf16.mxu0 0
  %3917 = vmatpush1.bf16.msra.mxu0 0
  %3918 = vmatprep.subr.bf16.mxu0 0
  %3919 = vmatpush1.bf16.msra.mxu0 0
  %3920 = vmatprep.subr.bf16.mxu0 0
  %3921 = vmatpush1.bf16.msra.mxu0 0
  %3922 = vmatprep.subr.bf16.mxu0 0
  %3923 = vmatpush1.bf16.msra.mxu0 0
  %3924 = vmatprep.mubr.bf16.mxu0 0
  %3925 = vmatmul.mubr.bf16.gmra.mrb[0].mxu0 %v3890
  %v3926 = vpop.f32.mrb[0].mxu0
  %v3927 = vadd.f32 0.0, %v3926
  %v3928 = vpop.f32.mrb[0].mxu0
  %v3929 = vadd.f32 0.0, %v3928
  %v3930 = vpop.f32.mrb[0].mxu0
  %v3931 = vadd.f32 0.0, %v3930
  %v3932 = vpop.f32.mrb[0].mxu0
  %v3933 = vadd.f32 0.0, %v3932
  %3934 = vdwg.mxu0
  %v3935 = vadd.f32 %v3870, %v3927
  %v3936 = vadd.f32 %v3871, %v3929
  %v3937 = vadd.f32 %v3872, %v3931
  %v3938 = vadd.f32 %v3873, %v3933
  %s3939 = scalar_lea.vmem %s1, 192
  %v3940 = vld [vmem:[%s3939] sm:$0xf]
  %v3941 = vld [vmem:[%s3939 + $0x4] sm:$0xf]
  %v3944 = vunpack.c.l.b16 %v3940
  %v3945 = vunpack.c.l.b16 %v3941
  %v3946 = vpack.c.b16 %v3945, %v3944
  %3947 = vrot.lane.b32.xlu0 %v3544, 120
  %v3948 = vpop.permute.xlu0 %3947
  %3949 = vrot.lane.b32.xlu0 %v3545, 120
  %v3950 = vpop.permute.xlu0 %3949
  %vm3951 = vcmask 982016
  %v3952 = vsel %vm3951, %v3948, %v3950
  %v3956 = vsel %vm134, %v3946, 0
  %3958 = vmatprep.subr.bf16.mxu0 %v3950
  %3959 = vmatpush1.bf16.msra.mxu0 %v3952
  %3960 = vmatprep.subr.bf16.mxu0 0
  %3961 = vmatpush1.bf16.msra.mxu0 0
  %3962 = vmatprep.subr.bf16.mxu0 0
  %3963 = vmatpush1.bf16.msra.mxu0 0
  %3964 = vmatprep.subr.bf16.mxu0 0
  %3965 = vmatpush1.bf16.msra.mxu0 0
  %3966 = vmatprep.subr.bf16.mxu0 0
  %3967 = vmatpush1.bf16.msra.mxu0 0
  %3968 = vmatprep.subr.bf16.mxu0 0
  %3969 = vmatpush1.bf16.msra.mxu0 0
  %3970 = vmatprep.subr.bf16.mxu0 0
  %3971 = vmatpush1.bf16.msra.mxu0 0
  %3972 = vmatprep.subr.bf16.mxu0 0
  %3973 = vmatpush1.bf16.msra.mxu0 0
  %3974 = vmatprep.subr.bf16.mxu0 0
  %3975 = vmatpush1.bf16.msra.mxu0 0
  %3976 = vmatprep.subr.bf16.mxu0 0
  %3977 = vmatpush1.bf16.msra.mxu0 0
  %3978 = vmatprep.subr.bf16.mxu0 0
  %3979 = vmatpush1.bf16.msra.mxu0 0
  %3980 = vmatprep.subr.bf16.mxu0 0
  %3981 = vmatpush1.bf16.msra.mxu0 0
  %3982 = vmatprep.subr.bf16.mxu0 0
  %3983 = vmatpush1.bf16.msra.mxu0 0
  %3984 = vmatprep.subr.bf16.mxu0 0
  %3985 = vmatpush1.bf16.msra.mxu0 0
  %3986 = vmatprep.subr.bf16.mxu0 0
  %3987 = vmatpush1.bf16.msra.mxu0 0
  %3988 = vmatprep.subr.bf16.mxu0 0
  %3989 = vmatpush1.bf16.msra.mxu0 0
  %3990 = vmatprep.mubr.bf16.mxu0 0
  %3991 = vmatmul.mubr.bf16.gmra.mrb[0].mxu0 %v3956
  %v3992 = vpop.f32.mrb[0].mxu0
  %v3993 = vadd.f32 0.0, %v3992
  %v3994 = vpop.f32.mrb[0].mxu0
  %v3995 = vadd.f32 0.0, %v3994
  %v3996 = vpop.f32.mrb[0].mxu0
  %v3997 = vadd.f32 0.0, %v3996
  %v3998 = vpop.f32.mrb[0].mxu0
  %v3999 = vadd.f32 0.0, %v3998
  %4000 = vdwg.mxu0
  %v4001 = vadd.f32 %v3935, %v3993
  %v4002 = vadd.f32 %v3936, %v3995
  %v4003 = vadd.f32 %v3937, %v3997
  %v4004 = vadd.f32 %v3938, %v3999
  %s4005 = scalar_lea.vmem %s1, 200
  %v4006 = vld [vmem:[%s4005] sm:$0xf]
  %v4007 = vld [vmem:[%s4005 + $0x4] sm:$0xf]
  %v4010 = vunpack.c.l.b16 %v4006
  %v4011 = vunpack.c.l.b16 %v4007
  %v4012 = vpack.c.b16 %v4011, %v4010
  %4013 = vrot.lane.b32.xlu0 %v3544, 119
  %v4014 = vpop.permute.xlu0 %4013
  %4015 = vrot.lane.b32.xlu0 %v3545, 119
  %v4016 = vpop.permute.xlu0 %4015
  %vm4017 = vcmask 973824
  %v4018 = vsel %vm4017, %v4014, %v4016
  %v4022 = vsel %vm134, %v4012, 0
  %4024 = vmatprep.subr.bf16.mxu0 %v4016
  %4025 = vmatpush1.bf16.msra.mxu0 %v4018
  %4026 = vmatprep.subr.bf16.mxu0 0
  %4027 = vmatpush1.bf16.msra.mxu0 0
  %4028 = vmatprep.subr.bf16.mxu0 0
  %4029 = vmatpush1.bf16.msra.mxu0 0
  %4030 = vmatprep.subr.bf16.mxu0 0
  %4031 = vmatpush1.bf16.msra.mxu0 0
  %4032 = vmatprep.subr.bf16.mxu0 0
  %4033 = vmatpush1.bf16.msra.mxu0 0
  %4034 = vmatprep.subr.bf16.mxu0 0
  %4035 = vmatpush1.bf16.msra.mxu0 0
  %4036 = vmatprep.subr.bf16.mxu0 0
  %4037 = vmatpush1.bf16.msra.mxu0 0
  %4038 = vmatprep.subr.bf16.mxu0 0
  %4039 = vmatpush1.bf16.msra.mxu0 0
  %4040 = vmatprep.subr.bf16.mxu0 0
  %4041 = vmatpush1.bf16.msra.mxu0 0
  %4042 = vmatprep.subr.bf16.mxu0 0
  %4043 = vmatpush1.bf16.msra.mxu0 0
  %4044 = vmatprep.subr.bf16.mxu0 0
  %4045 = vmatpush1.bf16.msra.mxu0 0
  %4046 = vmatprep.subr.bf16.mxu0 0
  %4047 = vmatpush1.bf16.msra.mxu0 0
  %4048 = vmatprep.subr.bf16.mxu0 0
  %4049 = vmatpush1.bf16.msra.mxu0 0
  %4050 = vmatprep.subr.bf16.mxu0 0
  %4051 = vmatpush1.bf16.msra.mxu0 0
  %4052 = vmatprep.subr.bf16.mxu0 0
  %4053 = vmatpush1.bf16.msra.mxu0 0
  %4054 = vmatprep.subr.bf16.mxu0 0
  %4055 = vmatpush1.bf16.msra.mxu0 0
  %4056 = vmatprep.mubr.bf16.mxu0 0
  %4057 = vmatmul.mubr.bf16.gmra.mrb[0].mxu0 %v4022
  %v4058 = vpop.f32.mrb[0].mxu0
  %v4059 = vadd.f32 0.0, %v4058
  %v4060 = vpop.f32.mrb[0].mxu0
  %v4061 = vadd.f32 0.0, %v4060
  %v4062 = vpop.f32.mrb[0].mxu0
  %v4063 = vadd.f32 0.0, %v4062
  %v4064 = vpop.f32.mrb[0].mxu0
  %v4065 = vadd.f32 0.0, %v4064
  %4066 = vdwg.mxu0
  %v4067 = vadd.f32 %v4001, %v4059
  %v4068 = vadd.f32 %v4002, %v4061
  %v4069 = vadd.f32 %v4003, %v4063
  %v4070 = vadd.f32 %v4004, %v4065
  %s4071 = scalar_lea.vmem %s1, 208
  %v4072 = vld [vmem:[%s4071] sm:$0xf]
  %v4073 = vld [vmem:[%s4071 + $0x4] sm:$0xf]
  %v4076 = vunpack.c.l.b16 %v4072
  %v4077 = vunpack.c.l.b16 %v4073
  %v4078 = vpack.c.b16 %v4077, %v4076
  %4079 = vrot.lane.b32.xlu0 %v3544, 118
  %v4080 = vpop.permute.xlu0 %4079
  %4081 = vrot.lane.b32.xlu0 %v3545, 118
  %v4082 = vpop.permute.xlu0 %4081
  %vm4083 = vcmask 965632
  %v4084 = vsel %vm4083, %v4080, %v4082
  %v4088 = vsel %vm134, %v4078, 0
  %4090 = vmatprep.subr.bf16.mxu0 %v4082
  %4091 = vmatpush1.bf16.msra.mxu0 %v4084
  %4092 = vmatprep.subr.bf16.mxu0 0
  %4093 = vmatpush1.bf16.msra.mxu0 0
  %4094 = vmatprep.subr.bf16.mxu0 0
  %4095 = vmatpush1.bf16.msra.mxu0 0
  %4096 = vmatprep.subr.bf16.mxu0 0
  %4097 = vmatpush1.bf16.msra.mxu0 0
  %4098 = vmatprep.subr.bf16.mxu0 0
  %4099 = vmatpush1.bf16.msra.mxu0 0
  %4100 = vmatprep.subr.bf16.mxu0 0
  %4101 = vmatpush1.bf16.msra.mxu0 0
  %4102 = vmatprep.subr.bf16.mxu0 0
  %4103 = vmatpush1.bf16.msra.mxu0 0
  %4104 = vmatprep.subr.bf16.mxu0 0
  %4105 = vmatpush1.bf16.msra.mxu0 0
  %4106 = vmatprep.subr.bf16.mxu0 0
  %4107 = vmatpush1.bf16.msra.mxu0 0
  %4108 = vmatprep.subr.bf16.mxu0 0
  %4109 = vmatpush1.bf16.msra.mxu0 0
  %4110 = vmatprep.subr.bf16.mxu0 0
  %4111 = vmatpush1.bf16.msra.mxu0 0
  %4112 = vmatprep.subr.bf16.mxu0 0
  %4113 = vmatpush1.bf16.msra.mxu0 0
  %4114 = vmatprep.subr.bf16.mxu0 0
  %4115 = vmatpush1.bf16.msra.mxu0 0
  %4116 = vmatprep.subr.bf16.mxu0 0
  %4117 = vmatpush1.bf16.msra.mxu0 0
  %4118 = vmatprep.subr.bf16.mxu0 0
  %4119 = vmatpush1.bf16.msra.mxu0 0
  %4120 = vmatprep.subr.bf16.mxu0 0
  %4121 = vmatpush1.bf16.msra.mxu0 0
  %4122 = vmatprep.mubr.bf16.mxu0 0
  %4123 = vmatmul.mubr.bf16.gmra.mrb[0].mxu0 %v4088
  %v4124 = vpop.f32.mrb[0].mxu0
  %v4125 = vadd.f32 0.0, %v4124
  %v4126 = vpop.f32.mrb[0].mxu0
  %v4127 = vadd.f32 0.0, %v4126
  %v4128 = vpop.f32.mrb[0].mxu0
  %v4129 = vadd.f32 0.0, %v4128
  %v4130 = vpop.f32.mrb[0].mxu0
  %v4131 = vadd.f32 0.0, %v4130
  %4132 = vdwg.mxu0
  %v4133 = vadd.f32 %v4067, %v4125
  %v4134 = vadd.f32 %v4068, %v4127
  %v4135 = vadd.f32 %v4069, %v4129
  %v4136 = vadd.f32 %v4070, %v4131
  %v4137 = vld [vmem:[%s2] sm:$0xff]
  %v4138 = vld [vmem:[%s2 + $0x8] sm:$0xff]
  %4140 = vset.pattern.permute.xlu0 2
  %4141 = vperm.xlu0 %4140, %v4137
  %v4142 = vpop.permute.xlu0 %4141
  %4145 = vset.pattern.permute.xlu0 2
  %4146 = vperm.xlu0 %4145, %v4138
  %v4147 = vpop.permute.xlu0 %4146
  %v4149 = vadd.f32 %v4133, %v4142
  %v4150 = vadd.f32 %v4134, %v4142
  %v4151 = vadd.f32 %v4135, %v4147
  %v4152 = vadd.f32 %v4136, %v4147
  %v4154 = vlaneseq
  %v4155 = vshrl.u32 %v4154, 7
  %v4156 = vsub.s32 0, %v4155
  %v4157 = vrot.slane %v49, %v4156
  %v4158 = vlaneseq
  %v4159 = vshrl.u32 %v4158, 7
  %v4160 = vsub.s32 1, %v4159
  %v4161 = vrot.slane %v49, %v4160
  %v4164 = vmul.f32 %v4149, %v4157
  %v4165 = vmul.f32 %v4150, %v4161
  %v4166 = vmul.f32 %v4151, %v4157
  %v4167 = vmul.f32 %v4152, %v4161
  %v4168 = vmax.f32 %v4164, 0.0
  %v4169 = vmax.f32 %v4165, 0.0
  %v4170 = vmax.f32 %v4166, 0.0
  %v4171 = vmax.f32 %v4167, 0.0
  %v4172 = vpack.c.bf16 %v4170, %v4168
  %v4173 = vpack.c.bf16 %v4171, %v4169
  %4174 = vst [vmem:[#allocation2 + $0x8] sm:$0xff] %v4172
  %4175 = vst.msk [vmem:[#allocation2 + $0x10] sm:$0xff] %vm3541, %v4173
  %v4176 = vld [vmem:[#allocation2] sm:$0xff]
  %v4177 = vld [vmem:[#allocation2 + $0x8] sm:$0xff]
  %v4178 = vld [vmem:[#allocation2 + $0x10] sm:$0xff]
  %s4179 = scalar_lea.vmem %s1, 216
  %v4180 = vld [vmem:[%s4179] sm:$0xf]
  %v4181 = vld [vmem:[%s4179 + $0x4] sm:$0xf]
  %s4182 = scalar_lea.vmem %s1, 224
  %v4183 = vld [vmem:[%s4182] sm:$0xf]
  %v4184 = vld [vmem:[%s4182 + $0x4] sm:$0xf]
  %v4187 = vunpack.c.l.b16 %v4183
  %v4188 = vunpack.c.l.b16 %v4184
  %v4189 = vpack.c.b16 %v4188, %v4187
  %4193 = vrot.lane.b32.xlu0 %v4176, 9
  %v4194 = vpop.permute.xlu0 %4193
  %4195 = vrot.lane.b32.xlu0 %v4177, 9
  %v4196 = vpop.permute.xlu0 %4195
  %4197 = vrot.lane.b32.xlu0 %v4178, 9
  %v4198 = vpop.permute.xlu0 %4197
  %v4199 = vsel %vm3566, %v4194, %v4196
  %v4200 = vsel %vm3566, %v4196, %v4198
  %v4204 = vsel %vm134, %v4189, 0
  %4206 = vmatprep.subr.bf16.mxu0 %v4200
  %4207 = vmatpush1.bf16.msra.mxu0 %v4199
  %4208 = vmatprep.subr.bf16.mxu0 0
  %4209 = vmatpush1.bf16.msra.mxu0 0
  %4210 = vmatprep.subr.bf16.mxu0 0
  %4211 = vmatpush1.bf16.msra.mxu0 0
  %4212 = vmatprep.subr.bf16.mxu0 0
  %4213 = vmatpush1.bf16.msra.mxu0 0
  %4214 = vmatprep.subr.bf16.mxu0 0
  %4215 = vmatpush1.bf16.msra.mxu0 0
  %4216 = vmatprep.subr.bf16.mxu0 0
  %4217 = vmatpush1.bf16.msra.mxu0 0
  %4218 = vmatprep.subr.bf16.mxu0 0
  %4219 = vmatpush1.bf16.msra.mxu0 0
  %4220 = vmatprep.subr.bf16.mxu0 0
  %4221 = vmatpush1.bf16.msra.mxu0 0
  %4222 = vmatprep.subr.bf16.mxu0 0
  %4223 = vmatpush1.bf16.msra.mxu0 0
  %4224 = vmatprep.subr.bf16.mxu0 0
  %4225 = vmatpush1.bf16.msra.mxu0 0
  %4226 = vmatprep.subr.bf16.mxu0 0
  %4227 = vmatpush1.bf16.msra.mxu0 0
  %4228 = vmatprep.subr.bf16.mxu0 0
  %4229 = vmatpush1.bf16.msra.mxu0 0
  %4230 = vmatprep.subr.bf16.mxu0 0
  %4231 = vmatpush1.bf16.msra.mxu0 0
  %4232 = vmatprep.subr.bf16.mxu0 0
  %4233 = vmatpush1.bf16.msra.mxu0 0
  %4234 = vmatprep.subr.bf16.mxu0 0
  %4235 = vmatpush1.bf16.msra.mxu0 0
  %4236 = vmatprep.subr.bf16.mxu0 0
  %4237 = vmatpush1.bf16.msra.mxu0 0
  %4238 = vmatprep.mubr.bf16.mxu0 0
  %4239 = vmatmul.mubr.bf16.gmra.mrb[0].mxu0 %v4204
  %v4240 = vpop.f32.mrb[0].mxu0
  %v4241 = vadd.f32 0.0, %v4240
  %v4242 = vpop.f32.mrb[0].mxu0
  %v4243 = vadd.f32 0.0, %v4242
  %v4244 = vpop.f32.mrb[0].mxu0
  %v4245 = vadd.f32 0.0, %v4244
  %v4246 = vpop.f32.mrb[0].mxu0
  %v4247 = vadd.f32 0.0, %v4246
  %4248 = vdwg.mxu0
  %v4251 = vunpack.c.l.b16 %v4180
  %v4252 = vunpack.c.l.b16 %v4181
  %v4253 = vpack.c.b16 %v4252, %v4251
  %4254 = vrot.lane.b32.xlu0 %v4176, 10
  %v4255 = vpop.permute.xlu0 %4254
  %4256 = vrot.lane.b32.xlu0 %v4177, 10
  %v4257 = vpop.permute.xlu0 %4256
  %4258 = vrot.lane.b32.xlu0 %v4178, 10
  %v4259 = vpop.permute.xlu0 %4258
  %v4260 = vsel %vm3628, %v4255, %v4257
  %v4261 = vsel %vm3628, %v4257, %v4259
  %v4265 = vsel %vm134, %v4253, 0
  %4267 = vmatprep.subr.bf16.mxu0 %v4261
  %4268 = vmatpush1.bf16.msra.mxu0 %v4260
  %4269 = vmatprep.subr.bf16.mxu0 0
  %4270 = vmatpush1.bf16.msra.mxu0 0
  %4271 = vmatprep.subr.bf16.mxu0 0
  %4272 = vmatpush1.bf16.msra.mxu0 0
  %4273 = vmatprep.subr.bf16.mxu0 0
  %4274 = vmatpush1.bf16.msra.mxu0 0
  %4275 = vmatprep.subr.bf16.mxu0 0
  %4276 = vmatpush1.bf16.msra.mxu0 0
  %4277 = vmatprep.subr.bf16.mxu0 0
  %4278 = vmatpush1.bf16.msra.mxu0 0
  %4279 = vmatprep.subr.bf16.mxu0 0
  %4280 = vmatpush1.bf16.msra.mxu0 0
  %4281 = vmatprep.subr.bf16.mxu0 0
  %4282 = vmatpush1.bf16.msra.mxu0 0
  %4283 = vmatprep.subr.bf16.mxu0 0
  %4284 = vmatpush1.bf16.msra.mxu0 0
  %4285 = vmatprep.subr.bf16.mxu0 0
  %4286 = vmatpush1.bf16.msra.mxu0 0
  %4287 = vmatprep.subr.bf16.mxu0 0
  %4288 = vmatpush1.bf16.msra.mxu0 0
  %4289 = vmatprep.subr.bf16.mxu0 0
  %4290 = vmatpush1.bf16.msra.mxu0 0
  %4291 = vmatprep.subr.bf16.mxu0 0
  %4292 = vmatpush1.bf16.msra.mxu0 0
  %4293 = vmatprep.subr.bf16.mxu0 0
  %4294 = vmatpush1.bf16.msra.mxu0 0
  %4295 = vmatprep.subr.bf16.mxu0 0
  %4296 = vmatpush1.bf16.msra.mxu0 0
  %4297 = vmatprep.subr.bf16.mxu0 0
  %4298 = vmatpush1.bf16.msra.mxu0 0
  %4299 = vmatprep.mubr.bf16.mxu0 0
  %4300 = vmatmul.mubr.bf16.gmra.mrb[0].mxu0 %v4265
  %v4301 = vpop.f32.mrb[0].mxu0
  %v4302 = vadd.f32 %v4241, %v4301
  %v4303 = vpop.f32.mrb[0].mxu0
  %v4304 = vadd.f32 %v4243, %v4303
  %v4305 = vpop.f32.mrb[0].mxu0
  %v4306 = vadd.f32 %v4245, %v4305
  %v4307 = vpop.f32.mrb[0].mxu0
  %v4308 = vadd.f32 %v4247, %v4307
  %4309 = vdwg.mxu0
  %s4310 = scalar_lea.vmem %s1, 232
  %v4311 = vld [vmem:[%s4310] sm:$0xf]
  %v4312 = vld [vmem:[%s4310 + $0x4] sm:$0xf]
  %v4315 = vunpack.c.l.b16 %v4311
  %v4316 = vunpack.c.l.b16 %v4312
  %v4317 = vpack.c.b16 %v4316, %v4315
  %4318 = vrot.lane.b32.xlu0 %v4176, 8
  %v4319 = vpop.permute.xlu0 %4318
  %4320 = vrot.lane.b32.xlu0 %v4177, 8
  %v4321 = vpop.permute.xlu0 %4320
  %4322 = vrot.lane.b32.xlu0 %v4178, 8
  %v4323 = vpop.permute.xlu0 %4322
  %v4324 = vsel %vm3693, %v4319, %v4321
  %v4325 = vsel %vm3693, %v4321, %v4323
  %v4329 = vsel %vm134, %v4317, 0
  %4331 = vmatprep.subr.bf16.mxu0 %v4325
  %4332 = vmatpush1.bf16.msra.mxu0 %v4324
  %4333 = vmatprep.subr.bf16.mxu0 0
  %4334 = vmatpush1.bf16.msra.mxu0 0
  %4335 = vmatprep.subr.bf16.mxu0 0
  %4336 = vmatpush1.bf16.msra.mxu0 0
  %4337 = vmatprep.subr.bf16.mxu0 0
  %4338 = vmatpush1.bf16.msra.mxu0 0
  %4339 = vmatprep.subr.bf16.mxu0 0
  %4340 = vmatpush1.bf16.msra.mxu0 0
  %4341 = vmatprep.subr.bf16.mxu0 0
  %4342 = vmatpush1.bf16.msra.mxu0 0
  %4343 = vmatprep.subr.bf16.mxu0 0
  %4344 = vmatpush1.bf16.msra.mxu0 0
  %4345 = vmatprep.subr.bf16.mxu0 0
  %4346 = vmatpush1.bf16.msra.mxu0 0
  %4347 = vmatprep.subr.bf16.mxu0 0
  %4348 = vmatpush1.bf16.msra.mxu0 0
  %4349 = vmatprep.subr.bf16.mxu0 0
  %4350 = vmatpush1.bf16.msra.mxu0 0
  %4351 = vmatprep.subr.bf16.mxu0 0
  %4352 = vmatpush1.bf16.msra.mxu0 0
  %4353 = vmatprep.subr.bf16.mxu0 0
  %4354 = vmatpush1.bf16.msra.mxu0 0
  %4355 = vmatprep.subr.bf16.mxu0 0
  %4356 = vmatpush1.bf16.msra.mxu0 0
  %4357 = vmatprep.subr.bf16.mxu0 0
  %4358 = vmatpush1.bf16.msra.mxu0 0
  %4359 = vmatprep.subr.bf16.mxu0 0
  %4360 = vmatpush1.bf16.msra.mxu0 0
  %4361 = vmatprep.subr.bf16.mxu0 0
  %4362 = vmatpush1.bf16.msra.mxu0 0
  %4363 = vmatprep.mubr.bf16.mxu0 0
  %4364 = vmatmul.mubr.bf16.gmra.mrb[0].mxu0 %v4329
  %v4365 = vpop.f32.mrb[0].mxu0
  %v4366 = vadd.f32 0.0, %v4365
  %v4367 = vpop.f32.mrb[0].mxu0
  %v4368 = vadd.f32 0.0, %v4367
  %v4369 = vpop.f32.mrb[0].mxu0
  %v4370 = vadd.f32 0.0, %v4369
  %v4371 = vpop.f32.mrb[0].mxu0
  %v4372 = vadd.f32 0.0, %v4371
  %4373 = vdwg.mxu0
  %v4374 = vadd.f32 %v4302, %v4366
  %v4375 = vadd.f32 %v4304, %v4368
  %v4376 = vadd.f32 %v4306, %v4370
  %v4377 = vadd.f32 %v4308, %v4372
  %s4378 = scalar_lea.vmem %s1, 240
  %v4379 = vld [vmem:[%s4378] sm:$0xf]
  %v4380 = vld [vmem:[%s4378 + $0x4] sm:$0xf]
  %v4383 = vunpack.c.l.b16 %v4379
  %v4384 = vunpack.c.l.b16 %v4380
  %v4385 = vpack.c.b16 %v4384, %v4383
  %4386 = vrot.lane.b32.xlu0 %v4176, 1
  %v4387 = vpop.permute.xlu0 %4386
  %4388 = vrot.lane.b32.xlu0 %v4177, 1
  %v4389 = vpop.permute.xlu0 %4388
  %4390 = vrot.lane.b32.xlu0 %v4178, 1
  %v4391 = vpop.permute.xlu0 %4390
  %v4392 = vsel %vm614, %v4387, %v4389
  %v4393 = vsel %vm614, %v4389, %v4391
  %v4397 = vsel %vm134, %v4385, 0
  %4399 = vmatprep.subr.bf16.mxu0 %v4393
  %4400 = vmatpush1.bf16.msra.mxu0 %v4392
  %4401 = vmatprep.subr.bf16.mxu0 0
  %4402 = vmatpush1.bf16.msra.mxu0 0
  %4403 = vmatprep.subr.bf16.mxu0 0
  %4404 = vmatpush1.bf16.msra.mxu0 0
  %4405 = vmatprep.subr.bf16.mxu0 0
  %4406 = vmatpush1.bf16.msra.mxu0 0
  %4407 = vmatprep.subr.bf16.mxu0 0
  %4408 = vmatpush1.bf16.msra.mxu0 0
  %4409 = vmatprep.subr.bf16.mxu0 0
  %4410 = vmatpush1.bf16.msra.mxu0 0
  %4411 = vmatprep.subr.bf16.mxu0 0
  %4412 = vmatpush1.bf16.msra.mxu0 0
  %4413 = vmatprep.subr.bf16.mxu0 0
  %4414 = vmatpush1.bf16.msra.mxu0 0
  %4415 = vmatprep.subr.bf16.mxu0 0
  %4416 = vmatpush1.bf16.msra.mxu0 0
  %4417 = vmatprep.subr.bf16.mxu0 0
  %4418 = vmatpush1.bf16.msra.mxu0 0
  %4419 = vmatprep.subr.bf16.mxu0 0
  %4420 = vmatpush1.bf16.msra.mxu0 0
  %4421 = vmatprep.subr.bf16.mxu0 0
  %4422 = vmatpush1.bf16.msra.mxu0 0
  %4423 = vmatprep.subr.bf16.mxu0 0
  %4424 = vmatpush1.bf16.msra.mxu0 0
  %4425 = vmatprep.subr.bf16.mxu0 0
  %4426 = vmatpush1.bf16.msra.mxu0 0
  %4427 = vmatprep.subr.bf16.mxu0 0
  %4428 = vmatpush1.bf16.msra.mxu0 0
  %4429 = vmatprep.subr.bf16.mxu0 0
  %4430 = vmatpush1.bf16.msra.mxu0 0
  %4431 = vmatprep.mubr.bf16.mxu0 0
  %4432 = vmatmul.mubr.bf16.gmra.mrb[0].mxu0 %v4397
  %v4433 = vpop.f32.mrb[0].mxu0
  %v4434 = vadd.f32 0.0, %v4433
  %v4435 = vpop.f32.mrb[0].mxu0
  %v4436 = vadd.f32 0.0, %v4435
  %v4437 = vpop.f32.mrb[0].mxu0
  %v4438 = vadd.f32 0.0, %v4437
  %v4439 = vpop.f32.mrb[0].mxu0
  %v4440 = vadd.f32 0.0, %v4439
  %4441 = vdwg.mxu0
  %v4442 = vadd.f32 %v4374, %v4434
  %v4443 = vadd.f32 %v4375, %v4436
  %v4444 = vadd.f32 %v4376, %v4438
  %v4445 = vadd.f32 %v4377, %v4440
  %s4446 = scalar_lea.vmem %s1, 248
  %v4447 = vld [vmem:[%s4446] sm:$0xf]
  %v4448 = vld [vmem:[%s4446 + $0x4] sm:$0xf]
  %v4451 = vunpack.c.l.b16 %v4447
  %v4452 = vunpack.c.l.b16 %v4448
  %v4453 = vpack.c.b16 %v4452, %v4451
  %v4455 = vsel %vm134, %v4453, 0
  %4457 = vmatprep.subr.bf16.mxu0 %v4178
  %4458 = vmatpush1.bf16.msra.mxu0 %v4177
  %4459 = vmatprep.subr.bf16.mxu0 0
  %4460 = vmatpush1.bf16.msra.mxu0 0
  %4461 = vmatprep.subr.bf16.mxu0 0
  %4462 = vmatpush1.bf16.msra.mxu0 0
  %4463 = vmatprep.subr.bf16.mxu0 0
  %4464 = vmatpush1.bf16.msra.mxu0 0
  %4465 = vmatprep.subr.bf16.mxu0 0
  %4466 = vmatpush1.bf16.msra.mxu0 0
  %4467 = vmatprep.subr.bf16.mxu0 0
  %4468 = vmatpush1.bf16.msra.mxu0 0
  %4469 = vmatprep.subr.bf16.mxu0 0
  %4470 = vmatpush1.bf16.msra.mxu0 0
  %4471 = vmatprep.subr.bf16.mxu0 0
  %4472 = vmatpush1.bf16.msra.mxu0 0
  %4473 = vmatprep.subr.bf16.mxu0 0
  %4474 = vmatpush1.bf16.msra.mxu0 0
  %4475 = vmatprep.subr.bf16.mxu0 0
  %4476 = vmatpush1.bf16.msra.mxu0 0
  %4477 = vmatprep.subr.bf16.mxu0 0
  %4478 = vmatpush1.bf16.msra.mxu0 0
  %4479 = vmatprep.subr.bf16.mxu0 0
  %4480 = vmatpush1.bf16.msra.mxu0 0
  %4481 = vmatprep.subr.bf16.mxu0 0
  %4482 = vmatpush1.bf16.msra.mxu0 0
  %4483 = vmatprep.subr.bf16.mxu0 0
  %4484 = vmatpush1.bf16.msra.mxu0 0
  %4485 = vmatprep.subr.bf16.mxu0 0
  %4486 = vmatpush1.bf16.msra.mxu0 0
  %4487 = vmatprep.subr.bf16.mxu0 0
  %4488 = vmatpush1.bf16.msra.mxu0 0
  %4489 = vmatprep.mubr.bf16.mxu0 0
  %4490 = vmatmul.mubr.bf16.gmra.mrb[0].mxu0 %v4455
  %v4491 = vpop.f32.mrb[0].mxu0
  %v4492 = vadd.f32 0.0, %v4491
  %v4493 = vpop.f32.mrb[0].mxu0
  %v4494 = vadd.f32 0.0, %v4493
  %v4495 = vpop.f32.mrb[0].mxu0
  %v4496 = vadd.f32 0.0, %v4495
  %v4497 = vpop.f32.mrb[0].mxu0
  %v4498 = vadd.f32 0.0, %v4497
  %4499 = vdwg.mxu0
  %v4500 = vadd.f32 %v4442, %v4492
  %v4501 = vadd.f32 %v4443, %v4494
  %v4502 = vadd.f32 %v4444, %v4496
  %v4503 = vadd.f32 %v4445, %v4498
  %s4504 = scalar_lea.vmem %s1, 256
  %v4505 = vld [vmem:[%s4504] sm:$0xf]
  %v4506 = vld [vmem:[%s4504 + $0x4] sm:$0xf]
  %v4509 = vunpack.c.l.b16 %v4505
  %v4510 = vunpack.c.l.b16 %v4506
  %v4511 = vpack.c.b16 %v4510, %v4509
  %4512 = vrot.lane.b32.xlu0 %v4177, 127
  %v4513 = vpop.permute.xlu0 %4512
  %4514 = vrot.lane.b32.xlu0 %v4178, 127
  %v4515 = vpop.permute.xlu0 %4514
  %v4516 = vsel %vm931, %v4513, %v4515
  %v4520 = vsel %vm134, %v4511, 0
  %4522 = vmatprep.subr.bf16.mxu0 %v4515
  %4523 = vmatpush1.bf16.msra.mxu0 %v4516
  %4524 = vmatprep.subr.bf16.mxu0 0
  %4525 = vmatpush1.bf16.msra.mxu0 0
  %4526 = vmatprep.subr.bf16.mxu0 0
  %4527 = vmatpush1.bf16.msra.mxu0 0
  %4528 = vmatprep.subr.bf16.mxu0 0
  %4529 = vmatpush1.bf16.msra.mxu0 0
  %4530 = vmatprep.subr.bf16.mxu0 0
  %4531 = vmatpush1.bf16.msra.mxu0 0
  %4532 = vmatprep.subr.bf16.mxu0 0
  %4533 = vmatpush1.bf16.msra.mxu0 0
  %4534 = vmatprep.subr.bf16.mxu0 0
  %4535 = vmatpush1.bf16.msra.mxu0 0
  %4536 = vmatprep.subr.bf16.mxu0 0
  %4537 = vmatpush1.bf16.msra.mxu0 0
  %4538 = vmatprep.subr.bf16.mxu0 0
  %4539 = vmatpush1.bf16.msra.mxu0 0
  %4540 = vmatprep.subr.bf16.mxu0 0
  %4541 = vmatpush1.bf16.msra.mxu0 0
  %4542 = vmatprep.subr.bf16.mxu0 0
  %4543 = vmatpush1.bf16.msra.mxu0 0
  %4544 = vmatprep.subr.bf16.mxu0 0
  %4545 = vmatpush1.bf16.msra.mxu0 0
  %4546 = vmatprep.subr.bf16.mxu0 0
  %4547 = vmatpush1.bf16.msra.mxu0 0
  %4548 = vmatprep.subr.bf16.mxu0 0
  %4549 = vmatpush1.bf16.msra.mxu0 0
  %4550 = vmatprep.subr.bf16.mxu0 0
  %4551 = vmatpush1.bf16.msra.mxu0 0
  %4552 = vmatprep.subr.bf16.mxu0 0
  %4553 = vmatpush1.bf16.msra.mxu0 0
  %4554 = vmatprep.mubr.bf16.mxu0 0
  %4555 = vmatmul.mubr.bf16.gmra.mrb[0].mxu0 %v4520
  %v4556 = vpop.f32.mrb[0].mxu0
  %v4557 = vadd.f32 0.0, %v4556
  %v4558 = vpop.f32.mrb[0].mxu0
  %v4559 = vadd.f32 0.0, %v4558
  %v4560 = vpop.f32.mrb[0].mxu0
  %v4561 = vadd.f32 0.0, %v4560
  %v4562 = vpop.f32.mrb[0].mxu0
  %v4563 = vadd.f32 0.0, %v4562
  %4564 = vdwg.mxu0
  %v4565 = vadd.f32 %v4500, %v4557
  %v4566 = vadd.f32 %v4501, %v4559
  %v4567 = vadd.f32 %v4502, %v4561
  %v4568 = vadd.f32 %v4503, %v4563
  %s4569 = scalar_lea.vmem %s1, 264
  %v4570 = vld [vmem:[%s4569] sm:$0xf]
  %v4571 = vld [vmem:[%s4569 + $0x4] sm:$0xf]
  %v4574 = vunpack.c.l.b16 %v4570
  %v4575 = vunpack.c.l.b16 %v4571
  %v4576 = vpack.c.b16 %v4575, %v4574
  %4577 = vrot.lane.b32.xlu0 %v4177, 120
  %v4578 = vpop.permute.xlu0 %4577
  %4579 = vrot.lane.b32.xlu0 %v4178, 120
  %v4580 = vpop.permute.xlu0 %4579
  %v4581 = vsel %vm3951, %v4578, %v4580
  %v4585 = vsel %vm134, %v4576, 0
  %4587 = vmatprep.subr.bf16.mxu0 %v4580
  %4588 = vmatpush1.bf16.msra.mxu0 %v4581
  %4589 = vmatprep.subr.bf16.mxu0 0
  %4590 = vmatpush1.bf16.msra.mxu0 0
  %4591 = vmatprep.subr.bf16.mxu0 0
  %4592 = vmatpush1.bf16.msra.mxu0 0
  %4593 = vmatprep.subr.bf16.mxu0 0
  %4594 = vmatpush1.bf16.msra.mxu0 0
  %4595 = vmatprep.subr.bf16.mxu0 0
  %4596 = vmatpush1.bf16.msra.mxu0 0
  %4597 = vmatprep.subr.bf16.mxu0 0
  %4598 = vmatpush1.bf16.msra.mxu0 0
  %4599 = vmatprep.subr.bf16.mxu0 0
  %4600 = vmatpush1.bf16.msra.mxu0 0
  %4601 = vmatprep.subr.bf16.mxu0 0
  %4602 = vmatpush1.bf16.msra.mxu0 0
  %4603 = vmatprep.subr.bf16.mxu0 0
  %4604 = vmatpush1.bf16.msra.mxu0 0
  %4605 = vmatprep.subr.bf16.mxu0 0
  %4606 = vmatpush1.bf16.msra.mxu0 0
  %4607 = vmatprep.subr.bf16.mxu0 0
  %4608 = vmatpush1.bf16.msra.mxu0 0
  %4609 = vmatprep.subr.bf16.mxu0 0
  %4610 = vmatpush1.bf16.msra.mxu0 0
  %4611 = vmatprep.subr.bf16.mxu0 0
  %4612 = vmatpush1.bf16.msra.mxu0 0
  %4613 = vmatprep.subr.bf16.mxu0 0
  %4614 = vmatpush1.bf16.msra.mxu0 0
  %4615 = vmatprep.subr.bf16.mxu0 0
  %4616 = vmatpush1.bf16.msra.mxu0 0
  %4617 = vmatprep.subr.bf16.mxu0 0
  %4618 = vmatpush1.bf16.msra.mxu0 0
  %4619 = vmatprep.mubr.bf16.mxu0 0
  %4620 = vmatmul.mubr.bf16.gmra.mrb[0].mxu0 %v4585
  %v4621 = vpop.f32.mrb[0].mxu0
  %v4622 = vadd.f32 0.0, %v4621
  %v4623 = vpop.f32.mrb[0].mxu0
  %v4624 = vadd.f32 0.0, %v4623
  %v4625 = vpop.f32.mrb[0].mxu0
  %v4626 = vadd.f32 0.0, %v4625
  %v4627 = vpop.f32.mrb[0].mxu0
  %v4628 = vadd.f32 0.0, %v4627
  %4629 = vdwg.mxu0
  %v4630 = vadd.f32 %v4565, %v4622
  %v4631 = vadd.f32 %v4566, %v4624
  %v4632 = vadd.f32 %v4567, %v4626
  %v4633 = vadd.f32 %v4568, %v4628
  %s4634 = scalar_lea.vmem %s1, 272
  %v4635 = vld [vmem:[%s4634] sm:$0xf]
  %v4636 = vld [vmem:[%s4634 + $0x4] sm:$0xf]
  %v4639 = vunpack.c.l.b16 %v4635
  %v4640 = vunpack.c.l.b16 %v4636
  %v4641 = vpack.c.b16 %v4640, %v4639
  %4642 = vrot.lane.b32.xlu0 %v4177, 119
  %v4643 = vpop.permute.xlu0 %4642
  %4644 = vrot.lane.b32.xlu0 %v4178, 119
  %v4645 = vpop.permute.xlu0 %4644
  %v4646 = vsel %vm4017, %v4643, %v4645
  %v4650 = vsel %vm134, %v4641, 0
  %4652 = vmatprep.subr.bf16.mxu0 %v4645
  %4653 = vmatpush1.bf16.msra.mxu0 %v4646
  %4654 = vmatprep.subr.bf16.mxu0 0
  %4655 = vmatpush1.bf16.msra.mxu0 0
  %4656 = vmatprep.subr.bf16.mxu0 0
  %4657 = vmatpush1.bf16.msra.mxu0 0
  %4658 = vmatprep.subr.bf16.mxu0 0
  %4659 = vmatpush1.bf16.msra.mxu0 0
  %4660 = vmatprep.subr.bf16.mxu0 0
  %4661 = vmatpush1.bf16.msra.mxu0 0
  %4662 = vmatprep.subr.bf16.mxu0 0
  %4663 = vmatpush1.bf16.msra.mxu0 0
  %4664 = vmatprep.subr.bf16.mxu0 0
  %4665 = vmatpush1.bf16.msra.mxu0 0
  %4666 = vmatprep.subr.bf16.mxu0 0
  %4667 = vmatpush1.bf16.msra.mxu0 0
  %4668 = vmatprep.subr.bf16.mxu0 0
  %4669 = vmatpush1.bf16.msra.mxu0 0
  %4670 = vmatprep.subr.bf16.mxu0 0
  %4671 = vmatpush1.bf16.msra.mxu0 0
  %4672 = vmatprep.subr.bf16.mxu0 0
  %4673 = vmatpush1.bf16.msra.mxu0 0
  %4674 = vmatprep.subr.bf16.mxu0 0
  %4675 = vmatpush1.bf16.msra.mxu0 0
  %4676 = vmatprep.subr.bf16.mxu0 0
  %4677 = vmatpush1.bf16.msra.mxu0 0
  %4678 = vmatprep.subr.bf16.mxu0 0
  %4679 = vmatpush1.bf16.msra.mxu0 0
  %4680 = vmatprep.subr.bf16.mxu0 0
  %4681 = vmatpush1.bf16.msra.mxu0 0
  %4682 = vmatprep.subr.bf16.mxu0 0
  %4683 = vmatpush1.bf16.msra.mxu0 0
  %4684 = vmatprep.mubr.bf16.mxu0 0
  %4685 = vmatmul.mubr.bf16.gmra.mrb[0].mxu0 %v4650
  %v4686 = vpop.f32.mrb[0].mxu0
  %v4687 = vadd.f32 0.0, %v4686
  %v4688 = vpop.f32.mrb[0].mxu0
  %v4689 = vadd.f32 0.0, %v4688
  %v4690 = vpop.f32.mrb[0].mxu0
  %v4691 = vadd.f32 0.0, %v4690
  %v4692 = vpop.f32.mrb[0].mxu0
  %v4693 = vadd.f32 0.0, %v4692
  %4694 = vdwg.mxu0
  %v4695 = vadd.f32 %v4630, %v4687
  %v4696 = vadd.f32 %v4631, %v4689
  %v4697 = vadd.f32 %v4632, %v4691
  %v4698 = vadd.f32 %v4633, %v4693
  %s4699 = scalar_lea.vmem %s1, 280
  %v4700 = vld [vmem:[%s4699] sm:$0xf]
  %v4701 = vld [vmem:[%s4699 + $0x4] sm:$0xf]
  %v4704 = vunpack.c.l.b16 %v4700
  %v4705 = vunpack.c.l.b16 %v4701
  %v4706 = vpack.c.b16 %v4705, %v4704
  %4707 = vrot.lane.b32.xlu0 %v4177, 118
  %v4708 = vpop.permute.xlu0 %4707
  %4709 = vrot.lane.b32.xlu0 %v4178, 118
  %v4710 = vpop.permute.xlu0 %4709
  %v4711 = vsel %vm4083, %v4708, %v4710
  %v4715 = vsel %vm134, %v4706, 0
  %4717 = vmatprep.subr.bf16.mxu0 %v4710
  %4718 = vmatpush1.bf16.msra.mxu0 %v4711
  %4719 = vmatprep.subr.bf16.mxu0 0
  %4720 = vmatpush1.bf16.msra.mxu0 0
  %4721 = vmatprep.subr.bf16.mxu0 0
  %4722 = vmatpush1.bf16.msra.mxu0 0
  %4723 = vmatprep.subr.bf16.mxu0 0
  %4724 = vmatpush1.bf16.msra.mxu0 0
  %4725 = vmatprep.subr.bf16.mxu0 0
  %4726 = vmatpush1.bf16.msra.mxu0 0
  %4727 = vmatprep.subr.bf16.mxu0 0
  %4728 = vmatpush1.bf16.msra.mxu0 0
  %4729 = vmatprep.subr.bf16.mxu0 0
  %4730 = vmatpush1.bf16.msra.mxu0 0
  %4731 = vmatprep.subr.bf16.mxu0 0
  %4732 = vmatpush1.bf16.msra.mxu0 0
  %4733 = vmatprep.subr.bf16.mxu0 0
  %4734 = vmatpush1.bf16.msra.mxu0 0
  %4735 = vmatprep.subr.bf16.mxu0 0
  %4736 = vmatpush1.bf16.msra.mxu0 0
  %4737 = vmatprep.subr.bf16.mxu0 0
  %4738 = vmatpush1.bf16.msra.mxu0 0
  %4739 = vmatprep.subr.bf16.mxu0 0
  %4740 = vmatpush1.bf16.msra.mxu0 0
  %4741 = vmatprep.subr.bf16.mxu0 0
  %4742 = vmatpush1.bf16.msra.mxu0 0
  %4743 = vmatprep.subr.bf16.mxu0 0
  %4744 = vmatpush1.bf16.msra.mxu0 0
  %4745 = vmatprep.subr.bf16.mxu0 0
  %4746 = vmatpush1.bf16.msra.mxu0 0
  %4747 = vmatprep.subr.bf16.mxu0 0
  %4748 = vmatpush1.bf16.msra.mxu0 0
  %4749 = vmatprep.mubr.bf16.mxu0 0
  %4750 = vmatmul.mubr.bf16.gmra.mrb[0].mxu0 %v4715
  %v4751 = vpop.f32.mrb[0].mxu0
  %v4752 = vadd.f32 0.0, %v4751
  %v4753 = vpop.f32.mrb[0].mxu0
  %v4754 = vadd.f32 0.0, %v4753
  %v4755 = vpop.f32.mrb[0].mxu0
  %v4756 = vadd.f32 0.0, %v4755
  %v4757 = vpop.f32.mrb[0].mxu0
  %v4758 = vadd.f32 0.0, %v4757
  %4759 = vdwg.mxu0
  %v4760 = vadd.f32 %v4695, %v4752
  %v4761 = vadd.f32 %v4696, %v4754
  %v4762 = vadd.f32 %v4697, %v4756
  %v4763 = vadd.f32 %v4698, %v4758
  %v4764 = vld [vmem:[%s2] sm:$0xff]
  %v4765 = vld [vmem:[%s2 + $0x8] sm:$0xff]
  %4767 = vset.pattern.permute.xlu0 3
  %4768 = vperm.xlu0 %4767, %v4764
  %v4769 = vpop.permute.xlu0 %4768
  %4772 = vset.pattern.permute.xlu0 3
  %4773 = vperm.xlu0 %4772, %v4765
  %v4774 = vpop.permute.xlu0 %4773
  %v4776 = vadd.f32 %v4760, %v4769
  %v4777 = vadd.f32 %v4761, %v4769
  %v4778 = vadd.f32 %v4762, %v4774
  %v4779 = vadd.f32 %v4763, %v4774
  %v4780 = vmul.f32 %v4776, %v4157
  %v4781 = vmul.f32 %v4777, %v4161
  %v4782 = vmul.f32 %v4778, %v4157
  %v4783 = vmul.f32 %v4779, %v4161
  %v4784 = vpack.c.bf16 %v4782, %v4780
  %v4785 = vpack.c.bf16 %v4783, %v4781
  %v4786 = vld [vmem:[%s6] sm:$0xf]
  %v4787 = vld [vmem:[%s6 + $0x4] sm:$0xf]
  %v4788 = vld [vmem:[%s6 + $0x8] sm:$0xf]
  %v4789 = vld [vmem:[%s6 + $0xc] sm:$0xf]
  %v4790 = vld [vmem:[%s6 + $0x10] sm:$0xf]
  %v4791 = vld [vmem:[%s6 + $0x14] sm:$0xf]
  %v4792 = vld [vmem:[%s6 + $0x18] sm:$0xf]
  %v4793 = vld [vmem:[%s6 + $0x1c] sm:$0xf]
  %v4794 = vld [vmem:[%s6 + $0x20] sm:$0xf]
  %v4795 = vld [vmem:[%s6 + $0x24] sm:$0xf]
  %v4796 = vld [vmem:[%s6 + $0x28] sm:$0x1]
  %v4808 = vunpack.c.l.b16 %v4786
  %v4809 = vunpack.c.l.b16 %v4787
  %v4810 = vunpack.c.l.b16 %v4788
  %v4811 = vunpack.c.l.b16 %v4789
  %v4812 = vunpack.c.l.b16 %v4790
  %v4813 = vunpack.c.l.b16 %v4791
  %v4814 = vunpack.c.l.b16 %v4792
  %v4815 = vunpack.c.l.b16 %v4793
  %v4816 = vunpack.c.l.b16 %v4794
  %v4817 = vunpack.c.l.b16 %v4795
  %v4818 = vunpack.c.l.b16 %v4796
  %v4819 = vpack.c.b16 %v4809, %v4808
  %v4820 = vpack.c.b16 %v4811, %v4810
  %v4821 = vpack.c.b16 %v4813, %v4812
  %v4822 = vpack.c.b16 %v4815, %v4814
  %v4823 = vpack.c.b16 %v4817, %v4816
  %v4824 = vpack.c.b16 %v4818, %v4818
  %v4831 = vsel %vm3535, %v4784, 0
  %v4834 = vand.u32 %v4824, %v3342
  %4836 = vmatprep.subr.bf16.mxu0 0
  %4837 = vmatpush1.bf16.msra.mxu0 %v4819
  %4838 = vmatprep.subr.bf16.mxu0 0
  %4839 = vmatpush1.bf16.msra.mxu0 %v4820
  %4840 = vmatprep.subr.bf16.mxu0 0
  %4841 = vmatpush1.bf16.msra.mxu0 %v4821
  %4842 = vmatprep.subr.bf16.mxu0 0
  %4843 = vmatpush1.bf16.msra.mxu0 %v4822
  %4844 = vmatprep.subr.bf16.mxu0 0
  %4845 = vmatpush1.bf16.msra.mxu0 %v4823
  %4846 = vmatprep.subr.bf16.mxu0 0
  %4847 = vmatpush1.bf16.msra.mxu0 %v4834
  %4848 = vmatprep.subr.bf16.mxu0 0
  %4849 = vmatpush1.bf16.msra.mxu0 0
  %4850 = vmatprep.subr.bf16.mxu0 0
  %4851 = vmatpush1.bf16.msra.mxu0 0
  %4852 = vmatprep.subr.bf16.mxu0 0
  %4853 = vmatpush1.bf16.msra.mxu0 0
  %4854 = vmatprep.subr.bf16.mxu0 0
  %4855 = vmatpush1.bf16.msra.mxu0 0
  %4856 = vmatprep.subr.bf16.mxu0 0
  %4857 = vmatpush1.bf16.msra.mxu0 0
  %4858 = vmatprep.subr.bf16.mxu0 0
  %4859 = vmatpush1.bf16.msra.mxu0 0
  %4860 = vmatprep.subr.bf16.mxu0 0
  %4861 = vmatpush1.bf16.msra.mxu0 0
  %4862 = vmatprep.subr.bf16.mxu0 0
  %4863 = vmatpush1.bf16.msra.mxu0 0
  %4864 = vmatprep.subr.bf16.mxu0 0
  %4865 = vmatpush1.bf16.msra.mxu0 0
  %4866 = vmatprep.subr.bf16.mxu0 0
  %4867 = vmatpush1.bf16.msra.mxu0 0
  %4868 = vmatprep.mubr.bf16.mxu0 0
  %4869 = vmatmul.mubr.bf16.gmra.mrb[0].mxu0 %v4831
  %v4870 = vpop.f32.mrb[0].mxu0
  %v4871 = vadd.f32 0.0, %v4870
  %v4872 = vpop.f32.mrb[0].mxu0
  %v4873 = vpop.f32.mrb[0].mxu0
  %v4874 = vadd.f32 0.0, %v4873
  %v4875 = vpop.f32.mrb[0].mxu0
  %4876 = vdwg.mxu0
  %4879 = vrot.lane.b32.xlu0 %v4784, 47
  %v4880 = vpop.permute.xlu0 %4879
  %4881 = vrot.lane.b32.xlu0 %v4785, 47
  %v4882 = vpop.permute.xlu0 %4881
  %vm4883 = vcmask 384000
  %v4884 = vsel %vm4883, %v4880, %v4882
  %v4886 = vsel %vm3535, %v4884, 0
  %4888 = vmatprep.subr.bf16.mxu0 0
  %4889 = vmatpush1.bf16.msra.mxu0 %v4819
  %4890 = vmatprep.subr.bf16.mxu0 0
  %4891 = vmatpush1.bf16.msra.mxu0 %v4820
  %4892 = vmatprep.subr.bf16.mxu0 0
  %4893 = vmatpush1.bf16.msra.mxu0 %v4821
  %4894 = vmatprep.subr.bf16.mxu0 0
  %4895 = vmatpush1.bf16.msra.mxu0 %v4822
  %4896 = vmatprep.subr.bf16.mxu0 0
  %4897 = vmatpush1.bf16.msra.mxu0 %v4823
  %4898 = vmatprep.subr.bf16.mxu0 0
  %4899 = vmatpush1.bf16.msra.mxu0 %v4834
  %4900 = vmatprep.subr.bf16.mxu0 0
  %4901 = vmatpush1.bf16.msra.mxu0 0
  %4902 = vmatprep.subr.bf16.mxu0 0
  %4903 = vmatpush1.bf16.msra.mxu0 0
  %4904 = vmatprep.subr.bf16.mxu0 0
  %4905 = vmatpush1.bf16.msra.mxu0 0
  %4906 = vmatprep.subr.bf16.mxu0 0
  %4907 = vmatpush1.bf16.msra.mxu0 0
  %4908 = vmatprep.subr.bf16.mxu0 0
  %4909 = vmatpush1.bf16.msra.mxu0 0
  %4910 = vmatprep.subr.bf16.mxu0 0
  %4911 = vmatpush1.bf16.msra.mxu0 0
  %4912 = vmatprep.subr.bf16.mxu0 0
  %4913 = vmatpush1.bf16.msra.mxu0 0
  %4914 = vmatprep.subr.bf16.mxu0 0
  %4915 = vmatpush1.bf16.msra.mxu0 0
  %4916 = vmatprep.subr.bf16.mxu0 0
  %4917 = vmatpush1.bf16.msra.mxu0 0
  %4918 = vmatprep.subr.bf16.mxu0 0
  %4919 = vmatpush1.bf16.msra.mxu0 0
  %4920 = vmatprep.mubr.bf16.mxu0 0
  %4921 = vmatmul.mubr.bf16.gmra.mrb[0].mxu0 %v4886
  %v4922 = vpop.f32.mrb[0].mxu0
  %v4923 = vadd.f32 0.0, %v4922
  %v4924 = vpop.f32.mrb[0].mxu0
  %v4925 = vpop.f32.mrb[0].mxu0
  %v4926 = vadd.f32 0.0, %v4925
  %v4927 = vpop.f32.mrb[0].mxu0
  %4928 = vdwg.mxu0
  %4931 = vrot.lane.b32.xlu0 %v4923, 25
  %v4932 = vpop.permute.xlu0 %4931
  %4933 = vrot.lane.b32.xlu0 %v4926, 25
  %v4934 = vpop.permute.xlu0 %4933
  %vm4937 = vcmask 203776
  %v4938 = vsel %vm4937, %v4871, %v4932
  %v4939 = vsel %vm4937, %v4874, %v4934
  %v4940 = vpack.c.bf16 %v4939, %v4938
  %vm4941 = vcmask 408576
  %4942 = vst.msk [vmem:[#allocation2 + $0x8] sm:$0xff] %vm4941, %v4940
  %v4943 = vld [vmem:[#allocation2] sm:$0xff]
  %v4944 = vld [vmem:[#allocation2 + $0x8] sm:$0xff]
  %s4945 = scalar_lea.vmem %s1, 288
  %v4946 = vld [vmem:[%s4945] sm:$0xf]
  %v4947 = vld [vmem:[%s4945 + $0x4] sm:$0xf]
  %s4948 = scalar_lea.vmem %s1, 296
  %v4949 = vld [vmem:[%s4948] sm:$0xf]
  %v4950 = vld [vmem:[%s4948 + $0x4] sm:$0xf]
  %v4953 = vunpack.c.l.b16 %v4949
  %v4954 = vunpack.c.l.b16 %v4950
  %v4955 = vpack.c.b16 %v4954, %v4953
  %4958 = vrot.lane.b32.xlu0 %v4943, 5
  %v4959 = vpop.permute.xlu0 %4958
  %4960 = vrot.lane.b32.xlu0 %v4944, 5
  %v4961 = vpop.permute.xlu0 %4960
  %vm4962 = vcmask 39936
  %v4963 = vsel %vm4962, %v4959, %v4961
  %v4966 = vsel %vm134, %v4955, 0
  %4968 = vmatprep.subr.bf16.mxu0 0
  %4969 = vmatpush1.bf16.msra.mxu0 %v4963
  %4970 = vmatprep.subr.bf16.mxu0 0
  %4971 = vmatpush1.bf16.msra.mxu0 0
  %4972 = vmatprep.subr.bf16.mxu0 0
  %4973 = vmatpush1.bf16.msra.mxu0 0
  %4974 = vmatprep.subr.bf16.mxu0 0
  %4975 = vmatpush1.bf16.msra.mxu0 0
  %4976 = vmatprep.subr.bf16.mxu0 0
  %4977 = vmatpush1.bf16.msra.mxu0 0
  %4978 = vmatprep.subr.bf16.mxu0 0
  %4979 = vmatpush1.bf16.msra.mxu0 0
  %4980 = vmatprep.subr.bf16.mxu0 0
  %4981 = vmatpush1.bf16.msra.mxu0 0
  %4982 = vmatprep.subr.bf16.mxu0 0
  %4983 = vmatpush1.bf16.msra.mxu0 0
  %4984 = vmatprep.subr.bf16.mxu0 0
  %4985 = vmatpush1.bf16.msra.mxu0 0
  %4986 = vmatprep.subr.bf16.mxu0 0
  %4987 = vmatpush1.bf16.msra.mxu0 0
  %4988 = vmatprep.subr.bf16.mxu0 0
  %4989 = vmatpush1.bf16.msra.mxu0 0
  %4990 = vmatprep.subr.bf16.mxu0 0
  %4991 = vmatpush1.bf16.msra.mxu0 0
  %4992 = vmatprep.subr.bf16.mxu0 0
  %4993 = vmatpush1.bf16.msra.mxu0 0
  %4994 = vmatprep.subr.bf16.mxu0 0
  %4995 = vmatpush1.bf16.msra.mxu0 0
  %4996 = vmatprep.subr.bf16.mxu0 0
  %4997 = vmatpush1.bf16.msra.mxu0 0
  %4998 = vmatprep.subr.bf16.mxu0 0
  %4999 = vmatpush1.bf16.msra.mxu0 0
  %5000 = vmatprep.mubr.bf16.mxu0 0
  %5001 = vmatmul.mubr.bf16.gmra.mrb[0].mxu0 %v4966
  %v5002 = vpop.f32.mrb[0].mxu0
  %v5003 = vadd.f32 0.0, %v5002
  %v5004 = vpop.f32.mrb[0].mxu0
  %v5005 = vpop.f32.mrb[0].mxu0
  %v5006 = vadd.f32 0.0, %v5005
  %v5007 = vpop.f32.mrb[0].mxu0
  %5008 = vdwg.mxu0
  %v5011 = vunpack.c.l.b16 %v4946
  %v5012 = vunpack.c.l.b16 %v4947
  %v5013 = vpack.c.b16 %v5012, %v5011
  %5014 = vrot.lane.b32.xlu0 %v4943, 6
  %v5015 = vpop.permute.xlu0 %5014
  %5016 = vrot.lane.b32.xlu0 %v4944, 6
  %v5017 = vpop.permute.xlu0 %5016
  %vm5018 = vcmask 48128
  %v5019 = vsel %vm5018, %v5015, %v5017
  %v5022 = vsel %vm134, %v5013, 0
  %5024 = vmatprep.subr.bf16.mxu0 0
  %5025 = vmatpush1.bf16.msra.mxu0 %v5019
  %5026 = vmatprep.subr.bf16.mxu0 0
  %5027 = vmatpush1.bf16.msra.mxu0 0
  %5028 = vmatprep.subr.bf16.mxu0 0
  %5029 = vmatpush1.bf16.msra.mxu0 0
  %5030 = vmatprep.subr.bf16.mxu0 0
  %5031 = vmatpush1.bf16.msra.mxu0 0
  %5032 = vmatprep.subr.bf16.mxu0 0
  %5033 = vmatpush1.bf16.msra.mxu0 0
  %5034 = vmatprep.subr.bf16.mxu0 0
  %5035 = vmatpush1.bf16.msra.mxu0 0
  %5036 = vmatprep.subr.bf16.mxu0 0
  %5037 = vmatpush1.bf16.msra.mxu0 0
  %5038 = vmatprep.subr.bf16.mxu0 0
  %5039 = vmatpush1.bf16.msra.mxu0 0
  %5040 = vmatprep.subr.bf16.mxu0 0
  %5041 = vmatpush1.bf16.msra.mxu0 0
  %5042 = vmatprep.subr.bf16.mxu0 0
  %5043 = vmatpush1.bf16.msra.mxu0 0
  %5044 = vmatprep.subr.bf16.mxu0 0
  %5045 = vmatpush1.bf16.msra.mxu0 0
  %5046 = vmatprep.subr.bf16.mxu0 0
  %5047 = vmatpush1.bf16.msra.mxu0 0
  %5048 = vmatprep.subr.bf16.mxu0 0
  %5049 = vmatpush1.bf16.msra.mxu0 0
  %5050 = vmatprep.subr.bf16.mxu0 0
  %5051 = vmatpush1.bf16.msra.mxu0 0
  %5052 = vmatprep.subr.bf16.mxu0 0
  %5053 = vmatpush1.bf16.msra.mxu0 0
  %5054 = vmatprep.subr.bf16.mxu0 0
  %5055 = vmatpush1.bf16.msra.mxu0 0
  %5056 = vmatprep.mubr.bf16.mxu0 0
  %5057 = vmatmul.mubr.bf16.gmra.mrb[0].mxu0 %v5022
  %v5058 = vpop.f32.mrb[0].mxu0
  %v5059 = vadd.f32 %v5003, %v5058
  %v5060 = vpop.f32.mrb[0].mxu0
  %v5061 = vpop.f32.mrb[0].mxu0
  %v5062 = vadd.f32 %v5006, %v5061
  %v5063 = vpop.f32.mrb[0].mxu0
  %5064 = vdwg.mxu0
  %s5065 = scalar_lea.vmem %s1, 304
  %v5066 = vld [vmem:[%s5065] sm:$0xf]
  %v5067 = vld [vmem:[%s5065 + $0x4] sm:$0xf]
  %v5070 = vunpack.c.l.b16 %v5066
  %v5071 = vunpack.c.l.b16 %v5067
  %v5072 = vpack.c.b16 %v5071, %v5070
  %5073 = vrot.lane.b32.xlu0 %v4943, 4
  %v5074 = vpop.permute.xlu0 %5073
  %5075 = vrot.lane.b32.xlu0 %v4944, 4
  %v5076 = vpop.permute.xlu0 %5075
  %vm5077 = vcmask 31744
  %v5078 = vsel %vm5077, %v5074, %v5076
  %v5081 = vsel %vm134, %v5072, 0
  %5083 = vmatprep.subr.bf16.mxu0 0
  %5084 = vmatpush1.bf16.msra.mxu0 %v5078
  %5085 = vmatprep.subr.bf16.mxu0 0
  %5086 = vmatpush1.bf16.msra.mxu0 0
  %5087 = vmatprep.subr.bf16.mxu0 0
  %5088 = vmatpush1.bf16.msra.mxu0 0
  %5089 = vmatprep.subr.bf16.mxu0 0
  %5090 = vmatpush1.bf16.msra.mxu0 0
  %5091 = vmatprep.subr.bf16.mxu0 0
  %5092 = vmatpush1.bf16.msra.mxu0 0
  %5093 = vmatprep.subr.bf16.mxu0 0
  %5094 = vmatpush1.bf16.msra.mxu0 0
  %5095 = vmatprep.subr.bf16.mxu0 0
  %5096 = vmatpush1.bf16.msra.mxu0 0
  %5097 = vmatprep.subr.bf16.mxu0 0
  %5098 = vmatpush1.bf16.msra.mxu0 0
  %5099 = vmatprep.subr.bf16.mxu0 0
  %5100 = vmatpush1.bf16.msra.mxu0 0
  %5101 = vmatprep.subr.bf16.mxu0 0
  %5102 = vmatpush1.bf16.msra.mxu0 0
  %5103 = vmatprep.subr.bf16.mxu0 0
  %5104 = vmatpush1.bf16.msra.mxu0 0
  %5105 = vmatprep.subr.bf16.mxu0 0
  %5106 = vmatpush1.bf16.msra.mxu0 0
  %5107 = vmatprep.subr.bf16.mxu0 0
  %5108 = vmatpush1.bf16.msra.mxu0 0
  %5109 = vmatprep.subr.bf16.mxu0 0
  %5110 = vmatpush1.bf16.msra.mxu0 0
  %5111 = vmatprep.subr.bf16.mxu0 0
  %5112 = vmatpush1.bf16.msra.mxu0 0
  %5113 = vmatprep.subr.bf16.mxu0 0
  %5114 = vmatpush1.bf16.msra.mxu0 0
  %5115 = vmatprep.mubr.bf16.mxu0 0
  %5116 = vmatmul.mubr.bf16.gmra.mrb[0].mxu0 %v5081
  %v5117 = vpop.f32.mrb[0].mxu0
  %v5118 = vadd.f32 0.0, %v5117
  %v5119 = vpop.f32.mrb[0].mxu0
  %v5120 = vpop.f32.mrb[0].mxu0
  %v5121 = vadd.f32 0.0, %v5120
  %v5122 = vpop.f32.mrb[0].mxu0
  %5123 = vdwg.mxu0
  %v5124 = vadd.f32 %v5059, %v5118
  %v5125 = vadd.f32 %v5062, %v5121
  %s5126 = scalar_lea.vmem %s1, 312
  %v5127 = vld [vmem:[%s5126] sm:$0xf]
  %v5128 = vld [vmem:[%s5126 + $0x4] sm:$0xf]
  %v5131 = vunpack.c.l.b16 %v5127
  %v5132 = vunpack.c.l.b16 %v5128
  %v5133 = vpack.c.b16 %v5132, %v5131
  %5134 = vrot.lane.b32.xlu0 %v4943, 1
  %v5135 = vpop.permute.xlu0 %5134
  %5136 = vrot.lane.b32.xlu0 %v4944, 1
  %v5137 = vpop.permute.xlu0 %5136
  %v5138 = vsel %vm614, %v5135, %v5137
  %v5141 = vsel %vm134, %v5133, 0
  %5143 = vmatprep.subr.bf16.mxu0 0
  %5144 = vmatpush1.bf16.msra.mxu0 %v5138
  %5145 = vmatprep.subr.bf16.mxu0 0
  %5146 = vmatpush1.bf16.msra.mxu0 0
  %5147 = vmatprep.subr.bf16.mxu0 0
  %5148 = vmatpush1.bf16.msra.mxu0 0
  %5149 = vmatprep.subr.bf16.mxu0 0
  %5150 = vmatpush1.bf16.msra.mxu0 0
  %5151 = vmatprep.subr.bf16.mxu0 0
  %5152 = vmatpush1.bf16.msra.mxu0 0
  %5153 = vmatprep.subr.bf16.mxu0 0
  %5154 = vmatpush1.bf16.msra.mxu0 0
  %5155 = vmatprep.subr.bf16.mxu0 0
  %5156 = vmatpush1.bf16.msra.mxu0 0
  %5157 = vmatprep.subr.bf16.mxu0 0
  %5158 = vmatpush1.bf16.msra.mxu0 0
  %5159 = vmatprep.subr.bf16.mxu0 0
  %5160 = vmatpush1.bf16.msra.mxu0 0
  %5161 = vmatprep.subr.bf16.mxu0 0
  %5162 = vmatpush1.bf16.msra.mxu0 0
  %5163 = vmatprep.subr.bf16.mxu0 0
  %5164 = vmatpush1.bf16.msra.mxu0 0
  %5165 = vmatprep.subr.bf16.mxu0 0
  %5166 = vmatpush1.bf16.msra.mxu0 0
  %5167 = vmatprep.subr.bf16.mxu0 0
  %5168 = vmatpush1.bf16.msra.mxu0 0
  %5169 = vmatprep.subr.bf16.mxu0 0
  %5170 = vmatpush1.bf16.msra.mxu0 0
  %5171 = vmatprep.subr.bf16.mxu0 0
  %5172 = vmatpush1.bf16.msra.mxu0 0
  %5173 = vmatprep.subr.bf16.mxu0 0
  %5174 = vmatpush1.bf16.msra.mxu0 0
  %5175 = vmatprep.mubr.bf16.mxu0 0
  %5176 = vmatmul.mubr.bf16.gmra.mrb[0].mxu0 %v5141
  %v5177 = vpop.f32.mrb[0].mxu0
  %v5178 = vadd.f32 0.0, %v5177
  %v5179 = vpop.f32.mrb[0].mxu0
  %v5180 = vpop.f32.mrb[0].mxu0
  %v5181 = vadd.f32 0.0, %v5180
  %v5182 = vpop.f32.mrb[0].mxu0
  %5183 = vdwg.mxu0
  %v5184 = vadd.f32 %v5124, %v5178
  %v5185 = vadd.f32 %v5125, %v5181
  %s5186 = scalar_lea.vmem %s1, 320
  %v5187 = vld [vmem:[%s5186] sm:$0xf]
  %v5188 = vld [vmem:[%s5186 + $0x4] sm:$0xf]
  %v5191 = vunpack.c.l.b16 %v5187
  %v5192 = vunpack.c.l.b16 %v5188
  %v5193 = vpack.c.b16 %v5192, %v5191
  %v5195 = vsel %vm134, %v5193, 0
  %5197 = vmatprep.subr.bf16.mxu0 0
  %5198 = vmatpush1.bf16.msra.mxu0 %v4944
  %5199 = vmatprep.subr.bf16.mxu0 0
  %5200 = vmatpush1.bf16.msra.mxu0 0
  %5201 = vmatprep.subr.bf16.mxu0 0
  %5202 = vmatpush1.bf16.msra.mxu0 0
  %5203 = vmatprep.subr.bf16.mxu0 0
  %5204 = vmatpush1.bf16.msra.mxu0 0
  %5205 = vmatprep.subr.bf16.mxu0 0
  %5206 = vmatpush1.bf16.msra.mxu0 0
  %5207 = vmatprep.subr.bf16.mxu0 0
  %5208 = vmatpush1.bf16.msra.mxu0 0
  %5209 = vmatprep.subr.bf16.mxu0 0
  %5210 = vmatpush1.bf16.msra.mxu0 0
  %5211 = vmatprep.subr.bf16.mxu0 0
  %5212 = vmatpush1.bf16.msra.mxu0 0
  %5213 = vmatprep.subr.bf16.mxu0 0
  %5214 = vmatpush1.bf16.msra.mxu0 0
  %5215 = vmatprep.subr.bf16.mxu0 0
  %5216 = vmatpush1.bf16.msra.mxu0 0
  %5217 = vmatprep.subr.bf16.mxu0 0
  %5218 = vmatpush1.bf16.msra.mxu0 0
  %5219 = vmatprep.subr.bf16.mxu0 0
  %5220 = vmatpush1.bf16.msra.mxu0 0
  %5221 = vmatprep.subr.bf16.mxu0 0
  %5222 = vmatpush1.bf16.msra.mxu0 0
  %5223 = vmatprep.subr.bf16.mxu0 0
  %5224 = vmatpush1.bf16.msra.mxu0 0
  %5225 = vmatprep.subr.bf16.mxu0 0
  %5226 = vmatpush1.bf16.msra.mxu0 0
  %5227 = vmatprep.subr.bf16.mxu0 0
  %5228 = vmatpush1.bf16.msra.mxu0 0
  %5229 = vmatprep.mubr.bf16.mxu0 0
  %5230 = vmatmul.mubr.bf16.gmra.mrb[0].mxu0 %v5195
  %v5231 = vpop.f32.mrb[0].mxu0
  %v5232 = vadd.f32 0.0, %v5231
  %v5233 = vpop.f32.mrb[0].mxu0
  %v5234 = vpop.f32.mrb[0].mxu0
  %v5235 = vadd.f32 0.0, %v5234
  %v5236 = vpop.f32.mrb[0].mxu0
  %5237 = vdwg.mxu0
  %v5238 = vadd.f32 %v5184, %v5232
  %v5239 = vadd.f32 %v5185, %v5235
  %s5240 = scalar_lea.vmem %s1, 328
  %v5241 = vld [vmem:[%s5240] sm:$0xf]
  %v5242 = vld [vmem:[%s5240 + $0x4] sm:$0xf]
  %v5245 = vunpack.c.l.b16 %v5241
  %v5246 = vunpack.c.l.b16 %v5242
  %v5247 = vpack.c.b16 %v5246, %v5245
  %5248 = vrot.lane.b32.xlu0 %v4944, 127
  %v5249 = vpop.permute.xlu0 %5248
  %v5252 = vsel %vm134, %v5247, 0
  %5254 = vmatprep.subr.bf16.mxu0 0
  %5255 = vmatpush1.bf16.msra.mxu0 %v5249
  %5256 = vmatprep.subr.bf16.mxu0 0
  %5257 = vmatpush1.bf16.msra.mxu0 0
  %5258 = vmatprep.subr.bf16.mxu0 0
  %5259 = vmatpush1.bf16.msra.mxu0 0
  %5260 = vmatprep.subr.bf16.mxu0 0
  %5261 = vmatpush1.bf16.msra.mxu0 0
  %5262 = vmatprep.subr.bf16.mxu0 0
  %5263 = vmatpush1.bf16.msra.mxu0 0
  %5264 = vmatprep.subr.bf16.mxu0 0
  %5265 = vmatpush1.bf16.msra.mxu0 0
  %5266 = vmatprep.subr.bf16.mxu0 0
  %5267 = vmatpush1.bf16.msra.mxu0 0
  %5268 = vmatprep.subr.bf16.mxu0 0
  %5269 = vmatpush1.bf16.msra.mxu0 0
  %5270 = vmatprep.subr.bf16.mxu0 0
  %5271 = vmatpush1.bf16.msra.mxu0 0
  %5272 = vmatprep.subr.bf16.mxu0 0
  %5273 = vmatpush1.bf16.msra.mxu0 0
  %5274 = vmatprep.subr.bf16.mxu0 0
  %5275 = vmatpush1.bf16.msra.mxu0 0
  %5276 = vmatprep.subr.bf16.mxu0 0
  %5277 = vmatpush1.bf16.msra.mxu0 0
  %5278 = vmatprep.subr.bf16.mxu0 0
  %5279 = vmatpush1.bf16.msra.mxu0 0
  %5280 = vmatprep.subr.bf16.mxu0 0
  %5281 = vmatpush1.bf16.msra.mxu0 0
  %5282 = vmatprep.subr.bf16.mxu0 0
  %5283 = vmatpush1.bf16.msra.mxu0 0
  %5284 = vmatprep.subr.bf16.mxu0 0
  %5285 = vmatpush1.bf16.msra.mxu0 0
  %5286 = vmatprep.mubr.bf16.mxu0 0
  %5287 = vmatmul.mubr.bf16.gmra.mrb[0].mxu0 %v5252
  %v5288 = vpop.f32.mrb[0].mxu0
  %v5289 = vadd.f32 0.0, %v5288
  %v5290 = vpop.f32.mrb[0].mxu0
  %v5291 = vpop.f32.mrb[0].mxu0
  %v5292 = vadd.f32 0.0, %v5291
  %v5293 = vpop.f32.mrb[0].mxu0
  %5294 = vdwg.mxu0
  %v5295 = vadd.f32 %v5238, %v5289
  %v5296 = vadd.f32 %v5239, %v5292
  %s5297 = scalar_lea.vmem %s1, 336
  %v5298 = vld [vmem:[%s5297] sm:$0xf]
  %v5299 = vld [vmem:[%s5297 + $0x4] sm:$0xf]
  %v5302 = vunpack.c.l.b16 %v5298
  %v5303 = vunpack.c.l.b16 %v5299
  %v5304 = vpack.c.b16 %v5303, %v5302
  %5305 = vrot.lane.b32.xlu0 %v4944, 124
  %v5306 = vpop.permute.xlu0 %5305
  %v5309 = vsel %vm134, %v5304, 0
  %5311 = vmatprep.subr.bf16.mxu0 0
  %5312 = vmatpush1.bf16.msra.mxu0 %v5306
  %5313 = vmatprep.subr.bf16.mxu0 0
  %5314 = vmatpush1.bf16.msra.mxu0 0
  %5315 = vmatprep.subr.bf16.mxu0 0
  %5316 = vmatpush1.bf16.msra.mxu0 0
  %5317 = vmatprep.subr.bf16.mxu0 0
  %5318 = vmatpush1.bf16.msra.mxu0 0
  %5319 = vmatprep.subr.bf16.mxu0 0
  %5320 = vmatpush1.bf16.msra.mxu0 0
  %5321 = vmatprep.subr.bf16.mxu0 0
  %5322 = vmatpush1.bf16.msra.mxu0 0
  %5323 = vmatprep.subr.bf16.mxu0 0
  %5324 = vmatpush1.bf16.msra.mxu0 0
  %5325 = vmatprep.subr.bf16.mxu0 0
  %5326 = vmatpush1.bf16.msra.mxu0 0
  %5327 = vmatprep.subr.bf16.mxu0 0
  %5328 = vmatpush1.bf16.msra.mxu0 0
  %5329 = vmatprep.subr.bf16.mxu0 0
  %5330 = vmatpush1.bf16.msra.mxu0 0
  %5331 = vmatprep.subr.bf16.mxu0 0
  %5332 = vmatpush1.bf16.msra.mxu0 0
  %5333 = vmatprep.subr.bf16.mxu0 0
  %5334 = vmatpush1.bf16.msra.mxu0 0
  %5335 = vmatprep.subr.bf16.mxu0 0
  %5336 = vmatpush1.bf16.msra.mxu0 0
  %5337 = vmatprep.subr.bf16.mxu0 0
  %5338 = vmatpush1.bf16.msra.mxu0 0
  %5339 = vmatprep.subr.bf16.mxu0 0
  %5340 = vmatpush1.bf16.msra.mxu0 0
  %5341 = vmatprep.subr.bf16.mxu0 0
  %5342 = vmatpush1.bf16.msra.mxu0 0
  %5343 = vmatprep.mubr.bf16.mxu0 0
  %5344 = vmatmul.mubr.bf16.gmra.mrb[0].mxu0 %v5309
  %v5345 = vpop.f32.mrb[0].mxu0
  %v5346 = vadd.f32 0.0, %v5345
  %v5347 = vpop.f32.mrb[0].mxu0
  %v5348 = vpop.f32.mrb[0].mxu0
  %v5349 = vadd.f32 0.0, %v5348
  %v5350 = vpop.f32.mrb[0].mxu0
  %5351 = vdwg.mxu0
  %v5352 = vadd.f32 %v5295, %v5346
  %v5353 = vadd.f32 %v5296, %v5349
  %s5354 = scalar_lea.vmem %s1, 344
  %v5355 = vld [vmem:[%s5354] sm:$0xf]
  %v5356 = vld [vmem:[%s5354 + $0x4] sm:$0xf]
  %v5359 = vunpack.c.l.b16 %v5355
  %v5360 = vunpack.c.l.b16 %v5356
  %v5361 = vpack.c.b16 %v5360, %v5359
  %5362 = vrot.lane.b32.xlu0 %v4944, 123
  %v5363 = vpop.permute.xlu0 %5362
  %v5366 = vsel %vm134, %v5361, 0
  %5368 = vmatprep.subr.bf16.mxu0 0
  %5369 = vmatpush1.bf16.msra.mxu0 %v5363
  %5370 = vmatprep.subr.bf16.mxu0 0
  %5371 = vmatpush1.bf16.msra.mxu0 0
  %5372 = vmatprep.subr.bf16.mxu0 0
  %5373 = vmatpush1.bf16.msra.mxu0 0
  %5374 = vmatprep.subr.bf16.mxu0 0
  %5375 = vmatpush1.bf16.msra.mxu0 0
  %5376 = vmatprep.subr.bf16.mxu0 0
  %5377 = vmatpush1.bf16.msra.mxu0 0
  %5378 = vmatprep.subr.bf16.mxu0 0
  %5379 = vmatpush1.bf16.msra.mxu0 0
  %5380 = vmatprep.subr.bf16.mxu0 0
  %5381 = vmatpush1.bf16.msra.mxu0 0
  %5382 = vmatprep.subr.bf16.mxu0 0
  %5383 = vmatpush1.bf16.msra.mxu0 0
  %5384 = vmatprep.subr.bf16.mxu0 0
  %5385 = vmatpush1.bf16.msra.mxu0 0
  %5386 = vmatprep.subr.bf16.mxu0 0
  %5387 = vmatpush1.bf16.msra.mxu0 0
  %5388 = vmatprep.subr.bf16.mxu0 0
  %5389 = vmatpush1.bf16.msra.mxu0 0
  %5390 = vmatprep.subr.bf16.mxu0 0
  %5391 = vmatpush1.bf16.msra.mxu0 0
  %5392 = vmatprep.subr.bf16.mxu0 0
  %5393 = vmatpush1.bf16.msra.mxu0 0
  %5394 = vmatprep.subr.bf16.mxu0 0
  %5395 = vmatpush1.bf16.msra.mxu0 0
  %5396 = vmatprep.subr.bf16.mxu0 0
  %5397 = vmatpush1.bf16.msra.mxu0 0
  %5398 = vmatprep.subr.bf16.mxu0 0
  %5399 = vmatpush1.bf16.msra.mxu0 0
  %5400 = vmatprep.mubr.bf16.mxu0 0
  %5401 = vmatmul.mubr.bf16.gmra.mrb[0].mxu0 %v5366
  %v5402 = vpop.f32.mrb[0].mxu0
  %v5403 = vadd.f32 0.0, %v5402
  %v5404 = vpop.f32.mrb[0].mxu0
  %v5405 = vpop.f32.mrb[0].mxu0
  %v5406 = vadd.f32 0.0, %v5405
  %v5407 = vpop.f32.mrb[0].mxu0
  %5408 = vdwg.mxu0
  %v5409 = vadd.f32 %v5352, %v5403
  %v5410 = vadd.f32 %v5353, %v5406
  %s5411 = scalar_lea.vmem %s1, 352
  %v5412 = vld [vmem:[%s5411] sm:$0xf]
  %v5413 = vld [vmem:[%s5411 + $0x4] sm:$0xf]
  %v5416 = vunpack.c.l.b16 %v5412
  %v5417 = vunpack.c.l.b16 %v5413
  %v5418 = vpack.c.b16 %v5417, %v5416
  %5419 = vrot.lane.b32.xlu0 %v4944, 122
  %v5420 = vpop.permute.xlu0 %5419
  %v5423 = vsel %vm134, %v5418, 0
  %5425 = vmatprep.subr.bf16.mxu0 0
  %5426 = vmatpush1.bf16.msra.mxu0 %v5420
  %5427 = vmatprep.subr.bf16.mxu0 0
  %5428 = vmatpush1.bf16.msra.mxu0 0
  %5429 = vmatprep.subr.bf16.mxu0 0
  %5430 = vmatpush1.bf16.msra.mxu0 0
  %5431 = vmatprep.subr.bf16.mxu0 0
  %5432 = vmatpush1.bf16.msra.mxu0 0
  %5433 = vmatprep.subr.bf16.mxu0 0
  %5434 = vmatpush1.bf16.msra.mxu0 0
  %5435 = vmatprep.subr.bf16.mxu0 0
  %5436 = vmatpush1.bf16.msra.mxu0 0
  %5437 = vmatprep.subr.bf16.mxu0 0
  %5438 = vmatpush1.bf16.msra.mxu0 0
  %5439 = vmatprep.subr.bf16.mxu0 0
  %5440 = vmatpush1.bf16.msra.mxu0 0
  %5441 = vmatprep.subr.bf16.mxu0 0
  %5442 = vmatpush1.bf16.msra.mxu0 0
  %5443 = vmatprep.subr.bf16.mxu0 0
  %5444 = vmatpush1.bf16.msra.mxu0 0
  %5445 = vmatprep.subr.bf16.mxu0 0
  %5446 = vmatpush1.bf16.msra.mxu0 0
  %5447 = vmatprep.subr.bf16.mxu0 0
  %5448 = vmatpush1.bf16.msra.mxu0 0
  %5449 = vmatprep.subr.bf16.mxu0 0
  %5450 = vmatpush1.bf16.msra.mxu0 0
  %5451 = vmatprep.subr.bf16.mxu0 0
  %5452 = vmatpush1.bf16.msra.mxu0 0
  %5453 = vmatprep.subr.bf16.mxu0 0
  %5454 = vmatpush1.bf16.msra.mxu0 0
  %5455 = vmatprep.subr.bf16.mxu0 0
  %5456 = vmatpush1.bf16.msra.mxu0 0
  %5457 = vmatprep.mubr.bf16.mxu0 0
  %5458 = vmatmul.mubr.bf16.gmra.mrb[0].mxu0 %v5423
  %v5459 = vpop.f32.mrb[0].mxu0
  %v5460 = vadd.f32 0.0, %v5459
  %v5461 = vpop.f32.mrb[0].mxu0
  %v5462 = vpop.f32.mrb[0].mxu0
  %v5463 = vadd.f32 0.0, %v5462
  %v5464 = vpop.f32.mrb[0].mxu0
  %5465 = vdwg.mxu0
  %v5466 = vadd.f32 %v5409, %v5460
  %v5467 = vadd.f32 %v5410, %v5463
  %v5468 = vld [vmem:[%s2] sm:$0xff]
  %v5469 = vld [vmem:[%s2 + $0x8] sm:$0xff]
  %5471 = vset.pattern.permute.xlu0 4
  %5472 = vperm.xlu0 %5471, %v5468
  %v5473 = vpop.permute.xlu0 %5472
  %5476 = vset.pattern.permute.xlu0 4
  %5477 = vperm.xlu0 %5476, %v5469
  %v5478 = vpop.permute.xlu0 %5477
  %v5480 = vadd.f32 %v5466, %v5473
  %v5481 = vadd.f32 %v5467, %v5478
  %v5483 = vlaneseq
  %v5484 = vshrl.u32 %v5483, 7
  %v5485 = vsub.s32 0, %v5484
  %v5486 = vrot.slane %v50, %v5485
  %v5488 = vmul.f32 %v5480, %v5486
  %v5489 = vmul.f32 %v5481, %v5486
  %v5490 = vmax.f32 %v5488, 0.0
  %v5491 = vmax.f32 %v5489, 0.0
  %v5492 = vpack.c.bf16 %v5491, %v5490
  %5493 = vst.msk [vmem:[#allocation2 + $0x8] sm:$0xff] %vm4941, %v5492
  %v5494 = vld [vmem:[#allocation2] sm:$0xff]
  %v5495 = vld [vmem:[#allocation2 + $0x8] sm:$0xff]
  %s5496 = scalar_lea.vmem %s1, 360
  %v5497 = vld [vmem:[%s5496] sm:$0xf]
  %v5498 = vld [vmem:[%s5496 + $0x4] sm:$0xf]
  %s5499 = scalar_lea.vmem %s1, 368
  %v5500 = vld [vmem:[%s5499] sm:$0xf]
  %v5501 = vld [vmem:[%s5499 + $0x4] sm:$0xf]
  %v5504 = vunpack.c.l.b16 %v5500
  %v5505 = vunpack.c.l.b16 %v5501
  %v5506 = vpack.c.b16 %v5505, %v5504
  %5509 = vrot.lane.b32.xlu0 %v5494, 5
  %v5510 = vpop.permute.xlu0 %5509
  %5511 = vrot.lane.b32.xlu0 %v5495, 5
  %v5512 = vpop.permute.xlu0 %5511
  %v5513 = vsel %vm4962, %v5510, %v5512
  %v5516 = vsel %vm134, %v5506, 0
  %5518 = vmatprep.subr.bf16.mxu0 0
  %5519 = vmatpush1.bf16.msra.mxu0 %v5513
  %5520 = vmatprep.subr.bf16.mxu0 0
  %5521 = vmatpush1.bf16.msra.mxu0 0
  %5522 = vmatprep.subr.bf16.mxu0 0
  %5523 = vmatpush1.bf16.msra.mxu0 0
  %5524 = vmatprep.subr.bf16.mxu0 0
  %5525 = vmatpush1.bf16.msra.mxu0 0
  %5526 = vmatprep.subr.bf16.mxu0 0
  %5527 = vmatpush1.bf16.msra.mxu0 0
  %5528 = vmatprep.subr.bf16.mxu0 0
  %5529 = vmatpush1.bf16.msra.mxu0 0
  %5530 = vmatprep.subr.bf16.mxu0 0
  %5531 = vmatpush1.bf16.msra.mxu0 0
  %5532 = vmatprep.subr.bf16.mxu0 0
  %5533 = vmatpush1.bf16.msra.mxu0 0
  %5534 = vmatprep.subr.bf16.mxu0 0
  %5535 = vmatpush1.bf16.msra.mxu0 0
  %5536 = vmatprep.subr.bf16.mxu0 0
  %5537 = vmatpush1.bf16.msra.mxu0 0
  %5538 = vmatprep.subr.bf16.mxu0 0
  %5539 = vmatpush1.bf16.msra.mxu0 0
  %5540 = vmatprep.subr.bf16.mxu0 0
  %5541 = vmatpush1.bf16.msra.mxu0 0
  %5542 = vmatprep.subr.bf16.mxu0 0
  %5543 = vmatpush1.bf16.msra.mxu0 0
  %5544 = vmatprep.subr.bf16.mxu0 0
  %5545 = vmatpush1.bf16.msra.mxu0 0
  %5546 = vmatprep.subr.bf16.mxu0 0
  %5547 = vmatpush1.bf16.msra.mxu0 0
  %5548 = vmatprep.subr.bf16.mxu0 0
  %5549 = vmatpush1.bf16.msra.mxu0 0
  %5550 = vmatprep.mubr.bf16.mxu0 0
  %5551 = vmatmul.mubr.bf16.gmra.mrb[0].mxu0 %v5516
  %v5552 = vpop.f32.mrb[0].mxu0
  %v5553 = vadd.f32 0.0, %v5552
  %v5554 = vpop.f32.mrb[0].mxu0
  %v5555 = vpop.f32.mrb[0].mxu0
  %v5556 = vadd.f32 0.0, %v5555
  %v5557 = vpop.f32.mrb[0].mxu0
  %5558 = vdwg.mxu0
  %v5561 = vunpack.c.l.b16 %v5497
  %v5562 = vunpack.c.l.b16 %v5498
  %v5563 = vpack.c.b16 %v5562, %v5561
  %5564 = vrot.lane.b32.xlu0 %v5494, 6
  %v5565 = vpop.permute.xlu0 %5564
  %5566 = vrot.lane.b32.xlu0 %v5495, 6
  %v5567 = vpop.permute.xlu0 %5566
  %v5568 = vsel %vm5018, %v5565, %v5567
  %v5571 = vsel %vm134, %v5563, 0
  %5573 = vmatprep.subr.bf16.mxu0 0
  %5574 = vmatpush1.bf16.msra.mxu0 %v5568
  %5575 = vmatprep.subr.bf16.mxu0 0
  %5576 = vmatpush1.bf16.msra.mxu0 0
  %5577 = vmatprep.subr.bf16.mxu0 0
  %5578 = vmatpush1.bf16.msra.mxu0 0
  %5579 = vmatprep.subr.bf16.mxu0 0
  %5580 = vmatpush1.bf16.msra.mxu0 0
  %5581 = vmatprep.subr.bf16.mxu0 0
  %5582 = vmatpush1.bf16.msra.mxu0 0
  %5583 = vmatprep.subr.bf16.mxu0 0
  %5584 = vmatpush1.bf16.msra.mxu0 0
  %5585 = vmatprep.subr.bf16.mxu0 0
  %5586 = vmatpush1.bf16.msra.mxu0 0
  %5587 = vmatprep.subr.bf16.mxu0 0
  %5588 = vmatpush1.bf16.msra.mxu0 0
  %5589 = vmatprep.subr.bf16.mxu0 0
  %5590 = vmatpush1.bf16.msra.mxu0 0
  %5591 = vmatprep.subr.bf16.mxu0 0
  %5592 = vmatpush1.bf16.msra.mxu0 0
  %5593 = vmatprep.subr.bf16.mxu0 0
  %5594 = vmatpush1.bf16.msra.mxu0 0
  %5595 = vmatprep.subr.bf16.mxu0 0
  %5596 = vmatpush1.bf16.msra.mxu0 0
  %5597 = vmatprep.subr.bf16.mxu0 0
  %5598 = vmatpush1.bf16.msra.mxu0 0
  %5599 = vmatprep.subr.bf16.mxu0 0
  %5600 = vmatpush1.bf16.msra.mxu0 0
  %5601 = vmatprep.subr.bf16.mxu0 0
  %5602 = vmatpush1.bf16.msra.mxu0 0
  %5603 = vmatprep.subr.bf16.mxu0 0
  %5604 = vmatpush1.bf16.msra.mxu0 0
  %5605 = vmatprep.mubr.bf16.mxu0 0
  %5606 = vmatmul.mubr.bf16.gmra.mrb[0].mxu0 %v5571
  %v5607 = vpop.f32.mrb[0].mxu0
  %v5608 = vadd.f32 %v5553, %v5607
  %v5609 = vpop.f32.mrb[0].mxu0
  %v5610 = vpop.f32.mrb[0].mxu0
  %v5611 = vadd.f32 %v5556, %v5610
  %v5612 = vpop.f32.mrb[0].mxu0
  %5613 = vdwg.mxu0
  %s5614 = scalar_lea.vmem %s1, 376
  %v5615 = vld [vmem:[%s5614] sm:$0xf]
  %v5616 = vld [vmem:[%s5614 + $0x4] sm:$0xf]
  %v5619 = vunpack.c.l.b16 %v5615
  %v5620 = vunpack.c.l.b16 %v5616
  %v5621 = vpack.c.b16 %v5620, %v5619
  %5622 = vrot.lane.b32.xlu0 %v5494, 4
  %v5623 = vpop.permute.xlu0 %5622
  %5624 = vrot.lane.b32.xlu0 %v5495, 4
  %v5625 = vpop.permute.xlu0 %5624
  %v5626 = vsel %vm5077, %v5623, %v5625
  %v5629 = vsel %vm134, %v5621, 0
  %5631 = vmatprep.subr.bf16.mxu0 0
  %5632 = vmatpush1.bf16.msra.mxu0 %v5626
  %5633 = vmatprep.subr.bf16.mxu0 0
  %5634 = vmatpush1.bf16.msra.mxu0 0
  %5635 = vmatprep.subr.bf16.mxu0 0
  %5636 = vmatpush1.bf16.msra.mxu0 0
  %5637 = vmatprep.subr.bf16.mxu0 0
  %5638 = vmatpush1.bf16.msra.mxu0 0
  %5639 = vmatprep.subr.bf16.mxu0 0
  %5640 = vmatpush1.bf16.msra.mxu0 0
  %5641 = vmatprep.subr.bf16.mxu0 0
  %5642 = vmatpush1.bf16.msra.mxu0 0
  %5643 = vmatprep.subr.bf16.mxu0 0
  %5644 = vmatpush1.bf16.msra.mxu0 0
  %5645 = vmatprep.subr.bf16.mxu0 0
  %5646 = vmatpush1.bf16.msra.mxu0 0
  %5647 = vmatprep.subr.bf16.mxu0 0
  %5648 = vmatpush1.bf16.msra.mxu0 0
  %5649 = vmatprep.subr.bf16.mxu0 0
  %5650 = vmatpush1.bf16.msra.mxu0 0
  %5651 = vmatprep.subr.bf16.mxu0 0
  %5652 = vmatpush1.bf16.msra.mxu0 0
  %5653 = vmatprep.subr.bf16.mxu0 0
  %5654 = vmatpush1.bf16.msra.mxu0 0
  %5655 = vmatprep.subr.bf16.mxu0 0
  %5656 = vmatpush1.bf16.msra.mxu0 0
  %5657 = vmatprep.subr.bf16.mxu0 0
  %5658 = vmatpush1.bf16.msra.mxu0 0
  %5659 = vmatprep.subr.bf16.mxu0 0
  %5660 = vmatpush1.bf16.msra.mxu0 0
  %5661 = vmatprep.subr.bf16.mxu0 0
  %5662 = vmatpush1.bf16.msra.mxu0 0
  %5663 = vmatprep.mubr.bf16.mxu0 0
  %5664 = vmatmul.mubr.bf16.gmra.mrb[0].mxu0 %v5629
  %v5665 = vpop.f32.mrb[0].mxu0
  %v5666 = vadd.f32 0.0, %v5665
  %v5667 = vpop.f32.mrb[0].mxu0
  %v5668 = vpop.f32.mrb[0].mxu0
  %v5669 = vadd.f32 0.0, %v5668
  %v5670 = vpop.f32.mrb[0].mxu0
  %5671 = vdwg.mxu0
  %v5672 = vadd.f32 %v5608, %v5666
  %v5673 = vadd.f32 %v5611, %v5669
  %s5674 = scalar_lea.vmem %s1, 384
  %v5675 = vld [vmem:[%s5674] sm:$0xf]
  %v5676 = vld [vmem:[%s5674 + $0x4] sm:$0xf]
  %v5679 = vunpack.c.l.b16 %v5675
  %v5680 = vunpack.c.l.b16 %v5676
  %v5681 = vpack.c.b16 %v5680, %v5679
  %5682 = vrot.lane.b32.xlu0 %v5494, 1
  %v5683 = vpop.permute.xlu0 %5682
  %5684 = vrot.lane.b32.xlu0 %v5495, 1
  %v5685 = vpop.permute.xlu0 %5684
  %v5686 = vsel %vm614, %v5683, %v5685
  %v5689 = vsel %vm134, %v5681, 0
  %5691 = vmatprep.subr.bf16.mxu0 0
  %5692 = vmatpush1.bf16.msra.mxu0 %v5686
  %5693 = vmatprep.subr.bf16.mxu0 0
  %5694 = vmatpush1.bf16.msra.mxu0 0
  %5695 = vmatprep.subr.bf16.mxu0 0
  %5696 = vmatpush1.bf16.msra.mxu0 0
  %5697 = vmatprep.subr.bf16.mxu0 0
  %5698 = vmatpush1.bf16.msra.mxu0 0
  %5699 = vmatprep.subr.bf16.mxu0 0
  %5700 = vmatpush1.bf16.msra.mxu0 0
  %5701 = vmatprep.subr.bf16.mxu0 0
  %5702 = vmatpush1.bf16.msra.mxu0 0
  %5703 = vmatprep.subr.bf16.mxu0 0
  %5704 = vmatpush1.bf16.msra.mxu0 0
  %5705 = vmatprep.subr.bf16.mxu0 0
  %5706 = vmatpush1.bf16.msra.mxu0 0
  %5707 = vmatprep.subr.bf16.mxu0 0
  %5708 = vmatpush1.bf16.msra.mxu0 0
  %5709 = vmatprep.subr.bf16.mxu0 0
  %5710 = vmatpush1.bf16.msra.mxu0 0
  %5711 = vmatprep.subr.bf16.mxu0 0
  %5712 = vmatpush1.bf16.msra.mxu0 0
  %5713 = vmatprep.subr.bf16.mxu0 0
  %5714 = vmatpush1.bf16.msra.mxu0 0
  %5715 = vmatprep.subr.bf16.mxu0 0
  %5716 = vmatpush1.bf16.msra.mxu0 0
  %5717 = vmatprep.subr.bf16.mxu0 0
  %5718 = vmatpush1.bf16.msra.mxu0 0
  %5719 = vmatprep.subr.bf16.mxu0 0
  %5720 = vmatpush1.bf16.msra.mxu0 0
  %5721 = vmatprep.subr.bf16.mxu0 0
  %5722 = vmatpush1.bf16.msra.mxu0 0
  %5723 = vmatprep.mubr.bf16.mxu0 0
  %5724 = vmatmul.mubr.bf16.gmra.mrb[0].mxu0 %v5689
  %v5725 = vpop.f32.mrb[0].mxu0
  %v5726 = vadd.f32 0.0, %v5725
  %v5727 = vpop.f32.mrb[0].mxu0
  %v5728 = vpop.f32.mrb[0].mxu0
  %v5729 = vadd.f32 0.0, %v5728
  %v5730 = vpop.f32.mrb[0].mxu0
  %5731 = vdwg.mxu0
  %v5732 = vadd.f32 %v5672, %v5726
  %v5733 = vadd.f32 %v5673, %v5729
  %s5734 = scalar_lea.vmem %s1, 392
  %v5735 = vld [vmem:[%s5734] sm:$0xf]
  %v5736 = vld [vmem:[%s5734 + $0x4] sm:$0xf]
  %v5739 = vunpack.c.l.b16 %v5735
  %v5740 = vunpack.c.l.b16 %v5736
  %v5741 = vpack.c.b16 %v5740, %v5739
  %v5743 = vsel %vm134, %v5741, 0
  %5745 = vmatprep.subr.bf16.mxu0 0
  %5746 = vmatpush1.bf16.msra.mxu0 %v5495
  %5747 = vmatprep.subr.bf16.mxu0 0
  %5748 = vmatpush1.bf16.msra.mxu0 0
  %5749 = vmatprep.subr.bf16.mxu0 0
  %5750 = vmatpush1.bf16.msra.mxu0 0
  %5751 = vmatprep.subr.bf16.mxu0 0
  %5752 = vmatpush1.bf16.msra.mxu0 0
  %5753 = vmatprep.subr.bf16.mxu0 0
  %5754 = vmatpush1.bf16.msra.mxu0 0
  %5755 = vmatprep.subr.bf16.mxu0 0
  %5756 = vmatpush1.bf16.msra.mxu0 0
  %5757 = vmatprep.subr.bf16.mxu0 0
  %5758 = vmatpush1.bf16.msra.mxu0 0
  %5759 = vmatprep.subr.bf16.mxu0 0
  %5760 = vmatpush1.bf16.msra.mxu0 0
  %5761 = vmatprep.subr.bf16.mxu0 0
  %5762 = vmatpush1.bf16.msra.mxu0 0
  %5763 = vmatprep.subr.bf16.mxu0 0
  %5764 = vmatpush1.bf16.msra.mxu0 0
  %5765 = vmatprep.subr.bf16.mxu0 0
  %5766 = vmatpush1.bf16.msra.mxu0 0
  %5767 = vmatprep.subr.bf16.mxu0 0
  %5768 = vmatpush1.bf16.msra.mxu0 0
  %5769 = vmatprep.subr.bf16.mxu0 0
  %5770 = vmatpush1.bf16.msra.mxu0 0
  %5771 = vmatprep.subr.bf16.mxu0 0
  %5772 = vmatpush1.bf16.msra.mxu0 0
  %5773 = vmatprep.subr.bf16.mxu0 0
  %5774 = vmatpush1.bf16.msra.mxu0 0
  %5775 = vmatprep.subr.bf16.mxu0 0
  %5776 = vmatpush1.bf16.msra.mxu0 0
  %5777 = vmatprep.mubr.bf16.mxu0 0
  %5778 = vmatmul.mubr.bf16.gmra.mrb[0].mxu0 %v5743
  %v5779 = vpop.f32.mrb[0].mxu0
  %v5780 = vadd.f32 0.0, %v5779
  %v5781 = vpop.f32.mrb[0].mxu0
  %v5782 = vpop.f32.mrb[0].mxu0
  %v5783 = vadd.f32 0.0, %v5782
  %v5784 = vpop.f32.mrb[0].mxu0
  %5785 = vdwg.mxu0
  %v5786 = vadd.f32 %v5732, %v5780
  %v5787 = vadd.f32 %v5733, %v5783
  %s5788 = scalar_lea.vmem %s1, 400
  %v5789 = vld [vmem:[%s5788] sm:$0xf]
  %v5790 = vld [vmem:[%s5788 + $0x4] sm:$0xf]
  %v5793 = vunpack.c.l.b16 %v5789
  %v5794 = vunpack.c.l.b16 %v5790
  %v5795 = vpack.c.b16 %v5794, %v5793
  %5796 = vrot.lane.b32.xlu0 %v5495, 127
  %v5797 = vpop.permute.xlu0 %5796
  %v5800 = vsel %vm134, %v5795, 0
  %5802 = vmatprep.subr.bf16.mxu0 0
  %5803 = vmatpush1.bf16.msra.mxu0 %v5797
  %5804 = vmatprep.subr.bf16.mxu0 0
  %5805 = vmatpush1.bf16.msra.mxu0 0
  %5806 = vmatprep.subr.bf16.mxu0 0
  %5807 = vmatpush1.bf16.msra.mxu0 0
  %5808 = vmatprep.subr.bf16.mxu0 0
  %5809 = vmatpush1.bf16.msra.mxu0 0
  %5810 = vmatprep.subr.bf16.mxu0 0
  %5811 = vmatpush1.bf16.msra.mxu0 0
  %5812 = vmatprep.subr.bf16.mxu0 0
  %5813 = vmatpush1.bf16.msra.mxu0 0
  %5814 = vmatprep.subr.bf16.mxu0 0
  %5815 = vmatpush1.bf16.msra.mxu0 0
  %5816 = vmatprep.subr.bf16.mxu0 0
  %5817 = vmatpush1.bf16.msra.mxu0 0
  %5818 = vmatprep.subr.bf16.mxu0 0
  %5819 = vmatpush1.bf16.msra.mxu0 0
  %5820 = vmatprep.subr.bf16.mxu0 0
  %5821 = vmatpush1.bf16.msra.mxu0 0
  %5822 = vmatprep.subr.bf16.mxu0 0
  %5823 = vmatpush1.bf16.msra.mxu0 0
  %5824 = vmatprep.subr.bf16.mxu0 0
  %5825 = vmatpush1.bf16.msra.mxu0 0
  %5826 = vmatprep.subr.bf16.mxu0 0
  %5827 = vmatpush1.bf16.msra.mxu0 0
  %5828 = vmatprep.subr.bf16.mxu0 0
  %5829 = vmatpush1.bf16.msra.mxu0 0
  %5830 = vmatprep.subr.bf16.mxu0 0
  %5831 = vmatpush1.bf16.msra.mxu0 0
  %5832 = vmatprep.subr.bf16.mxu0 0
  %5833 = vmatpush1.bf16.msra.mxu0 0
  %5834 = vmatprep.mubr.bf16.mxu0 0
  %5835 = vmatmul.mubr.bf16.gmra.mrb[0].mxu0 %v5800
  %v5836 = vpop.f32.mrb[0].mxu0
  %v5837 = vadd.f32 0.0, %v5836
  %v5838 = vpop.f32.mrb[0].mxu0
  %v5839 = vpop.f32.mrb[0].mxu0
  %v5840 = vadd.f32 0.0, %v5839
  %v5841 = vpop.f32.mrb[0].mxu0
  %5842 = vdwg.mxu0
  %v5843 = vadd.f32 %v5786, %v5837
  %v5844 = vadd.f32 %v5787, %v5840
  %s5845 = scalar_lea.vmem %s1, 408
  %v5846 = vld [vmem:[%s5845] sm:$0xf]
  %v5847 = vld [vmem:[%s5845 + $0x4] sm:$0xf]
  %v5850 = vunpack.c.l.b16 %v5846
  %v5851 = vunpack.c.l.b16 %v5847
  %v5852 = vpack.c.b16 %v5851, %v5850
  %5853 = vrot.lane.b32.xlu0 %v5495, 124
  %v5854 = vpop.permute.xlu0 %5853
  %v5857 = vsel %vm134, %v5852, 0
  %5859 = vmatprep.subr.bf16.mxu0 0
  %5860 = vmatpush1.bf16.msra.mxu0 %v5854
  %5861 = vmatprep.subr.bf16.mxu0 0
  %5862 = vmatpush1.bf16.msra.mxu0 0
  %5863 = vmatprep.subr.bf16.mxu0 0
  %5864 = vmatpush1.bf16.msra.mxu0 0
  %5865 = vmatprep.subr.bf16.mxu0 0
  %5866 = vmatpush1.bf16.msra.mxu0 0
  %5867 = vmatprep.subr.bf16.mxu0 0
  %5868 = vmatpush1.bf16.msra.mxu0 0
  %5869 = vmatprep.subr.bf16.mxu0 0
  %5870 = vmatpush1.bf16.msra.mxu0 0
  %5871 = vmatprep.subr.bf16.mxu0 0
  %5872 = vmatpush1.bf16.msra.mxu0 0
  %5873 = vmatprep.subr.bf16.mxu0 0
  %5874 = vmatpush1.bf16.msra.mxu0 0
  %5875 = vmatprep.subr.bf16.mxu0 0
  %5876 = vmatpush1.bf16.msra.mxu0 0
  %5877 = vmatprep.subr.bf16.mxu0 0
  %5878 = vmatpush1.bf16.msra.mxu0 0
  %5879 = vmatprep.subr.bf16.mxu0 0
  %5880 = vmatpush1.bf16.msra.mxu0 0
  %5881 = vmatprep.subr.bf16.mxu0 0
  %5882 = vmatpush1.bf16.msra.mxu0 0
  %5883 = vmatprep.subr.bf16.mxu0 0
  %5884 = vmatpush1.bf16.msra.mxu0 0
  %5885 = vmatprep.subr.bf16.mxu0 0
  %5886 = vmatpush1.bf16.msra.mxu0 0
  %5887 = vmatprep.subr.bf16.mxu0 0
  %5888 = vmatpush1.bf16.msra.mxu0 0
  %5889 = vmatprep.subr.bf16.mxu0 0
  %5890 = vmatpush1.bf16.msra.mxu0 0
  %5891 = vmatprep.mubr.bf16.mxu0 0
  %5892 = vmatmul.mubr.bf16.gmra.mrb[0].mxu0 %v5857
  %v5893 = vpop.f32.mrb[0].mxu0
  %v5894 = vadd.f32 0.0, %v5893
  %v5895 = vpop.f32.mrb[0].mxu0
  %v5896 = vpop.f32.mrb[0].mxu0
  %v5897 = vadd.f32 0.0, %v5896
  %v5898 = vpop.f32.mrb[0].mxu0
  %5899 = vdwg.mxu0
  %v5900 = vadd.f32 %v5843, %v5894
  %v5901 = vadd.f32 %v5844, %v5897
  %s5902 = scalar_lea.vmem %s1, 416
  %v5903 = vld [vmem:[%s5902] sm:$0xf]
  %v5904 = vld [vmem:[%s5902 + $0x4] sm:$0xf]
  %v5907 = vunpack.c.l.b16 %v5903
  %v5908 = vunpack.c.l.b16 %v5904
  %v5909 = vpack.c.b16 %v5908, %v5907
  %5910 = vrot.lane.b32.xlu0 %v5495, 123
  %v5911 = vpop.permute.xlu0 %5910
  %v5914 = vsel %vm134, %v5909, 0
  %5916 = vmatprep.subr.bf16.mxu0 0
  %5917 = vmatpush1.bf16.msra.mxu0 %v5911
  %5918 = vmatprep.subr.bf16.mxu0 0
  %5919 = vmatpush1.bf16.msra.mxu0 0
  %5920 = vmatprep.subr.bf16.mxu0 0
  %5921 = vmatpush1.bf16.msra.mxu0 0
  %5922 = vmatprep.subr.bf16.mxu0 0
  %5923 = vmatpush1.bf16.msra.mxu0 0
  %5924 = vmatprep.subr.bf16.mxu0 0
  %5925 = vmatpush1.bf16.msra.mxu0 0
  %5926 = vmatprep.subr.bf16.mxu0 0
  %5927 = vmatpush1.bf16.msra.mxu0 0
  %5928 = vmatprep.subr.bf16.mxu0 0
  %5929 = vmatpush1.bf16.msra.mxu0 0
  %5930 = vmatprep.subr.bf16.mxu0 0
  %5931 = vmatpush1.bf16.msra.mxu0 0
  %5932 = vmatprep.subr.bf16.mxu0 0
  %5933 = vmatpush1.bf16.msra.mxu0 0
  %5934 = vmatprep.subr.bf16.mxu0 0
  %5935 = vmatpush1.bf16.msra.mxu0 0
  %5936 = vmatprep.subr.bf16.mxu0 0
  %5937 = vmatpush1.bf16.msra.mxu0 0
  %5938 = vmatprep.subr.bf16.mxu0 0
  %5939 = vmatpush1.bf16.msra.mxu0 0
  %5940 = vmatprep.subr.bf16.mxu0 0
  %5941 = vmatpush1.bf16.msra.mxu0 0
  %5942 = vmatprep.subr.bf16.mxu0 0
  %5943 = vmatpush1.bf16.msra.mxu0 0
  %5944 = vmatprep.subr.bf16.mxu0 0
  %5945 = vmatpush1.bf16.msra.mxu0 0
  %5946 = vmatprep.subr.bf16.mxu0 0
  %5947 = vmatpush1.bf16.msra.mxu0 0
  %5948 = vmatprep.mubr.bf16.mxu0 0
  %5949 = vmatmul.mubr.bf16.gmra.mrb[0].mxu0 %v5914
  %v5950 = vpop.f32.mrb[0].mxu0
  %v5951 = vadd.f32 0.0, %v5950
  %v5952 = vpop.f32.mrb[0].mxu0
  %v5953 = vpop.f32.mrb[0].mxu0
  %v5954 = vadd.f32 0.0, %v5953
  %v5955 = vpop.f32.mrb[0].mxu0
  %5956 = vdwg.mxu0
  %v5957 = vadd.f32 %v5900, %v5951
  %v5958 = vadd.f32 %v5901, %v5954
  %s5959 = scalar_lea.vmem %s1, 424
  %v5960 = vld [vmem:[%s5959] sm:$0xf]
  %v5961 = vld [vmem:[%s5959 + $0x4] sm:$0xf]
  %v5964 = vunpack.c.l.b16 %v5960
  %v5965 = vunpack.c.l.b16 %v5961
  %v5966 = vpack.c.b16 %v5965, %v5964
  %5967 = vrot.lane.b32.xlu0 %v5495, 122
  %v5968 = vpop.permute.xlu0 %5967
  %v5971 = vsel %vm134, %v5966, 0
  %5973 = vmatprep.subr.bf16.mxu0 0
  %5974 = vmatpush1.bf16.msra.mxu0 %v5968
  %5975 = vmatprep.subr.bf16.mxu0 0
  %5976 = vmatpush1.bf16.msra.mxu0 0
  %5977 = vmatprep.subr.bf16.mxu0 0
  %5978 = vmatpush1.bf16.msra.mxu0 0
  %5979 = vmatprep.subr.bf16.mxu0 0
  %5980 = vmatpush1.bf16.msra.mxu0 0
  %5981 = vmatprep.subr.bf16.mxu0 0
  %5982 = vmatpush1.bf16.msra.mxu0 0
  %5983 = vmatprep.subr.bf16.mxu0 0
  %5984 = vmatpush1.bf16.msra.mxu0 0
  %5985 = vmatprep.subr.bf16.mxu0 0
  %5986 = vmatpush1.bf16.msra.mxu0 0
  %5987 = vmatprep.subr.bf16.mxu0 0
  %5988 = vmatpush1.bf16.msra.mxu0 0
  %5989 = vmatprep.subr.bf16.mxu0 0
  %5990 = vmatpush1.bf16.msra.mxu0 0
  %5991 = vmatprep.subr.bf16.mxu0 0
  %5992 = vmatpush1.bf16.msra.mxu0 0
  %5993 = vmatprep.subr.bf16.mxu0 0
  %5994 = vmatpush1.bf16.msra.mxu0 0
  %5995 = vmatprep.subr.bf16.mxu0 0
  %5996 = vmatpush1.bf16.msra.mxu0 0
  %5997 = vmatprep.subr.bf16.mxu0 0
  %5998 = vmatpush1.bf16.msra.mxu0 0
  %5999 = vmatprep.subr.bf16.mxu0 0
  %6000 = vmatpush1.bf16.msra.mxu0 0
  %6001 = vmatprep.subr.bf16.mxu0 0
  %6002 = vmatpush1.bf16.msra.mxu0 0
  %6003 = vmatprep.subr.bf16.mxu0 0
  %6004 = vmatpush1.bf16.msra.mxu0 0
  %6005 = vmatprep.mubr.bf16.mxu0 0
  %6006 = vmatmul.mubr.bf16.gmra.mrb[0].mxu0 %v5971
  %v6007 = vpop.f32.mrb[0].mxu0
  %v6008 = vadd.f32 0.0, %v6007
  %v6009 = vpop.f32.mrb[0].mxu0
  %v6010 = vpop.f32.mrb[0].mxu0
  %v6011 = vadd.f32 0.0, %v6010
  %v6012 = vpop.f32.mrb[0].mxu0
  %6013 = vdwg.mxu0
  %v6014 = vadd.f32 %v5957, %v6008
  %v6015 = vadd.f32 %v5958, %v6011
  %v6016 = vld [vmem:[%s2] sm:$0xff]
  %v6017 = vld [vmem:[%s2 + $0x8] sm:$0xff]
  %6019 = vset.pattern.permute.xlu0 5
  %6020 = vperm.xlu0 %6019, %v6016
  %v6021 = vpop.permute.xlu0 %6020
  %6024 = vset.pattern.permute.xlu0 5
  %6025 = vperm.xlu0 %6024, %v6017
  %v6026 = vpop.permute.xlu0 %6025
  %v6028 = vadd.f32 %v6014, %v6021
  %v6029 = vadd.f32 %v6015, %v6026
  %v6030 = vmul.f32 %v6028, %v5486
  %v6031 = vmul.f32 %v6029, %v5486
  %v6032 = vld [vmem:[%s7] sm:$0xf]
  %v6033 = vld [vmem:[%s7 + $0x4] sm:$0xf]
  %v6034 = vld [vmem:[%s7 + $0x8] sm:$0xf]
  %v6035 = vld [vmem:[%s7 + $0xc] sm:$0x1]
  %v6036 = vpack.c.bf16 %v6031, %v6030
  %v6041 = vunpack.c.l.b16 %v6032
  %v6042 = vunpack.c.l.b16 %v6033
  %v6043 = vunpack.c.l.b16 %v6034
  %v6044 = vunpack.c.l.b16 %v6035
  %v6045 = vpack.c.b16 %v6042, %v6041
  %v6046 = vpack.c.b16 %v6044, %v6043
  %v6049 = vsel %vm4937, %v6036, 0
  %vm6051 = vcmask 1043456
  %vm6052 = vcmask 1044480
  %v6053 = vsel %vm6051, 4294967295, 65535
  %v6054 = vsel %vm6052, %v6053, 0
  %v6056 = vand.u32 %v6046, %v6054
  %6058 = vmatprep.subr.bf16.mxu0 0
  %6059 = vmatpush1.bf16.msra.mxu0 %v6045
  %6060 = vmatprep.subr.bf16.mxu0 0
  %6061 = vmatpush1.bf16.msra.mxu0 %v6056
  %6062 = vmatprep.subr.bf16.mxu0 0
  %6063 = vmatpush1.bf16.msra.mxu0 0
  %6064 = vmatprep.subr.bf16.mxu0 0
  %6065 = vmatpush1.bf16.msra.mxu0 0
  %6066 = vmatprep.subr.bf16.mxu0 0
  %6067 = vmatpush1.bf16.msra.mxu0 0
  %6068 = vmatprep.subr.bf16.mxu0 0
  %6069 = vmatpush1.bf16.msra.mxu0 0
  %6070 = vmatprep.subr.bf16.mxu0 0
  %6071 = vmatpush1.bf16.msra.mxu0 0
  %6072 = vmatprep.subr.bf16.mxu0 0
  %6073 = vmatpush1.bf16.msra.mxu0 0
  %6074 = vmatprep.subr.bf16.mxu0 0
  %6075 = vmatpush1.bf16.msra.mxu0 0
  %6076 = vmatprep.subr.bf16.mxu0 0
  %6077 = vmatpush1.bf16.msra.mxu0 0
  %6078 = vmatprep.subr.bf16.mxu0 0
  %6079 = vmatpush1.bf16.msra.mxu0 0
  %6080 = vmatprep.subr.bf16.mxu0 0
  %6081 = vmatpush1.bf16.msra.mxu0 0
  %6082 = vmatprep.subr.bf16.mxu0 0
  %6083 = vmatpush1.bf16.msra.mxu0 0
  %6084 = vmatprep.subr.bf16.mxu0 0
  %6085 = vmatpush1.bf16.msra.mxu0 0
  %6086 = vmatprep.subr.bf16.mxu0 0
  %6087 = vmatpush1.bf16.msra.mxu0 0
  %6088 = vmatprep.subr.bf16.mxu0 0
  %6089 = vmatpush1.bf16.msra.mxu0 0
  %6090 = vmatprep.mubr.bf16.mxu0 0
  %6091 = vmatmul.mubr.bf16.gmra.mrb[0].mxu0 %v6049
  %v6092 = vpop.f32.mrb[0].mxu0
  %v6093 = vadd.f32 0.0, %v6092
  %v6094 = vpop.f32.mrb[0].mxu0
  %v6095 = vpop.f32.mrb[0].mxu0
  %v6096 = vadd.f32 0.0, %v6095
  %v6097 = vpop.f32.mrb[0].mxu0
  %6098 = vdwg.mxu0
  %6100 = vrot.lane.b32.xlu0 %v6036, 103
  %v6101 = vpop.permute.xlu0 %6100
  %v6103 = vsel %vm4937, %v6101, 0
  %6105 = vmatprep.subr.bf16.mxu0 0
  %6106 = vmatpush1.bf16.msra.mxu0 %v6045
  %6107 = vmatprep.subr.bf16.mxu0 0
  %6108 = vmatpush1.bf16.msra.mxu0 %v6056
  %6109 = vmatprep.subr.bf16.mxu0 0
  %6110 = vmatpush1.bf16.msra.mxu0 0
  %6111 = vmatprep.subr.bf16.mxu0 0
  %6112 = vmatpush1.bf16.msra.mxu0 0
  %6113 = vmatprep.subr.bf16.mxu0 0
  %6114 = vmatpush1.bf16.msra.mxu0 0
  %6115 = vmatprep.subr.bf16.mxu0 0
  %6116 = vmatpush1.bf16.msra.mxu0 0
  %6117 = vmatprep.subr.bf16.mxu0 0
  %6118 = vmatpush1.bf16.msra.mxu0 0
  %6119 = vmatprep.subr.bf16.mxu0 0
  %6120 = vmatpush1.bf16.msra.mxu0 0
  %6121 = vmatprep.subr.bf16.mxu0 0
  %6122 = vmatpush1.bf16.msra.mxu0 0
  %6123 = vmatprep.subr.bf16.mxu0 0
  %6124 = vmatpush1.bf16.msra.mxu0 0
  %6125 = vmatprep.subr.bf16.mxu0 0
  %6126 = vmatpush1.bf16.msra.mxu0 0
  %6127 = vmatprep.subr.bf16.mxu0 0
  %6128 = vmatpush1.bf16.msra.mxu0 0
  %6129 = vmatprep.subr.bf16.mxu0 0
  %6130 = vmatpush1.bf16.msra.mxu0 0
  %6131 = vmatprep.subr.bf16.mxu0 0
  %6132 = vmatpush1.bf16.msra.mxu0 0
  %6133 = vmatprep.subr.bf16.mxu0 0
  %6134 = vmatpush1.bf16.msra.mxu0 0
  %6135 = vmatprep.subr.bf16.mxu0 0
  %6136 = vmatpush1.bf16.msra.mxu0 0
  %6137 = vmatprep.mubr.bf16.mxu0 0
  %6138 = vmatmul.mubr.bf16.gmra.mrb[0].mxu0 %v6103
  %v6139 = vpop.f32.mrb[0].mxu0
  %v6140 = vadd.f32 0.0, %v6139
  %v6141 = vpop.f32.mrb[0].mxu0
  %v6142 = vpop.f32.mrb[0].mxu0
  %v6143 = vadd.f32 0.0, %v6142
  %v6144 = vpop.f32.mrb[0].mxu0
  %6145 = vdwg.mxu0
  %6148 = vrot.lane.b32.xlu0 %v6140, 81
  %v6149 = vpop.permute.xlu0 %6148
  %6150 = vrot.lane.b32.xlu0 %v6143, 81
  %v6151 = vpop.permute.xlu0 %6150
  %v6154 = vsel %vm3535, %v6093, %v6149
  %v6155 = vsel %vm3535, %v6096, %v6151
  %v6156 = vunpack.c.l.bf16 %v4784
  %v6157 = vunpack.c.l.bf16 %v4785
  %v6158 = vunpack.c.h.bf16 %v4784
  %v6159 = vunpack.c.h.bf16 %v4785
  %v6160 = vadd.f32 %v6154, %v6156
  %v6161 = vadd.f32 %v6149, %v6157
  %v6162 = vadd.f32 %v6155, %v6158
  %v6163 = vadd.f32 %v6151, %v6159
  %v6164 = vmax.f32 %v6160, 0.0
  %v6165 = vmax.f32 %v6161, 0.0
  %v6166 = vmax.f32 %v6162, 0.0
  %v6167 = vmax.f32 %v6163, 0.0
  %v6168 = vpack.c.bf16 %v6166, %v6164
  %v6169 = vpack.c.bf16 %v6167, %v6165
  %6170 = vst [vmem:[#allocation2 + $0x8] sm:$0xff] %v6168
  %6171 = vst.msk [vmem:[#allocation2 + $0x10] sm:$0xff] %vm3541, %v6169
  %v6172 = vld [vmem:[#allocation2] sm:$0xff]
  %v6173 = vld [vmem:[#allocation2 + $0x8] sm:$0xff]
  %v6174 = vld [vmem:[#allocation2 + $0x10] sm:$0xff]
  %s6175 = scalar_lea.vmem %s1, 432
  %v6176 = vld [vmem:[%s6175] sm:$0xf]
  %v6177 = vld [vmem:[%s6175 + $0x4] sm:$0xf]
  %s6178 = scalar_lea.vmem %s1, 440
  %v6179 = vld [vmem:[%s6178] sm:$0xf]
  %v6180 = vld [vmem:[%s6178 + $0x4] sm:$0xf]
  %v6183 = vunpack.c.l.b16 %v6179
  %v6184 = vunpack.c.l.b16 %v6180
  %v6185 = vpack.c.b16 %v6184, %v6183
  %6189 = vrot.lane.b32.xlu0 %v6172, 9
  %v6190 = vpop.permute.xlu0 %6189
  %6191 = vrot.lane.b32.xlu0 %v6173, 9
  %v6192 = vpop.permute.xlu0 %6191
  %6193 = vrot.lane.b32.xlu0 %v6174, 9
  %v6194 = vpop.permute.xlu0 %6193
  %v6195 = vsel %vm3566, %v6190, %v6192
  %v6196 = vsel %vm3566, %v6192, %v6194
  %v6200 = vsel %vm134, %v6185, 0
  %6202 = vmatprep.subr.bf16.mxu0 %v6196
  %6203 = vmatpush1.bf16.msra.mxu0 %v6195
  %6204 = vmatprep.subr.bf16.mxu0 0
  %6205 = vmatpush1.bf16.msra.mxu0 0
  %6206 = vmatprep.subr.bf16.mxu0 0
  %6207 = vmatpush1.bf16.msra.mxu0 0
  %6208 = vmatprep.subr.bf16.mxu0 0
  %6209 = vmatpush1.bf16.msra.mxu0 0
  %6210 = vmatprep.subr.bf16.mxu0 0
  %6211 = vmatpush1.bf16.msra.mxu0 0
  %6212 = vmatprep.subr.bf16.mxu0 0
  %6213 = vmatpush1.bf16.msra.mxu0 0
  %6214 = vmatprep.subr.bf16.mxu0 0
  %6215 = vmatpush1.bf16.msra.mxu0 0
  %6216 = vmatprep.subr.bf16.mxu0 0
  %6217 = vmatpush1.bf16.msra.mxu0 0
  %6218 = vmatprep.subr.bf16.mxu0 0
  %6219 = vmatpush1.bf16.msra.mxu0 0
  %6220 = vmatprep.subr.bf16.mxu0 0
  %6221 = vmatpush1.bf16.msra.mxu0 0
  %6222 = vmatprep.subr.bf16.mxu0 0
  %6223 = vmatpush1.bf16.msra.mxu0 0
  %6224 = vmatprep.subr.bf16.mxu0 0
  %6225 = vmatpush1.bf16.msra.mxu0 0
  %6226 = vmatprep.subr.bf16.mxu0 0
  %6227 = vmatpush1.bf16.msra.mxu0 0
  %6228 = vmatprep.subr.bf16.mxu0 0
  %6229 = vmatpush1.bf16.msra.mxu0 0
  %6230 = vmatprep.subr.bf16.mxu0 0
  %6231 = vmatpush1.bf16.msra.mxu0 0
  %6232 = vmatprep.subr.bf16.mxu0 0
  %6233 = vmatpush1.bf16.msra.mxu0 0
  %6234 = vmatprep.mubr.bf16.mxu0 0
  %6235 = vmatmul.mubr.bf16.gmra.mrb[0].mxu0 %v6200
  %v6236 = vpop.f32.mrb[0].mxu0
  %v6237 = vadd.f32 0.0, %v6236
  %v6238 = vpop.f32.mrb[0].mxu0
  %v6239 = vadd.f32 0.0, %v6238
  %v6240 = vpop.f32.mrb[0].mxu0
  %v6241 = vadd.f32 0.0, %v6240
  %v6242 = vpop.f32.mrb[0].mxu0
  %v6243 = vadd.f32 0.0, %v6242
  %6244 = vdwg.mxu0
  %v6247 = vunpack.c.l.b16 %v6176
  %v6248 = vunpack.c.l.b16 %v6177
  %v6249 = vpack.c.b16 %v6248, %v6247
  %6250 = vrot.lane.b32.xlu0 %v6172, 10
  %v6251 = vpop.permute.xlu0 %6250
  %6252 = vrot.lane.b32.xlu0 %v6173, 10
  %v6253 = vpop.permute.xlu0 %6252
  %6254 = vrot.lane.b32.xlu0 %v6174, 10
  %v6255 = vpop.permute.xlu0 %6254
  %v6256 = vsel %vm3628, %v6251, %v6253
  %v6257 = vsel %vm3628, %v6253, %v6255
  %v6261 = vsel %vm134, %v6249, 0
  %6263 = vmatprep.subr.bf16.mxu0 %v6257
  %6264 = vmatpush1.bf16.msra.mxu0 %v6256
  %6265 = vmatprep.subr.bf16.mxu0 0
  %6266 = vmatpush1.bf16.msra.mxu0 0
  %6267 = vmatprep.subr.bf16.mxu0 0
  %6268 = vmatpush1.bf16.msra.mxu0 0
  %6269 = vmatprep.subr.bf16.mxu0 0
  %6270 = vmatpush1.bf16.msra.mxu0 0
  %6271 = vmatprep.subr.bf16.mxu0 0
  %6272 = vmatpush1.bf16.msra.mxu0 0
  %6273 = vmatprep.subr.bf16.mxu0 0
  %6274 = vmatpush1.bf16.msra.mxu0 0
  %6275 = vmatprep.subr.bf16.mxu0 0
  %6276 = vmatpush1.bf16.msra.mxu0 0
  %6277 = vmatprep.subr.bf16.mxu0 0
  %6278 = vmatpush1.bf16.msra.mxu0 0
  %6279 = vmatprep.subr.bf16.mxu0 0
  %6280 = vmatpush1.bf16.msra.mxu0 0
  %6281 = vmatprep.subr.bf16.mxu0 0
  %6282 = vmatpush1.bf16.msra.mxu0 0
  %6283 = vmatprep.subr.bf16.mxu0 0
  %6284 = vmatpush1.bf16.msra.mxu0 0
  %6285 = vmatprep.subr.bf16.mxu0 0
  %6286 = vmatpush1.bf16.msra.mxu0 0
  %6287 = vmatprep.subr.bf16.mxu0 0
  %6288 = vmatpush1.bf16.msra.mxu0 0
  %6289 = vmatprep.subr.bf16.mxu0 0
  %6290 = vmatpush1.bf16.msra.mxu0 0
  %6291 = vmatprep.subr.bf16.mxu0 0
  %6292 = vmatpush1.bf16.msra.mxu0 0
  %6293 = vmatprep.subr.bf16.mxu0 0
  %6294 = vmatpush1.bf16.msra.mxu0 0
  %6295 = vmatprep.mubr.bf16.mxu0 0
  %6296 = vmatmul.mubr.bf16.gmra.mrb[0].mxu0 %v6261
  %v6297 = vpop.f32.mrb[0].mxu0
  %v6298 = vadd.f32 %v6237, %v6297
  %v6299 = vpop.f32.mrb[0].mxu0
  %v6300 = vadd.f32 %v6239, %v6299
  %v6301 = vpop.f32.mrb[0].mxu0
  %v6302 = vadd.f32 %v6241, %v6301
  %v6303 = vpop.f32.mrb[0].mxu0
  %v6304 = vadd.f32 %v6243, %v6303
  %6305 = vdwg.mxu0
  %s6306 = scalar_lea.vmem %s1, 448
  %v6307 = vld [vmem:[%s6306] sm:$0xf]
  %v6308 = vld [vmem:[%s6306 + $0x4] sm:$0xf]
  %v6311 = vunpack.c.l.b16 %v6307
  %v6312 = vunpack.c.l.b16 %v6308
  %v6313 = vpack.c.b16 %v6312, %v6311
  %6314 = vrot.lane.b32.xlu0 %v6172, 8
  %v6315 = vpop.permute.xlu0 %6314
  %6316 = vrot.lane.b32.xlu0 %v6173, 8
  %v6317 = vpop.permute.xlu0 %6316
  %6318 = vrot.lane.b32.xlu0 %v6174, 8
  %v6319 = vpop.permute.xlu0 %6318
  %v6320 = vsel %vm3693, %v6315, %v6317
  %v6321 = vsel %vm3693, %v6317, %v6319
  %v6325 = vsel %vm134, %v6313, 0
  %6327 = vmatprep.subr.bf16.mxu0 %v6321
  %6328 = vmatpush1.bf16.msra.mxu0 %v6320
  %6329 = vmatprep.subr.bf16.mxu0 0
  %6330 = vmatpush1.bf16.msra.mxu0 0
  %6331 = vmatprep.subr.bf16.mxu0 0
  %6332 = vmatpush1.bf16.msra.mxu0 0
  %6333 = vmatprep.subr.bf16.mxu0 0
  %6334 = vmatpush1.bf16.msra.mxu0 0
  %6335 = vmatprep.subr.bf16.mxu0 0
  %6336 = vmatpush1.bf16.msra.mxu0 0
  %6337 = vmatprep.subr.bf16.mxu0 0
  %6338 = vmatpush1.bf16.msra.mxu0 0
  %6339 = vmatprep.subr.bf16.mxu0 0
  %6340 = vmatpush1.bf16.msra.mxu0 0
  %6341 = vmatprep.subr.bf16.mxu0 0
  %6342 = vmatpush1.bf16.msra.mxu0 0
  %6343 = vmatprep.subr.bf16.mxu0 0
  %6344 = vmatpush1.bf16.msra.mxu0 0
  %6345 = vmatprep.subr.bf16.mxu0 0
  %6346 = vmatpush1.bf16.msra.mxu0 0
  %6347 = vmatprep.subr.bf16.mxu0 0
  %6348 = vmatpush1.bf16.msra.mxu0 0
  %6349 = vmatprep.subr.bf16.mxu0 0
  %6350 = vmatpush1.bf16.msra.mxu0 0
  %6351 = vmatprep.subr.bf16.mxu0 0
  %6352 = vmatpush1.bf16.msra.mxu0 0
  %6353 = vmatprep.subr.bf16.mxu0 0
  %6354 = vmatpush1.bf16.msra.mxu0 0
  %6355 = vmatprep.subr.bf16.mxu0 0
  %6356 = vmatpush1.bf16.msra.mxu0 0
  %6357 = vmatprep.subr.bf16.mxu0 0
  %6358 = vmatpush1.bf16.msra.mxu0 0
  %6359 = vmatprep.mubr.bf16.mxu0 0
  %6360 = vmatmul.mubr.bf16.gmra.mrb[0].mxu0 %v6325
  %v6361 = vpop.f32.mrb[0].mxu0
  %v6362 = vadd.f32 0.0, %v6361
  %v6363 = vpop.f32.mrb[0].mxu0
  %v6364 = vadd.f32 0.0, %v6363
  %v6365 = vpop.f32.mrb[0].mxu0
  %v6366 = vadd.f32 0.0, %v6365
  %v6367 = vpop.f32.mrb[0].mxu0
  %v6368 = vadd.f32 0.0, %v6367
  %6369 = vdwg.mxu0
  %v6370 = vadd.f32 %v6298, %v6362
  %v6371 = vadd.f32 %v6300, %v6364
  %v6372 = vadd.f32 %v6302, %v6366
  %v6373 = vadd.f32 %v6304, %v6368
  %s6374 = scalar_lea.vmem %s1, 456
  %v6375 = vld [vmem:[%s6374] sm:$0xf]
  %v6376 = vld [vmem:[%s6374 + $0x4] sm:$0xf]
  %v6379 = vunpack.c.l.b16 %v6375
  %v6380 = vunpack.c.l.b16 %v6376
  %v6381 = vpack.c.b16 %v6380, %v6379
  %6382 = vrot.lane.b32.xlu0 %v6172, 1
  %v6383 = vpop.permute.xlu0 %6382
  %6384 = vrot.lane.b32.xlu0 %v6173, 1
  %v6385 = vpop.permute.xlu0 %6384
  %6386 = vrot.lane.b32.xlu0 %v6174, 1
  %v6387 = vpop.permute.xlu0 %6386
  %v6388 = vsel %vm614, %v6383, %v6385
  %v6389 = vsel %vm614, %v6385, %v6387
  %v6393 = vsel %vm134, %v6381, 0
  %6395 = vmatprep.subr.bf16.mxu0 %v6389
  %6396 = vmatpush1.bf16.msra.mxu0 %v6388
  %6397 = vmatprep.subr.bf16.mxu0 0
  %6398 = vmatpush1.bf16.msra.mxu0 0
  %6399 = vmatprep.subr.bf16.mxu0 0
  %6400 = vmatpush1.bf16.msra.mxu0 0
  %6401 = vmatprep.subr.bf16.mxu0 0
  %6402 = vmatpush1.bf16.msra.mxu0 0
  %6403 = vmatprep.subr.bf16.mxu0 0
  %6404 = vmatpush1.bf16.msra.mxu0 0
  %6405 = vmatprep.subr.bf16.mxu0 0
  %6406 = vmatpush1.bf16.msra.mxu0 0
  %6407 = vmatprep.subr.bf16.mxu0 0
  %6408 = vmatpush1.bf16.msra.mxu0 0
  %6409 = vmatprep.subr.bf16.mxu0 0
  %6410 = vmatpush1.bf16.msra.mxu0 0
  %6411 = vmatprep.subr.bf16.mxu0 0
  %6412 = vmatpush1.bf16.msra.mxu0 0
  %6413 = vmatprep.subr.bf16.mxu0 0
  %6414 = vmatpush1.bf16.msra.mxu0 0
  %6415 = vmatprep.subr.bf16.mxu0 0
  %6416 = vmatpush1.bf16.msra.mxu0 0
  %6417 = vmatprep.subr.bf16.mxu0 0
  %6418 = vmatpush1.bf16.msra.mxu0 0
  %6419 = vmatprep.subr.bf16.mxu0 0
  %6420 = vmatpush1.bf16.msra.mxu0 0
  %6421 = vmatprep.subr.bf16.mxu0 0
  %6422 = vmatpush1.bf16.msra.mxu0 0
  %6423 = vmatprep.subr.bf16.mxu0 0
  %6424 = vmatpush1.bf16.msra.mxu0 0
  %6425 = vmatprep.subr.bf16.mxu0 0
  %6426 = vmatpush1.bf16.msra.mxu0 0
  %6427 = vmatprep.mubr.bf16.mxu0 0
  %6428 = vmatmul.mubr.bf16.gmra.mrb[0].mxu0 %v6393
  %v6429 = vpop.f32.mrb[0].mxu0
  %v6430 = vadd.f32 0.0, %v6429
  %v6431 = vpop.f32.mrb[0].mxu0
  %v6432 = vadd.f32 0.0, %v6431
  %v6433 = vpop.f32.mrb[0].mxu0
  %v6434 = vadd.f32 0.0, %v6433
  %v6435 = vpop.f32.mrb[0].mxu0
  %v6436 = vadd.f32 0.0, %v6435
  %6437 = vdwg.mxu0
  %v6438 = vadd.f32 %v6370, %v6430
  %v6439 = vadd.f32 %v6371, %v6432
  %v6440 = vadd.f32 %v6372, %v6434
  %v6441 = vadd.f32 %v6373, %v6436
  %s6442 = scalar_lea.vmem %s1, 464
  %v6443 = vld [vmem:[%s6442] sm:$0xf]
  %v6444 = vld [vmem:[%s6442 + $0x4] sm:$0xf]
  %v6447 = vunpack.c.l.b16 %v6443
  %v6448 = vunpack.c.l.b16 %v6444
  %v6449 = vpack.c.b16 %v6448, %v6447
  %v6451 = vsel %vm134, %v6449, 0
  %6453 = vmatprep.subr.bf16.mxu0 %v6174
  %6454 = vmatpush1.bf16.msra.mxu0 %v6173
  %6455 = vmatprep.subr.bf16.mxu0 0
  %6456 = vmatpush1.bf16.msra.mxu0 0
  %6457 = vmatprep.subr.bf16.mxu0 0
  %6458 = vmatpush1.bf16.msra.mxu0 0
  %6459 = vmatprep.subr.bf16.mxu0 0
  %6460 = vmatpush1.bf16.msra.mxu0 0
  %6461 = vmatprep.subr.bf16.mxu0 0
  %6462 = vmatpush1.bf16.msra.mxu0 0
  %6463 = vmatprep.subr.bf16.mxu0 0
  %6464 = vmatpush1.bf16.msra.mxu0 0
  %6465 = vmatprep.subr.bf16.mxu0 0
  %6466 = vmatpush1.bf16.msra.mxu0 0
  %6467 = vmatprep.subr.bf16.mxu0 0
  %6468 = vmatpush1.bf16.msra.mxu0 0
  %6469 = vmatprep.subr.bf16.mxu0 0
  %6470 = vmatpush1.bf16.msra.mxu0 0
  %6471 = vmatprep.subr.bf16.mxu0 0
  %6472 = vmatpush1.bf16.msra.mxu0 0
  %6473 = vmatprep.subr.bf16.mxu0 0
  %6474 = vmatpush1.bf16.msra.mxu0 0
  %6475 = vmatprep.subr.bf16.mxu0 0
  %6476 = vmatpush1.bf16.msra.mxu0 0
  %6477 = vmatprep.subr.bf16.mxu0 0
  %6478 = vmatpush1.bf16.msra.mxu0 0
  %6479 = vmatprep.subr.bf16.mxu0 0
  %6480 = vmatpush1.bf16.msra.mxu0 0
  %6481 = vmatprep.subr.bf16.mxu0 0
  %6482 = vmatpush1.bf16.msra.mxu0 0
  %6483 = vmatprep.subr.bf16.mxu0 0
  %6484 = vmatpush1.bf16.msra.mxu0 0
  %6485 = vmatprep.mubr.bf16.mxu0 0
  %6486 = vmatmul.mubr.bf16.gmra.mrb[0].mxu0 %v6451
  %v6487 = vpop.f32.mrb[0].mxu0
  %v6488 = vadd.f32 0.0, %v6487
  %v6489 = vpop.f32.mrb[0].mxu0
  %v6490 = vadd.f32 0.0, %v6489
  %v6491 = vpop.f32.mrb[0].mxu0
  %v6492 = vadd.f32 0.0, %v6491
  %v6493 = vpop.f32.mrb[0].mxu0
  %v6494 = vadd.f32 0.0, %v6493
  %6495 = vdwg.mxu0
  %v6496 = vadd.f32 %v6438, %v6488
  %v6497 = vadd.f32 %v6439, %v6490
  %v6498 = vadd.f32 %v6440, %v6492
  %v6499 = vadd.f32 %v6441, %v6494
  %s6500 = scalar_lea.vmem %s1, 472
  %v6501 = vld [vmem:[%s6500] sm:$0xf]
  %v6502 = vld [vmem:[%s6500 + $0x4] sm:$0xf]
  %v6505 = vunpack.c.l.b16 %v6501
  %v6506 = vunpack.c.l.b16 %v6502
  %v6507 = vpack.c.b16 %v6506, %v6505
  %6508 = vrot.lane.b32.xlu0 %v6173, 127
  %v6509 = vpop.permute.xlu0 %6508
  %6510 = vrot.lane.b32.xlu0 %v6174, 127
  %v6511 = vpop.permute.xlu0 %6510
  %v6512 = vsel %vm931, %v6509, %v6511
  %v6516 = vsel %vm134, %v6507, 0
  %6518 = vmatprep.subr.bf16.mxu0 %v6511
  %6519 = vmatpush1.bf16.msra.mxu0 %v6512
  %6520 = vmatprep.subr.bf16.mxu0 0
  %6521 = vmatpush1.bf16.msra.mxu0 0
  %6522 = vmatprep.subr.bf16.mxu0 0
  %6523 = vmatpush1.bf16.msra.mxu0 0
  %6524 = vmatprep.subr.bf16.mxu0 0
  %6525 = vmatpush1.bf16.msra.mxu0 0
  %6526 = vmatprep.subr.bf16.mxu0 0
  %6527 = vmatpush1.bf16.msra.mxu0 0
  %6528 = vmatprep.subr.bf16.mxu0 0
  %6529 = vmatpush1.bf16.msra.mxu0 0
  %6530 = vmatprep.subr.bf16.mxu0 0
  %6531 = vmatpush1.bf16.msra.mxu0 0
  %6532 = vmatprep.subr.bf16.mxu0 0
  %6533 = vmatpush1.bf16.msra.mxu0 0
  %6534 = vmatprep.subr.bf16.mxu0 0
  %6535 = vmatpush1.bf16.msra.mxu0 0
  %6536 = vmatprep.subr.bf16.mxu0 0
  %6537 = vmatpush1.bf16.msra.mxu0 0
  %6538 = vmatprep.subr.bf16.mxu0 0
  %6539 = vmatpush1.bf16.msra.mxu0 0
  %6540 = vmatprep.subr.bf16.mxu0 0
  %6541 = vmatpush1.bf16.msra.mxu0 0
  %6542 = vmatprep.subr.bf16.mxu0 0
  %6543 = vmatpush1.bf16.msra.mxu0 0
  %6544 = vmatprep.subr.bf16.mxu0 0
  %6545 = vmatpush1.bf16.msra.mxu0 0
  %6546 = vmatprep.subr.bf16.mxu0 0
  %6547 = vmatpush1.bf16.msra.mxu0 0
  %6548 = vmatprep.subr.bf16.mxu0 0
  %6549 = vmatpush1.bf16.msra.mxu0 0
  %6550 = vmatprep.mubr.bf16.mxu0 0
  %6551 = vmatmul.mubr.bf16.gmra.mrb[0].mxu0 %v6516
  %v6552 = vpop.f32.mrb[0].mxu0
  %v6553 = vadd.f32 0.0, %v6552
  %v6554 = vpop.f32.mrb[0].mxu0
  %v6555 = vadd.f32 0.0, %v6554
  %v6556 = vpop.f32.mrb[0].mxu0
  %v6557 = vadd.f32 0.0, %v6556
  %v6558 = vpop.f32.mrb[0].mxu0
  %v6559 = vadd.f32 0.0, %v6558
  %6560 = vdwg.mxu0
  %v6561 = vadd.f32 %v6496, %v6553
  %v6562 = vadd.f32 %v6497, %v6555
  %v6563 = vadd.f32 %v6498, %v6557
  %v6564 = vadd.f32 %v6499, %v6559
  %s6565 = scalar_lea.vmem %s1, 480
  %v6566 = vld [vmem:[%s6565] sm:$0xf]
  %v6567 = vld [vmem:[%s6565 + $0x4] sm:$0xf]
  %v6570 = vunpack.c.l.b16 %v6566
  %v6571 = vunpack.c.l.b16 %v6567
  %v6572 = vpack.c.b16 %v6571, %v6570
  %6573 = vrot.lane.b32.xlu0 %v6173, 120
  %v6574 = vpop.permute.xlu0 %6573
  %6575 = vrot.lane.b32.xlu0 %v6174, 120
  %v6576 = vpop.permute.xlu0 %6575
  %v6577 = vsel %vm3951, %v6574, %v6576
  %v6581 = vsel %vm134, %v6572, 0
  %6583 = vmatprep.subr.bf16.mxu0 %v6576
  %6584 = vmatpush1.bf16.msra.mxu0 %v6577
  %6585 = vmatprep.subr.bf16.mxu0 0
  %6586 = vmatpush1.bf16.msra.mxu0 0
  %6587 = vmatprep.subr.bf16.mxu0 0
  %6588 = vmatpush1.bf16.msra.mxu0 0
  %6589 = vmatprep.subr.bf16.mxu0 0
  %6590 = vmatpush1.bf16.msra.mxu0 0
  %6591 = vmatprep.subr.bf16.mxu0 0
  %6592 = vmatpush1.bf16.msra.mxu0 0
  %6593 = vmatprep.subr.bf16.mxu0 0
  %6594 = vmatpush1.bf16.msra.mxu0 0
  %6595 = vmatprep.subr.bf16.mxu0 0
  %6596 = vmatpush1.bf16.msra.mxu0 0
  %6597 = vmatprep.subr.bf16.mxu0 0
  %6598 = vmatpush1.bf16.msra.mxu0 0
  %6599 = vmatprep.subr.bf16.mxu0 0
  %6600 = vmatpush1.bf16.msra.mxu0 0
  %6601 = vmatprep.subr.bf16.mxu0 0
  %6602 = vmatpush1.bf16.msra.mxu0 0
  %6603 = vmatprep.subr.bf16.mxu0 0
  %6604 = vmatpush1.bf16.msra.mxu0 0
  %6605 = vmatprep.subr.bf16.mxu0 0
  %6606 = vmatpush1.bf16.msra.mxu0 0
  %6607 = vmatprep.subr.bf16.mxu0 0
  %6608 = vmatpush1.bf16.msra.mxu0 0
  %6609 = vmatprep.subr.bf16.mxu0 0
  %6610 = vmatpush1.bf16.msra.mxu0 0
  %6611 = vmatprep.subr.bf16.mxu0 0
  %6612 = vmatpush1.bf16.msra.mxu0 0
  %6613 = vmatprep.subr.bf16.mxu0 0
  %6614 = vmatpush1.bf16.msra.mxu0 0
  %6615 = vmatprep.mubr.bf16.mxu0 0
  %6616 = vmatmul.mubr.bf16.gmra.mrb[0].mxu0 %v6581
  %v6617 = vpop.f32.mrb[0].mxu0
  %v6618 = vadd.f32 0.0, %v6617
  %v6619 = vpop.f32.mrb[0].mxu0
  %v6620 = vadd.f32 0.0, %v6619
  %v6621 = vpop.f32.mrb[0].mxu0
  %v6622 = vadd.f32 0.0, %v6621
  %v6623 = vpop.f32.mrb[0].mxu0
  %v6624 = vadd.f32 0.0, %v6623
  %6625 = vdwg.mxu0
  %v6626 = vadd.f32 %v6561, %v6618
  %v6627 = vadd.f32 %v6562, %v6620
  %v6628 = vadd.f32 %v6563, %v6622
  %v6629 = vadd.f32 %v6564, %v6624
  %s6630 = scalar_lea.vmem %s1, 488
  %v6631 = vld [vmem:[%s6630] sm:$0xf]
  %v6632 = vld [vmem:[%s6630 + $0x4] sm:$0xf]
  %v6635 = vunpack.c.l.b16 %v6631
  %v6636 = vunpack.c.l.b16 %v6632
  %v6637 = vpack.c.b16 %v6636, %v6635
  %6638 = vrot.lane.b32.xlu0 %v6173, 119
  %v6639 = vpop.permute.xlu0 %6638
  %6640 = vrot.lane.b32.xlu0 %v6174, 119
  %v6641 = vpop.permute.xlu0 %6640
  %v6642 = vsel %vm4017, %v6639, %v6641
  %v6646 = vsel %vm134, %v6637, 0
  %6648 = vmatprep.subr.bf16.mxu0 %v6641
  %6649 = vmatpush1.bf16.msra.mxu0 %v6642
  %6650 = vmatprep.subr.bf16.mxu0 0
  %6651 = vmatpush1.bf16.msra.mxu0 0
  %6652 = vmatprep.subr.bf16.mxu0 0
  %6653 = vmatpush1.bf16.msra.mxu0 0
  %6654 = vmatprep.subr.bf16.mxu0 0
  %6655 = vmatpush1.bf16.msra.mxu0 0
  %6656 = vmatprep.subr.bf16.mxu0 0
  %6657 = vmatpush1.bf16.msra.mxu0 0
  %6658 = vmatprep.subr.bf16.mxu0 0
  %6659 = vmatpush1.bf16.msra.mxu0 0
  %6660 = vmatprep.subr.bf16.mxu0 0
  %6661 = vmatpush1.bf16.msra.mxu0 0
  %6662 = vmatprep.subr.bf16.mxu0 0
  %6663 = vmatpush1.bf16.msra.mxu0 0
  %6664 = vmatprep.subr.bf16.mxu0 0
  %6665 = vmatpush1.bf16.msra.mxu0 0
  %6666 = vmatprep.subr.bf16.mxu0 0
  %6667 = vmatpush1.bf16.msra.mxu0 0
  %6668 = vmatprep.subr.bf16.mxu0 0
  %6669 = vmatpush1.bf16.msra.mxu0 0
  %6670 = vmatprep.subr.bf16.mxu0 0
  %6671 = vmatpush1.bf16.msra.mxu0 0
  %6672 = vmatprep.subr.bf16.mxu0 0
  %6673 = vmatpush1.bf16.msra.mxu0 0
  %6674 = vmatprep.subr.bf16.mxu0 0
  %6675 = vmatpush1.bf16.msra.mxu0 0
  %6676 = vmatprep.subr.bf16.mxu0 0
  %6677 = vmatpush1.bf16.msra.mxu0 0
  %6678 = vmatprep.subr.bf16.mxu0 0
  %6679 = vmatpush1.bf16.msra.mxu0 0
  %6680 = vmatprep.mubr.bf16.mxu0 0
  %6681 = vmatmul.mubr.bf16.gmra.mrb[0].mxu0 %v6646
  %v6682 = vpop.f32.mrb[0].mxu0
  %v6683 = vadd.f32 0.0, %v6682
  %v6684 = vpop.f32.mrb[0].mxu0
  %v6685 = vadd.f32 0.0, %v6684
  %v6686 = vpop.f32.mrb[0].mxu0
  %v6687 = vadd.f32 0.0, %v6686
  %v6688 = vpop.f32.mrb[0].mxu0
  %v6689 = vadd.f32 0.0, %v6688
  %6690 = vdwg.mxu0
  %v6691 = vadd.f32 %v6626, %v6683
  %v6692 = vadd.f32 %v6627, %v6685
  %v6693 = vadd.f32 %v6628, %v6687
  %v6694 = vadd.f32 %v6629, %v6689
  %s6695 = scalar_lea.vmem %s1, 496
  %v6696 = vld [vmem:[%s6695] sm:$0xf]
  %v6697 = vld [vmem:[%s6695 + $0x4] sm:$0xf]
  %v6700 = vunpack.c.l.b16 %v6696
  %v6701 = vunpack.c.l.b16 %v6697
  %v6702 = vpack.c.b16 %v6701, %v6700
  %6703 = vrot.lane.b32.xlu0 %v6173, 118
  %v6704 = vpop.permute.xlu0 %6703
  %6705 = vrot.lane.b32.xlu0 %v6174, 118
  %v6706 = vpop.permute.xlu0 %6705
  %v6707 = vsel %vm4083, %v6704, %v6706
  %v6711 = vsel %vm134, %v6702, 0
  %6713 = vmatprep.subr.bf16.mxu0 %v6706
  %6714 = vmatpush1.bf16.msra.mxu0 %v6707
  %6715 = vmatprep.subr.bf16.mxu0 0
  %6716 = vmatpush1.bf16.msra.mxu0 0
  %6717 = vmatprep.subr.bf16.mxu0 0
  %6718 = vmatpush1.bf16.msra.mxu0 0
  %6719 = vmatprep.subr.bf16.mxu0 0
  %6720 = vmatpush1.bf16.msra.mxu0 0
  %6721 = vmatprep.subr.bf16.mxu0 0
  %6722 = vmatpush1.bf16.msra.mxu0 0
  %6723 = vmatprep.subr.bf16.mxu0 0
  %6724 = vmatpush1.bf16.msra.mxu0 0
  %6725 = vmatprep.subr.bf16.mxu0 0
  %6726 = vmatpush1.bf16.msra.mxu0 0
  %6727 = vmatprep.subr.bf16.mxu0 0
  %6728 = vmatpush1.bf16.msra.mxu0 0
  %6729 = vmatprep.subr.bf16.mxu0 0
  %6730 = vmatpush1.bf16.msra.mxu0 0
  %6731 = vmatprep.subr.bf16.mxu0 0
  %6732 = vmatpush1.bf16.msra.mxu0 0
  %6733 = vmatprep.subr.bf16.mxu0 0
  %6734 = vmatpush1.bf16.msra.mxu0 0
  %6735 = vmatprep.subr.bf16.mxu0 0
  %6736 = vmatpush1.bf16.msra.mxu0 0
  %6737 = vmatprep.subr.bf16.mxu0 0
  %6738 = vmatpush1.bf16.msra.mxu0 0
  %6739 = vmatprep.subr.bf16.mxu0 0
  %6740 = vmatpush1.bf16.msra.mxu0 0
  %6741 = vmatprep.subr.bf16.mxu0 0
  %6742 = vmatpush1.bf16.msra.mxu0 0
  %6743 = vmatprep.subr.bf16.mxu0 0
  %6744 = vmatpush1.bf16.msra.mxu0 0
  %6745 = vmatprep.mubr.bf16.mxu0 0
  %6746 = vmatmul.mubr.bf16.gmra.mrb[0].mxu0 %v6711
  %v6747 = vpop.f32.mrb[0].mxu0
  %v6748 = vadd.f32 0.0, %v6747
  %v6749 = vpop.f32.mrb[0].mxu0
  %v6750 = vadd.f32 0.0, %v6749
  %v6751 = vpop.f32.mrb[0].mxu0
  %v6752 = vadd.f32 0.0, %v6751
  %v6753 = vpop.f32.mrb[0].mxu0
  %v6754 = vadd.f32 0.0, %v6753
  %6755 = vdwg.mxu0
  %v6756 = vadd.f32 %v6691, %v6748
  %v6757 = vadd.f32 %v6692, %v6750
  %v6758 = vadd.f32 %v6693, %v6752
  %v6759 = vadd.f32 %v6694, %v6754
  %v6760 = vld [vmem:[%s2] sm:$0xff]
  %v6761 = vld [vmem:[%s2 + $0x8] sm:$0xff]
  %6763 = vset.pattern.permute.xlu0 6
  %6764 = vperm.xlu0 %6763, %v6760
  %v6765 = vpop.permute.xlu0 %6764
  %6768 = vset.pattern.permute.xlu0 6
  %6769 = vperm.xlu0 %6768, %v6761
  %v6770 = vpop.permute.xlu0 %6769
  %v6772 = vadd.f32 %v6756, %v6765
  %v6773 = vadd.f32 %v6757, %v6765
  %v6774 = vadd.f32 %v6758, %v6770
  %v6775 = vadd.f32 %v6759, %v6770
  %v6776 = vmul.f32 %v6772, %v4157
  %v6777 = vmul.f32 %v6773, %v4161
  %v6778 = vmul.f32 %v6774, %v4157
  %v6779 = vmul.f32 %v6775, %v4161
  %v6780 = vmax.f32 %v6776, 0.0
  %v6781 = vmax.f32 %v6777, 0.0
  %v6782 = vmax.f32 %v6778, 0.0
  %v6783 = vmax.f32 %v6779, 0.0
  %v6784 = vpack.c.bf16 %v6782, %v6780
  %v6785 = vpack.c.bf16 %v6783, %v6781
  %6786 = vst [vmem:[#allocation2 + $0x8] sm:$0xff] %v6784
  %6787 = vst.msk [vmem:[#allocation2 + $0x10] sm:$0xff] %vm3541, %v6785
  %v6788 = vld [vmem:[#allocation2] sm:$0xff]
  %v6789 = vld [vmem:[#allocation2 + $0x8] sm:$0xff]
  %v6790 = vld [vmem:[#allocation2 + $0x10] sm:$0xff]
  %s6791 = scalar_lea.vmem %s1, 504
  %v6792 = vld [vmem:[%s6791] sm:$0xf]
  %v6793 = vld [vmem:[%s6791 + $0x4] sm:$0xf]
  %s6794 = scalar_lea.vmem %s1, 512
  %v6795 = vld [vmem:[%s6794] sm:$0xf]
  %v6796 = vld [vmem:[%s6794 + $0x4] sm:$0xf]
  %v6799 = vunpack.c.l.b16 %v6795
  %v6800 = vunpack.c.l.b16 %v6796
  %v6801 = vpack.c.b16 %v6800, %v6799
  %6805 = vrot.lane.b32.xlu0 %v6788, 9
  %v6806 = vpop.permute.xlu0 %6805
  %6807 = vrot.lane.b32.xlu0 %v6789, 9
  %v6808 = vpop.permute.xlu0 %6807
  %6809 = vrot.lane.b32.xlu0 %v6790, 9
  %v6810 = vpop.permute.xlu0 %6809
  %v6811 = vsel %vm3566, %v6806, %v6808
  %v6812 = vsel %vm3566, %v6808, %v6810
  %v6816 = vsel %vm134, %v6801, 0
  %6818 = vmatprep.subr.bf16.mxu0 %v6812
  %6819 = vmatpush1.bf16.msra.mxu0 %v6811
  %6820 = vmatprep.subr.bf16.mxu0 0
  %6821 = vmatpush1.bf16.msra.mxu0 0
  %6822 = vmatprep.subr.bf16.mxu0 0
  %6823 = vmatpush1.bf16.msra.mxu0 0
  %6824 = vmatprep.subr.bf16.mxu0 0
  %6825 = vmatpush1.bf16.msra.mxu0 0
  %6826 = vmatprep.subr.bf16.mxu0 0
  %6827 = vmatpush1.bf16.msra.mxu0 0
  %6828 = vmatprep.subr.bf16.mxu0 0
  %6829 = vmatpush1.bf16.msra.mxu0 0
  %6830 = vmatprep.subr.bf16.mxu0 0
  %6831 = vmatpush1.bf16.msra.mxu0 0
  %6832 = vmatprep.subr.bf16.mxu0 0
  %6833 = vmatpush1.bf16.msra.mxu0 0
  %6834 = vmatprep.subr.bf16.mxu0 0
  %6835 = vmatpush1.bf16.msra.mxu0 0
  %6836 = vmatprep.subr.bf16.mxu0 0
  %6837 = vmatpush1.bf16.msra.mxu0 0
  %6838 = vmatprep.subr.bf16.mxu0 0
  %6839 = vmatpush1.bf16.msra.mxu0 0
  %6840 = vmatprep.subr.bf16.mxu0 0
  %6841 = vmatpush1.bf16.msra.mxu0 0
  %6842 = vmatprep.subr.bf16.mxu0 0
  %6843 = vmatpush1.bf16.msra.mxu0 0
  %6844 = vmatprep.subr.bf16.mxu0 0
  %6845 = vmatpush1.bf16.msra.mxu0 0
  %6846 = vmatprep.subr.bf16.mxu0 0
  %6847 = vmatpush1.bf16.msra.mxu0 0
  %6848 = vmatprep.subr.bf16.mxu0 0
  %6849 = vmatpush1.bf16.msra.mxu0 0
  %6850 = vmatprep.mubr.bf16.mxu0 0
  %6851 = vmatmul.mubr.bf16.gmra.mrb[0].mxu0 %v6816
  %v6852 = vpop.f32.mrb[0].mxu0
  %v6853 = vadd.f32 0.0, %v6852
  %v6854 = vpop.f32.mrb[0].mxu0
  %v6855 = vadd.f32 0.0, %v6854
  %v6856 = vpop.f32.mrb[0].mxu0
  %v6857 = vadd.f32 0.0, %v6856
  %v6858 = vpop.f32.mrb[0].mxu0
  %v6859 = vadd.f32 0.0, %v6858
  %6860 = vdwg.mxu0
  %v6863 = vunpack.c.l.b16 %v6792
  %v6864 = vunpack.c.l.b16 %v6793
  %v6865 = vpack.c.b16 %v6864, %v6863
  %6866 = vrot.lane.b32.xlu0 %v6788, 10
  %v6867 = vpop.permute.xlu0 %6866
  %6868 = vrot.lane.b32.xlu0 %v6789, 10
  %v6869 = vpop.permute.xlu0 %6868
  %6870 = vrot.lane.b32.xlu0 %v6790, 10
  %v6871 = vpop.permute.xlu0 %6870
  %v6872 = vsel %vm3628, %v6867, %v6869
  %v6873 = vsel %vm3628, %v6869, %v6871
  %v6877 = vsel %vm134, %v6865, 0
  %6879 = vmatprep.subr.bf16.mxu0 %v6873
  %6880 = vmatpush1.bf16.msra.mxu0 %v6872
  %6881 = vmatprep.subr.bf16.mxu0 0
  %6882 = vmatpush1.bf16.msra.mxu0 0
  %6883 = vmatprep.subr.bf16.mxu0 0
  %6884 = vmatpush1.bf16.msra.mxu0 0
  %6885 = vmatprep.subr.bf16.mxu0 0
  %6886 = vmatpush1.bf16.msra.mxu0 0
  %6887 = vmatprep.subr.bf16.mxu0 0
  %6888 = vmatpush1.bf16.msra.mxu0 0
  %6889 = vmatprep.subr.bf16.mxu0 0
  %6890 = vmatpush1.bf16.msra.mxu0 0
  %6891 = vmatprep.subr.bf16.mxu0 0
  %6892 = vmatpush1.bf16.msra.mxu0 0
  %6893 = vmatprep.subr.bf16.mxu0 0
  %6894 = vmatpush1.bf16.msra.mxu0 0
  %6895 = vmatprep.subr.bf16.mxu0 0
  %6896 = vmatpush1.bf16.msra.mxu0 0
  %6897 = vmatprep.subr.bf16.mxu0 0
  %6898 = vmatpush1.bf16.msra.mxu0 0
  %6899 = vmatprep.subr.bf16.mxu0 0
  %6900 = vmatpush1.bf16.msra.mxu0 0
  %6901 = vmatprep.subr.bf16.mxu0 0
  %6902 = vmatpush1.bf16.msra.mxu0 0
  %6903 = vmatprep.subr.bf16.mxu0 0
  %6904 = vmatpush1.bf16.msra.mxu0 0
  %6905 = vmatprep.subr.bf16.mxu0 0
  %6906 = vmatpush1.bf16.msra.mxu0 0
  %6907 = vmatprep.subr.bf16.mxu0 0
  %6908 = vmatpush1.bf16.msra.mxu0 0
  %6909 = vmatprep.subr.bf16.mxu0 0
  %6910 = vmatpush1.bf16.msra.mxu0 0
  %6911 = vmatprep.mubr.bf16.mxu0 0
  %6912 = vmatmul.mubr.bf16.gmra.mrb[0].mxu0 %v6877
  %v6913 = vpop.f32.mrb[0].mxu0
  %v6914 = vadd.f32 %v6853, %v6913
  %v6915 = vpop.f32.mrb[0].mxu0
  %v6916 = vadd.f32 %v6855, %v6915
  %v6917 = vpop.f32.mrb[0].mxu0
  %v6918 = vadd.f32 %v6857, %v6917
  %v6919 = vpop.f32.mrb[0].mxu0
  %v6920 = vadd.f32 %v6859, %v6919
  %6921 = vdwg.mxu0
  %s6922 = scalar_lea.vmem %s1, 520
  %v6923 = vld [vmem:[%s6922] sm:$0xf]
  %v6924 = vld [vmem:[%s6922 + $0x4] sm:$0xf]
  %v6927 = vunpack.c.l.b16 %v6923
  %v6928 = vunpack.c.l.b16 %v6924
  %v6929 = vpack.c.b16 %v6928, %v6927
  %6930 = vrot.lane.b32.xlu0 %v6788, 8
  %v6931 = vpop.permute.xlu0 %6930
  %6932 = vrot.lane.b32.xlu0 %v6789, 8
  %v6933 = vpop.permute.xlu0 %6932
  %6934 = vrot.lane.b32.xlu0 %v6790, 8
  %v6935 = vpop.permute.xlu0 %6934
  %v6936 = vsel %vm3693, %v6931, %v6933
  %v6937 = vsel %vm3693, %v6933, %v6935
  %v6941 = vsel %vm134, %v6929, 0
  %6943 = vmatprep.subr.bf16.mxu0 %v6937
  %6944 = vmatpush1.bf16.msra.mxu0 %v6936
  %6945 = vmatprep.subr.bf16.mxu0 0
  %6946 = vmatpush1.bf16.msra.mxu0 0
  %6947 = vmatprep.subr.bf16.mxu0 0
  %6948 = vmatpush1.bf16.msra.mxu0 0
  %6949 = vmatprep.subr.bf16.mxu0 0
  %6950 = vmatpush1.bf16.msra.mxu0 0
  %6951 = vmatprep.subr.bf16.mxu0 0
  %6952 = vmatpush1.bf16.msra.mxu0 0
  %6953 = vmatprep.subr.bf16.mxu0 0
  %6954 = vmatpush1.bf16.msra.mxu0 0
  %6955 = vmatprep.subr.bf16.mxu0 0
  %6956 = vmatpush1.bf16.msra.mxu0 0
  %6957 = vmatprep.subr.bf16.mxu0 0
  %6958 = vmatpush1.bf16.msra.mxu0 0
  %6959 = vmatprep.subr.bf16.mxu0 0
  %6960 = vmatpush1.bf16.msra.mxu0 0
  %6961 = vmatprep.subr.bf16.mxu0 0
  %6962 = vmatpush1.bf16.msra.mxu0 0
  %6963 = vmatprep.subr.bf16.mxu0 0
  %6964 = vmatpush1.bf16.msra.mxu0 0
  %6965 = vmatprep.subr.bf16.mxu0 0
  %6966 = vmatpush1.bf16.msra.mxu0 0
  %6967 = vmatprep.subr.bf16.mxu0 0
  %6968 = vmatpush1.bf16.msra.mxu0 0
  %6969 = vmatprep.subr.bf16.mxu0 0
  %6970 = vmatpush1.bf16.msra.mxu0 0
  %6971 = vmatprep.subr.bf16.mxu0 0
  %6972 = vmatpush1.bf16.msra.mxu0 0
  %6973 = vmatprep.subr.bf16.mxu0 0
  %6974 = vmatpush1.bf16.msra.mxu0 0
  %6975 = vmatprep.mubr.bf16.mxu0 0
  %6976 = vmatmul.mubr.bf16.gmra.mrb[0].mxu0 %v6941
  %v6977 = vpop.f32.mrb[0].mxu0
  %v6978 = vadd.f32 0.0, %v6977
  %v6979 = vpop.f32.mrb[0].mxu0
  %v6980 = vadd.f32 0.0, %v6979
  %v6981 = vpop.f32.mrb[0].mxu0
  %v6982 = vadd.f32 0.0, %v6981
  %v6983 = vpop.f32.mrb[0].mxu0
  %v6984 = vadd.f32 0.0, %v6983
  %6985 = vdwg.mxu0
  %v6986 = vadd.f32 %v6914, %v6978
  %v6987 = vadd.f32 %v6916, %v6980
  %v6988 = vadd.f32 %v6918, %v6982
  %v6989 = vadd.f32 %v6920, %v6984
  %s6990 = scalar_lea.vmem %s1, 528
  %v6991 = vld [vmem:[%s6990] sm:$0xf]
  %v6992 = vld [vmem:[%s6990 + $0x4] sm:$0xf]
  %v6995 = vunpack.c.l.b16 %v6991
  %v6996 = vunpack.c.l.b16 %v6992
  %v6997 = vpack.c.b16 %v6996, %v6995
  %6998 = vrot.lane.b32.xlu0 %v6788, 1
  %v6999 = vpop.permute.xlu0 %6998
  %7000 = vrot.lane.b32.xlu0 %v6789, 1
  %v7001 = vpop.permute.xlu0 %7000
  %7002 = vrot.lane.b32.xlu0 %v6790, 1
  %v7003 = vpop.permute.xlu0 %7002
  %v7004 = vsel %vm614, %v6999, %v7001
  %v7005 = vsel %vm614, %v7001, %v7003
  %v7009 = vsel %vm134, %v6997, 0
  %7011 = vmatprep.subr.bf16.mxu0 %v7005
  %7012 = vmatpush1.bf16.msra.mxu0 %v7004
  %7013 = vmatprep.subr.bf16.mxu0 0
  %7014 = vmatpush1.bf16.msra.mxu0 0
  %7015 = vmatprep.subr.bf16.mxu0 0
  %7016 = vmatpush1.bf16.msra.mxu0 0
  %7017 = vmatprep.subr.bf16.mxu0 0
  %7018 = vmatpush1.bf16.msra.mxu0 0
  %7019 = vmatprep.subr.bf16.mxu0 0
  %7020 = vmatpush1.bf16.msra.mxu0 0
  %7021 = vmatprep.subr.bf16.mxu0 0
  %7022 = vmatpush1.bf16.msra.mxu0 0
  %7023 = vmatprep.subr.bf16.mxu0 0
  %7024 = vmatpush1.bf16.msra.mxu0 0
  %7025 = vmatprep.subr.bf16.mxu0 0
  %7026 = vmatpush1.bf16.msra.mxu0 0
  %7027 = vmatprep.subr.bf16.mxu0 0
  %7028 = vmatpush1.bf16.msra.mxu0 0
  %7029 = vmatprep.subr.bf16.mxu0 0
  %7030 = vmatpush1.bf16.msra.mxu0 0
  %7031 = vmatprep.subr.bf16.mxu0 0
  %7032 = vmatpush1.bf16.msra.mxu0 0
  %7033 = vmatprep.subr.bf16.mxu0 0
  %7034 = vmatpush1.bf16.msra.mxu0 0
  %7035 = vmatprep.subr.bf16.mxu0 0
  %7036 = vmatpush1.bf16.msra.mxu0 0
  %7037 = vmatprep.subr.bf16.mxu0 0
  %7038 = vmatpush1.bf16.msra.mxu0 0
  %7039 = vmatprep.subr.bf16.mxu0 0
  %7040 = vmatpush1.bf16.msra.mxu0 0
  %7041 = vmatprep.subr.bf16.mxu0 0
  %7042 = vmatpush1.bf16.msra.mxu0 0
  %7043 = vmatprep.mubr.bf16.mxu0 0
  %7044 = vmatmul.mubr.bf16.gmra.mrb[0].mxu0 %v7009
  %v7045 = vpop.f32.mrb[0].mxu0
  %v7046 = vadd.f32 0.0, %v7045
  %v7047 = vpop.f32.mrb[0].mxu0
  %v7048 = vadd.f32 0.0, %v7047
  %v7049 = vpop.f32.mrb[0].mxu0
  %v7050 = vadd.f32 0.0, %v7049
  %v7051 = vpop.f32.mrb[0].mxu0
  %v7052 = vadd.f32 0.0, %v7051
  %7053 = vdwg.mxu0
  %v7054 = vadd.f32 %v6986, %v7046
  %v7055 = vadd.f32 %v6987, %v7048
  %v7056 = vadd.f32 %v6988, %v7050
  %v7057 = vadd.f32 %v6989, %v7052
  %s7058 = scalar_lea.vmem %s1, 536
  %v7059 = vld [vmem:[%s7058] sm:$0xf]
  %v7060 = vld [vmem:[%s7058 + $0x4] sm:$0xf]
  %v7063 = vunpack.c.l.b16 %v7059
  %v7064 = vunpack.c.l.b16 %v7060
  %v7065 = vpack.c.b16 %v7064, %v7063
  %v7067 = vsel %vm134, %v7065, 0
  %7069 = vmatprep.subr.bf16.mxu0 %v6790
  %7070 = vmatpush1.bf16.msra.mxu0 %v6789
  %7071 = vmatprep.subr.bf16.mxu0 0
  %7072 = vmatpush1.bf16.msra.mxu0 0
  %7073 = vmatprep.subr.bf16.mxu0 0
  %7074 = vmatpush1.bf16.msra.mxu0 0
  %7075 = vmatprep.subr.bf16.mxu0 0
  %7076 = vmatpush1.bf16.msra.mxu0 0
  %7077 = vmatprep.subr.bf16.mxu0 0
  %7078 = vmatpush1.bf16.msra.mxu0 0
  %7079 = vmatprep.subr.bf16.mxu0 0
  %7080 = vmatpush1.bf16.msra.mxu0 0
  %7081 = vmatprep.subr.bf16.mxu0 0
  %7082 = vmatpush1.bf16.msra.mxu0 0
  %7083 = vmatprep.subr.bf16.mxu0 0
  %7084 = vmatpush1.bf16.msra.mxu0 0
  %7085 = vmatprep.subr.bf16.mxu0 0
  %7086 = vmatpush1.bf16.msra.mxu0 0
  %7087 = vmatprep.subr.bf16.mxu0 0
  %7088 = vmatpush1.bf16.msra.mxu0 0
  %7089 = vmatprep.subr.bf16.mxu0 0
  %7090 = vmatpush1.bf16.msra.mxu0 0
  %7091 = vmatprep.subr.bf16.mxu0 0
  %7092 = vmatpush1.bf16.msra.mxu0 0
  %7093 = vmatprep.subr.bf16.mxu0 0
  %7094 = vmatpush1.bf16.msra.mxu0 0
  %7095 = vmatprep.subr.bf16.mxu0 0
  %7096 = vmatpush1.bf16.msra.mxu0 0
  %7097 = vmatprep.subr.bf16.mxu0 0
  %7098 = vmatpush1.bf16.msra.mxu0 0
  %7099 = vmatprep.subr.bf16.mxu0 0
  %7100 = vmatpush1.bf16.msra.mxu0 0
  %7101 = vmatprep.mubr.bf16.mxu0 0
  %7102 = vmatmul.mubr.bf16.gmra.mrb[0].mxu0 %v7067
  %v7103 = vpop.f32.mrb[0].mxu0
  %v7104 = vadd.f32 0.0, %v7103
  %v7105 = vpop.f32.mrb[0].mxu0
  %v7106 = vadd.f32 0.0, %v7105
  %v7107 = vpop.f32.mrb[0].mxu0
  %v7108 = vadd.f32 0.0, %v7107
  %v7109 = vpop.f32.mrb[0].mxu0
  %v7110 = vadd.f32 0.0, %v7109
  %7111 = vdwg.mxu0
  %v7112 = vadd.f32 %v7054, %v7104
  %v7113 = vadd.f32 %v7055, %v7106
  %v7114 = vadd.f32 %v7056, %v7108
  %v7115 = vadd.f32 %v7057, %v7110
  %s7116 = scalar_lea.vmem %s1, 544
  %v7117 = vld [vmem:[%s7116] sm:$0xf]
  %v7118 = vld [vmem:[%s7116 + $0x4] sm:$0xf]
  %v7121 = vunpack.c.l.b16 %v7117
  %v7122 = vunpack.c.l.b16 %v7118
  %v7123 = vpack.c.b16 %v7122, %v7121
  %7124 = vrot.lane.b32.xlu0 %v6789, 127
  %v7125 = vpop.permute.xlu0 %7124
  %7126 = vrot.lane.b32.xlu0 %v6790, 127
  %v7127 = vpop.permute.xlu0 %7126
  %v7128 = vsel %vm931, %v7125, %v7127
  %v7132 = vsel %vm134, %v7123, 0
  %7134 = vmatprep.subr.bf16.mxu0 %v7127
  %7135 = vmatpush1.bf16.msra.mxu0 %v7128
  %7136 = vmatprep.subr.bf16.mxu0 0
  %7137 = vmatpush1.bf16.msra.mxu0 0
  %7138 = vmatprep.subr.bf16.mxu0 0
  %7139 = vmatpush1.bf16.msra.mxu0 0
  %7140 = vmatprep.subr.bf16.mxu0 0
  %7141 = vmatpush1.bf16.msra.mxu0 0
  %7142 = vmatprep.subr.bf16.mxu0 0
  %7143 = vmatpush1.bf16.msra.mxu0 0
  %7144 = vmatprep.subr.bf16.mxu0 0
  %7145 = vmatpush1.bf16.msra.mxu0 0
  %7146 = vmatprep.subr.bf16.mxu0 0
  %7147 = vmatpush1.bf16.msra.mxu0 0
  %7148 = vmatprep.subr.bf16.mxu0 0
  %7149 = vmatpush1.bf16.msra.mxu0 0
  %7150 = vmatprep.subr.bf16.mxu0 0
  %7151 = vmatpush1.bf16.msra.mxu0 0
  %7152 = vmatprep.subr.bf16.mxu0 0
  %7153 = vmatpush1.bf16.msra.mxu0 0
  %7154 = vmatprep.subr.bf16.mxu0 0
  %7155 = vmatpush1.bf16.msra.mxu0 0
  %7156 = vmatprep.subr.bf16.mxu0 0
  %7157 = vmatpush1.bf16.msra.mxu0 0
  %7158 = vmatprep.subr.bf16.mxu0 0
  %7159 = vmatpush1.bf16.msra.mxu0 0
  %7160 = vmatprep.subr.bf16.mxu0 0
  %7161 = vmatpush1.bf16.msra.mxu0 0
  %7162 = vmatprep.subr.bf16.mxu0 0
  %7163 = vmatpush1.bf16.msra.mxu0 0
  %7164 = vmatprep.subr.bf16.mxu0 0
  %7165 = vmatpush1.bf16.msra.mxu0 0
  %7166 = vmatprep.mubr.bf16.mxu0 0
  %7167 = vmatmul.mubr.bf16.gmra.mrb[0].mxu0 %v7132
  %v7168 = vpop.f32.mrb[0].mxu0
  %v7169 = vadd.f32 0.0, %v7168
  %v7170 = vpop.f32.mrb[0].mxu0
  %v7171 = vadd.f32 0.0, %v7170
  %v7172 = vpop.f32.mrb[0].mxu0
  %v7173 = vadd.f32 0.0, %v7172
  %v7174 = vpop.f32.mrb[0].mxu0
  %v7175 = vadd.f32 0.0, %v7174
  %7176 = vdwg.mxu0
  %v7177 = vadd.f32 %v7112, %v7169
  %v7178 = vadd.f32 %v7113, %v7171
  %v7179 = vadd.f32 %v7114, %v7173
  %v7180 = vadd.f32 %v7115, %v7175
  %s7181 = scalar_lea.vmem %s1, 552
  %v7182 = vld [vmem:[%s7181] sm:$0xf]
  %v7183 = vld [vmem:[%s7181 + $0x4] sm:$0xf]
  %v7186 = vunpack.c.l.b16 %v7182
  %v7187 = vunpack.c.l.b16 %v7183
  %v7188 = vpack.c.b16 %v7187, %v7186
  %7189 = vrot.lane.b32.xlu0 %v6789, 120
  %v7190 = vpop.permute.xlu0 %7189
  %7191 = vrot.lane.b32.xlu0 %v6790, 120
  %v7192 = vpop.permute.xlu0 %7191
  %v7193 = vsel %vm3951, %v7190, %v7192
  %v7197 = vsel %vm134, %v7188, 0
  %7199 = vmatprep.subr.bf16.mxu0 %v7192
  %7200 = vmatpush1.bf16.msra.mxu0 %v7193
  %7201 = vmatprep.subr.bf16.mxu0 0
  %7202 = vmatpush1.bf16.msra.mxu0 0
  %7203 = vmatprep.subr.bf16.mxu0 0
  %7204 = vmatpush1.bf16.msra.mxu0 0
  %7205 = vmatprep.subr.bf16.mxu0 0
  %7206 = vmatpush1.bf16.msra.mxu0 0
  %7207 = vmatprep.subr.bf16.mxu0 0
  %7208 = vmatpush1.bf16.msra.mxu0 0
  %7209 = vmatprep.subr.bf16.mxu0 0
  %7210 = vmatpush1.bf16.msra.mxu0 0
  %7211 = vmatprep.subr.bf16.mxu0 0
  %7212 = vmatpush1.bf16.msra.mxu0 0
  %7213 = vmatprep.subr.bf16.mxu0 0
  %7214 = vmatpush1.bf16.msra.mxu0 0
  %7215 = vmatprep.subr.bf16.mxu0 0
  %7216 = vmatpush1.bf16.msra.mxu0 0
  %7217 = vmatprep.subr.bf16.mxu0 0
  %7218 = vmatpush1.bf16.msra.mxu0 0
  %7219 = vmatprep.subr.bf16.mxu0 0
  %7220 = vmatpush1.bf16.msra.mxu0 0
  %7221 = vmatprep.subr.bf16.mxu0 0
  %7222 = vmatpush1.bf16.msra.mxu0 0
  %7223 = vmatprep.subr.bf16.mxu0 0
  %7224 = vmatpush1.bf16.msra.mxu0 0
  %7225 = vmatprep.subr.bf16.mxu0 0
  %7226 = vmatpush1.bf16.msra.mxu0 0
  %7227 = vmatprep.subr.bf16.mxu0 0
  %7228 = vmatpush1.bf16.msra.mxu0 0
  %7229 = vmatprep.subr.bf16.mxu0 0
  %7230 = vmatpush1.bf16.msra.mxu0 0
  %7231 = vmatprep.mubr.bf16.mxu0 0
  %7232 = vmatmul.mubr.bf16.gmra.mrb[0].mxu0 %v7197
  %v7233 = vpop.f32.mrb[0].mxu0
  %v7234 = vadd.f32 0.0, %v7233
  %v7235 = vpop.f32.mrb[0].mxu0
  %v7236 = vadd.f32 0.0, %v7235
  %v7237 = vpop.f32.mrb[0].mxu0
  %v7238 = vadd.f32 0.0, %v7237
  %v7239 = vpop.f32.mrb[0].mxu0
  %v7240 = vadd.f32 0.0, %v7239
  %7241 = vdwg.mxu0
  %v7242 = vadd.f32 %v7177, %v7234
  %v7243 = vadd.f32 %v7178, %v7236
  %v7244 = vadd.f32 %v7179, %v7238
  %v7245 = vadd.f32 %v7180, %v7240
  %s7246 = scalar_lea.vmem %s1, 560
  %v7247 = vld [vmem:[%s7246] sm:$0xf]
  %v7248 = vld [vmem:[%s7246 + $0x4] sm:$0xf]
  %v7251 = vunpack.c.l.b16 %v7247
  %v7252 = vunpack.c.l.b16 %v7248
  %v7253 = vpack.c.b16 %v7252, %v7251
  %7254 = vrot.lane.b32.xlu0 %v6789, 119
  %v7255 = vpop.permute.xlu0 %7254
  %7256 = vrot.lane.b32.xlu0 %v6790, 119
  %v7257 = vpop.permute.xlu0 %7256
  %v7258 = vsel %vm4017, %v7255, %v7257
  %v7262 = vsel %vm134, %v7253, 0
  %7264 = vmatprep.subr.bf16.mxu0 %v7257
  %7265 = vmatpush1.bf16.msra.mxu0 %v7258
  %7266 = vmatprep.subr.bf16.mxu0 0
  %7267 = vmatpush1.bf16.msra.mxu0 0
  %7268 = vmatprep.subr.bf16.mxu0 0
  %7269 = vmatpush1.bf16.msra.mxu0 0
  %7270 = vmatprep.subr.bf16.mxu0 0
  %7271 = vmatpush1.bf16.msra.mxu0 0
  %7272 = vmatprep.subr.bf16.mxu0 0
  %7273 = vmatpush1.bf16.msra.mxu0 0
  %7274 = vmatprep.subr.bf16.mxu0 0
  %7275 = vmatpush1.bf16.msra.mxu0 0
  %7276 = vmatprep.subr.bf16.mxu0 0
  %7277 = vmatpush1.bf16.msra.mxu0 0
  %7278 = vmatprep.subr.bf16.mxu0 0
  %7279 = vmatpush1.bf16.msra.mxu0 0
  %7280 = vmatprep.subr.bf16.mxu0 0
  %7281 = vmatpush1.bf16.msra.mxu0 0
  %7282 = vmatprep.subr.bf16.mxu0 0
  %7283 = vmatpush1.bf16.msra.mxu0 0
  %7284 = vmatprep.subr.bf16.mxu0 0
  %7285 = vmatpush1.bf16.msra.mxu0 0
  %7286 = vmatprep.subr.bf16.mxu0 0
  %7287 = vmatpush1.bf16.msra.mxu0 0
  %7288 = vmatprep.subr.bf16.mxu0 0
  %7289 = vmatpush1.bf16.msra.mxu0 0
  %7290 = vmatprep.subr.bf16.mxu0 0
  %7291 = vmatpush1.bf16.msra.mxu0 0
  %7292 = vmatprep.subr.bf16.mxu0 0
  %7293 = vmatpush1.bf16.msra.mxu0 0
  %7294 = vmatprep.subr.bf16.mxu0 0
  %7295 = vmatpush1.bf16.msra.mxu0 0
  %7296 = vmatprep.mubr.bf16.mxu0 0
  %7297 = vmatmul.mubr.bf16.gmra.mrb[0].mxu0 %v7262
  %v7298 = vpop.f32.mrb[0].mxu0
  %v7299 = vadd.f32 0.0, %v7298
  %v7300 = vpop.f32.mrb[0].mxu0
  %v7301 = vadd.f32 0.0, %v7300
  %v7302 = vpop.f32.mrb[0].mxu0
  %v7303 = vadd.f32 0.0, %v7302
  %v7304 = vpop.f32.mrb[0].mxu0
  %v7305 = vadd.f32 0.0, %v7304
  %7306 = vdwg.mxu0
  %v7307 = vadd.f32 %v7242, %v7299
  %v7308 = vadd.f32 %v7243, %v7301
  %v7309 = vadd.f32 %v7244, %v7303
  %v7310 = vadd.f32 %v7245, %v7305
  %s7311 = scalar_lea.vmem %s1, 568
  %v7312 = vld [vmem:[%s7311] sm:$0xf]
  %v7313 = vld [vmem:[%s7311 + $0x4] sm:$0xf]
  %v7316 = vunpack.c.l.b16 %v7312
  %v7317 = vunpack.c.l.b16 %v7313
  %v7318 = vpack.c.b16 %v7317, %v7316
  %7319 = vrot.lane.b32.xlu0 %v6789, 118
  %v7320 = vpop.permute.xlu0 %7319
  %7321 = vrot.lane.b32.xlu0 %v6790, 118
  %v7322 = vpop.permute.xlu0 %7321
  %v7323 = vsel %vm4083, %v7320, %v7322
  %v7327 = vsel %vm134, %v7318, 0
  %7329 = vmatprep.subr.bf16.mxu0 %v7322
  %7330 = vmatpush1.bf16.msra.mxu0 %v7323
  %7331 = vmatprep.subr.bf16.mxu0 0
  %7332 = vmatpush1.bf16.msra.mxu0 0
  %7333 = vmatprep.subr.bf16.mxu0 0
  %7334 = vmatpush1.bf16.msra.mxu0 0
  %7335 = vmatprep.subr.bf16.mxu0 0
  %7336 = vmatpush1.bf16.msra.mxu0 0
  %7337 = vmatprep.subr.bf16.mxu0 0
  %7338 = vmatpush1.bf16.msra.mxu0 0
  %7339 = vmatprep.subr.bf16.mxu0 0
  %7340 = vmatpush1.bf16.msra.mxu0 0
  %7341 = vmatprep.subr.bf16.mxu0 0
  %7342 = vmatpush1.bf16.msra.mxu0 0
  %7343 = vmatprep.subr.bf16.mxu0 0
  %7344 = vmatpush1.bf16.msra.mxu0 0
  %7345 = vmatprep.subr.bf16.mxu0 0
  %7346 = vmatpush1.bf16.msra.mxu0 0
  %7347 = vmatprep.subr.bf16.mxu0 0
  %7348 = vmatpush1.bf16.msra.mxu0 0
  %7349 = vmatprep.subr.bf16.mxu0 0
  %7350 = vmatpush1.bf16.msra.mxu0 0
  %7351 = vmatprep.subr.bf16.mxu0 0
  %7352 = vmatpush1.bf16.msra.mxu0 0
  %7353 = vmatprep.subr.bf16.mxu0 0
  %7354 = vmatpush1.bf16.msra.mxu0 0
  %7355 = vmatprep.subr.bf16.mxu0 0
  %7356 = vmatpush1.bf16.msra.mxu0 0
  %7357 = vmatprep.subr.bf16.mxu0 0
  %7358 = vmatpush1.bf16.msra.mxu0 0
  %7359 = vmatprep.subr.bf16.mxu0 0
  %7360 = vmatpush1.bf16.msra.mxu0 0
  %7361 = vmatprep.mubr.bf16.mxu0 0
  %7362 = vmatmul.mubr.bf16.gmra.mrb[0].mxu0 %v7327
  %v7363 = vpop.f32.mrb[0].mxu0
  %v7364 = vadd.f32 0.0, %v7363
  %v7365 = vpop.f32.mrb[0].mxu0
  %v7366 = vadd.f32 0.0, %v7365
  %v7367 = vpop.f32.mrb[0].mxu0
  %v7368 = vadd.f32 0.0, %v7367
  %v7369 = vpop.f32.mrb[0].mxu0
  %v7370 = vadd.f32 0.0, %v7369
  %7371 = vdwg.mxu0
  %v7372 = vadd.f32 %v7307, %v7364
  %v7373 = vadd.f32 %v7308, %v7366
  %v7374 = vadd.f32 %v7309, %v7368
  %v7375 = vadd.f32 %v7310, %v7370
  %v7376 = vld [vmem:[%s2] sm:$0xff]
  %v7377 = vld [vmem:[%s2 + $0x8] sm:$0xff]
  %7379 = vset.pattern.permute.xlu0 7
  %7380 = vperm.xlu0 %7379, %v7376
  %v7381 = vpop.permute.xlu0 %7380
  %7384 = vset.pattern.permute.xlu0 7
  %7385 = vperm.xlu0 %7384, %v7377
  %v7386 = vpop.permute.xlu0 %7385
  %v7388 = vadd.f32 %v7372, %v7381
  %v7389 = vadd.f32 %v7373, %v7381
  %v7390 = vadd.f32 %v7374, %v7386
  %v7391 = vadd.f32 %v7375, %v7386
  %v7392 = vmul.f32 %v7388, %v4157
  %v7393 = vmul.f32 %v7389, %v4161
  %v7394 = vmul.f32 %v7390, %v4157
  %v7395 = vmul.f32 %v7391, %v4161
  %v7396 = vld [vmem:[%s8] sm:$0xff]
  %v7397 = vld [vmem:[%s8 + $0x8] sm:$0xf]
  %v7398 = vld [vmem:[%s8 + $0xc] sm:$0xff]
  %v7399 = vld [vmem:[%s8 + $0x14] sm:$0xf]
  %v7400 = vld [vmem:[%s8 + $0x18] sm:$0xff]
  %v7401 = vld [vmem:[%s8 + $0x20] sm:$0xf]
  %v7402 = vld [vmem:[%s8 + $0x24] sm:$0xff]
  %v7403 = vld [vmem:[%s8 + $0x2c] sm:$0xf]
  %v7404 = vld [vmem:[%s8 + $0x30] sm:$0xff]
  %v7405 = vld [vmem:[%s8 + $0x38] sm:$0xf]
  %v7406 = vld [vmem:[%s8 + $0x3c] sm:$0xff]
  %v7407 = vld [vmem:[%s8 + $0x44] sm:$0xf]
  %v7408 = vld [vmem:[%s8 + $0x48] sm:$0xff]
  %v7409 = vld [vmem:[%s8 + $0x50] sm:$0xf]
  %v7410 = vld [vmem:[%s8 + $0x54] sm:$0xff]
  %v7411 = vld [vmem:[%s8 + $0x5c] sm:$0xf]
  %v7412 = vld [vmem:[%s8 + $0x60] sm:$0xff]
  %v7413 = vld [vmem:[%s8 + $0x68] sm:$0xf]
  %v7414 = vld [vmem:[%s8 + $0x6c] sm:$0xff]
  %v7415 = vld [vmem:[%s8 + $0x74] sm:$0xf]
  %v7416 = vld [vmem:[%s8 + $0x78] sm:$0x11]
  %v7417 = vld [vmem:[%s8 + $0x80] sm:$0x1]
  %v7418 = vpack.c.bf16 %v7394, %v7392
  %v7419 = vpack.c.bf16 %v7395, %v7393
  %v7442 = vunpack.c.l.b16 %v7396
  %v7443 = vunpack.c.h.b16 %v7396
  %v7444 = vunpack.c.l.b16 %v7397
  %v7445 = vunpack.c.l.b16 %v7398
  %v7446 = vunpack.c.h.b16 %v7398
  %v7447 = vunpack.c.l.b16 %v7399
  %v7448 = vunpack.c.l.b16 %v7400
  %v7449 = vunpack.c.h.b16 %v7400
  %v7450 = vunpack.c.l.b16 %v7401
  %v7451 = vunpack.c.l.b16 %v7402
  %v7452 = vunpack.c.h.b16 %v7402
  %v7453 = vunpack.c.l.b16 %v7403
  %v7454 = vunpack.c.l.b16 %v7404
  %v7455 = vunpack.c.h.b16 %v7404
  %v7456 = vunpack.c.l.b16 %v7405
  %v7457 = vunpack.c.l.b16 %v7406
  %v7458 = vunpack.c.h.b16 %v7406
  %v7459 = vunpack.c.l.b16 %v7407
  %v7460 = vunpack.c.l.b16 %v7408
  %v7461 = vunpack.c.h.b16 %v7408
  %v7462 = vunpack.c.l.b16 %v7409
  %v7463 = vunpack.c.l.b16 %v7410
  %v7464 = vunpack.c.h.b16 %v7410
  %v7465 = vunpack.c.l.b16 %v7411
  %v7466 = vunpack.c.l.b16 %v7412
  %v7467 = vunpack.c.h.b16 %v7412
  %v7468 = vunpack.c.l.b16 %v7413
  %v7469 = vunpack.c.l.b16 %v7414
  %v7470 = vunpack.c.h.b16 %v7414
  %v7471 = vunpack.c.l.b16 %v7415
  %v7472 = vunpack.c.l.b16 %v7416
  %v7473 = vunpack.c.h.b16 %v7416
  %v7474 = vunpack.c.l.b16 %v7417
  %v7475 = vpack.c.b16 %v7445, %v7442
  %v7476 = vpack.c.b16 %v7446, %v7443
  %v7477 = vpack.c.b16 %v7447, %v7444
  %v7478 = vpack.c.b16 %v7451, %v7448
  %v7479 = vpack.c.b16 %v7452, %v7449
  %v7480 = vpack.c.b16 %v7453, %v7450
  %v7481 = vpack.c.b16 %v7457, %v7454
  %v7482 = vpack.c.b16 %v7458, %v7455
  %v7483 = vpack.c.b16 %v7459, %v7456
  %v7484 = vpack.c.b16 %v7463, %v7460
  %v7485 = vpack.c.b16 %v7464, %v7461
  %v7486 = vpack.c.b16 %v7465, %v7462
  %v7487 = vpack.c.b16 %v7469, %v7466
  %v7488 = vpack.c.b16 %v7470, %v7467
  %v7489 = vpack.c.b16 %v7471, %v7468
  %v7490 = vpack.c.b16 %v7472, %v7472
  %v7491 = vpack.c.b16 %v7473, %v7473
  %v7492 = vpack.c.b16 %v7474, %v7474
  %v7509 = vsel %vm3535, %v7418, 0
  %v7512 = vand.u32 %v7490, %v3342
  %v7515 = vand.u32 %v7491, %v3342
  %v7518 = vand.u32 %v7492, %v3342
  %7520 = vmatprep.subr.bf16.mxu0 %v7476
  %7521 = vmatpush1.bf16.msra.mxu0 %v7475
  %7522 = vmatprep.subr.bf16.mxu0 %v7479
  %7523 = vmatpush1.bf16.msra.mxu0 %v7478
  %7524 = vmatprep.subr.bf16.mxu0 %v7482
  %7525 = vmatpush1.bf16.msra.mxu0 %v7481
  %7526 = vmatprep.subr.bf16.mxu0 %v7485
  %7527 = vmatpush1.bf16.msra.mxu0 %v7484
  %7528 = vmatprep.subr.bf16.mxu0 %v7488
  %7529 = vmatpush1.bf16.msra.mxu0 %v7487
  %7530 = vmatprep.subr.bf16.mxu0 %v7515
  %7531 = vmatpush1.bf16.msra.mxu0 %v7512
  %7532 = vmatprep.subr.bf16.mxu0 0
  %7533 = vmatpush1.bf16.msra.mxu0 0
  %7534 = vmatprep.subr.bf16.mxu0 0
  %7535 = vmatpush1.bf16.msra.mxu0 0
  %7536 = vmatprep.subr.bf16.mxu0 0
  %7537 = vmatpush1.bf16.msra.mxu0 0
  %7538 = vmatprep.subr.bf16.mxu0 0
  %7539 = vmatpush1.bf16.msra.mxu0 0
  %7540 = vmatprep.subr.bf16.mxu0 0
  %7541 = vmatpush1.bf16.msra.mxu0 0
  %7542 = vmatprep.subr.bf16.mxu0 0
  %7543 = vmatpush1.bf16.msra.mxu0 0
  %7544 = vmatprep.subr.bf16.mxu0 0
  %7545 = vmatpush1.bf16.msra.mxu0 0
  %7546 = vmatprep.subr.bf16.mxu0 0
  %7547 = vmatpush1.bf16.msra.mxu0 0
  %7548 = vmatprep.subr.bf16.mxu0 0
  %7549 = vmatpush1.bf16.msra.mxu0 0
  %7550 = vmatprep.subr.bf16.mxu0 0
  %7551 = vmatpush1.bf16.msra.mxu0 0
  %7552 = vmatprep.mubr.bf16.mxu0 0
  %7553 = vmatmul.mubr.bf16.gmra.mrb[0].mxu0 %v7509
  %v7554 = vpop.f32.mrb[0].mxu0
  %v7555 = vadd.f32 0.0, %v7554
  %v7556 = vpop.f32.mrb[0].mxu0
  %v7557 = vadd.f32 0.0, %v7556
  %v7558 = vpop.f32.mrb[0].mxu0
  %v7559 = vadd.f32 0.0, %v7558
  %v7560 = vpop.f32.mrb[0].mxu0
  %v7561 = vadd.f32 0.0, %v7560
  %7562 = vdwg.mxu0
  %7563 = vmatprep.subr.bf16.mxu0 0
  %7564 = vmatpush1.bf16.msra.mxu0 %v7477
  %7565 = vmatprep.subr.bf16.mxu0 0
  %7566 = vmatpush1.bf16.msra.mxu0 %v7480
  %7567 = vmatprep.subr.bf16.mxu0 0
  %7568 = vmatpush1.bf16.msra.mxu0 %v7483
  %7569 = vmatprep.subr.bf16.mxu0 0
  %7570 = vmatpush1.bf16.msra.mxu0 %v7486
  %7571 = vmatprep.subr.bf16.mxu0 0
  %7572 = vmatpush1.bf16.msra.mxu0 %v7489
  %7573 = vmatprep.subr.bf16.mxu0 0
  %7574 = vmatpush1.bf16.msra.mxu0 %v7518
  %7575 = vmatprep.subr.bf16.mxu0 0
  %7576 = vmatpush1.bf16.msra.mxu0 0
  %7577 = vmatprep.subr.bf16.mxu0 0
  %7578 = vmatpush1.bf16.msra.mxu0 0
  %7579 = vmatprep.subr.bf16.mxu0 0
  %7580 = vmatpush1.bf16.msra.mxu0 0
  %7581 = vmatprep.subr.bf16.mxu0 0
  %7582 = vmatpush1.bf16.msra.mxu0 0
  %7583 = vmatprep.subr.bf16.mxu0 0
  %7584 = vmatpush1.bf16.msra.mxu0 0
  %7585 = vmatprep.subr.bf16.mxu0 0
  %7586 = vmatpush1.bf16.msra.mxu0 0
  %7587 = vmatprep.subr.bf16.mxu0 0
  %7588 = vmatpush1.bf16.msra.mxu0 0
  %7589 = vmatprep.subr.bf16.mxu0 0
  %7590 = vmatpush1.bf16.msra.mxu0 0
  %7591 = vmatprep.subr.bf16.mxu0 0
  %7592 = vmatpush1.bf16.msra.mxu0 0
  %7593 = vmatprep.subr.bf16.mxu0 0
  %7594 = vmatpush1.bf16.msra.mxu0 0
  %7595 = vmatprep.mubr.bf16.mxu0 0
  %7596 = vmatmul.mubr.bf16.gmra.mrb[0].mxu0 %v7509
  %v7597 = vpop.f32.mrb[0].mxu0
  %v7598 = vadd.f32 0.0, %v7597
  %v7599 = vpop.f32.mrb[0].mxu0
  %v7600 = vpop.f32.mrb[0].mxu0
  %v7601 = vadd.f32 0.0, %v7600
  %v7602 = vpop.f32.mrb[0].mxu0
  %7603 = vdwg.mxu0
  %7606 = vrot.lane.b32.xlu0 %v7418, 47
  %v7607 = vpop.permute.xlu0 %7606
  %7608 = vrot.lane.b32.xlu0 %v7419, 47
  %v7609 = vpop.permute.xlu0 %7608
  %v7610 = vsel %vm4883, %v7607, %v7609
  %v7612 = vsel %vm3535, %v7610, 0
  %7614 = vmatprep.subr.bf16.mxu0 %v7476
  %7615 = vmatpush1.bf16.msra.mxu0 %v7475
  %7616 = vmatprep.subr.bf16.mxu0 %v7479
  %7617 = vmatpush1.bf16.msra.mxu0 %v7478
  %7618 = vmatprep.subr.bf16.mxu0 %v7482
  %7619 = vmatpush1.bf16.msra.mxu0 %v7481
  %7620 = vmatprep.subr.bf16.mxu0 %v7485
  %7621 = vmatpush1.bf16.msra.mxu0 %v7484
  %7622 = vmatprep.subr.bf16.mxu0 %v7488
  %7623 = vmatpush1.bf16.msra.mxu0 %v7487
  %7624 = vmatprep.subr.bf16.mxu0 %v7515
  %7625 = vmatpush1.bf16.msra.mxu0 %v7512
  %7626 = vmatprep.subr.bf16.mxu0 0
  %7627 = vmatpush1.bf16.msra.mxu0 0
  %7628 = vmatprep.subr.bf16.mxu0 0
  %7629 = vmatpush1.bf16.msra.mxu0 0
  %7630 = vmatprep.subr.bf16.mxu0 0
  %7631 = vmatpush1.bf16.msra.mxu0 0
  %7632 = vmatprep.subr.bf16.mxu0 0
  %7633 = vmatpush1.bf16.msra.mxu0 0
  %7634 = vmatprep.subr.bf16.mxu0 0
  %7635 = vmatpush1.bf16.msra.mxu0 0
  %7636 = vmatprep.subr.bf16.mxu0 0
  %7637 = vmatpush1.bf16.msra.mxu0 0
  %7638 = vmatprep.subr.bf16.mxu0 0
  %7639 = vmatpush1.bf16.msra.mxu0 0
  %7640 = vmatprep.subr.bf16.mxu0 0
  %7641 = vmatpush1.bf16.msra.mxu0 0
  %7642 = vmatprep.subr.bf16.mxu0 0
  %7643 = vmatpush1.bf16.msra.mxu0 0
  %7644 = vmatprep.subr.bf16.mxu0 0
  %7645 = vmatpush1.bf16.msra.mxu0 0
  %7646 = vmatprep.mubr.bf16.mxu0 0
  %7647 = vmatmul.mubr.bf16.gmra.mrb[0].mxu0 %v7612
  %v7648 = vpop.f32.mrb[0].mxu0
  %v7649 = vadd.f32 0.0, %v7648
  %v7650 = vpop.f32.mrb[0].mxu0
  %v7651 = vadd.f32 0.0, %v7650
  %v7652 = vpop.f32.mrb[0].mxu0
  %v7653 = vadd.f32 0.0, %v7652
  %v7654 = vpop.f32.mrb[0].mxu0
  %v7655 = vadd.f32 0.0, %v7654
  %7656 = vdwg.mxu0
  %7657 = vmatprep.subr.bf16.mxu0 0
  %7658 = vmatpush1.bf16.msra.mxu0 %v7477
  %7659 = vmatprep.subr.bf16.mxu0 0
  %7660 = vmatpush1.bf16.msra.mxu0 %v7480
  %7661 = vmatprep.subr.bf16.mxu0 0
  %7662 = vmatpush1.bf16.msra.mxu0 %v7483
  %7663 = vmatprep.subr.bf16.mxu0 0
  %7664 = vmatpush1.bf16.msra.mxu0 %v7486
  %7665 = vmatprep.subr.bf16.mxu0 0
  %7666 = vmatpush1.bf16.msra.mxu0 %v7489
  %7667 = vmatprep.subr.bf16.mxu0 0
  %7668 = vmatpush1.bf16.msra.mxu0 %v7518
  %7669 = vmatprep.subr.bf16.mxu0 0
  %7670 = vmatpush1.bf16.msra.mxu0 0
  %7671 = vmatprep.subr.bf16.mxu0 0
  %7672 = vmatpush1.bf16.msra.mxu0 0
  %7673 = vmatprep.subr.bf16.mxu0 0
  %7674 = vmatpush1.bf16.msra.mxu0 0
  %7675 = vmatprep.subr.bf16.mxu0 0
  %7676 = vmatpush1.bf16.msra.mxu0 0
  %7677 = vmatprep.subr.bf16.mxu0 0
  %7678 = vmatpush1.bf16.msra.mxu0 0
  %7679 = vmatprep.subr.bf16.mxu0 0
  %7680 = vmatpush1.bf16.msra.mxu0 0
  %7681 = vmatprep.subr.bf16.mxu0 0
  %7682 = vmatpush1.bf16.msra.mxu0 0
  %7683 = vmatprep.subr.bf16.mxu0 0
  %7684 = vmatpush1.bf16.msra.mxu0 0
  %7685 = vmatprep.subr.bf16.mxu0 0
  %7686 = vmatpush1.bf16.msra.mxu0 0
  %7687 = vmatprep.subr.bf16.mxu0 0
  %7688 = vmatpush1.bf16.msra.mxu0 0
  %7689 = vmatprep.mubr.bf16.mxu0 0
  %7690 = vmatmul.mubr.bf16.gmra.mrb[0].mxu0 %v7612
  %v7691 = vpop.f32.mrb[0].mxu0
  %v7692 = vadd.f32 0.0, %v7691
  %v7693 = vpop.f32.mrb[0].mxu0
  %v7694 = vpop.f32.mrb[0].mxu0
  %v7695 = vadd.f32 0.0, %v7694
  %v7696 = vpop.f32.mrb[0].mxu0
  %7697 = vdwg.mxu0
  %7704 = vrot.lane.b32.xlu0 %v7649, 33
  %v7705 = vpop.permute.xlu0 %7704
  %7706 = vrot.lane.b32.xlu0 %v7651, 33
  %v7707 = vpop.permute.xlu0 %7706
  %7708 = vrot.lane.b32.xlu0 %v7692, 33
  %v7709 = vpop.permute.xlu0 %7708
  %7710 = vrot.lane.b32.xlu0 %v7653, 33
  %v7711 = vpop.permute.xlu0 %7710
  %7712 = vrot.lane.b32.xlu0 %v7655, 33
  %v7713 = vpop.permute.xlu0 %7712
  %7714 = vrot.lane.b32.xlu0 %v7695, 33
  %v7715 = vpop.permute.xlu0 %7714
  %v7716 = vsel %vm3336, %v7705, %v7707
  %v7717 = vsel %vm3336, %v7707, %v7709
  %v7718 = vsel %vm3336, %v7711, %v7713
  %v7719 = vsel %vm3336, %v7713, %v7715
  %v7726 = vsel %vm3336, %v7598, %v7705
  %v7727 = vsel %vm3336, %v7601, %v7711
  %v7728 = vunpack.c.l.bf16 %v3183
  %v7729 = vunpack.c.l.bf16 %v3184
  %v7730 = vunpack.c.l.bf16 %v3185
  %v7731 = vunpack.c.l.bf16 %v3186
  %v7732 = vunpack.c.l.bf16 %v3187
  %v7733 = vunpack.c.h.bf16 %v3183
  %v7734 = vunpack.c.h.bf16 %v3184
  %v7735 = vunpack.c.h.bf16 %v3185
  %v7736 = vunpack.c.h.bf16 %v3186
  %v7737 = vunpack.c.h.bf16 %v3187
  %v7738 = vadd.f32 %v7555, %v7728
  %v7739 = vadd.f32 %v7557, %v7729
  %v7740 = vadd.f32 %v7726, %v7730
  %v7741 = vadd.f32 %v7716, %v7731
  %v7742 = vadd.f32 %v7717, %v7732
  %v7743 = vadd.f32 %v7559, %v7733
  %v7744 = vadd.f32 %v7561, %v7734
  %v7745 = vadd.f32 %v7727, %v7735
  %v7746 = vadd.f32 %v7718, %v7736
  %v7747 = vadd.f32 %v7719, %v7737
  %v7748 = vmax.f32 %v7738, 0.0
  %v7749 = vmax.f32 %v7739, 0.0
  %v7750 = vmax.f32 %v7740, 0.0
  %v7751 = vmax.f32 %v7741, 0.0
  %v7752 = vmax.f32 %v7742, 0.0
  %v7753 = vmax.f32 %v7743, 0.0
  %v7754 = vmax.f32 %v7744, 0.0
  %v7755 = vmax.f32 %v7745, 0.0
  %v7756 = vmax.f32 %v7746, 0.0
  %v7757 = vmax.f32 %v7747, 0.0
  %v7758 = vpack.c.bf16 %v7753, %v7748
  %v7759 = vpack.c.bf16 %v7754, %v7749
  %v7760 = vpack.c.bf16 %v7755, %v7750
  %v7761 = vpack.c.bf16 %v7756, %v7751
  %v7762 = vpack.c.bf16 %v7757, %v7752
  %7763 = vst [vmem:[#allocation2 + $0x8] sm:$0xff] %v7758
  %7764 = vst [vmem:[#allocation2 + $0x10] sm:$0xff] %v7759
  %7765 = vst [vmem:[#allocation2 + $0x18] sm:$0xff] %v7760
  %7766 = vst [vmem:[#allocation2 + $0x20] sm:$0xff] %v7761
  %7767 = vst.msk [vmem:[#allocation2 + $0x28] sm:$0xff] %vm87, %v7762
  %v7768 = vld [vmem:[#allocation2] sm:$0xff]
  %v7769 = vld [vmem:[#allocation2 + $0x8] sm:$0xff]
  %v7770 = vld [vmem:[#allocation2 + $0x10] sm:$0xff]
  %v7771 = vld [vmem:[#allocation2 + $0x18] sm:$0xff]
  %v7772 = vld [vmem:[#allocation2 + $0x20] sm:$0xff]
  %v7773 = vld [vmem:[#allocation2 + $0x28] sm:$0xff]
  %s7774 = scalar_lea.vmem %s1, 576
  %v7775 = vld [vmem:[%s7774] sm:$0xf]
  %v7776 = vld [vmem:[%s7774 + $0x4] sm:$0xf]
  %s7777 = scalar_lea.vmem %s1, 584
  %v7778 = vld [vmem:[%s7777] sm:$0xf]
  %v7779 = vld [vmem:[%s7777 + $0x4] sm:$0xf]
  %v7782 = vunpack.c.l.b16 %v7778
  %v7783 = vunpack.c.l.b16 %v7779
  %v7784 = vpack.c.b16 %v7783, %v7782
  %7791 = vrot.lane.b32.xlu0 %v7768, 17
  %v7792 = vpop.permute.xlu0 %7791
  %7793 = vrot.lane.b32.xlu0 %v7769, 17
  %v7794 = vpop.permute.xlu0 %7793
  %7795 = vrot.lane.b32.xlu0 %v7770, 17
  %v7796 = vpop.permute.xlu0 %7795
  %7797 = vrot.lane.b32.xlu0 %v7771, 17
  %v7798 = vpop.permute.xlu0 %7797
  %7799 = vrot.lane.b32.xlu0 %v7772, 17
  %v7800 = vpop.permute.xlu0 %7799
  %7801 = vrot.lane.b32.xlu0 %v7773, 17
  %v7802 = vpop.permute.xlu0 %7801
  %v7803 = vsel %vm123, %v7792, %v7794
  %v7804 = vsel %vm123, %v7794, %v7796
  %v7805 = vsel %vm123, %v7796, %v7798
  %v7806 = vsel %vm123, %v7798, %v7800
  %v7807 = vsel %vm123, %v7800, %v7802
  %v7814 = vsel %vm134, %v7784, 0
  %7816 = vmatprep.subr.bf16.mxu0 %v7804
  %7817 = vmatpush1.bf16.msra.mxu0 %v7803
  %7818 = vmatprep.subr.bf16.mxu0 0
  %7819 = vmatpush1.bf16.msra.mxu0 0
  %7820 = vmatprep.subr.bf16.mxu0 0
  %7821 = vmatpush1.bf16.msra.mxu0 0
  %7822 = vmatprep.subr.bf16.mxu0 0
  %7823 = vmatpush1.bf16.msra.mxu0 0
  %7824 = vmatprep.subr.bf16.mxu0 0
  %7825 = vmatpush1.bf16.msra.mxu0 0
  %7826 = vmatprep.subr.bf16.mxu0 0
  %7827 = vmatpush1.bf16.msra.mxu0 0
  %7828 = vmatprep.subr.bf16.mxu0 0
  %7829 = vmatpush1.bf16.msra.mxu0 0
  %7830 = vmatprep.subr.bf16.mxu0 0
  %7831 = vmatpush1.bf16.msra.mxu0 0
  %7832 = vmatprep.subr.bf16.mxu0 0
  %7833 = vmatpush1.bf16.msra.mxu0 0
  %7834 = vmatprep.subr.bf16.mxu0 0
  %7835 = vmatpush1.bf16.msra.mxu0 0
  %7836 = vmatprep.subr.bf16.mxu0 0
  %7837 = vmatpush1.bf16.msra.mxu0 0
  %7838 = vmatprep.subr.bf16.mxu0 0
  %7839 = vmatpush1.bf16.msra.mxu0 0
  %7840 = vmatprep.subr.bf16.mxu0 0
  %7841 = vmatpush1.bf16.msra.mxu0 0
  %7842 = vmatprep.subr.bf16.mxu0 0
  %7843 = vmatpush1.bf16.msra.mxu0 0
  %7844 = vmatprep.subr.bf16.mxu0 0
  %7845 = vmatpush1.bf16.msra.mxu0 0
  %7846 = vmatprep.subr.bf16.mxu0 0
  %7847 = vmatpush1.bf16.msra.mxu0 0
  %7848 = vmatprep.mubr.bf16.mxu0 0
  %7849 = vmatmul.mubr.bf16.gmra.mrb[0].mxu0 %v7814
  %v7850 = vpop.f32.mrb[0].mxu0
  %v7851 = vadd.f32 0.0, %v7850
  %v7852 = vpop.f32.mrb[0].mxu0
  %v7853 = vadd.f32 0.0, %v7852
  %v7854 = vpop.f32.mrb[0].mxu0
  %v7855 = vadd.f32 0.0, %v7854
  %v7856 = vpop.f32.mrb[0].mxu0
  %v7857 = vadd.f32 0.0, %v7856
  %7858 = vdwg.mxu0
  %7859 = vmatprep.subr.bf16.mxu0 %v7806
  %7860 = vmatpush1.bf16.msra.mxu0 %v7805
  %7861 = vmatprep.subr.bf16.mxu0 0
  %7862 = vmatpush1.bf16.msra.mxu0 0
  %7863 = vmatprep.subr.bf16.mxu0 0
  %7864 = vmatpush1.bf16.msra.mxu0 0
  %7865 = vmatprep.subr.bf16.mxu0 0
  %7866 = vmatpush1.bf16.msra.mxu0 0
  %7867 = vmatprep.subr.bf16.mxu0 0
  %7868 = vmatpush1.bf16.msra.mxu0 0
  %7869 = vmatprep.subr.bf16.mxu0 0
  %7870 = vmatpush1.bf16.msra.mxu0 0
  %7871 = vmatprep.subr.bf16.mxu0 0
  %7872 = vmatpush1.bf16.msra.mxu0 0
  %7873 = vmatprep.subr.bf16.mxu0 0
  %7874 = vmatpush1.bf16.msra.mxu0 0
  %7875 = vmatprep.subr.bf16.mxu0 0
  %7876 = vmatpush1.bf16.msra.mxu0 0
  %7877 = vmatprep.subr.bf16.mxu0 0
  %7878 = vmatpush1.bf16.msra.mxu0 0
  %7879 = vmatprep.subr.bf16.mxu0 0
  %7880 = vmatpush1.bf16.msra.mxu0 0
  %7881 = vmatprep.subr.bf16.mxu0 0
  %7882 = vmatpush1.bf16.msra.mxu0 0
  %7883 = vmatprep.subr.bf16.mxu0 0
  %7884 = vmatpush1.bf16.msra.mxu0 0
  %7885 = vmatprep.subr.bf16.mxu0 0
  %7886 = vmatpush1.bf16.msra.mxu0 0
  %7887 = vmatprep.subr.bf16.mxu0 0
  %7888 = vmatpush1.bf16.msra.mxu0 0
  %7889 = vmatprep.subr.bf16.mxu0 0
  %7890 = vmatpush1.bf16.msra.mxu0 0
  %7891 = vmatprep.mubr.bf16.mxu0 0
  %7892 = vmatmul.mubr.bf16.gmra.mrb[0].mxu0 %v7814
  %v7893 = vpop.f32.mrb[0].mxu0
  %v7894 = vadd.f32 0.0, %v7893
  %v7895 = vpop.f32.mrb[0].mxu0
  %v7896 = vadd.f32 0.0, %v7895
  %v7897 = vpop.f32.mrb[0].mxu0
  %v7898 = vadd.f32 0.0, %v7897
  %v7899 = vpop.f32.mrb[0].mxu0
  %v7900 = vadd.f32 0.0, %v7899
  %7901 = vdwg.mxu0
  %7902 = vmatprep.subr.bf16.mxu0 0
  %7903 = vmatpush1.bf16.msra.mxu0 %v7807
  %7904 = vmatprep.subr.bf16.mxu0 0
  %7905 = vmatpush1.bf16.msra.mxu0 0
  %7906 = vmatprep.subr.bf16.mxu0 0
  %7907 = vmatpush1.bf16.msra.mxu0 0
  %7908 = vmatprep.subr.bf16.mxu0 0
  %7909 = vmatpush1.bf16.msra.mxu0 0
  %7910 = vmatprep.subr.bf16.mxu0 0
  %7911 = vmatpush1.bf16.msra.mxu0 0
  %7912 = vmatprep.subr.bf16.mxu0 0
  %7913 = vmatpush1.bf16.msra.mxu0 0
  %7914 = vmatprep.subr.bf16.mxu0 0
  %7915 = vmatpush1.bf16.msra.mxu0 0
  %7916 = vmatprep.subr.bf16.mxu0 0
  %7917 = vmatpush1.bf16.msra.mxu0 0
  %7918 = vmatprep.subr.bf16.mxu0 0
  %7919 = vmatpush1.bf16.msra.mxu0 0
  %7920 = vmatprep.subr.bf16.mxu0 0
  %7921 = vmatpush1.bf16.msra.mxu0 0
  %7922 = vmatprep.subr.bf16.mxu0 0
  %7923 = vmatpush1.bf16.msra.mxu0 0
  %7924 = vmatprep.subr.bf16.mxu0 0
  %7925 = vmatpush1.bf16.msra.mxu0 0
  %7926 = vmatprep.subr.bf16.mxu0 0
  %7927 = vmatpush1.bf16.msra.mxu0 0
  %7928 = vmatprep.subr.bf16.mxu0 0
  %7929 = vmatpush1.bf16.msra.mxu0 0
  %7930 = vmatprep.subr.bf16.mxu0 0
  %7931 = vmatpush1.bf16.msra.mxu0 0
  %7932 = vmatprep.subr.bf16.mxu0 0
  %7933 = vmatpush1.bf16.msra.mxu0 0
  %7934 = vmatprep.mubr.bf16.mxu0 0
  %7935 = vmatmul.mubr.bf16.gmra.mrb[0].mxu0 %v7814
  %v7936 = vpop.f32.mrb[0].mxu0
  %v7937 = vadd.f32 0.0, %v7936
  %v7938 = vpop.f32.mrb[0].mxu0
  %v7939 = vpop.f32.mrb[0].mxu0
  %v7940 = vadd.f32 0.0, %v7939
  %v7941 = vpop.f32.mrb[0].mxu0
  %7942 = vdwg.mxu0
  %v7945 = vunpack.c.l.b16 %v7775
  %v7946 = vunpack.c.l.b16 %v7776
  %v7947 = vpack.c.b16 %v7946, %v7945
  %7948 = vrot.lane.b32.xlu0 %v7768, 18
  %v7949 = vpop.permute.xlu0 %7948
  %7950 = vrot.lane.b32.xlu0 %v7769, 18
  %v7951 = vpop.permute.xlu0 %7950
  %7952 = vrot.lane.b32.xlu0 %v7770, 18
  %v7953 = vpop.permute.xlu0 %7952
  %7954 = vrot.lane.b32.xlu0 %v7771, 18
  %v7955 = vpop.permute.xlu0 %7954
  %7956 = vrot.lane.b32.xlu0 %v7772, 18
  %v7957 = vpop.permute.xlu0 %7956
  %7958 = vrot.lane.b32.xlu0 %v7773, 18
  %v7959 = vpop.permute.xlu0 %7958
  %v7960 = vsel %vm282, %v7949, %v7951
  %v7961 = vsel %vm282, %v7951, %v7953
  %v7962 = vsel %vm282, %v7953, %v7955
  %v7963 = vsel %vm282, %v7955, %v7957
  %v7964 = vsel %vm282, %v7957, %v7959
  %v7971 = vsel %vm134, %v7947, 0
  %7973 = vmatprep.subr.bf16.mxu0 %v7961
  %7974 = vmatpush1.bf16.msra.mxu0 %v7960
  %7975 = vmatprep.subr.bf16.mxu0 0
  %7976 = vmatpush1.bf16.msra.mxu0 0
  %7977 = vmatprep.subr.bf16.mxu0 0
  %7978 = vmatpush1.bf16.msra.mxu0 0
  %7979 = vmatprep.subr.bf16.mxu0 0
  %7980 = vmatpush1.bf16.msra.mxu0 0
  %7981 = vmatprep.subr.bf16.mxu0 0
  %7982 = vmatpush1.bf16.msra.mxu0 0
  %7983 = vmatprep.subr.bf16.mxu0 0
  %7984 = vmatpush1.bf16.msra.mxu0 0
  %7985 = vmatprep.subr.bf16.mxu0 0
  %7986 = vmatpush1.bf16.msra.mxu0 0
  %7987 = vmatprep.subr.bf16.mxu0 0
  %7988 = vmatpush1.bf16.msra.mxu0 0
  %7989 = vmatprep.subr.bf16.mxu0 0
  %7990 = vmatpush1.bf16.msra.mxu0 0
  %7991 = vmatprep.subr.bf16.mxu0 0
  %7992 = vmatpush1.bf16.msra.mxu0 0
  %7993 = vmatprep.subr.bf16.mxu0 0
  %7994 = vmatpush1.bf16.msra.mxu0 0
  %7995 = vmatprep.subr.bf16.mxu0 0
  %7996 = vmatpush1.bf16.msra.mxu0 0
  %7997 = vmatprep.subr.bf16.mxu0 0
  %7998 = vmatpush1.bf16.msra.mxu0 0
  %7999 = vmatprep.subr.bf16.mxu0 0
  %8000 = vmatpush1.bf16.msra.mxu0 0
  %8001 = vmatprep.subr.bf16.mxu0 0
  %8002 = vmatpush1.bf16.msra.mxu0 0
  %8003 = vmatprep.subr.bf16.mxu0 0
  %8004 = vmatpush1.bf16.msra.mxu0 0
  %8005 = vmatprep.mubr.bf16.mxu0 0
  %8006 = vmatmul.mubr.bf16.gmra.mrb[0].mxu0 %v7971
  %v8007 = vpop.f32.mrb[0].mxu0
  %v8008 = vadd.f32 %v7851, %v8007
  %v8009 = vpop.f32.mrb[0].mxu0
  %v8010 = vadd.f32 %v7853, %v8009
  %v8011 = vpop.f32.mrb[0].mxu0
  %v8012 = vadd.f32 %v7855, %v8011
  %v8013 = vpop.f32.mrb[0].mxu0
  %v8014 = vadd.f32 %v7857, %v8013
  %8015 = vdwg.mxu0
  %8016 = vmatprep.subr.bf16.mxu0 %v7963
  %8017 = vmatpush1.bf16.msra.mxu0 %v7962
  %8018 = vmatprep.subr.bf16.mxu0 0
  %8019 = vmatpush1.bf16.msra.mxu0 0
  %8020 = vmatprep.subr.bf16.mxu0 0
  %8021 = vmatpush1.bf16.msra.mxu0 0
  %8022 = vmatprep.subr.bf16.mxu0 0
  %8023 = vmatpush1.bf16.msra.mxu0 0
  %8024 = vmatprep.subr.bf16.mxu0 0
  %8025 = vmatpush1.bf16.msra.mxu0 0
  %8026 = vmatprep.subr.bf16.mxu0 0
  %8027 = vmatpush1.bf16.msra.mxu0 0
  %8028 = vmatprep.subr.bf16.mxu0 0
  %8029 = vmatpush1.bf16.msra.mxu0 0
  %8030 = vmatprep.subr.bf16.mxu0 0
  %8031 = vmatpush1.bf16.msra.mxu0 0
  %8032 = vmatprep.subr.bf16.mxu0 0
  %8033 = vmatpush1.bf16.msra.mxu0 0
  %8034 = vmatprep.subr.bf16.mxu0 0
  %8035 = vmatpush1.bf16.msra.mxu0 0
  %8036 = vmatprep.subr.bf16.mxu0 0
  %8037 = vmatpush1.bf16.msra.mxu0 0
  %8038 = vmatprep.subr.bf16.mxu0 0
  %8039 = vmatpush1.bf16.msra.mxu0 0
  %8040 = vmatprep.subr.bf16.mxu0 0
  %8041 = vmatpush1.bf16.msra.mxu0 0
  %8042 = vmatprep.subr.bf16.mxu0 0
  %8043 = vmatpush1.bf16.msra.mxu0 0
  %8044 = vmatprep.subr.bf16.mxu0 0
  %8045 = vmatpush1.bf16.msra.mxu0 0
  %8046 = vmatprep.subr.bf16.mxu0 0
  %8047 = vmatpush1.bf16.msra.mxu0 0
  %8048 = vmatprep.mubr.bf16.mxu0 0
  %8049 = vmatmul.mubr.bf16.gmra.mrb[0].mxu0 %v7971
  %v8050 = vpop.f32.mrb[0].mxu0
  %v8051 = vadd.f32 %v7894, %v8050
  %v8052 = vpop.f32.mrb[0].mxu0
  %v8053 = vadd.f32 %v7896, %v8052
  %v8054 = vpop.f32.mrb[0].mxu0
  %v8055 = vadd.f32 %v7898, %v8054
  %v8056 = vpop.f32.mrb[0].mxu0
  %v8057 = vadd.f32 %v7900, %v8056
  %8058 = vdwg.mxu0
  %8059 = vmatprep.subr.bf16.mxu0 0
  %8060 = vmatpush1.bf16.msra.mxu0 %v7964
  %8061 = vmatprep.subr.bf16.mxu0 0
  %8062 = vmatpush1.bf16.msra.mxu0 0
  %8063 = vmatprep.subr.bf16.mxu0 0
  %8064 = vmatpush1.bf16.msra.mxu0 0
  %8065 = vmatprep.subr.bf16.mxu0 0
  %8066 = vmatpush1.bf16.msra.mxu0 0
  %8067 = vmatprep.subr.bf16.mxu0 0
  %8068 = vmatpush1.bf16.msra.mxu0 0
  %8069 = vmatprep.subr.bf16.mxu0 0
  %8070 = vmatpush1.bf16.msra.mxu0 0
  %8071 = vmatprep.subr.bf16.mxu0 0
  %8072 = vmatpush1.bf16.msra.mxu0 0
  %8073 = vmatprep.subr.bf16.mxu0 0
  %8074 = vmatpush1.bf16.msra.mxu0 0
  %8075 = vmatprep.subr.bf16.mxu0 0
  %8076 = vmatpush1.bf16.msra.mxu0 0
  %8077 = vmatprep.subr.bf16.mxu0 0
  %8078 = vmatpush1.bf16.msra.mxu0 0
  %8079 = vmatprep.subr.bf16.mxu0 0
  %8080 = vmatpush1.bf16.msra.mxu0 0
  %8081 = vmatprep.subr.bf16.mxu0 0
  %8082 = vmatpush1.bf16.msra.mxu0 0
  %8083 = vmatprep.subr.bf16.mxu0 0
  %8084 = vmatpush1.bf16.msra.mxu0 0
  %8085 = vmatprep.subr.bf16.mxu0 0
  %8086 = vmatpush1.bf16.msra.mxu0 0
  %8087 = vmatprep.subr.bf16.mxu0 0
  %8088 = vmatpush1.bf16.msra.mxu0 0
  %8089 = vmatprep.subr.bf16.mxu0 0
  %8090 = vmatpush1.bf16.msra.mxu0 0
  %8091 = vmatprep.mubr.bf16.mxu0 0
  %8092 = vmatmul.mubr.bf16.gmra.mrb[0].mxu0 %v7971
  %v8093 = vpop.f32.mrb[0].mxu0
  %v8094 = vadd.f32 %v7937, %v8093
  %v8095 = vpop.f32.mrb[0].mxu0
  %v8096 = vpop.f32.mrb[0].mxu0
  %v8097 = vadd.f32 %v7940, %v8096
  %v8098 = vpop.f32.mrb[0].mxu0
  %8099 = vdwg.mxu0
  %s8100 = scalar_lea.vmem %s1, 592
  %v8101 = vld [vmem:[%s8100] sm:$0xf]
  %v8102 = vld [vmem:[%s8100 + $0x4] sm:$0xf]
  %v8105 = vunpack.c.l.b16 %v8101
  %v8106 = vunpack.c.l.b16 %v8102
  %v8107 = vpack.c.b16 %v8106, %v8105
  %8108 = vrot.lane.b32.xlu0 %v7768, 16
  %v8109 = vpop.permute.xlu0 %8108
  %8110 = vrot.lane.b32.xlu0 %v7769, 16
  %v8111 = vpop.permute.xlu0 %8110
  %8112 = vrot.lane.b32.xlu0 %v7770, 16
  %v8113 = vpop.permute.xlu0 %8112
  %8114 = vrot.lane.b32.xlu0 %v7771, 16
  %v8115 = vpop.permute.xlu0 %8114
  %8116 = vrot.lane.b32.xlu0 %v7772, 16
  %v8117 = vpop.permute.xlu0 %8116
  %8118 = vrot.lane.b32.xlu0 %v7773, 16
  %v8119 = vpop.permute.xlu0 %8118
  %v8120 = vsel %vm443, %v8109, %v8111
  %v8121 = vsel %vm443, %v8111, %v8113
  %v8122 = vsel %vm443, %v8113, %v8115
  %v8123 = vsel %vm443, %v8115, %v8117
  %v8124 = vsel %vm443, %v8117, %v8119
  %v8131 = vsel %vm134, %v8107, 0
  %8133 = vmatprep.subr.bf16.mxu0 %v8121
  %8134 = vmatpush1.bf16.msra.mxu0 %v8120
  %8135 = vmatprep.subr.bf16.mxu0 0
  %8136 = vmatpush1.bf16.msra.mxu0 0
  %8137 = vmatprep.subr.bf16.mxu0 0
  %8138 = vmatpush1.bf16.msra.mxu0 0
  %8139 = vmatprep.subr.bf16.mxu0 0
  %8140 = vmatpush1.bf16.msra.mxu0 0
  %8141 = vmatprep.subr.bf16.mxu0 0
  %8142 = vmatpush1.bf16.msra.mxu0 0
  %8143 = vmatprep.subr.bf16.mxu0 0
  %8144 = vmatpush1.bf16.msra.mxu0 0
  %8145 = vmatprep.subr.bf16.mxu0 0
  %8146 = vmatpush1.bf16.msra.mxu0 0
  %8147 = vmatprep.subr.bf16.mxu0 0
  %8148 = vmatpush1.bf16.msra.mxu0 0
  %8149 = vmatprep.subr.bf16.mxu0 0
  %8150 = vmatpush1.bf16.msra.mxu0 0
  %8151 = vmatprep.subr.bf16.mxu0 0
  %8152 = vmatpush1.bf16.msra.mxu0 0
  %8153 = vmatprep.subr.bf16.mxu0 0
  %8154 = vmatpush1.bf16.msra.mxu0 0
  %8155 = vmatprep.subr.bf16.mxu0 0
  %8156 = vmatpush1.bf16.msra.mxu0 0
  %8157 = vmatprep.subr.bf16.mxu0 0
  %8158 = vmatpush1.bf16.msra.mxu0 0
  %8159 = vmatprep.subr.bf16.mxu0 0
  %8160 = vmatpush1.bf16.msra.mxu0 0
  %8161 = vmatprep.subr.bf16.mxu0 0
  %8162 = vmatpush1.bf16.msra.mxu0 0
  %8163 = vmatprep.subr.bf16.mxu0 0
  %8164 = vmatpush1.bf16.msra.mxu0 0
  %8165 = vmatprep.mubr.bf16.mxu0 0
  %8166 = vmatmul.mubr.bf16.gmra.mrb[0].mxu0 %v8131
  %v8167 = vpop.f32.mrb[0].mxu0
  %v8168 = vadd.f32 0.0, %v8167
  %v8169 = vpop.f32.mrb[0].mxu0
  %v8170 = vadd.f32 0.0, %v8169
  %v8171 = vpop.f32.mrb[0].mxu0
  %v8172 = vadd.f32 0.0, %v8171
  %v8173 = vpop.f32.mrb[0].mxu0
  %v8174 = vadd.f32 0.0, %v8173
  %8175 = vdwg.mxu0
  %8176 = vmatprep.subr.bf16.mxu0 %v8123
  %8177 = vmatpush1.bf16.msra.mxu0 %v8122
  %8178 = vmatprep.subr.bf16.mxu0 0
  %8179 = vmatpush1.bf16.msra.mxu0 0
  %8180 = vmatprep.subr.bf16.mxu0 0
  %8181 = vmatpush1.bf16.msra.mxu0 0
  %8182 = vmatprep.subr.bf16.mxu0 0
  %8183 = vmatpush1.bf16.msra.mxu0 0
  %8184 = vmatprep.subr.bf16.mxu0 0
  %8185 = vmatpush1.bf16.msra.mxu0 0
  %8186 = vmatprep.subr.bf16.mxu0 0
  %8187 = vmatpush1.bf16.msra.mxu0 0
  %8188 = vmatprep.subr.bf16.mxu0 0
  %8189 = vmatpush1.bf16.msra.mxu0 0
  %8190 = vmatprep.subr.bf16.mxu0 0
  %8191 = vmatpush1.bf16.msra.mxu0 0
  %8192 = vmatprep.subr.bf16.mxu0 0
  %8193 = vmatpush1.bf16.msra.mxu0 0
  %8194 = vmatprep.subr.bf16.mxu0 0
  %8195 = vmatpush1.bf16.msra.mxu0 0
  %8196 = vmatprep.subr.bf16.mxu0 0
  %8197 = vmatpush1.bf16.msra.mxu0 0
  %8198 = vmatprep.subr.bf16.mxu0 0
  %8199 = vmatpush1.bf16.msra.mxu0 0
  %8200 = vmatprep.subr.bf16.mxu0 0
  %8201 = vmatpush1.bf16.msra.mxu0 0
  %8202 = vmatprep.subr.bf16.mxu0 0
  %8203 = vmatpush1.bf16.msra.mxu0 0
  %8204 = vmatprep.subr.bf16.mxu0 0
  %8205 = vmatpush1.bf16.msra.mxu0 0
  %8206 = vmatprep.subr.bf16.mxu0 0
  %8207 = vmatpush1.bf16.msra.mxu0 0
  %8208 = vmatprep.mubr.bf16.mxu0 0
  %8209 = vmatmul.mubr.bf16.gmra.mrb[0].mxu0 %v8131
  %v8210 = vpop.f32.mrb[0].mxu0
  %v8211 = vadd.f32 0.0, %v8210
  %v8212 = vpop.f32.mrb[0].mxu0
  %v8213 = vadd.f32 0.0, %v8212
  %v8214 = vpop.f32.mrb[0].mxu0
  %v8215 = vadd.f32 0.0, %v8214
  %v8216 = vpop.f32.mrb[0].mxu0
  %v8217 = vadd.f32 0.0, %v8216
  %8218 = vdwg.mxu0
  %8219 = vmatprep.subr.bf16.mxu0 0
  %8220 = vmatpush1.bf16.msra.mxu0 %v8124
  %8221 = vmatprep.subr.bf16.mxu0 0
  %8222 = vmatpush1.bf16.msra.mxu0 0
  %8223 = vmatprep.subr.bf16.mxu0 0
  %8224 = vmatpush1.bf16.msra.mxu0 0
  %8225 = vmatprep.subr.bf16.mxu0 0
  %8226 = vmatpush1.bf16.msra.mxu0 0
  %8227 = vmatprep.subr.bf16.mxu0 0
  %8228 = vmatpush1.bf16.msra.mxu0 0
  %8229 = vmatprep.subr.bf16.mxu0 0
  %8230 = vmatpush1.bf16.msra.mxu0 0
  %8231 = vmatprep.subr.bf16.mxu0 0
  %8232 = vmatpush1.bf16.msra.mxu0 0
  %8233 = vmatprep.subr.bf16.mxu0 0
  %8234 = vmatpush1.bf16.msra.mxu0 0
  %8235 = vmatprep.subr.bf16.mxu0 0
  %8236 = vmatpush1.bf16.msra.mxu0 0
  %8237 = vmatprep.subr.bf16.mxu0 0
  %8238 = vmatpush1.bf16.msra.mxu0 0
  %8239 = vmatprep.subr.bf16.mxu0 0
  %8240 = vmatpush1.bf16.msra.mxu0 0
  %8241 = vmatprep.subr.bf16.mxu0 0
  %8242 = vmatpush1.bf16.msra.mxu0 0
  %8243 = vmatprep.subr.bf16.mxu0 0
  %8244 = vmatpush1.bf16.msra.mxu0 0
  %8245 = vmatprep.subr.bf16.mxu0 0
  %8246 = vmatpush1.bf16.msra.mxu0 0
  %8247 = vmatprep.subr.bf16.mxu0 0
  %8248 = vmatpush1.bf16.msra.mxu0 0
  %8249 = vmatprep.subr.bf16.mxu0 0
  %8250 = vmatpush1.bf16.msra.mxu0 0
  %8251 = vmatprep.mubr.bf16.mxu0 0
  %8252 = vmatmul.mubr.bf16.gmra.mrb[0].mxu0 %v8131
  %v8253 = vpop.f32.mrb[0].mxu0
  %v8254 = vadd.f32 0.0, %v8253
  %v8255 = vpop.f32.mrb[0].mxu0
  %v8256 = vpop.f32.mrb[0].mxu0
  %v8257 = vadd.f32 0.0, %v8256
  %v8258 = vpop.f32.mrb[0].mxu0
  %8259 = vdwg.mxu0
  %v8260 = vadd.f32 %v8008, %v8168
  %v8261 = vadd.f32 %v8010, %v8170
  %v8262 = vadd.f32 %v8051, %v8211
  %v8263 = vadd.f32 %v8053, %v8213
  %v8264 = vadd.f32 %v8094, %v8254
  %v8265 = vadd.f32 %v8012, %v8172
  %v8266 = vadd.f32 %v8014, %v8174
  %v8267 = vadd.f32 %v8055, %v8215
  %v8268 = vadd.f32 %v8057, %v8217
  %v8269 = vadd.f32 %v8097, %v8257
  %s8270 = scalar_lea.vmem %s1, 600
  %v8271 = vld [vmem:[%s8270] sm:$0xf]
  %v8272 = vld [vmem:[%s8270 + $0x4] sm:$0xf]
  %v8275 = vunpack.c.l.b16 %v8271
  %v8276 = vunpack.c.l.b16 %v8272
  %v8277 = vpack.c.b16 %v8276, %v8275
  %8278 = vrot.lane.b32.xlu0 %v7768, 1
  %v8279 = vpop.permute.xlu0 %8278
  %8280 = vrot.lane.b32.xlu0 %v7769, 1
  %v8281 = vpop.permute.xlu0 %8280
  %8282 = vrot.lane.b32.xlu0 %v7770, 1
  %v8283 = vpop.permute.xlu0 %8282
  %8284 = vrot.lane.b32.xlu0 %v7771, 1
  %v8285 = vpop.permute.xlu0 %8284
  %8286 = vrot.lane.b32.xlu0 %v7772, 1
  %v8287 = vpop.permute.xlu0 %8286
  %8288 = vrot.lane.b32.xlu0 %v7773, 1
  %v8289 = vpop.permute.xlu0 %8288
  %v8290 = vsel %vm614, %v8279, %v8281
  %v8291 = vsel %vm614, %v8281, %v8283
  %v8292 = vsel %vm614, %v8283, %v8285
  %v8293 = vsel %vm614, %v8285, %v8287
  %v8294 = vsel %vm614, %v8287, %v8289
  %v8301 = vsel %vm134, %v8277, 0
  %8303 = vmatprep.subr.bf16.mxu0 %v8291
  %8304 = vmatpush1.bf16.msra.mxu0 %v8290
  %8305 = vmatprep.subr.bf16.mxu0 0
  %8306 = vmatpush1.bf16.msra.mxu0 0
  %8307 = vmatprep.subr.bf16.mxu0 0
  %8308 = vmatpush1.bf16.msra.mxu0 0
  %8309 = vmatprep.subr.bf16.mxu0 0
  %8310 = vmatpush1.bf16.msra.mxu0 0
  %8311 = vmatprep.subr.bf16.mxu0 0
  %8312 = vmatpush1.bf16.msra.mxu0 0
  %8313 = vmatprep.subr.bf16.mxu0 0
  %8314 = vmatpush1.bf16.msra.mxu0 0
  %8315 = vmatprep.subr.bf16.mxu0 0
  %8316 = vmatpush1.bf16.msra.mxu0 0
  %8317 = vmatprep.subr.bf16.mxu0 0
  %8318 = vmatpush1.bf16.msra.mxu0 0
  %8319 = vmatprep.subr.bf16.mxu0 0
  %8320 = vmatpush1.bf16.msra.mxu0 0
  %8321 = vmatprep.subr.bf16.mxu0 0
  %8322 = vmatpush1.bf16.msra.mxu0 0
  %8323 = vmatprep.subr.bf16.mxu0 0
  %8324 = vmatpush1.bf16.msra.mxu0 0
  %8325 = vmatprep.subr.bf16.mxu0 0
  %8326 = vmatpush1.bf16.msra.mxu0 0
  %8327 = vmatprep.subr.bf16.mxu0 0
  %8328 = vmatpush1.bf16.msra.mxu0 0
  %8329 = vmatprep.subr.bf16.mxu0 0
  %8330 = vmatpush1.bf16.msra.mxu0 0
  %8331 = vmatprep.subr.bf16.mxu0 0
  %8332 = vmatpush1.bf16.msra.mxu0 0
  %8333 = vmatprep.subr.bf16.mxu0 0
  %8334 = vmatpush1.bf16.msra.mxu0 0
  %8335 = vmatprep.mubr.bf16.mxu0 0
  %8336 = vmatmul.mubr.bf16.gmra.mrb[0].mxu0 %v8301
  %v8337 = vpop.f32.mrb[0].mxu0
  %v8338 = vadd.f32 0.0, %v8337
  %v8339 = vpop.f32.mrb[0].mxu0
  %v8340 = vadd.f32 0.0, %v8339
  %v8341 = vpop.f32.mrb[0].mxu0
  %v8342 = vadd.f32 0.0, %v8341
  %v8343 = vpop.f32.mrb[0].mxu0
  %v8344 = vadd.f32 0.0, %v8343
  %8345 = vdwg.mxu0
  %8346 = vmatprep.subr.bf16.mxu0 %v8293
  %8347 = vmatpush1.bf16.msra.mxu0 %v8292
  %8348 = vmatprep.subr.bf16.mxu0 0
  %8349 = vmatpush1.bf16.msra.mxu0 0
  %8350 = vmatprep.subr.bf16.mxu0 0
  %8351 = vmatpush1.bf16.msra.mxu0 0
  %8352 = vmatprep.subr.bf16.mxu0 0
  %8353 = vmatpush1.bf16.msra.mxu0 0
  %8354 = vmatprep.subr.bf16.mxu0 0
  %8355 = vmatpush1.bf16.msra.mxu0 0
  %8356 = vmatprep.subr.bf16.mxu0 0
  %8357 = vmatpush1.bf16.msra.mxu0 0
  %8358 = vmatprep.subr.bf16.mxu0 0
  %8359 = vmatpush1.bf16.msra.mxu0 0
  %8360 = vmatprep.subr.bf16.mxu0 0
  %8361 = vmatpush1.bf16.msra.mxu0 0
  %8362 = vmatprep.subr.bf16.mxu0 0
  %8363 = vmatpush1.bf16.msra.mxu0 0
  %8364 = vmatprep.subr.bf16.mxu0 0
  %8365 = vmatpush1.bf16.msra.mxu0 0
  %8366 = vmatprep.subr.bf16.mxu0 0
  %8367 = vmatpush1.bf16.msra.mxu0 0
  %8368 = vmatprep.subr.bf16.mxu0 0
  %8369 = vmatpush1.bf16.msra.mxu0 0
  %8370 = vmatprep.subr.bf16.mxu0 0
  %8371 = vmatpush1.bf16.msra.mxu0 0
  %8372 = vmatprep.subr.bf16.mxu0 0
  %8373 = vmatpush1.bf16.msra.mxu0 0
  %8374 = vmatprep.subr.bf16.mxu0 0
  %8375 = vmatpush1.bf16.msra.mxu0 0
  %8376 = vmatprep.subr.bf16.mxu0 0
  %8377 = vmatpush1.bf16.msra.mxu0 0
  %8378 = vmatprep.mubr.bf16.mxu0 0
  %8379 = vmatmul.mubr.bf16.gmra.mrb[0].mxu0 %v8301
  %v8380 = vpop.f32.mrb[0].mxu0
  %v8381 = vadd.f32 0.0, %v8380
  %v8382 = vpop.f32.mrb[0].mxu0
  %v8383 = vadd.f32 0.0, %v8382
  %v8384 = vpop.f32.mrb[0].mxu0
  %v8385 = vadd.f32 0.0, %v8384
  %v8386 = vpop.f32.mrb[0].mxu0
  %v8387 = vadd.f32 0.0, %v8386
  %8388 = vdwg.mxu0
  %8389 = vmatprep.subr.bf16.mxu0 0
  %8390 = vmatpush1.bf16.msra.mxu0 %v8294
  %8391 = vmatprep.subr.bf16.mxu0 0
  %8392 = vmatpush1.bf16.msra.mxu0 0
  %8393 = vmatprep.subr.bf16.mxu0 0
  %8394 = vmatpush1.bf16.msra.mxu0 0
  %8395 = vmatprep.subr.bf16.mxu0 0
  %8396 = vmatpush1.bf16.msra.mxu0 0
  %8397 = vmatprep.subr.bf16.mxu0 0
  %8398 = vmatpush1.bf16.msra.mxu0 0
  %8399 = vmatprep.subr.bf16.mxu0 0
  %8400 = vmatpush1.bf16.msra.mxu0 0
  %8401 = vmatprep.subr.bf16.mxu0 0
  %8402 = vmatpush1.bf16.msra.mxu0 0
  %8403 = vmatprep.subr.bf16.mxu0 0
  %8404 = vmatpush1.bf16.msra.mxu0 0
  %8405 = vmatprep.subr.bf16.mxu0 0
  %8406 = vmatpush1.bf16.msra.mxu0 0
  %8407 = vmatprep.subr.bf16.mxu0 0
  %8408 = vmatpush1.bf16.msra.mxu0 0
  %8409 = vmatprep.subr.bf16.mxu0 0
  %8410 = vmatpush1.bf16.msra.mxu0 0
  %8411 = vmatprep.subr.bf16.mxu0 0
  %8412 = vmatpush1.bf16.msra.mxu0 0
  %8413 = vmatprep.subr.bf16.mxu0 0
  %8414 = vmatpush1.bf16.msra.mxu0 0
  %8415 = vmatprep.subr.bf16.mxu0 0
  %8416 = vmatpush1.bf16.msra.mxu0 0
  %8417 = vmatprep.subr.bf16.mxu0 0
  %8418 = vmatpush1.bf16.msra.mxu0 0
  %8419 = vmatprep.subr.bf16.mxu0 0
  %8420 = vmatpush1.bf16.msra.mxu0 0
  %8421 = vmatprep.mubr.bf16.mxu0 0
  %8422 = vmatmul.mubr.bf16.gmra.mrb[0].mxu0 %v8301
  %v8423 = vpop.f32.mrb[0].mxu0
  %v8424 = vadd.f32 0.0, %v8423
  %v8425 = vpop.f32.mrb[0].mxu0
  %v8426 = vpop.f32.mrb[0].mxu0
  %v8427 = vadd.f32 0.0, %v8426
  %v8428 = vpop.f32.mrb[0].mxu0
  %8429 = vdwg.mxu0
  %v8430 = vadd.f32 %v8260, %v8338
  %v8431 = vadd.f32 %v8261, %v8340
  %v8432 = vadd.f32 %v8262, %v8381
  %v8433 = vadd.f32 %v8263, %v8383
  %v8434 = vadd.f32 %v8264, %v8424
  %v8435 = vadd.f32 %v8265, %v8342
  %v8436 = vadd.f32 %v8266, %v8344
  %v8437 = vadd.f32 %v8267, %v8385
  %v8438 = vadd.f32 %v8268, %v8387
  %v8439 = vadd.f32 %v8269, %v8427
  %s8440 = scalar_lea.vmem %s1, 608
  %v8441 = vld [vmem:[%s8440] sm:$0xf]
  %v8442 = vld [vmem:[%s8440 + $0x4] sm:$0xf]
  %v8445 = vunpack.c.l.b16 %v8441
  %v8446 = vunpack.c.l.b16 %v8442
  %v8447 = vpack.c.b16 %v8446, %v8445
  %v8449 = vsel %vm134, %v8447, 0
  %8451 = vmatprep.subr.bf16.mxu0 %v7770
  %8452 = vmatpush1.bf16.msra.mxu0 %v7769
  %8453 = vmatprep.subr.bf16.mxu0 0
  %8454 = vmatpush1.bf16.msra.mxu0 0
  %8455 = vmatprep.subr.bf16.mxu0 0
  %8456 = vmatpush1.bf16.msra.mxu0 0
  %8457 = vmatprep.subr.bf16.mxu0 0
  %8458 = vmatpush1.bf16.msra.mxu0 0
  %8459 = vmatprep.subr.bf16.mxu0 0
  %8460 = vmatpush1.bf16.msra.mxu0 0
  %8461 = vmatprep.subr.bf16.mxu0 0
  %8462 = vmatpush1.bf16.msra.mxu0 0
  %8463 = vmatprep.subr.bf16.mxu0 0
  %8464 = vmatpush1.bf16.msra.mxu0 0
  %8465 = vmatprep.subr.bf16.mxu0 0
  %8466 = vmatpush1.bf16.msra.mxu0 0
  %8467 = vmatprep.subr.bf16.mxu0 0
  %8468 = vmatpush1.bf16.msra.mxu0 0
  %8469 = vmatprep.subr.bf16.mxu0 0
  %8470 = vmatpush1.bf16.msra.mxu0 0
  %8471 = vmatprep.subr.bf16.mxu0 0
  %8472 = vmatpush1.bf16.msra.mxu0 0
  %8473 = vmatprep.subr.bf16.mxu0 0
  %8474 = vmatpush1.bf16.msra.mxu0 0
  %8475 = vmatprep.subr.bf16.mxu0 0
  %8476 = vmatpush1.bf16.msra.mxu0 0
  %8477 = vmatprep.subr.bf16.mxu0 0
  %8478 = vmatpush1.bf16.msra.mxu0 0
  %8479 = vmatprep.subr.bf16.mxu0 0
  %8480 = vmatpush1.bf16.msra.mxu0 0
  %8481 = vmatprep.subr.bf16.mxu0 0
  %8482 = vmatpush1.bf16.msra.mxu0 0
  %8483 = vmatprep.mubr.bf16.mxu0 0
  %8484 = vmatmul.mubr.bf16.gmra.mrb[0].mxu0 %v8449
  %v8485 = vpop.f32.mrb[0].mxu0
  %v8486 = vadd.f32 0.0, %v8485
  %v8487 = vpop.f32.mrb[0].mxu0
  %v8488 = vadd.f32 0.0, %v8487
  %v8489 = vpop.f32.mrb[0].mxu0
  %v8490 = vadd.f32 0.0, %v8489
  %v8491 = vpop.f32.mrb[0].mxu0
  %v8492 = vadd.f32 0.0, %v8491
  %8493 = vdwg.mxu0
  %8494 = vmatprep.subr.bf16.mxu0 %v7772
  %8495 = vmatpush1.bf16.msra.mxu0 %v7771
  %8496 = vmatprep.subr.bf16.mxu0 0
  %8497 = vmatpush1.bf16.msra.mxu0 0
  %8498 = vmatprep.subr.bf16.mxu0 0
  %8499 = vmatpush1.bf16.msra.mxu0 0
  %8500 = vmatprep.subr.bf16.mxu0 0
  %8501 = vmatpush1.bf16.msra.mxu0 0
  %8502 = vmatprep.subr.bf16.mxu0 0
  %8503 = vmatpush1.bf16.msra.mxu0 0
  %8504 = vmatprep.subr.bf16.mxu0 0
  %8505 = vmatpush1.bf16.msra.mxu0 0
  %8506 = vmatprep.subr.bf16.mxu0 0
  %8507 = vmatpush1.bf16.msra.mxu0 0
  %8508 = vmatprep.subr.bf16.mxu0 0
  %8509 = vmatpush1.bf16.msra.mxu0 0
  %8510 = vmatprep.subr.bf16.mxu0 0
  %8511 = vmatpush1.bf16.msra.mxu0 0
  %8512 = vmatprep.subr.bf16.mxu0 0
  %8513 = vmatpush1.bf16.msra.mxu0 0
  %8514 = vmatprep.subr.bf16.mxu0 0
  %8515 = vmatpush1.bf16.msra.mxu0 0
  %8516 = vmatprep.subr.bf16.mxu0 0
  %8517 = vmatpush1.bf16.msra.mxu0 0
  %8518 = vmatprep.subr.bf16.mxu0 0
  %8519 = vmatpush1.bf16.msra.mxu0 0
  %8520 = vmatprep.subr.bf16.mxu0 0
  %8521 = vmatpush1.bf16.msra.mxu0 0
  %8522 = vmatprep.subr.bf16.mxu0 0
  %8523 = vmatpush1.bf16.msra.mxu0 0
  %8524 = vmatprep.subr.bf16.mxu0 0
  %8525 = vmatpush1.bf16.msra.mxu0 0
  %8526 = vmatprep.mubr.bf16.mxu0 0
  %8527 = vmatmul.mubr.bf16.gmra.mrb[0].mxu0 %v8449
  %v8528 = vpop.f32.mrb[0].mxu0
  %v8529 = vadd.f32 0.0, %v8528
  %v8530 = vpop.f32.mrb[0].mxu0
  %v8531 = vadd.f32 0.0, %v8530
  %v8532 = vpop.f32.mrb[0].mxu0
  %v8533 = vadd.f32 0.0, %v8532
  %v8534 = vpop.f32.mrb[0].mxu0
  %v8535 = vadd.f32 0.0, %v8534
  %8536 = vdwg.mxu0
  %8537 = vmatprep.subr.bf16.mxu0 0
  %8538 = vmatpush1.bf16.msra.mxu0 %v7773
  %8539 = vmatprep.subr.bf16.mxu0 0
  %8540 = vmatpush1.bf16.msra.mxu0 0
  %8541 = vmatprep.subr.bf16.mxu0 0
  %8542 = vmatpush1.bf16.msra.mxu0 0
  %8543 = vmatprep.subr.bf16.mxu0 0
  %8544 = vmatpush1.bf16.msra.mxu0 0
  %8545 = vmatprep.subr.bf16.mxu0 0
  %8546 = vmatpush1.bf16.msra.mxu0 0
  %8547 = vmatprep.subr.bf16.mxu0 0
  %8548 = vmatpush1.bf16.msra.mxu0 0
  %8549 = vmatprep.subr.bf16.mxu0 0
  %8550 = vmatpush1.bf16.msra.mxu0 0
  %8551 = vmatprep.subr.bf16.mxu0 0
  %8552 = vmatpush1.bf16.msra.mxu0 0
  %8553 = vmatprep.subr.bf16.mxu0 0
  %8554 = vmatpush1.bf16.msra.mxu0 0
  %8555 = vmatprep.subr.bf16.mxu0 0
  %8556 = vmatpush1.bf16.msra.mxu0 0
  %8557 = vmatprep.subr.bf16.mxu0 0
  %8558 = vmatpush1.bf16.msra.mxu0 0
  %8559 = vmatprep.subr.bf16.mxu0 0
  %8560 = vmatpush1.bf16.msra.mxu0 0
  %8561 = vmatprep.subr.bf16.mxu0 0
  %8562 = vmatpush1.bf16.msra.mxu0 0
  %8563 = vmatprep.subr.bf16.mxu0 0
  %8564 = vmatpush1.bf16.msra.mxu0 0
  %8565 = vmatprep.subr.bf16.mxu0 0
  %8566 = vmatpush1.bf16.msra.mxu0 0
  %8567 = vmatprep.subr.bf16.mxu0 0
  %8568 = vmatpush1.bf16.msra.mxu0 0
  %8569 = vmatprep.mubr.bf16.mxu0 0
  %8570 = vmatmul.mubr.bf16.gmra.mrb[0].mxu0 %v8449
  %v8571 = vpop.f32.mrb[0].mxu0
  %v8572 = vadd.f32 0.0, %v8571
  %v8573 = vpop.f32.mrb[0].mxu0
  %v8574 = vpop.f32.mrb[0].mxu0
  %v8575 = vadd.f32 0.0, %v8574
  %v8576 = vpop.f32.mrb[0].mxu0
  %8577 = vdwg.mxu0
  %v8578 = vadd.f32 %v8430, %v8486
  %v8579 = vadd.f32 %v8431, %v8488
  %v8580 = vadd.f32 %v8432, %v8529
  %v8581 = vadd.f32 %v8433, %v8531
  %v8582 = vadd.f32 %v8434, %v8572
  %v8583 = vadd.f32 %v8435, %v8490
  %v8584 = vadd.f32 %v8436, %v8492
  %v8585 = vadd.f32 %v8437, %v8533
  %v8586 = vadd.f32 %v8438, %v8535
  %v8587 = vadd.f32 %v8439, %v8575
  %s8588 = scalar_lea.vmem %s1, 616
  %v8589 = vld [vmem:[%s8588] sm:$0xf]
  %v8590 = vld [vmem:[%s8588 + $0x4] sm:$0xf]
  %v8593 = vunpack.c.l.b16 %v8589
  %v8594 = vunpack.c.l.b16 %v8590
  %v8595 = vpack.c.b16 %v8594, %v8593
  %8596 = vrot.lane.b32.xlu0 %v7769, 127
  %v8597 = vpop.permute.xlu0 %8596
  %8598 = vrot.lane.b32.xlu0 %v7770, 127
  %v8599 = vpop.permute.xlu0 %8598
  %8600 = vrot.lane.b32.xlu0 %v7771, 127
  %v8601 = vpop.permute.xlu0 %8600
  %8602 = vrot.lane.b32.xlu0 %v7772, 127
  %v8603 = vpop.permute.xlu0 %8602
  %8604 = vrot.lane.b32.xlu0 %v7773, 127
  %v8605 = vpop.permute.xlu0 %8604
  %v8606 = vsel %vm931, %v8597, %v8599
  %v8607 = vsel %vm931, %v8599, %v8601
  %v8608 = vsel %vm931, %v8601, %v8603
  %v8609 = vsel %vm931, %v8603, %v8605
  %v8616 = vsel %vm134, %v8595, 0
  %8618 = vmatprep.subr.bf16.mxu0 %v8607
  %8619 = vmatpush1.bf16.msra.mxu0 %v8606
  %8620 = vmatprep.subr.bf16.mxu0 0
  %8621 = vmatpush1.bf16.msra.mxu0 0
  %8622 = vmatprep.subr.bf16.mxu0 0
  %8623 = vmatpush1.bf16.msra.mxu0 0
  %8624 = vmatprep.subr.bf16.mxu0 0
  %8625 = vmatpush1.bf16.msra.mxu0 0
  %8626 = vmatprep.subr.bf16.mxu0 0
  %8627 = vmatpush1.bf16.msra.mxu0 0
  %8628 = vmatprep.subr.bf16.mxu0 0
  %8629 = vmatpush1.bf16.msra.mxu0 0
  %8630 = vmatprep.subr.bf16.mxu0 0
  %8631 = vmatpush1.bf16.msra.mxu0 0
  %8632 = vmatprep.subr.bf16.mxu0 0
  %8633 = vmatpush1.bf16.msra.mxu0 0
  %8634 = vmatprep.subr.bf16.mxu0 0
  %8635 = vmatpush1.bf16.msra.mxu0 0
  %8636 = vmatprep.subr.bf16.mxu0 0
  %8637 = vmatpush1.bf16.msra.mxu0 0
  %8638 = vmatprep.subr.bf16.mxu0 0
  %8639 = vmatpush1.bf16.msra.mxu0 0
  %8640 = vmatprep.subr.bf16.mxu0 0
  %8641 = vmatpush1.bf16.msra.mxu0 0
  %8642 = vmatprep.subr.bf16.mxu0 0
  %8643 = vmatpush1.bf16.msra.mxu0 0
  %8644 = vmatprep.subr.bf16.mxu0 0
  %8645 = vmatpush1.bf16.msra.mxu0 0
  %8646 = vmatprep.subr.bf16.mxu0 0
  %8647 = vmatpush1.bf16.msra.mxu0 0
  %8648 = vmatprep.subr.bf16.mxu0 0
  %8649 = vmatpush1.bf16.msra.mxu0 0
  %8650 = vmatprep.mubr.bf16.mxu0 0
  %8651 = vmatmul.mubr.bf16.gmra.mrb[0].mxu0 %v8616
  %v8652 = vpop.f32.mrb[0].mxu0
  %v8653 = vadd.f32 0.0, %v8652
  %v8654 = vpop.f32.mrb[0].mxu0
  %v8655 = vadd.f32 0.0, %v8654
  %v8656 = vpop.f32.mrb[0].mxu0
  %v8657 = vadd.f32 0.0, %v8656
  %v8658 = vpop.f32.mrb[0].mxu0
  %v8659 = vadd.f32 0.0, %v8658
  %8660 = vdwg.mxu0
  %8661 = vmatprep.subr.bf16.mxu0 %v8609
  %8662 = vmatpush1.bf16.msra.mxu0 %v8608
  %8663 = vmatprep.subr.bf16.mxu0 0
  %8664 = vmatpush1.bf16.msra.mxu0 0
  %8665 = vmatprep.subr.bf16.mxu0 0
  %8666 = vmatpush1.bf16.msra.mxu0 0
  %8667 = vmatprep.subr.bf16.mxu0 0
  %8668 = vmatpush1.bf16.msra.mxu0 0
  %8669 = vmatprep.subr.bf16.mxu0 0
  %8670 = vmatpush1.bf16.msra.mxu0 0
  %8671 = vmatprep.subr.bf16.mxu0 0
  %8672 = vmatpush1.bf16.msra.mxu0 0
  %8673 = vmatprep.subr.bf16.mxu0 0
  %8674 = vmatpush1.bf16.msra.mxu0 0
  %8675 = vmatprep.subr.bf16.mxu0 0
  %8676 = vmatpush1.bf16.msra.mxu0 0
  %8677 = vmatprep.subr.bf16.mxu0 0
  %8678 = vmatpush1.bf16.msra.mxu0 0
  %8679 = vmatprep.subr.bf16.mxu0 0
  %8680 = vmatpush1.bf16.msra.mxu0 0
  %8681 = vmatprep.subr.bf16.mxu0 0
  %8682 = vmatpush1.bf16.msra.mxu0 0
  %8683 = vmatprep.subr.bf16.mxu0 0
  %8684 = vmatpush1.bf16.msra.mxu0 0
  %8685 = vmatprep.subr.bf16.mxu0 0
  %8686 = vmatpush1.bf16.msra.mxu0 0
  %8687 = vmatprep.subr.bf16.mxu0 0
  %8688 = vmatpush1.bf16.msra.mxu0 0
  %8689 = vmatprep.subr.bf16.mxu0 0
  %8690 = vmatpush1.bf16.msra.mxu0 0
  %8691 = vmatprep.subr.bf16.mxu0 0
  %8692 = vmatpush1.bf16.msra.mxu0 0
  %8693 = vmatprep.mubr.bf16.mxu0 0
  %8694 = vmatmul.mubr.bf16.gmra.mrb[0].mxu0 %v8616
  %v8695 = vpop.f32.mrb[0].mxu0
  %v8696 = vadd.f32 0.0, %v8695
  %v8697 = vpop.f32.mrb[0].mxu0
  %v8698 = vadd.f32 0.0, %v8697
  %v8699 = vpop.f32.mrb[0].mxu0
  %v8700 = vadd.f32 0.0, %v8699
  %v8701 = vpop.f32.mrb[0].mxu0
  %v8702 = vadd.f32 0.0, %v8701
  %8703 = vdwg.mxu0
  %8704 = vmatprep.subr.bf16.mxu0 0
  %8705 = vmatpush1.bf16.msra.mxu0 %v8605
  %8706 = vmatprep.subr.bf16.mxu0 0
  %8707 = vmatpush1.bf16.msra.mxu0 0
  %8708 = vmatprep.subr.bf16.mxu0 0
  %8709 = vmatpush1.bf16.msra.mxu0 0
  %8710 = vmatprep.subr.bf16.mxu0 0
  %8711 = vmatpush1.bf16.msra.mxu0 0
  %8712 = vmatprep.subr.bf16.mxu0 0
  %8713 = vmatpush1.bf16.msra.mxu0 0
  %8714 = vmatprep.subr.bf16.mxu0 0
  %8715 = vmatpush1.bf16.msra.mxu0 0
  %8716 = vmatprep.subr.bf16.mxu0 0
  %8717 = vmatpush1.bf16.msra.mxu0 0
  %8718 = vmatprep.subr.bf16.mxu0 0
  %8719 = vmatpush1.bf16.msra.mxu0 0
  %8720 = vmatprep.subr.bf16.mxu0 0
  %8721 = vmatpush1.bf16.msra.mxu0 0
  %8722 = vmatprep.subr.bf16.mxu0 0
  %8723 = vmatpush1.bf16.msra.mxu0 0
  %8724 = vmatprep.subr.bf16.mxu0 0
  %8725 = vmatpush1.bf16.msra.mxu0 0
  %8726 = vmatprep.subr.bf16.mxu0 0
  %8727 = vmatpush1.bf16.msra.mxu0 0
  %8728 = vmatprep.subr.bf16.mxu0 0
  %8729 = vmatpush1.bf16.msra.mxu0 0
  %8730 = vmatprep.subr.bf16.mxu0 0
  %8731 = vmatpush1.bf16.msra.mxu0 0
  %8732 = vmatprep.subr.bf16.mxu0 0
  %8733 = vmatpush1.bf16.msra.mxu0 0
  %8734 = vmatprep.subr.bf16.mxu0 0
  %8735 = vmatpush1.bf16.msra.mxu0 0
  %8736 = vmatprep.mubr.bf16.mxu0 0
  %8737 = vmatmul.mubr.bf16.gmra.mrb[0].mxu0 %v8616
  %v8738 = vpop.f32.mrb[0].mxu0
  %v8739 = vadd.f32 0.0, %v8738
  %v8740 = vpop.f32.mrb[0].mxu0
  %v8741 = vpop.f32.mrb[0].mxu0
  %v8742 = vadd.f32 0.0, %v8741
  %v8743 = vpop.f32.mrb[0].mxu0
  %8744 = vdwg.mxu0
  %v8745 = vadd.f32 %v8578, %v8653
  %v8746 = vadd.f32 %v8579, %v8655
  %v8747 = vadd.f32 %v8580, %v8696
  %v8748 = vadd.f32 %v8581, %v8698
  %v8749 = vadd.f32 %v8582, %v8739
  %v8750 = vadd.f32 %v8583, %v8657
  %v8751 = vadd.f32 %v8584, %v8659
  %v8752 = vadd.f32 %v8585, %v8700
  %v8753 = vadd.f32 %v8586, %v8702
  %v8754 = vadd.f32 %v8587, %v8742
  %s8755 = scalar_lea.vmem %s1, 624
  %v8756 = vld [vmem:[%s8755] sm:$0xf]
  %v8757 = vld [vmem:[%s8755 + $0x4] sm:$0xf]
  %v8760 = vunpack.c.l.b16 %v8756
  %v8761 = vunpack.c.l.b16 %v8757
  %v8762 = vpack.c.b16 %v8761, %v8760
  %8763 = vrot.lane.b32.xlu0 %v7769, 112
  %v8764 = vpop.permute.xlu0 %8763
  %8765 = vrot.lane.b32.xlu0 %v7770, 112
  %v8766 = vpop.permute.xlu0 %8765
  %8767 = vrot.lane.b32.xlu0 %v7771, 112
  %v8768 = vpop.permute.xlu0 %8767
  %8769 = vrot.lane.b32.xlu0 %v7772, 112
  %v8770 = vpop.permute.xlu0 %8769
  %8771 = vrot.lane.b32.xlu0 %v7773, 112
  %v8772 = vpop.permute.xlu0 %8771
  %v8773 = vsel %vm1099, %v8764, %v8766
  %v8774 = vsel %vm1099, %v8766, %v8768
  %v8775 = vsel %vm1099, %v8768, %v8770
  %v8776 = vsel %vm1099, %v8770, %v8772
  %v8783 = vsel %vm134, %v8762, 0
  %8785 = vmatprep.subr.bf16.mxu0 %v8774
  %8786 = vmatpush1.bf16.msra.mxu0 %v8773
  %8787 = vmatprep.subr.bf16.mxu0 0
  %8788 = vmatpush1.bf16.msra.mxu0 0
  %8789 = vmatprep.subr.bf16.mxu0 0
  %8790 = vmatpush1.bf16.msra.mxu0 0
  %8791 = vmatprep.subr.bf16.mxu0 0
  %8792 = vmatpush1.bf16.msra.mxu0 0
  %8793 = vmatprep.subr.bf16.mxu0 0
  %8794 = vmatpush1.bf16.msra.mxu0 0
  %8795 = vmatprep.subr.bf16.mxu0 0
  %8796 = vmatpush1.bf16.msra.mxu0 0
  %8797 = vmatprep.subr.bf16.mxu0 0
  %8798 = vmatpush1.bf16.msra.mxu0 0
  %8799 = vmatprep.subr.bf16.mxu0 0
  %8800 = vmatpush1.bf16.msra.mxu0 0
  %8801 = vmatprep.subr.bf16.mxu0 0
  %8802 = vmatpush1.bf16.msra.mxu0 0
  %8803 = vmatprep.subr.bf16.mxu0 0
  %8804 = vmatpush1.bf16.msra.mxu0 0
  %8805 = vmatprep.subr.bf16.mxu0 0
  %8806 = vmatpush1.bf16.msra.mxu0 0
  %8807 = vmatprep.subr.bf16.mxu0 0
  %8808 = vmatpush1.bf16.msra.mxu0 0
  %8809 = vmatprep.subr.bf16.mxu0 0
  %8810 = vmatpush1.bf16.msra.mxu0 0
  %8811 = vmatprep.subr.bf16.mxu0 0
  %8812 = vmatpush1.bf16.msra.mxu0 0
  %8813 = vmatprep.subr.bf16.mxu0 0
  %8814 = vmatpush1.bf16.msra.mxu0 0
  %8815 = vmatprep.subr.bf16.mxu0 0
  %8816 = vmatpush1.bf16.msra.mxu0 0
  %8817 = vmatprep.mubr.bf16.mxu0 0
  %8818 = vmatmul.mubr.bf16.gmra.mrb[0].mxu0 %v8783
  %v8819 = vpop.f32.mrb[0].mxu0
  %v8820 = vadd.f32 0.0, %v8819
  %v8821 = vpop.f32.mrb[0].mxu0
  %v8822 = vadd.f32 0.0, %v8821
  %v8823 = vpop.f32.mrb[0].mxu0
  %v8824 = vadd.f32 0.0, %v8823
  %v8825 = vpop.f32.mrb[0].mxu0
  %v8826 = vadd.f32 0.0, %v8825
  %8827 = vdwg.mxu0
  %8828 = vmatprep.subr.bf16.mxu0 %v8776
  %8829 = vmatpush1.bf16.msra.mxu0 %v8775
  %8830 = vmatprep.subr.bf16.mxu0 0
  %8831 = vmatpush1.bf16.msra.mxu0 0
  %8832 = vmatprep.subr.bf16.mxu0 0
  %8833 = vmatpush1.bf16.msra.mxu0 0
  %8834 = vmatprep.subr.bf16.mxu0 0
  %8835 = vmatpush1.bf16.msra.mxu0 0
  %8836 = vmatprep.subr.bf16.mxu0 0
  %8837 = vmatpush1.bf16.msra.mxu0 0
  %8838 = vmatprep.subr.bf16.mxu0 0
  %8839 = vmatpush1.bf16.msra.mxu0 0
  %8840 = vmatprep.subr.bf16.mxu0 0
  %8841 = vmatpush1.bf16.msra.mxu0 0
  %8842 = vmatprep.subr.bf16.mxu0 0
  %8843 = vmatpush1.bf16.msra.mxu0 0
  %8844 = vmatprep.subr.bf16.mxu0 0
  %8845 = vmatpush1.bf16.msra.mxu0 0
  %8846 = vmatprep.subr.bf16.mxu0 0
  %8847 = vmatpush1.bf16.msra.mxu0 0
  %8848 = vmatprep.subr.bf16.mxu0 0
  %8849 = vmatpush1.bf16.msra.mxu0 0
  %8850 = vmatprep.subr.bf16.mxu0 0
  %8851 = vmatpush1.bf16.msra.mxu0 0
  %8852 = vmatprep.subr.bf16.mxu0 0
  %8853 = vmatpush1.bf16.msra.mxu0 0
  %8854 = vmatprep.subr.bf16.mxu0 0
  %8855 = vmatpush1.bf16.msra.mxu0 0
  %8856 = vmatprep.subr.bf16.mxu0 0
  %8857 = vmatpush1.bf16.msra.mxu0 0
  %8858 = vmatprep.subr.bf16.mxu0 0
  %8859 = vmatpush1.bf16.msra.mxu0 0
  %8860 = vmatprep.mubr.bf16.mxu0 0
  %8861 = vmatmul.mubr.bf16.gmra.mrb[0].mxu0 %v8783
  %v8862 = vpop.f32.mrb[0].mxu0
  %v8863 = vadd.f32 0.0, %v8862
  %v8864 = vpop.f32.mrb[0].mxu0
  %v8865 = vadd.f32 0.0, %v8864
  %v8866 = vpop.f32.mrb[0].mxu0
  %v8867 = vadd.f32 0.0, %v8866
  %v8868 = vpop.f32.mrb[0].mxu0
  %v8869 = vadd.f32 0.0, %v8868
  %8870 = vdwg.mxu0
  %8871 = vmatprep.subr.bf16.mxu0 0
  %8872 = vmatpush1.bf16.msra.mxu0 %v8772
  %8873 = vmatprep.subr.bf16.mxu0 0
  %8874 = vmatpush1.bf16.msra.mxu0 0
  %8875 = vmatprep.subr.bf16.mxu0 0
  %8876 = vmatpush1.bf16.msra.mxu0 0
  %8877 = vmatprep.subr.bf16.mxu0 0
  %8878 = vmatpush1.bf16.msra.mxu0 0
  %8879 = vmatprep.subr.bf16.mxu0 0
  %8880 = vmatpush1.bf16.msra.mxu0 0
  %8881 = vmatprep.subr.bf16.mxu0 0
  %8882 = vmatpush1.bf16.msra.mxu0 0
  %8883 = vmatprep.subr.bf16.mxu0 0
  %8884 = vmatpush1.bf16.msra.mxu0 0
  %8885 = vmatprep.subr.bf16.mxu0 0
  %8886 = vmatpush1.bf16.msra.mxu0 0
  %8887 = vmatprep.subr.bf16.mxu0 0
  %8888 = vmatpush1.bf16.msra.mxu0 0
  %8889 = vmatprep.subr.bf16.mxu0 0
  %8890 = vmatpush1.bf16.msra.mxu0 0
  %8891 = vmatprep.subr.bf16.mxu0 0
  %8892 = vmatpush1.bf16.msra.mxu0 0
  %8893 = vmatprep.subr.bf16.mxu0 0
  %8894 = vmatpush1.bf16.msra.mxu0 0
  %8895 = vmatprep.subr.bf16.mxu0 0
  %8896 = vmatpush1.bf16.msra.mxu0 0
  %8897 = vmatprep.subr.bf16.mxu0 0
  %8898 = vmatpush1.bf16.msra.mxu0 0
  %8899 = vmatprep.subr.bf16.mxu0 0
  %8900 = vmatpush1.bf16.msra.mxu0 0
  %8901 = vmatprep.subr.bf16.mxu0 0
  %8902 = vmatpush1.bf16.msra.mxu0 0
  %8903 = vmatprep.mubr.bf16.mxu0 0
  %8904 = vmatmul.mubr.bf16.gmra.mrb[0].mxu0 %v8783
  %v8905 = vpop.f32.mrb[0].mxu0
  %v8906 = vadd.f32 0.0, %v8905
  %v8907 = vpop.f32.mrb[0].mxu0
  %v8908 = vpop.f32.mrb[0].mxu0
  %v8909 = vadd.f32 0.0, %v8908
  %v8910 = vpop.f32.mrb[0].mxu0
  %8911 = vdwg.mxu0
  %v8912 = vadd.f32 %v8745, %v8820
  %v8913 = vadd.f32 %v8746, %v8822
  %v8914 = vadd.f32 %v8747, %v8863
  %v8915 = vadd.f32 %v8748, %v8865
  %v8916 = vadd.f32 %v8749, %v8906
  %v8917 = vadd.f32 %v8750, %v8824
  %v8918 = vadd.f32 %v8751, %v8826
  %v8919 = vadd.f32 %v8752, %v8867
  %v8920 = vadd.f32 %v8753, %v8869
  %v8921 = vadd.f32 %v8754, %v8909
  %s8922 = scalar_lea.vmem %s1, 632
  %v8923 = vld [vmem:[%s8922] sm:$0xf]
  %v8924 = vld [vmem:[%s8922 + $0x4] sm:$0xf]
  %v8927 = vunpack.c.l.b16 %v8923
  %v8928 = vunpack.c.l.b16 %v8924
  %v8929 = vpack.c.b16 %v8928, %v8927
  %8930 = vrot.lane.b32.xlu0 %v7769, 111
  %v8931 = vpop.permute.xlu0 %8930
  %8932 = vrot.lane.b32.xlu0 %v7770, 111
  %v8933 = vpop.permute.xlu0 %8932
  %8934 = vrot.lane.b32.xlu0 %v7771, 111
  %v8935 = vpop.permute.xlu0 %8934
  %8936 = vrot.lane.b32.xlu0 %v7772, 111
  %v8937 = vpop.permute.xlu0 %8936
  %8938 = vrot.lane.b32.xlu0 %v7773, 111
  %v8939 = vpop.permute.xlu0 %8938
  %v8940 = vsel %vm1267, %v8931, %v8933
  %v8941 = vsel %vm1267, %v8933, %v8935
  %v8942 = vsel %vm1267, %v8935, %v8937
  %v8943 = vsel %vm1267, %v8937, %v8939
  %v8950 = vsel %vm134, %v8929, 0
  %8952 = vmatprep.subr.bf16.mxu0 %v8941
  %8953 = vmatpush1.bf16.msra.mxu0 %v8940
  %8954 = vmatprep.subr.bf16.mxu0 0
  %8955 = vmatpush1.bf16.msra.mxu0 0
  %8956 = vmatprep.subr.bf16.mxu0 0
  %8957 = vmatpush1.bf16.msra.mxu0 0
  %8958 = vmatprep.subr.bf16.mxu0 0
  %8959 = vmatpush1.bf16.msra.mxu0 0
  %8960 = vmatprep.subr.bf16.mxu0 0
  %8961 = vmatpush1.bf16.msra.mxu0 0
  %8962 = vmatprep.subr.bf16.mxu0 0
  %8963 = vmatpush1.bf16.msra.mxu0 0
  %8964 = vmatprep.subr.bf16.mxu0 0
  %8965 = vmatpush1.bf16.msra.mxu0 0
  %8966 = vmatprep.subr.bf16.mxu0 0
  %8967 = vmatpush1.bf16.msra.mxu0 0
  %8968 = vmatprep.subr.bf16.mxu0 0
  %8969 = vmatpush1.bf16.msra.mxu0 0
  %8970 = vmatprep.subr.bf16.mxu0 0
  %8971 = vmatpush1.bf16.msra.mxu0 0
  %8972 = vmatprep.subr.bf16.mxu0 0
  %8973 = vmatpush1.bf16.msra.mxu0 0
  %8974 = vmatprep.subr.bf16.mxu0 0
  %8975 = vmatpush1.bf16.msra.mxu0 0
  %8976 = vmatprep.subr.bf16.mxu0 0
  %8977 = vmatpush1.bf16.msra.mxu0 0
  %8978 = vmatprep.subr.bf16.mxu0 0
  %8979 = vmatpush1.bf16.msra.mxu0 0
  %8980 = vmatprep.subr.bf16.mxu0 0
  %8981 = vmatpush1.bf16.msra.mxu0 0
  %8982 = vmatprep.subr.bf16.mxu0 0
  %8983 = vmatpush1.bf16.msra.mxu0 0
  %8984 = vmatprep.mubr.bf16.mxu0 0
  %8985 = vmatmul.mubr.bf16.gmra.mrb[0].mxu0 %v8950
  %v8986 = vpop.f32.mrb[0].mxu0
  %v8987 = vadd.f32 0.0, %v8986
  %v8988 = vpop.f32.mrb[0].mxu0
  %v8989 = vadd.f32 0.0, %v8988
  %v8990 = vpop.f32.mrb[0].mxu0
  %v8991 = vadd.f32 0.0, %v8990
  %v8992 = vpop.f32.mrb[0].mxu0
  %v8993 = vadd.f32 0.0, %v8992
  %8994 = vdwg.mxu0
  %8995 = vmatprep.subr.bf16.mxu0 %v8943
  %8996 = vmatpush1.bf16.msra.mxu0 %v8942
  %8997 = vmatprep.subr.bf16.mxu0 0
  %8998 = vmatpush1.bf16.msra.mxu0 0
  %8999 = vmatprep.subr.bf16.mxu0 0
  %9000 = vmatpush1.bf16.msra.mxu0 0
  %9001 = vmatprep.subr.bf16.mxu0 0
  %9002 = vmatpush1.bf16.msra.mxu0 0
  %9003 = vmatprep.subr.bf16.mxu0 0
  %9004 = vmatpush1.bf16.msra.mxu0 0
  %9005 = vmatprep.subr.bf16.mxu0 0
  %9006 = vmatpush1.bf16.msra.mxu0 0
  %9007 = vmatprep.subr.bf16.mxu0 0
  %9008 = vmatpush1.bf16.msra.mxu0 0
  %9009 = vmatprep.subr.bf16.mxu0 0
  %9010 = vmatpush1.bf16.msra.mxu0 0
  %9011 = vmatprep.subr.bf16.mxu0 0
  %9012 = vmatpush1.bf16.msra.mxu0 0
  %9013 = vmatprep.subr.bf16.mxu0 0
  %9014 = vmatpush1.bf16.msra.mxu0 0
  %9015 = vmatprep.subr.bf16.mxu0 0
  %9016 = vmatpush1.bf16.msra.mxu0 0
  %9017 = vmatprep.subr.bf16.mxu0 0
  %9018 = vmatpush1.bf16.msra.mxu0 0
  %9019 = vmatprep.subr.bf16.mxu0 0
  %9020 = vmatpush1.bf16.msra.mxu0 0
  %9021 = vmatprep.subr.bf16.mxu0 0
  %9022 = vmatpush1.bf16.msra.mxu0 0
  %9023 = vmatprep.subr.bf16.mxu0 0
  %9024 = vmatpush1.bf16.msra.mxu0 0
  %9025 = vmatprep.subr.bf16.mxu0 0
  %9026 = vmatpush1.bf16.msra.mxu0 0
  %9027 = vmatprep.mubr.bf16.mxu0 0
  %9028 = vmatmul.mubr.bf16.gmra.mrb[0].mxu0 %v8950
  %v9029 = vpop.f32.mrb[0].mxu0
  %v9030 = vadd.f32 0.0, %v9029
  %v9031 = vpop.f32.mrb[0].mxu0
  %v9032 = vadd.f32 0.0, %v9031
  %v9033 = vpop.f32.mrb[0].mxu0
  %v9034 = vadd.f32 0.0, %v9033
  %v9035 = vpop.f32.mrb[0].mxu0
  %v9036 = vadd.f32 0.0, %v9035
  %9037 = vdwg.mxu0
  %9038 = vmatprep.subr.bf16.mxu0 0
  %9039 = vmatpush1.bf16.msra.mxu0 %v8939
  %9040 = vmatprep.subr.bf16.mxu0 0
  %9041 = vmatpush1.bf16.msra.mxu0 0
  %9042 = vmatprep.subr.bf16.mxu0 0
  %9043 = vmatpush1.bf16.msra.mxu0 0
  %9044 = vmatprep.subr.bf16.mxu0 0
  %9045 = vmatpush1.bf16.msra.mxu0 0
  %9046 = vmatprep.subr.bf16.mxu0 0
  %9047 = vmatpush1.bf16.msra.mxu0 0
  %9048 = vmatprep.subr.bf16.mxu0 0
  %9049 = vmatpush1.bf16.msra.mxu0 0
  %9050 = vmatprep.subr.bf16.mxu0 0
  %9051 = vmatpush1.bf16.msra.mxu0 0
  %9052 = vmatprep.subr.bf16.mxu0 0
  %9053 = vmatpush1.bf16.msra.mxu0 0
  %9054 = vmatprep.subr.bf16.mxu0 0
  %9055 = vmatpush1.bf16.msra.mxu0 0
  %9056 = vmatprep.subr.bf16.mxu0 0
  %9057 = vmatpush1.bf16.msra.mxu0 0
  %9058 = vmatprep.subr.bf16.mxu0 0
  %9059 = vmatpush1.bf16.msra.mxu0 0
  %9060 = vmatprep.subr.bf16.mxu0 0
  %9061 = vmatpush1.bf16.msra.mxu0 0
  %9062 = vmatprep.subr.bf16.mxu0 0
  %9063 = vmatpush1.bf16.msra.mxu0 0
  %9064 = vmatprep.subr.bf16.mxu0 0
  %9065 = vmatpush1.bf16.msra.mxu0 0
  %9066 = vmatprep.subr.bf16.mxu0 0
  %9067 = vmatpush1.bf16.msra.mxu0 0
  %9068 = vmatprep.subr.bf16.mxu0 0
  %9069 = vmatpush1.bf16.msra.mxu0 0
  %9070 = vmatprep.mubr.bf16.mxu0 0
  %9071 = vmatmul.mubr.bf16.gmra.mrb[0].mxu0 %v8950
  %v9072 = vpop.f32.mrb[0].mxu0
  %v9073 = vadd.f32 0.0, %v9072
  %v9074 = vpop.f32.mrb[0].mxu0
  %v9075 = vpop.f32.mrb[0].mxu0
  %v9076 = vadd.f32 0.0, %v9075
  %v9077 = vpop.f32.mrb[0].mxu0
  %9078 = vdwg.mxu0
  %v9079 = vadd.f32 %v8912, %v8987
  %v9080 = vadd.f32 %v8913, %v8989
  %v9081 = vadd.f32 %v8914, %v9030
  %v9082 = vadd.f32 %v8915, %v9032
  %v9083 = vadd.f32 %v8916, %v9073
  %v9084 = vadd.f32 %v8917, %v8991
  %v9085 = vadd.f32 %v8918, %v8993
  %v9086 = vadd.f32 %v8919, %v9034
  %v9087 = vadd.f32 %v8920, %v9036
  %v9088 = vadd.f32 %v8921, %v9076
  %s9089 = scalar_lea.vmem %s1, 640
  %v9090 = vld [vmem:[%s9089] sm:$0xf]
  %v9091 = vld [vmem:[%s9089 + $0x4] sm:$0xf]
  %v9094 = vunpack.c.l.b16 %v9090
  %v9095 = vunpack.c.l.b16 %v9091
  %v9096 = vpack.c.b16 %v9095, %v9094
  %9097 = vrot.lane.b32.xlu0 %v7769, 110
  %v9098 = vpop.permute.xlu0 %9097
  %9099 = vrot.lane.b32.xlu0 %v7770, 110
  %v9100 = vpop.permute.xlu0 %9099
  %9101 = vrot.lane.b32.xlu0 %v7771, 110
  %v9102 = vpop.permute.xlu0 %9101
  %9103 = vrot.lane.b32.xlu0 %v7772, 110
  %v9104 = vpop.permute.xlu0 %9103
  %9105 = vrot.lane.b32.xlu0 %v7773, 110
  %v9106 = vpop.permute.xlu0 %9105
  %v9107 = vsel %vm1435, %v9098, %v9100
  %v9108 = vsel %vm1435, %v9100, %v9102
  %v9109 = vsel %vm1435, %v9102, %v9104
  %v9110 = vsel %vm1435, %v9104, %v9106
  %v9117 = vsel %vm134, %v9096, 0
  %9119 = vmatprep.subr.bf16.mxu0 %v9108
  %9120 = vmatpush1.bf16.msra.mxu0 %v9107
  %9121 = vmatprep.subr.bf16.mxu0 0
  %9122 = vmatpush1.bf16.msra.mxu0 0
  %9123 = vmatprep.subr.bf16.mxu0 0
  %9124 = vmatpush1.bf16.msra.mxu0 0
  %9125 = vmatprep.subr.bf16.mxu0 0
  %9126 = vmatpush1.bf16.msra.mxu0 0
  %9127 = vmatprep.subr.bf16.mxu0 0
  %9128 = vmatpush1.bf16.msra.mxu0 0
  %9129 = vmatprep.subr.bf16.mxu0 0
  %9130 = vmatpush1.bf16.msra.mxu0 0
  %9131 = vmatprep.subr.bf16.mxu0 0
  %9132 = vmatpush1.bf16.msra.mxu0 0
  %9133 = vmatprep.subr.bf16.mxu0 0
  %9134 = vmatpush1.bf16.msra.mxu0 0
  %9135 = vmatprep.subr.bf16.mxu0 0
  %9136 = vmatpush1.bf16.msra.mxu0 0
  %9137 = vmatprep.subr.bf16.mxu0 0
  %9138 = vmatpush1.bf16.msra.mxu0 0
  %9139 = vmatprep.subr.bf16.mxu0 0
  %9140 = vmatpush1.bf16.msra.mxu0 0
  %9141 = vmatprep.subr.bf16.mxu0 0
  %9142 = vmatpush1.bf16.msra.mxu0 0
  %9143 = vmatprep.subr.bf16.mxu0 0
  %9144 = vmatpush1.bf16.msra.mxu0 0
  %9145 = vmatprep.subr.bf16.mxu0 0
  %9146 = vmatpush1.bf16.msra.mxu0 0
  %9147 = vmatprep.subr.bf16.mxu0 0
  %9148 = vmatpush1.bf16.msra.mxu0 0
  %9149 = vmatprep.subr.bf16.mxu0 0
  %9150 = vmatpush1.bf16.msra.mxu0 0
  %9151 = vmatprep.mubr.bf16.mxu0 0
  %9152 = vmatmul.mubr.bf16.gmra.mrb[0].mxu0 %v9117
  %v9153 = vpop.f32.mrb[0].mxu0
  %v9154 = vadd.f32 0.0, %v9153
  %v9155 = vpop.f32.mrb[0].mxu0
  %v9156 = vadd.f32 0.0, %v9155
  %v9157 = vpop.f32.mrb[0].mxu0
  %v9158 = vadd.f32 0.0, %v9157
  %v9159 = vpop.f32.mrb[0].mxu0
  %v9160 = vadd.f32 0.0, %v9159
  %9161 = vdwg.mxu0
  %9162 = vmatprep.subr.bf16.mxu0 %v9110
  %9163 = vmatpush1.bf16.msra.mxu0 %v9109
  %9164 = vmatprep.subr.bf16.mxu0 0
  %9165 = vmatpush1.bf16.msra.mxu0 0
  %9166 = vmatprep.subr.bf16.mxu0 0
  %9167 = vmatpush1.bf16.msra.mxu0 0
  %9168 = vmatprep.subr.bf16.mxu0 0
  %9169 = vmatpush1.bf16.msra.mxu0 0
  %9170 = vmatprep.subr.bf16.mxu0 0
  %9171 = vmatpush1.bf16.msra.mxu0 0
  %9172 = vmatprep.subr.bf16.mxu0 0
  %9173 = vmatpush1.bf16.msra.mxu0 0
  %9174 = vmatprep.subr.bf16.mxu0 0
  %9175 = vmatpush1.bf16.msra.mxu0 0
  %9176 = vmatprep.subr.bf16.mxu0 0
  %9177 = vmatpush1.bf16.msra.mxu0 0
  %9178 = vmatprep.subr.bf16.mxu0 0
  %9179 = vmatpush1.bf16.msra.mxu0 0
  %9180 = vmatprep.subr.bf16.mxu0 0
  %9181 = vmatpush1.bf16.msra.mxu0 0
  %9182 = vmatprep.subr.bf16.mxu0 0
  %9183 = vmatpush1.bf16.msra.mxu0 0
  %9184 = vmatprep.subr.bf16.mxu0 0
  %9185 = vmatpush1.bf16.msra.mxu0 0
  %9186 = vmatprep.subr.bf16.mxu0 0
  %9187 = vmatpush1.bf16.msra.mxu0 0
  %9188 = vmatprep.subr.bf16.mxu0 0
  %9189 = vmatpush1.bf16.msra.mxu0 0
  %9190 = vmatprep.subr.bf16.mxu0 0
  %9191 = vmatpush1.bf16.msra.mxu0 0
  %9192 = vmatprep.subr.bf16.mxu0 0
  %9193 = vmatpush1.bf16.msra.mxu0 0
  %9194 = vmatprep.mubr.bf16.mxu0 0
  %9195 = vmatmul.mubr.bf16.gmra.mrb[0].mxu0 %v9117
  %v9196 = vpop.f32.mrb[0].mxu0
  %v9197 = vadd.f32 0.0, %v9196
  %v9198 = vpop.f32.mrb[0].mxu0
  %v9199 = vadd.f32 0.0, %v9198
  %v9200 = vpop.f32.mrb[0].mxu0
  %v9201 = vadd.f32 0.0, %v9200
  %v9202 = vpop.f32.mrb[0].mxu0
  %v9203 = vadd.f32 0.0, %v9202
  %9204 = vdwg.mxu0
  %9205 = vmatprep.subr.bf16.mxu0 0
  %9206 = vmatpush1.bf16.msra.mxu0 %v9106
  %9207 = vmatprep.subr.bf16.mxu0 0
  %9208 = vmatpush1.bf16.msra.mxu0 0
  %9209 = vmatprep.subr.bf16.mxu0 0
  %9210 = vmatpush1.bf16.msra.mxu0 0
  %9211 = vmatprep.subr.bf16.mxu0 0
  %9212 = vmatpush1.bf16.msra.mxu0 0
  %9213 = vmatprep.subr.bf16.mxu0 0
  %9214 = vmatpush1.bf16.msra.mxu0 0
  %9215 = vmatprep.subr.bf16.mxu0 0
  %9216 = vmatpush1.bf16.msra.mxu0 0
  %9217 = vmatprep.subr.bf16.mxu0 0
  %9218 = vmatpush1.bf16.msra.mxu0 0
  %9219 = vmatprep.subr.bf16.mxu0 0
  %9220 = vmatpush1.bf16.msra.mxu0 0
  %9221 = vmatprep.subr.bf16.mxu0 0
  %9222 = vmatpush1.bf16.msra.mxu0 0
  %9223 = vmatprep.subr.bf16.mxu0 0
  %9224 = vmatpush1.bf16.msra.mxu0 0
  %9225 = vmatprep.subr.bf16.mxu0 0
  %9226 = vmatpush1.bf16.msra.mxu0 0
  %9227 = vmatprep.subr.bf16.mxu0 0
  %9228 = vmatpush1.bf16.msra.mxu0 0
  %9229 = vmatprep.subr.bf16.mxu0 0
  %9230 = vmatpush1.bf16.msra.mxu0 0
  %9231 = vmatprep.subr.bf16.mxu0 0
  %9232 = vmatpush1.bf16.msra.mxu0 0
  %9233 = vmatprep.subr.bf16.mxu0 0
  %9234 = vmatpush1.bf16.msra.mxu0 0
  %9235 = vmatprep.subr.bf16.mxu0 0
  %9236 = vmatpush1.bf16.msra.mxu0 0
  %9237 = vmatprep.mubr.bf16.mxu0 0
  %9238 = vmatmul.mubr.bf16.gmra.mrb[0].mxu0 %v9117
  %v9239 = vpop.f32.mrb[0].mxu0
  %v9240 = vadd.f32 0.0, %v9239
  %v9241 = vpop.f32.mrb[0].mxu0
  %v9242 = vpop.f32.mrb[0].mxu0
  %v9243 = vadd.f32 0.0, %v9242
  %v9244 = vpop.f32.mrb[0].mxu0
  %9245 = vdwg.mxu0
  %v9246 = vadd.f32 %v9079, %v9154
  %v9247 = vadd.f32 %v9080, %v9156
  %v9248 = vadd.f32 %v9081, %v9197
  %v9249 = vadd.f32 %v9082, %v9199
  %v9250 = vadd.f32 %v9083, %v9240
  %v9251 = vadd.f32 %v9084, %v9158
  %v9252 = vadd.f32 %v9085, %v9160
  %v9253 = vadd.f32 %v9086, %v9201
  %v9254 = vadd.f32 %v9087, %v9203
  %v9255 = vadd.f32 %v9088, %v9243
  %v9256 = vld [vmem:[%s2] sm:$0xff]
  %v9257 = vld [vmem:[%s2 + $0x8] sm:$0xff]
  %9259 = vset.pattern.permute.xlu0 8
  %9260 = vperm.xlu0 %9259, %v9256
  %v9261 = vpop.permute.xlu0 %9260
  %9264 = vset.pattern.permute.xlu0 8
  %9265 = vperm.xlu0 %9264, %v9257
  %v9266 = vpop.permute.xlu0 %9265
  %v9268 = vadd.f32 %v9246, %v9261
  %v9269 = vadd.f32 %v9247, %v9261
  %v9270 = vadd.f32 %v9248, %v9261
  %v9271 = vadd.f32 %v9249, %v9261
  %v9272 = vadd.f32 %v9250, %v9261
  %v9273 = vadd.f32 %v9251, %v9266
  %v9274 = vadd.f32 %v9252, %v9266
  %v9275 = vadd.f32 %v9253, %v9266
  %v9276 = vadd.f32 %v9254, %v9266
  %v9277 = vadd.f32 %v9255, %v9266
  %v9278 = vmul.f32 %v9268, %v1611
  %v9279 = vmul.f32 %v9269, %v1615
  %v9280 = vmul.f32 %v9270, %v1619
  %v9281 = vmul.f32 %v9271, %v1623
  %v9282 = vmul.f32 %v9272, %v1627
  %v9283 = vmul.f32 %v9273, %v1611
  %v9284 = vmul.f32 %v9274, %v1615
  %v9285 = vmul.f32 %v9275, %v1619
  %v9286 = vmul.f32 %v9276, %v1623
  %v9287 = vmul.f32 %v9277, %v1627
  %v9288 = vmax.f32 %v9278, 0.0
  %v9289 = vmax.f32 %v9279, 0.0
  %v9290 = vmax.f32 %v9280, 0.0
  %v9291 = vmax.f32 %v9281, 0.0
  %v9292 = vmax.f32 %v9282, 0.0
  %v9293 = vmax.f32 %v9283, 0.0
  %v9294 = vmax.f32 %v9284, 0.0
  %v9295 = vmax.f32 %v9285, 0.0
  %v9296 = vmax.f32 %v9286, 0.0
  %v9297 = vmax.f32 %v9287, 0.0
  %v9298 = vpack.c.bf16 %v9293, %v9288
  %v9299 = vpack.c.bf16 %v9294, %v9289
  %v9300 = vpack.c.bf16 %v9295, %v9290
  %v9301 = vpack.c.bf16 %v9296, %v9291
  %v9302 = vpack.c.bf16 %v9297, %v9292
  %9303 = vst [vmem:[#allocation2 + $0x8] sm:$0xff] %v9298
  %9304 = vst [vmem:[#allocation2 + $0x10] sm:$0xff] %v9299
  %9305 = vst [vmem:[#allocation2 + $0x18] sm:$0xff] %v9300
  %9306 = vst [vmem:[#allocation2 + $0x20] sm:$0xff] %v9301
  %9307 = vst.msk [vmem:[#allocation2 + $0x28] sm:$0xff] %vm87, %v9302
  %v9308 = vld [vmem:[#allocation2] sm:$0xff]
  %v9309 = vld [vmem:[#allocation2 + $0x8] sm:$0xff]
  %v9310 = vld [vmem:[#allocation2 + $0x10] sm:$0xff]
  %v9311 = vld [vmem:[#allocation2 + $0x18] sm:$0xff]
  %v9312 = vld [vmem:[#allocation2 + $0x20] sm:$0xff]
  %v9313 = vld [vmem:[#allocation2 + $0x28] sm:$0xff]
  %s9314 = scalar_lea.vmem %s1, 648
  %v9315 = vld [vmem:[%s9314] sm:$0xf]
  %v9316 = vld [vmem:[%s9314 + $0x4] sm:$0xf]
  %s9317 = scalar_lea.vmem %s1, 656
  %v9318 = vld [vmem:[%s9317] sm:$0xf]
  %v9319 = vld [vmem:[%s9317 + $0x4] sm:$0xf]
  %v9322 = vunpack.c.l.b16 %v9318
  %v9323 = vunpack.c.l.b16 %v9319
  %v9324 = vpack.c.b16 %v9323, %v9322
  %9331 = vrot.lane.b32.xlu0 %v9308, 17
  %v9332 = vpop.permute.xlu0 %9331
  %9333 = vrot.lane.b32.xlu0 %v9309, 17
  %v9334 = vpop.permute.xlu0 %9333
  %9335 = vrot.lane.b32.xlu0 %v9310, 17
  %v9336 = vpop.permute.xlu0 %9335
  %9337 = vrot.lane.b32.xlu0 %v9311, 17
  %v9338 = vpop.permute.xlu0 %9337
  %9339 = vrot.lane.b32.xlu0 %v9312, 17
  %v9340 = vpop.permute.xlu0 %9339
  %9341 = vrot.lane.b32.xlu0 %v9313, 17
  %v9342 = vpop.permute.xlu0 %9341
  %v9343 = vsel %vm123, %v9332, %v9334
  %v9344 = vsel %vm123, %v9334, %v9336
  %v9345 = vsel %vm123, %v9336, %v9338
  %v9346 = vsel %vm123, %v9338, %v9340
  %v9347 = vsel %vm123, %v9340, %v9342
  %v9354 = vsel %vm134, %v9324, 0
  %9356 = vmatprep.subr.bf16.mxu0 %v9344
  %9357 = vmatpush1.bf16.msra.mxu0 %v9343
  %9358 = vmatprep.subr.bf16.mxu0 0
  %9359 = vmatpush1.bf16.msra.mxu0 0
  %9360 = vmatprep.subr.bf16.mxu0 0
  %9361 = vmatpush1.bf16.msra.mxu0 0
  %9362 = vmatprep.subr.bf16.mxu0 0
  %9363 = vmatpush1.bf16.msra.mxu0 0
  %9364 = vmatprep.subr.bf16.mxu0 0
  %9365 = vmatpush1.bf16.msra.mxu0 0
  %9366 = vmatprep.subr.bf16.mxu0 0
  %9367 = vmatpush1.bf16.msra.mxu0 0
  %9368 = vmatprep.subr.bf16.mxu0 0
  %9369 = vmatpush1.bf16.msra.mxu0 0
  %9370 = vmatprep.subr.bf16.mxu0 0
  %9371 = vmatpush1.bf16.msra.mxu0 0
  %9372 = vmatprep.subr.bf16.mxu0 0
  %9373 = vmatpush1.bf16.msra.mxu0 0
  %9374 = vmatprep.subr.bf16.mxu0 0
  %9375 = vmatpush1.bf16.msra.mxu0 0
  %9376 = vmatprep.subr.bf16.mxu0 0
  %9377 = vmatpush1.bf16.msra.mxu0 0
  %9378 = vmatprep.subr.bf16.mxu0 0
  %9379 = vmatpush1.bf16.msra.mxu0 0
  %9380 = vmatprep.subr.bf16.mxu0 0
  %9381 = vmatpush1.bf16.msra.mxu0 0
  %9382 = vmatprep.subr.bf16.mxu0 0
  %9383 = vmatpush1.bf16.msra.mxu0 0
  %9384 = vmatprep.subr.bf16.mxu0 0
  %9385 = vmatpush1.bf16.msra.mxu0 0
  %9386 = vmatprep.subr.bf16.mxu0 0
  %9387 = vmatpush1.bf16.msra.mxu0 0
  %9388 = vmatprep.mubr.bf16.mxu0 0
  %9389 = vmatmul.mubr.bf16.gmra.mrb[0].mxu0 %v9354
  %v9390 = vpop.f32.mrb[0].mxu0
  %v9391 = vadd.f32 0.0, %v9390
  %v9392 = vpop.f32.mrb[0].mxu0
  %v9393 = vadd.f32 0.0, %v9392
  %v9394 = vpop.f32.mrb[0].mxu0
  %v9395 = vadd.f32 0.0, %v9394
  %v9396 = vpop.f32.mrb[0].mxu0
  %v9397 = vadd.f32 0.0, %v9396
  %9398 = vdwg.mxu0
  %9399 = vmatprep.subr.bf16.mxu0 %v9346
  %9400 = vmatpush1.bf16.msra.mxu0 %v9345
  %9401 = vmatprep.subr.bf16.mxu0 0
  %9402 = vmatpush1.bf16.msra.mxu0 0
  %9403 = vmatprep.subr.bf16.mxu0 0
  %9404 = vmatpush1.bf16.msra.mxu0 0
  %9405 = vmatprep.subr.bf16.mxu0 0
  %9406 = vmatpush1.bf16.msra.mxu0 0
  %9407 = vmatprep.subr.bf16.mxu0 0
  %9408 = vmatpush1.bf16.msra.mxu0 0
  %9409 = vmatprep.subr.bf16.mxu0 0
  %9410 = vmatpush1.bf16.msra.mxu0 0
  %9411 = vmatprep.subr.bf16.mxu0 0
  %9412 = vmatpush1.bf16.msra.mxu0 0
  %9413 = vmatprep.subr.bf16.mxu0 0
  %9414 = vmatpush1.bf16.msra.mxu0 0
  %9415 = vmatprep.subr.bf16.mxu0 0
  %9416 = vmatpush1.bf16.msra.mxu0 0
  %9417 = vmatprep.subr.bf16.mxu0 0
  %9418 = vmatpush1.bf16.msra.mxu0 0
  %9419 = vmatprep.subr.bf16.mxu0 0
  %9420 = vmatpush1.bf16.msra.mxu0 0
  %9421 = vmatprep.subr.bf16.mxu0 0
  %9422 = vmatpush1.bf16.msra.mxu0 0
  %9423 = vmatprep.subr.bf16.mxu0 0
  %9424 = vmatpush1.bf16.msra.mxu0 0
  %9425 = vmatprep.subr.bf16.mxu0 0
  %9426 = vmatpush1.bf16.msra.mxu0 0
  %9427 = vmatprep.subr.bf16.mxu0 0
  %9428 = vmatpush1.bf16.msra.mxu0 0
  %9429 = vmatprep.subr.bf16.mxu0 0
  %9430 = vmatpush1.bf16.msra.mxu0 0
  %9431 = vmatprep.mubr.bf16.mxu0 0
  %9432 = vmatmul.mubr.bf16.gmra.mrb[0].mxu0 %v9354
  %v9433 = vpop.f32.mrb[0].mxu0
  %v9434 = vadd.f32 0.0, %v9433
  %v9435 = vpop.f32.mrb[0].mxu0
  %v9436 = vadd.f32 0.0, %v9435
  %v9437 = vpop.f32.mrb[0].mxu0
  %v9438 = vadd.f32 0.0, %v9437
  %v9439 = vpop.f32.mrb[0].mxu0
  %v9440 = vadd.f32 0.0, %v9439
  %9441 = vdwg.mxu0
  %9442 = vmatprep.subr.bf16.mxu0 0
  %9443 = vmatpush1.bf16.msra.mxu0 %v9347
  %9444 = vmatprep.subr.bf16.mxu0 0
  %9445 = vmatpush1.bf16.msra.mxu0 0
  %9446 = vmatprep.subr.bf16.mxu0 0
  %9447 = vmatpush1.bf16.msra.mxu0 0
  %9448 = vmatprep.subr.bf16.mxu0 0
  %9449 = vmatpush1.bf16.msra.mxu0 0
  %9450 = vmatprep.subr.bf16.mxu0 0
  %9451 = vmatpush1.bf16.msra.mxu0 0
  %9452 = vmatprep.subr.bf16.mxu0 0
  %9453 = vmatpush1.bf16.msra.mxu0 0
  %9454 = vmatprep.subr.bf16.mxu0 0
  %9455 = vmatpush1.bf16.msra.mxu0 0
  %9456 = vmatprep.subr.bf16.mxu0 0
  %9457 = vmatpush1.bf16.msra.mxu0 0
  %9458 = vmatprep.subr.bf16.mxu0 0
  %9459 = vmatpush1.bf16.msra.mxu0 0
  %9460 = vmatprep.subr.bf16.mxu0 0
  %9461 = vmatpush1.bf16.msra.mxu0 0
  %9462 = vmatprep.subr.bf16.mxu0 0
  %9463 = vmatpush1.bf16.msra.mxu0 0
  %9464 = vmatprep.subr.bf16.mxu0 0
  %9465 = vmatpush1.bf16.msra.mxu0 0
  %9466 = vmatprep.subr.bf16.mxu0 0
  %9467 = vmatpush1.bf16.msra.mxu0 0
  %9468 = vmatprep.subr.bf16.mxu0 0
  %9469 = vmatpush1.bf16.msra.mxu0 0
  %9470 = vmatprep.subr.bf16.mxu0 0
  %9471 = vmatpush1.bf16.msra.mxu0 0
  %9472 = vmatprep.subr.bf16.mxu0 0
  %9473 = vmatpush1.bf16.msra.mxu0 0
  %9474 = vmatprep.mubr.bf16.mxu0 0
  %9475 = vmatmul.mubr.bf16.gmra.mrb[0].mxu0 %v9354
  %v9476 = vpop.f32.mrb[0].mxu0
  %v9477 = vadd.f32 0.0, %v9476
  %v9478 = vpop.f32.mrb[0].mxu0
  %v9479 = vpop.f32.mrb[0].mxu0
  %v9480 = vadd.f32 0.0, %v9479
  %v9481 = vpop.f32.mrb[0].mxu0
  %9482 = vdwg.mxu0
  %v9485 = vunpack.c.l.b16 %v9315
  %v9486 = vunpack.c.l.b16 %v9316
  %v9487 = vpack.c.b16 %v9486, %v9485
  %9488 = vrot.lane.b32.xlu0 %v9308, 18
  %v9489 = vpop.permute.xlu0 %9488
  %9490 = vrot.lane.b32.xlu0 %v9309, 18
  %v9491 = vpop.permute.xlu0 %9490
  %9492 = vrot.lane.b32.xlu0 %v9310, 18
  %v9493 = vpop.permute.xlu0 %9492
  %9494 = vrot.lane.b32.xlu0 %v9311, 18
  %v9495 = vpop.permute.xlu0 %9494
  %9496 = vrot.lane.b32.xlu0 %v9312, 18
  %v9497 = vpop.permute.xlu0 %9496
  %9498 = vrot.lane.b32.xlu0 %v9313, 18
  %v9499 = vpop.permute.xlu0 %9498
  %v9500 = vsel %vm282, %v9489, %v9491
  %v9501 = vsel %vm282, %v9491, %v9493
  %v9502 = vsel %vm282, %v9493, %v9495
  %v9503 = vsel %vm282, %v9495, %v9497
  %v9504 = vsel %vm282, %v9497, %v9499
  %v9511 = vsel %vm134, %v9487, 0
  %9513 = vmatprep.subr.bf16.mxu0 %v9501
  %9514 = vmatpush1.bf16.msra.mxu0 %v9500
  %9515 = vmatprep.subr.bf16.mxu0 0
  %9516 = vmatpush1.bf16.msra.mxu0 0
  %9517 = vmatprep.subr.bf16.mxu0 0
  %9518 = vmatpush1.bf16.msra.mxu0 0
  %9519 = vmatprep.subr.bf16.mxu0 0
  %9520 = vmatpush1.bf16.msra.mxu0 0
  %9521 = vmatprep.subr.bf16.mxu0 0
  %9522 = vmatpush1.bf16.msra.mxu0 0
  %9523 = vmatprep.subr.bf16.mxu0 0
  %9524 = vmatpush1.bf16.msra.mxu0 0
  %9525 = vmatprep.subr.bf16.mxu0 0
  %9526 = vmatpush1.bf16.msra.mxu0 0
  %9527 = vmatprep.subr.bf16.mxu0 0
  %9528 = vmatpush1.bf16.msra.mxu0 0
  %9529 = vmatprep.subr.bf16.mxu0 0
  %9530 = vmatpush1.bf16.msra.mxu0 0
  %9531 = vmatprep.subr.bf16.mxu0 0
  %9532 = vmatpush1.bf16.msra.mxu0 0
  %9533 = vmatprep.subr.bf16.mxu0 0
  %9534 = vmatpush1.bf16.msra.mxu0 0
  %9535 = vmatprep.subr.bf16.mxu0 0
  %9536 = vmatpush1.bf16.msra.mxu0 0
  %9537 = vmatprep.subr.bf16.mxu0 0
  %9538 = vmatpush1.bf16.msra.mxu0 0
  %9539 = vmatprep.subr.bf16.mxu0 0
  %9540 = vmatpush1.bf16.msra.mxu0 0
  %9541 = vmatprep.subr.bf16.mxu0 0
  %9542 = vmatpush1.bf16.msra.mxu0 0
  %9543 = vmatprep.subr.bf16.mxu0 0
  %9544 = vmatpush1.bf16.msra.mxu0 0
  %9545 = vmatprep.mubr.bf16.mxu0 0
  %9546 = vmatmul.mubr.bf16.gmra.mrb[0].mxu0 %v9511
  %v9547 = vpop.f32.mrb[0].mxu0
  %v9548 = vadd.f32 %v9391, %v9547
  %v9549 = vpop.f32.mrb[0].mxu0
  %v9550 = vadd.f32 %v9393, %v9549
  %v9551 = vpop.f32.mrb[0].mxu0
  %v9552 = vadd.f32 %v9395, %v9551
  %v9553 = vpop.f32.mrb[0].mxu0
  %v9554 = vadd.f32 %v9397, %v9553
  %9555 = vdwg.mxu0
  %9556 = vmatprep.subr.bf16.mxu0 %v9503
  %9557 = vmatpush1.bf16.msra.mxu0 %v9502
  %9558 = vmatprep.subr.bf16.mxu0 0
  %9559 = vmatpush1.bf16.msra.mxu0 0
  %9560 = vmatprep.subr.bf16.mxu0 0
  %9561 = vmatpush1.bf16.msra.mxu0 0
  %9562 = vmatprep.subr.bf16.mxu0 0
  %9563 = vmatpush1.bf16.msra.mxu0 0
  %9564 = vmatprep.subr.bf16.mxu0 0
  %9565 = vmatpush1.bf16.msra.mxu0 0
  %9566 = vmatprep.subr.bf16.mxu0 0
  %9567 = vmatpush1.bf16.msra.mxu0 0
  %9568 = vmatprep.subr.bf16.mxu0 0
  %9569 = vmatpush1.bf16.msra.mxu0 0
  %9570 = vmatprep.subr.bf16.mxu0 0
  %9571 = vmatpush1.bf16.msra.mxu0 0
  %9572 = vmatprep.subr.bf16.mxu0 0
  %9573 = vmatpush1.bf16.msra.mxu0 0
  %9574 = vmatprep.subr.bf16.mxu0 0
  %9575 = vmatpush1.bf16.msra.mxu0 0
  %9576 = vmatprep.subr.bf16.mxu0 0
  %9577 = vmatpush1.bf16.msra.mxu0 0
  %9578 = vmatprep.subr.bf16.mxu0 0
  %9579 = vmatpush1.bf16.msra.mxu0 0
  %9580 = vmatprep.subr.bf16.mxu0 0
  %9581 = vmatpush1.bf16.msra.mxu0 0
  %9582 = vmatprep.subr.bf16.mxu0 0
  %9583 = vmatpush1.bf16.msra.mxu0 0
  %9584 = vmatprep.subr.bf16.mxu0 0
  %9585 = vmatpush1.bf16.msra.mxu0 0
  %9586 = vmatprep.subr.bf16.mxu0 0
  %9587 = vmatpush1.bf16.msra.mxu0 0
  %9588 = vmatprep.mubr.bf16.mxu0 0
  %9589 = vmatmul.mubr.bf16.gmra.mrb[0].mxu0 %v9511
  %v9590 = vpop.f32.mrb[0].mxu0
  %v9591 = vadd.f32 %v9434, %v9590
  %v9592 = vpop.f32.mrb[0].mxu0
  %v9593 = vadd.f32 %v9436, %v9592
  %v9594 = vpop.f32.mrb[0].mxu0
  %v9595 = vadd.f32 %v9438, %v9594
  %v9596 = vpop.f32.mrb[0].mxu0
  %v9597 = vadd.f32 %v9440, %v9596
  %9598 = vdwg.mxu0
  %9599 = vmatprep.subr.bf16.mxu0 0
  %9600 = vmatpush1.bf16.msra.mxu0 %v9504
  %9601 = vmatprep.subr.bf16.mxu0 0
  %9602 = vmatpush1.bf16.msra.mxu0 0
  %9603 = vmatprep.subr.bf16.mxu0 0
  %9604 = vmatpush1.bf16.msra.mxu0 0
  %9605 = vmatprep.subr.bf16.mxu0 0
  %9606 = vmatpush1.bf16.msra.mxu0 0
  %9607 = vmatprep.subr.bf16.mxu0 0
  %9608 = vmatpush1.bf16.msra.mxu0 0
  %9609 = vmatprep.subr.bf16.mxu0 0
  %9610 = vmatpush1.bf16.msra.mxu0 0
  %9611 = vmatprep.subr.bf16.mxu0 0
  %9612 = vmatpush1.bf16.msra.mxu0 0
  %9613 = vmatprep.subr.bf16.mxu0 0
  %9614 = vmatpush1.bf16.msra.mxu0 0
  %9615 = vmatprep.subr.bf16.mxu0 0
  %9616 = vmatpush1.bf16.msra.mxu0 0
  %9617 = vmatprep.subr.bf16.mxu0 0
  %9618 = vmatpush1.bf16.msra.mxu0 0
  %9619 = vmatprep.subr.bf16.mxu0 0
  %9620 = vmatpush1.bf16.msra.mxu0 0
  %9621 = vmatprep.subr.bf16.mxu0 0
  %9622 = vmatpush1.bf16.msra.mxu0 0
  %9623 = vmatprep.subr.bf16.mxu0 0
  %9624 = vmatpush1.bf16.msra.mxu0 0
  %9625 = vmatprep.subr.bf16.mxu0 0
  %9626 = vmatpush1.bf16.msra.mxu0 0
  %9627 = vmatprep.subr.bf16.mxu0 0
  %9628 = vmatpush1.bf16.msra.mxu0 0
  %9629 = vmatprep.subr.bf16.mxu0 0
  %9630 = vmatpush1.bf16.msra.mxu0 0
  %9631 = vmatprep.mubr.bf16.mxu0 0
  %9632 = vmatmul.mubr.bf16.gmra.mrb[0].mxu0 %v9511
  %v9633 = vpop.f32.mrb[0].mxu0
  %v9634 = vadd.f32 %v9477, %v9633
  %v9635 = vpop.f32.mrb[0].mxu0
  %v9636 = vpop.f32.mrb[0].mxu0
  %v9637 = vadd.f32 %v9480, %v9636
  %v9638 = vpop.f32.mrb[0].mxu0
  %9639 = vdwg.mxu0
  %s9640 = scalar_lea.vmem %s1, 664
  %v9641 = vld [vmem:[%s9640] sm:$0xf]
  %v9642 = vld [vmem:[%s9640 + $0x4] sm:$0xf]
  %v9645 = vunpack.c.l.b16 %v9641
  %v9646 = vunpack.c.l.b16 %v9642
  %v9647 = vpack.c.b16 %v9646, %v9645
  %9648 = vrot.lane.b32.xlu0 %v9308, 16
  %v9649 = vpop.permute.xlu0 %9648
  %9650 = vrot.lane.b32.xlu0 %v9309, 16
  %v9651 = vpop.permute.xlu0 %9650
  %9652 = vrot.lane.b32.xlu0 %v9310, 16
  %v9653 = vpop.permute.xlu0 %9652
  %9654 = vrot.lane.b32.xlu0 %v9311, 16
  %v9655 = vpop.permute.xlu0 %9654
  %9656 = vrot.lane.b32.xlu0 %v9312, 16
  %v9657 = vpop.permute.xlu0 %9656
  %9658 = vrot.lane.b32.xlu0 %v9313, 16
  %v9659 = vpop.permute.xlu0 %9658
  %v9660 = vsel %vm443, %v9649, %v9651
  %v9661 = vsel %vm443, %v9651, %v9653
  %v9662 = vsel %vm443, %v9653, %v9655
  %v9663 = vsel %vm443, %v9655, %v9657
  %v9664 = vsel %vm443, %v9657, %v9659
  %v9671 = vsel %vm134, %v9647, 0
  %9673 = vmatprep.subr.bf16.mxu0 %v9661
  %9674 = vmatpush1.bf16.msra.mxu0 %v9660
  %9675 = vmatprep.subr.bf16.mxu0 0
  %9676 = vmatpush1.bf16.msra.mxu0 0
  %9677 = vmatprep.subr.bf16.mxu0 0
  %9678 = vmatpush1.bf16.msra.mxu0 0
  %9679 = vmatprep.subr.bf16.mxu0 0
  %9680 = vmatpush1.bf16.msra.mxu0 0
  %9681 = vmatprep.subr.bf16.mxu0 0
  %9682 = vmatpush1.bf16.msra.mxu0 0
  %9683 = vmatprep.subr.bf16.mxu0 0
  %9684 = vmatpush1.bf16.msra.mxu0 0
  %9685 = vmatprep.subr.bf16.mxu0 0
  %9686 = vmatpush1.bf16.msra.mxu0 0
  %9687 = vmatprep.subr.bf16.mxu0 0
  %9688 = vmatpush1.bf16.msra.mxu0 0
  %9689 = vmatprep.subr.bf16.mxu0 0
  %9690 = vmatpush1.bf16.msra.mxu0 0
  %9691 = vmatprep.subr.bf16.mxu0 0
  %9692 = vmatpush1.bf16.msra.mxu0 0
  %9693 = vmatprep.subr.bf16.mxu0 0
  %9694 = vmatpush1.bf16.msra.mxu0 0
  %9695 = vmatprep.subr.bf16.mxu0 0
  %9696 = vmatpush1.bf16.msra.mxu0 0
  %9697 = vmatprep.subr.bf16.mxu0 0
  %9698 = vmatpush1.bf16.msra.mxu0 0
  %9699 = vmatprep.subr.bf16.mxu0 0
  %9700 = vmatpush1.bf16.msra.mxu0 0
  %9701 = vmatprep.subr.bf16.mxu0 0
  %9702 = vmatpush1.bf16.msra.mxu0 0
  %9703 = vmatprep.subr.bf16.mxu0 0
  %9704 = vmatpush1.bf16.msra.mxu0 0
  %9705 = vmatprep.mubr.bf16.mxu0 0
  %9706 = vmatmul.mubr.bf16.gmra.mrb[0].mxu0 %v9671
  %v9707 = vpop.f32.mrb[0].mxu0
  %v9708 = vadd.f32 0.0, %v9707
  %v9709 = vpop.f32.mrb[0].mxu0
  %v9710 = vadd.f32 0.0, %v9709
  %v9711 = vpop.f32.mrb[0].mxu0
  %v9712 = vadd.f32 0.0, %v9711
  %v9713 = vpop.f32.mrb[0].mxu0
  %v9714 = vadd.f32 0.0, %v9713
  %9715 = vdwg.mxu0
  %9716 = vmatprep.subr.bf16.mxu0 %v9663
  %9717 = vmatpush1.bf16.msra.mxu0 %v9662
  %9718 = vmatprep.subr.bf16.mxu0 0
  %9719 = vmatpush1.bf16.msra.mxu0 0
  %9720 = vmatprep.subr.bf16.mxu0 0
  %9721 = vmatpush1.bf16.msra.mxu0 0
  %9722 = vmatprep.subr.bf16.mxu0 0
  %9723 = vmatpush1.bf16.msra.mxu0 0
  %9724 = vmatprep.subr.bf16.mxu0 0
  %9725 = vmatpush1.bf16.msra.mxu0 0
  %9726 = vmatprep.subr.bf16.mxu0 0
  %9727 = vmatpush1.bf16.msra.mxu0 0
  %9728 = vmatprep.subr.bf16.mxu0 0
  %9729 = vmatpush1.bf16.msra.mxu0 0
  %9730 = vmatprep.subr.bf16.mxu0 0
  %9731 = vmatpush1.bf16.msra.mxu0 0
  %9732 = vmatprep.subr.bf16.mxu0 0
  %9733 = vmatpush1.bf16.msra.mxu0 0
  %9734 = vmatprep.subr.bf16.mxu0 0
  %9735 = vmatpush1.bf16.msra.mxu0 0
  %9736 = vmatprep.subr.bf16.mxu0 0
  %9737 = vmatpush1.bf16.msra.mxu0 0
  %9738 = vmatprep.subr.bf16.mxu0 0
  %9739 = vmatpush1.bf16.msra.mxu0 0
  %9740 = vmatprep.subr.bf16.mxu0 0
  %9741 = vmatpush1.bf16.msra.mxu0 0
  %9742 = vmatprep.subr.bf16.mxu0 0
  %9743 = vmatpush1.bf16.msra.mxu0 0
  %9744 = vmatprep.subr.bf16.mxu0 0
  %9745 = vmatpush1.bf16.msra.mxu0 0
  %9746 = vmatprep.subr.bf16.mxu0 0
  %9747 = vmatpush1.bf16.msra.mxu0 0
  %9748 = vmatprep.mubr.bf16.mxu0 0
  %9749 = vmatmul.mubr.bf16.gmra.mrb[0].mxu0 %v9671
  %v9750 = vpop.f32.mrb[0].mxu0
  %v9751 = vadd.f32 0.0, %v9750
  %v9752 = vpop.f32.mrb[0].mxu0
  %v9753 = vadd.f32 0.0, %v9752
  %v9754 = vpop.f32.mrb[0].mxu0
  %v9755 = vadd.f32 0.0, %v9754
  %v9756 = vpop.f32.mrb[0].mxu0
  %v9757 = vadd.f32 0.0, %v9756
  %9758 = vdwg.mxu0
  %9759 = vmatprep.subr.bf16.mxu0 0
  %9760 = vmatpush1.bf16.msra.mxu0 %v9664
  %9761 = vmatprep.subr.bf16.mxu0 0
  %9762 = vmatpush1.bf16.msra.mxu0 0
  %9763 = vmatprep.subr.bf16.mxu0 0
  %9764 = vmatpush1.bf16.msra.mxu0 0
  %9765 = vmatprep.subr.bf16.mxu0 0
  %9766 = vmatpush1.bf16.msra.mxu0 0
  %9767 = vmatprep.subr.bf16.mxu0 0
  %9768 = vmatpush1.bf16.msra.mxu0 0
  %9769 = vmatprep.subr.bf16.mxu0 0
  %9770 = vmatpush1.bf16.msra.mxu0 0
  %9771 = vmatprep.subr.bf16.mxu0 0
  %9772 = vmatpush1.bf16.msra.mxu0 0
  %9773 = vmatprep.subr.bf16.mxu0 0
  %9774 = vmatpush1.bf16.msra.mxu0 0
  %9775 = vmatprep.subr.bf16.mxu0 0
  %9776 = vmatpush1.bf16.msra.mxu0 0
  %9777 = vmatprep.subr.bf16.mxu0 0
  %9778 = vmatpush1.bf16.msra.mxu0 0
  %9779 = vmatprep.subr.bf16.mxu0 0
  %9780 = vmatpush1.bf16.msra.mxu0 0
  %9781 = vmatprep.subr.bf16.mxu0 0
  %9782 = vmatpush1.bf16.msra.mxu0 0
  %9783 = vmatprep.subr.bf16.mxu0 0
  %9784 = vmatpush1.bf16.msra.mxu0 0
  %9785 = vmatprep.subr.bf16.mxu0 0
  %9786 = vmatpush1.bf16.msra.mxu0 0
  %9787 = vmatprep.subr.bf16.mxu0 0
  %9788 = vmatpush1.bf16.msra.mxu0 0
  %9789 = vmatprep.subr.bf16.mxu0 0
  %9790 = vmatpush1.bf16.msra.mxu0 0
  %9791 = vmatprep.mubr.bf16.mxu0 0
  %9792 = vmatmul.mubr.bf16.gmra.mrb[0].mxu0 %v9671
  %v9793 = vpop.f32.mrb[0].mxu0
  %v9794 = vadd.f32 0.0, %v9793
  %v9795 = vpop.f32.mrb[0].mxu0
  %v9796 = vpop.f32.mrb[0].mxu0
  %v9797 = vadd.f32 0.0, %v9796
  %v9798 = vpop.f32.mrb[0].mxu0
  %9799 = vdwg.mxu0
  %v9800 = vadd.f32 %v9548, %v9708
  %v9801 = vadd.f32 %v9550, %v9710
  %v9802 = vadd.f32 %v9591, %v9751
  %v9803 = vadd.f32 %v9593, %v9753
  %v9804 = vadd.f32 %v9634, %v9794
  %v9805 = vadd.f32 %v9552, %v9712
  %v9806 = vadd.f32 %v9554, %v9714
  %v9807 = vadd.f32 %v9595, %v9755
  %v9808 = vadd.f32 %v9597, %v9757
  %v9809 = vadd.f32 %v9637, %v9797
  %s9810 = scalar_lea.vmem %s1, 672
  %v9811 = vld [vmem:[%s9810] sm:$0xf]
  %v9812 = vld [vmem:[%s9810 + $0x4] sm:$0xf]
  %v9815 = vunpack.c.l.b16 %v9811
  %v9816 = vunpack.c.l.b16 %v9812
  %v9817 = vpack.c.b16 %v9816, %v9815
  %9818 = vrot.lane.b32.xlu0 %v9308, 1
  %v9819 = vpop.permute.xlu0 %9818
  %9820 = vrot.lane.b32.xlu0 %v9309, 1
  %v9821 = vpop.permute.xlu0 %9820
  %9822 = vrot.lane.b32.xlu0 %v9310, 1
  %v9823 = vpop.permute.xlu0 %9822
  %9824 = vrot.lane.b32.xlu0 %v9311, 1
  %v9825 = vpop.permute.xlu0 %9824
  %9826 = vrot.lane.b32.xlu0 %v9312, 1
  %v9827 = vpop.permute.xlu0 %9826
  %9828 = vrot.lane.b32.xlu0 %v9313, 1
  %v9829 = vpop.permute.xlu0 %9828
  %v9830 = vsel %vm614, %v9819, %v9821
  %v9831 = vsel %vm614, %v9821, %v9823
  %v9832 = vsel %vm614, %v9823, %v9825
  %v9833 = vsel %vm614, %v9825, %v9827
  %v9834 = vsel %vm614, %v9827, %v9829
  %v9841 = vsel %vm134, %v9817, 0
  %9843 = vmatprep.subr.bf16.mxu0 %v9831
  %9844 = vmatpush1.bf16.msra.mxu0 %v9830
  %9845 = vmatprep.subr.bf16.mxu0 0
  %9846 = vmatpush1.bf16.msra.mxu0 0
  %9847 = vmatprep.subr.bf16.mxu0 0
  %9848 = vmatpush1.bf16.msra.mxu0 0
  %9849 = vmatprep.subr.bf16.mxu0 0
  %9850 = vmatpush1.bf16.msra.mxu0 0
  %9851 = vmatprep.subr.bf16.mxu0 0
  %9852 = vmatpush1.bf16.msra.mxu0 0
  %9853 = vmatprep.subr.bf16.mxu0 0
  %9854 = vmatpush1.bf16.msra.mxu0 0
  %9855 = vmatprep.subr.bf16.mxu0 0
  %9856 = vmatpush1.bf16.msra.mxu0 0
  %9857 = vmatprep.subr.bf16.mxu0 0
  %9858 = vmatpush1.bf16.msra.mxu0 0
  %9859 = vmatprep.subr.bf16.mxu0 0
  %9860 = vmatpush1.bf16.msra.mxu0 0
  %9861 = vmatprep.subr.bf16.mxu0 0
  %9862 = vmatpush1.bf16.msra.mxu0 0
  %9863 = vmatprep.subr.bf16.mxu0 0
  %9864 = vmatpush1.bf16.msra.mxu0 0
  %9865 = vmatprep.subr.bf16.mxu0 0
  %9866 = vmatpush1.bf16.msra.mxu0 0
  %9867 = vmatprep.subr.bf16.mxu0 0
  %9868 = vmatpush1.bf16.msra.mxu0 0
  %9869 = vmatprep.subr.bf16.mxu0 0
  %9870 = vmatpush1.bf16.msra.mxu0 0
  %9871 = vmatprep.subr.bf16.mxu0 0
  %9872 = vmatpush1.bf16.msra.mxu0 0
  %9873 = vmatprep.subr.bf16.mxu0 0
  %9874 = vmatpush1.bf16.msra.mxu0 0
  %9875 = vmatprep.mubr.bf16.mxu0 0
  %9876 = vmatmul.mubr.bf16.gmra.mrb[0].mxu0 %v9841
  %v9877 = vpop.f32.mrb[0].mxu0
  %v9878 = vadd.f32 0.0, %v9877
  %v9879 = vpop.f32.mrb[0].mxu0
  %v9880 = vadd.f32 0.0, %v9879
  %v9881 = vpop.f32.mrb[0].mxu0
  %v9882 = vadd.f32 0.0, %v9881
  %v9883 = vpop.f32.mrb[0].mxu0
  %v9884 = vadd.f32 0.0, %v9883
  %9885 = vdwg.mxu0
  %9886 = vmatprep.subr.bf16.mxu0 %v9833
  %9887 = vmatpush1.bf16.msra.mxu0 %v9832
  %9888 = vmatprep.subr.bf16.mxu0 0
  %9889 = vmatpush1.bf16.msra.mxu0 0
  %9890 = vmatprep.subr.bf16.mxu0 0
  %9891 = vmatpush1.bf16.msra.mxu0 0
  %9892 = vmatprep.subr.bf16.mxu0 0
  %9893 = vmatpush1.bf16.msra.mxu0 0
  %9894 = vmatprep.subr.bf16.mxu0 0
  %9895 = vmatpush1.bf16.msra.mxu0 0
  %9896 = vmatprep.subr.bf16.mxu0 0
  %9897 = vmatpush1.bf16.msra.mxu0 0
  %9898 = vmatprep.subr.bf16.mxu0 0
  %9899 = vmatpush1.bf16.msra.mxu0 0
  %9900 = vmatprep.subr.bf16.mxu0 0
  %9901 = vmatpush1.bf16.msra.mxu0 0
  %9902 = vmatprep.subr.bf16.mxu0 0
  %9903 = vmatpush1.bf16.msra.mxu0 0
  %9904 = vmatprep.subr.bf16.mxu0 0
  %9905 = vmatpush1.bf16.msra.mxu0 0
  %9906 = vmatprep.subr.bf16.mxu0 0
  %9907 = vmatpush1.bf16.msra.mxu0 0
  %9908 = vmatprep.subr.bf16.mxu0 0
  %9909 = vmatpush1.bf16.msra.mxu0 0
  %9910 = vmatprep.subr.bf16.mxu0 0
  %9911 = vmatpush1.bf16.msra.mxu0 0
  %9912 = vmatprep.subr.bf16.mxu0 0
  %9913 = vmatpush1.bf16.msra.mxu0 0
  %9914 = vmatprep.subr.bf16.mxu0 0
  %9915 = vmatpush1.bf16.msra.mxu0 0
  %9916 = vmatprep.subr.bf16.mxu0 0
  %9917 = vmatpush1.bf16.msra.mxu0 0
  %9918 = vmatprep.mubr.bf16.mxu0 0
  %9919 = vmatmul.mubr.bf16.gmra.mrb[0].mxu0 %v9841
  %v9920 = vpop.f32.mrb[0].mxu0
  %v9921 = vadd.f32 0.0, %v9920
  %v9922 = vpop.f32.mrb[0].mxu0
  %v9923 = vadd.f32 0.0, %v9922
  %v9924 = vpop.f32.mrb[0].mxu0
  %v9925 = vadd.f32 0.0, %v9924
  %v9926 = vpop.f32.mrb[0].mxu0
  %v9927 = vadd.f32 0.0, %v9926
  %9928 = vdwg.mxu0
  %9929 = vmatprep.subr.bf16.mxu0 0
  %9930 = vmatpush1.bf16.msra.mxu0 %v9834
  %9931 = vmatprep.subr.bf16.mxu0 0
  %9932 = vmatpush1.bf16.msra.mxu0 0
  %9933 = vmatprep.subr.bf16.mxu0 0
  %9934 = vmatpush1.bf16.msra.mxu0 0
  %9935 = vmatprep.subr.bf16.mxu0 0
  %9936 = vmatpush1.bf16.msra.mxu0 0
  %9937 = vmatprep.subr.bf16.mxu0 0
  %9938 = vmatpush1.bf16.msra.mxu0 0
  %9939 = vmatprep.subr.bf16.mxu0 0
  %9940 = vmatpush1.bf16.msra.mxu0 0
  %9941 = vmatprep.subr.bf16.mxu0 0
  %9942 = vmatpush1.bf16.msra.mxu0 0
  %9943 = vmatprep.subr.bf16.mxu0 0
  %9944 = vmatpush1.bf16.msra.mxu0 0
  %9945 = vmatprep.subr.bf16.mxu0 0
  %9946 = vmatpush1.bf16.msra.mxu0 0
  %9947 = vmatprep.subr.bf16.mxu0 0
  %9948 = vmatpush1.bf16.msra.mxu0 0
  %9949 = vmatprep.subr.bf16.mxu0 0
  %9950 = vmatpush1.bf16.msra.mxu0 0
  %9951 = vmatprep.subr.bf16.mxu0 0
  %9952 = vmatpush1.bf16.msra.mxu0 0
  %9953 = vmatprep.subr.bf16.mxu0 0
  %9954 = vmatpush1.bf16.msra.mxu0 0
  %9955 = vmatprep.subr.bf16.mxu0 0
  %9956 = vmatpush1.bf16.msra.mxu0 0
  %9957 = vmatprep.subr.bf16.mxu0 0
  %9958 = vmatpush1.bf16.msra.mxu0 0
  %9959 = vmatprep.subr.bf16.mxu0 0
  %9960 = vmatpush1.bf16.msra.mxu0 0
  %9961 = vmatprep.mubr.bf16.mxu0 0
  %9962 = vmatmul.mubr.bf16.gmra.mrb[0].mxu0 %v9841
  %v9963 = vpop.f32.mrb[0].mxu0
  %v9964 = vadd.f32 0.0, %v9963
  %v9965 = vpop.f32.mrb[0].mxu0
  %v9966 = vpop.f32.mrb[0].mxu0
  %v9967 = vadd.f32 0.0, %v9966
  %v9968 = vpop.f32.mrb[0].mxu0
  %9969 = vdwg.mxu0
  %v9970 = vadd.f32 %v9800, %v9878
  %v9971 = vadd.f32 %v9801, %v9880
  %v9972 = vadd.f32 %v9802, %v9921
  %v9973 = vadd.f32 %v9803, %v9923
  %v9974 = vadd.f32 %v9804, %v9964
  %v9975 = vadd.f32 %v9805, %v9882
  %v9976 = vadd.f32 %v9806, %v9884
  %v9977 = vadd.f32 %v9807, %v9925
  %v9978 = vadd.f32 %v9808, %v9927
  %v9979 = vadd.f32 %v9809, %v9967
  %s9980 = scalar_lea.vmem %s1, 680
  %v9981 = vld [vmem:[%s9980] sm:$0xf]
  %v9982 = vld [vmem:[%s9980 + $0x4] sm:$0xf]
  %v9985 = vunpack.c.l.b16 %v9981
  %v9986 = vunpack.c.l.b16 %v9982
  %v9987 = vpack.c.b16 %v9986, %v9985
  %v9989 = vsel %vm134, %v9987, 0
  %9991 = vmatprep.subr.bf16.mxu0 %v9310
  %9992 = vmatpush1.bf16.msra.mxu0 %v9309
  %9993 = vmatprep.subr.bf16.mxu0 0
  %9994 = vmatpush1.bf16.msra.mxu0 0
  %9995 = vmatprep.subr.bf16.mxu0 0
  %9996 = vmatpush1.bf16.msra.mxu0 0
  %9997 = vmatprep.subr.bf16.mxu0 0
  %9998 = vmatpush1.bf16.msra.mxu0 0
  %9999 = vmatprep.subr.bf16.mxu0 0
  %10000 = vmatpush1.bf16.msra.mxu0 0
  %10001 = vmatprep.subr.bf16.mxu0 0
  %10002 = vmatpush1.bf16.msra.mxu0 0
  %10003 = vmatprep.subr.bf16.mxu0 0
  %10004 = vmatpush1.bf16.msra.mxu0 0
  %10005 = vmatprep.subr.bf16.mxu0 0
  %10006 = vmatpush1.bf16.msra.mxu0 0
  %10007 = vmatprep.subr.bf16.mxu0 0
  %10008 = vmatpush1.bf16.msra.mxu0 0
  %10009 = vmatprep.subr.bf16.mxu0 0
  %10010 = vmatpush1.bf16.msra.mxu0 0
  %10011 = vmatprep.subr.bf16.mxu0 0
  %10012 = vmatpush1.bf16.msra.mxu0 0
  %10013 = vmatprep.subr.bf16.mxu0 0
  %10014 = vmatpush1.bf16.msra.mxu0 0
  %10015 = vmatprep.subr.bf16.mxu0 0
  %10016 = vmatpush1.bf16.msra.mxu0 0
  %10017 = vmatprep.subr.bf16.mxu0 0
  %10018 = vmatpush1.bf16.msra.mxu0 0
  %10019 = vmatprep.subr.bf16.mxu0 0
  %10020 = vmatpush1.bf16.msra.mxu0 0
  %10021 = vmatprep.subr.bf16.mxu0 0
  %10022 = vmatpush1.bf16.msra.mxu0 0
  %10023 = vmatprep.mubr.bf16.mxu0 0
  %10024 = vmatmul.mubr.bf16.gmra.mrb[0].mxu0 %v9989
  %v10025 = vpop.f32.mrb[0].mxu0
  %v10026 = vadd.f32 0.0, %v10025
  %v10027 = vpop.f32.mrb[0].mxu0
  %v10028 = vadd.f32 0.0, %v10027
  %v10029 = vpop.f32.mrb[0].mxu0
  %v10030 = vadd.f32 0.0, %v10029
  %v10031 = vpop.f32.mrb[0].mxu0
  %v10032 = vadd.f32 0.0, %v10031
  %10033 = vdwg.mxu0
  %10034 = vmatprep.subr.bf16.mxu0 %v9312
  %10035 = vmatpush1.bf16.msra.mxu0 %v9311
  %10036 = vmatprep.subr.bf16.mxu0 0
  %10037 = vmatpush1.bf16.msra.mxu0 0
  %10038 = vmatprep.subr.bf16.mxu0 0
  %10039 = vmatpush1.bf16.msra.mxu0 0
  %10040 = vmatprep.subr.bf16.mxu0 0
  %10041 = vmatpush1.bf16.msra.mxu0 0
  %10042 = vmatprep.subr.bf16.mxu0 0
  %10043 = vmatpush1.bf16.msra.mxu0 0
  %10044 = vmatprep.subr.bf16.mxu0 0
  %10045 = vmatpush1.bf16.msra.mxu0 0
  %10046 = vmatprep.subr.bf16.mxu0 0
  %10047 = vmatpush1.bf16.msra.mxu0 0
  %10048 = vmatprep.subr.bf16.mxu0 0
  %10049 = vmatpush1.bf16.msra.mxu0 0
  %10050 = vmatprep.subr.bf16.mxu0 0
  %10051 = vmatpush1.bf16.msra.mxu0 0
  %10052 = vmatprep.subr.bf16.mxu0 0
  %10053 = vmatpush1.bf16.msra.mxu0 0
  %10054 = vmatprep.subr.bf16.mxu0 0
  %10055 = vmatpush1.bf16.msra.mxu0 0
  %10056 = vmatprep.subr.bf16.mxu0 0
  %10057 = vmatpush1.bf16.msra.mxu0 0
  %10058 = vmatprep.subr.bf16.mxu0 0
  %10059 = vmatpush1.bf16.msra.mxu0 0
  %10060 = vmatprep.subr.bf16.mxu0 0
  %10061 = vmatpush1.bf16.msra.mxu0 0
  %10062 = vmatprep.subr.bf16.mxu0 0
  %10063 = vmatpush1.bf16.msra.mxu0 0
  %10064 = vmatprep.subr.bf16.mxu0 0
  %10065 = vmatpush1.bf16.msra.mxu0 0
  %10066 = vmatprep.mubr.bf16.mxu0 0
  %10067 = vmatmul.mubr.bf16.gmra.mrb[0].mxu0 %v9989
  %v10068 = vpop.f32.mrb[0].mxu0
  %v10069 = vadd.f32 0.0, %v10068
  %v10070 = vpop.f32.mrb[0].mxu0
  %v10071 = vadd.f32 0.0, %v10070
  %v10072 = vpop.f32.mrb[0].mxu0
  %v10073 = vadd.f32 0.0, %v10072
  %v10074 = vpop.f32.mrb[0].mxu0
  %v10075 = vadd.f32 0.0, %v10074
  %10076 = vdwg.mxu0
  %10077 = vmatprep.subr.bf16.mxu0 0
  %10078 = vmatpush1.bf16.msra.mxu0 %v9313
  %10079 = vmatprep.subr.bf16.mxu0 0
  %10080 = vmatpush1.bf16.msra.mxu0 0
  %10081 = vmatprep.subr.bf16.mxu0 0
  %10082 = vmatpush1.bf16.msra.mxu0 0
  %10083 = vmatprep.subr.bf16.mxu0 0
  %10084 = vmatpush1.bf16.msra.mxu0 0
  %10085 = vmatprep.subr.bf16.mxu0 0
  %10086 = vmatpush1.bf16.msra.mxu0 0
  %10087 = vmatprep.subr.bf16.mxu0 0
  %10088 = vmatpush1.bf16.msra.mxu0 0
  %10089 = vmatprep.subr.bf16.mxu0 0
  %10090 = vmatpush1.bf16.msra.mxu0 0
  %10091 = vmatprep.subr.bf16.mxu0 0
  %10092 = vmatpush1.bf16.msra.mxu0 0
  %10093 = vmatprep.subr.bf16.mxu0 0
  %10094 = vmatpush1.bf16.msra.mxu0 0
  %10095 = vmatprep.subr.bf16.mxu0 0
  %10096 = vmatpush1.bf16.msra.mxu0 0
  %10097 = vmatprep.subr.bf16.mxu0 0
  %10098 = vmatpush1.bf16.msra.mxu0 0
  %10099 = vmatprep.subr.bf16.mxu0 0
  %10100 = vmatpush1.bf16.msra.mxu0 0
  %10101 = vmatprep.subr.bf16.mxu0 0
  %10102 = vmatpush1.bf16.msra.mxu0 0
  %10103 = vmatprep.subr.bf16.mxu0 0
  %10104 = vmatpush1.bf16.msra.mxu0 0
  %10105 = vmatprep.subr.bf16.mxu0 0
  %10106 = vmatpush1.bf16.msra.mxu0 0
  %10107 = vmatprep.subr.bf16.mxu0 0
  %10108 = vmatpush1.bf16.msra.mxu0 0
  %10109 = vmatprep.mubr.bf16.mxu0 0
  %10110 = vmatmul.mubr.bf16.gmra.mrb[0].mxu0 %v9989
  %v10111 = vpop.f32.mrb[0].mxu0
  %v10112 = vadd.f32 0.0, %v10111
  %v10113 = vpop.f32.mrb[0].mxu0
  %v10114 = vpop.f32.mrb[0].mxu0
  %v10115 = vadd.f32 0.0, %v10114
  %v10116 = vpop.f32.mrb[0].mxu0
  %10117 = vdwg.mxu0
  %v10118 = vadd.f32 %v9970, %v10026
  %v10119 = vadd.f32 %v9971, %v10028
  %v10120 = vadd.f32 %v9972, %v10069
  %v10121 = vadd.f32 %v9973, %v10071
  %v10122 = vadd.f32 %v9974, %v10112
  %v10123 = vadd.f32 %v9975, %v10030
  %v10124 = vadd.f32 %v9976, %v10032
  %v10125 = vadd.f32 %v9977, %v10073
  %v10126 = vadd.f32 %v9978, %v10075
  %v10127 = vadd.f32 %v9979, %v10115
  %s10128 = scalar_lea.vmem %s1, 688
  %v10129 = vld [vmem:[%s10128] sm:$0xf]
  %v10130 = vld [vmem:[%s10128 + $0x4] sm:$0xf]
  %v10133 = vunpack.c.l.b16 %v10129
  %v10134 = vunpack.c.l.b16 %v10130
  %v10135 = vpack.c.b16 %v10134, %v10133
  %10136 = vrot.lane.b32.xlu0 %v9309, 127
  %v10137 = vpop.permute.xlu0 %10136
  %10138 = vrot.lane.b32.xlu0 %v9310, 127
  %v10139 = vpop.permute.xlu0 %10138
  %10140 = vrot.lane.b32.xlu0 %v9311, 127
  %v10141 = vpop.permute.xlu0 %10140
  %10142 = vrot.lane.b32.xlu0 %v9312, 127
  %v10143 = vpop.permute.xlu0 %10142
  %10144 = vrot.lane.b32.xlu0 %v9313, 127
  %v10145 = vpop.permute.xlu0 %10144
  %v10146 = vsel %vm931, %v10137, %v10139
  %v10147 = vsel %vm931, %v10139, %v10141
  %v10148 = vsel %vm931, %v10141, %v10143
  %v10149 = vsel %vm931, %v10143, %v10145
  %v10156 = vsel %vm134, %v10135, 0
  %10158 = vmatprep.subr.bf16.mxu0 %v10147
  %10159 = vmatpush1.bf16.msra.mxu0 %v10146
  %10160 = vmatprep.subr.bf16.mxu0 0
  %10161 = vmatpush1.bf16.msra.mxu0 0
  %10162 = vmatprep.subr.bf16.mxu0 0
  %10163 = vmatpush1.bf16.msra.mxu0 0
  %10164 = vmatprep.subr.bf16.mxu0 0
  %10165 = vmatpush1.bf16.msra.mxu0 0
  %10166 = vmatprep.subr.bf16.mxu0 0
  %10167 = vmatpush1.bf16.msra.mxu0 0
  %10168 = vmatprep.subr.bf16.mxu0 0
  %10169 = vmatpush1.bf16.msra.mxu0 0
  %10170 = vmatprep.subr.bf16.mxu0 0
  %10171 = vmatpush1.bf16.msra.mxu0 0
  %10172 = vmatprep.subr.bf16.mxu0 0
  %10173 = vmatpush1.bf16.msra.mxu0 0
  %10174 = vmatprep.subr.bf16.mxu0 0
  %10175 = vmatpush1.bf16.msra.mxu0 0
  %10176 = vmatprep.subr.bf16.mxu0 0
  %10177 = vmatpush1.bf16.msra.mxu0 0
  %10178 = vmatprep.subr.bf16.mxu0 0
  %10179 = vmatpush1.bf16.msra.mxu0 0
  %10180 = vmatprep.subr.bf16.mxu0 0
  %10181 = vmatpush1.bf16.msra.mxu0 0
  %10182 = vmatprep.subr.bf16.mxu0 0
  %10183 = vmatpush1.bf16.msra.mxu0 0
  %10184 = vmatprep.subr.bf16.mxu0 0
  %10185 = vmatpush1.bf16.msra.mxu0 0
  %10186 = vmatprep.subr.bf16.mxu0 0
  %10187 = vmatpush1.bf16.msra.mxu0 0
  %10188 = vmatprep.subr.bf16.mxu0 0
  %10189 = vmatpush1.bf16.msra.mxu0 0
  %10190 = vmatprep.mubr.bf16.mxu0 0
  %10191 = vmatmul.mubr.bf16.gmra.mrb[0].mxu0 %v10156
  %v10192 = vpop.f32.mrb[0].mxu0
  %v10193 = vadd.f32 0.0, %v10192
  %v10194 = vpop.f32.mrb[0].mxu0
  %v10195 = vadd.f32 0.0, %v10194
  %v10196 = vpop.f32.mrb[0].mxu0
  %v10197 = vadd.f32 0.0, %v10196
  %v10198 = vpop.f32.mrb[0].mxu0
  %v10199 = vadd.f32 0.0, %v10198
  %10200 = vdwg.mxu0
  %10201 = vmatprep.subr.bf16.mxu0 %v10149
  %10202 = vmatpush1.bf16.msra.mxu0 %v10148
  %10203 = vmatprep.subr.bf16.mxu0 0
  %10204 = vmatpush1.bf16.msra.mxu0 0
  %10205 = vmatprep.subr.bf16.mxu0 0
  %10206 = vmatpush1.bf16.msra.mxu0 0
  %10207 = vmatprep.subr.bf16.mxu0 0
  %10208 = vmatpush1.bf16.msra.mxu0 0
  %10209 = vmatprep.subr.bf16.mxu0 0
  %10210 = vmatpush1.bf16.msra.mxu0 0
  %10211 = vmatprep.subr.bf16.mxu0 0
  %10212 = vmatpush1.bf16.msra.mxu0 0
  %10213 = vmatprep.subr.bf16.mxu0 0
  %10214 = vmatpush1.bf16.msra.mxu0 0
  %10215 = vmatprep.subr.bf16.mxu0 0
  %10216 = vmatpush1.bf16.msra.mxu0 0
  %10217 = vmatprep.subr.bf16.mxu0 0
  %10218 = vmatpush1.bf16.msra.mxu0 0
  %10219 = vmatprep.subr.bf16.mxu0 0
  %10220 = vmatpush1.bf16.msra.mxu0 0
  %10221 = vmatprep.subr.bf16.mxu0 0
  %10222 = vmatpush1.bf16.msra.mxu0 0
  %10223 = vmatprep.subr.bf16.mxu0 0
  %10224 = vmatpush1.bf16.msra.mxu0 0
  %10225 = vmatprep.subr.bf16.mxu0 0
  %10226 = vmatpush1.bf16.msra.mxu0 0
  %10227 = vmatprep.subr.bf16.mxu0 0
  %10228 = vmatpush1.bf16.msra.mxu0 0
  %10229 = vmatprep.subr.bf16.mxu0 0
  %10230 = vmatpush1.bf16.msra.mxu0 0
  %10231 = vmatprep.subr.bf16.mxu0 0
  %10232 = vmatpush1.bf16.msra.mxu0 0
  %10233 = vmatprep.mubr.bf16.mxu0 0
  %10234 = vmatmul.mubr.bf16.gmra.mrb[0].mxu0 %v10156
  %v10235 = vpop.f32.mrb[0].mxu0
  %v10236 = vadd.f32 0.0, %v10235
  %v10237 = vpop.f32.mrb[0].mxu0
  %v10238 = vadd.f32 0.0, %v10237
  %v10239 = vpop.f32.mrb[0].mxu0
  %v10240 = vadd.f32 0.0, %v10239
  %v10241 = vpop.f32.mrb[0].mxu0
  %v10242 = vadd.f32 0.0, %v10241
  %10243 = vdwg.mxu0
  %10244 = vmatprep.subr.bf16.mxu0 0
  %10245 = vmatpush1.bf16.msra.mxu0 %v10145
  %10246 = vmatprep.subr.bf16.mxu0 0
  %10247 = vmatpush1.bf16.msra.mxu0 0
  %10248 = vmatprep.subr.bf16.mxu0 0
  %10249 = vmatpush1.bf16.msra.mxu0 0
  %10250 = vmatprep.subr.bf16.mxu0 0
  %10251 = vmatpush1.bf16.msra.mxu0 0
  %10252 = vmatprep.subr.bf16.mxu0 0
  %10253 = vmatpush1.bf16.msra.mxu0 0
  %10254 = vmatprep.subr.bf16.mxu0 0
  %10255 = vmatpush1.bf16.msra.mxu0 0
  %10256 = vmatprep.subr.bf16.mxu0 0
  %10257 = vmatpush1.bf16.msra.mxu0 0
  %10258 = vmatprep.subr.bf16.mxu0 0
  %10259 = vmatpush1.bf16.msra.mxu0 0
  %10260 = vmatprep.subr.bf16.mxu0 0
  %10261 = vmatpush1.bf16.msra.mxu0 0
  %10262 = vmatprep.subr.bf16.mxu0 0
  %10263 = vmatpush1.bf16.msra.mxu0 0
  %10264 = vmatprep.subr.bf16.mxu0 0
  %10265 = vmatpush1.bf16.msra.mxu0 0
  %10266 = vmatprep.subr.bf16.mxu0 0
  %10267 = vmatpush1.bf16.msra.mxu0 0
  %10268 = vmatprep.subr.bf16.mxu0 0
  %10269 = vmatpush1.bf16.msra.mxu0 0
  %10270 = vmatprep.subr.bf16.mxu0 0
  %10271 = vmatpush1.bf16.msra.mxu0 0
  %10272 = vmatprep.subr.bf16.mxu0 0
  %10273 = vmatpush1.bf16.msra.mxu0 0
  %10274 = vmatprep.subr.bf16.mxu0 0
  %10275 = vmatpush1.bf16.msra.mxu0 0
  %10276 = vmatprep.mubr.bf16.mxu0 0
  %10277 = vmatmul.mubr.bf16.gmra.mrb[0].mxu0 %v10156
  %v10278 = vpop.f32.mrb[0].mxu0
  %v10279 = vadd.f32 0.0, %v10278
  %v10280 = vpop.f32.mrb[0].mxu0
  %v10281 = vpop.f32.mrb[0].mxu0
  %v10282 = vadd.f32 0.0, %v10281
  %v10283 = vpop.f32.mrb[0].mxu0
  %10284 = vdwg.mxu0
  %v10285 = vadd.f32 %v10118, %v10193
  %v10286 = vadd.f32 %v10119, %v10195
  %v10287 = vadd.f32 %v10120, %v10236
  %v10288 = vadd.f32 %v10121, %v10238
  %v10289 = vadd.f32 %v10122, %v10279
  %v10290 = vadd.f32 %v10123, %v10197
  %v10291 = vadd.f32 %v10124, %v10199
  %v10292 = vadd.f32 %v10125, %v10240
  %v10293 = vadd.f32 %v10126, %v10242
  %v10294 = vadd.f32 %v10127, %v10282
  %s10295 = scalar_lea.vmem %s1, 696
  %v10296 = vld [vmem:[%s10295] sm:$0xf]
  %v10297 = vld [vmem:[%s10295 + $0x4] sm:$0xf]
  %v10300 = vunpack.c.l.b16 %v10296
  %v10301 = vunpack.c.l.b16 %v10297
  %v10302 = vpack.c.b16 %v10301, %v10300
  %10303 = vrot.lane.b32.xlu0 %v9309, 112
  %v10304 = vpop.permute.xlu0 %10303
  %10305 = vrot.lane.b32.xlu0 %v9310, 112
  %v10306 = vpop.permute.xlu0 %10305
  %10307 = vrot.lane.b32.xlu0 %v9311, 112
  %v10308 = vpop.permute.xlu0 %10307
  %10309 = vrot.lane.b32.xlu0 %v9312, 112
  %v10310 = vpop.permute.xlu0 %10309
  %10311 = vrot.lane.b32.xlu0 %v9313, 112
  %v10312 = vpop.permute.xlu0 %10311
  %v10313 = vsel %vm1099, %v10304, %v10306
  %v10314 = vsel %vm1099, %v10306, %v10308
  %v10315 = vsel %vm1099, %v10308, %v10310
  %v10316 = vsel %vm1099, %v10310, %v10312
  %v10323 = vsel %vm134, %v10302, 0
  %10325 = vmatprep.subr.bf16.mxu0 %v10314
  %10326 = vmatpush1.bf16.msra.mxu0 %v10313
  %10327 = vmatprep.subr.bf16.mxu0 0
  %10328 = vmatpush1.bf16.msra.mxu0 0
  %10329 = vmatprep.subr.bf16.mxu0 0
  %10330 = vmatpush1.bf16.msra.mxu0 0
  %10331 = vmatprep.subr.bf16.mxu0 0
  %10332 = vmatpush1.bf16.msra.mxu0 0
  %10333 = vmatprep.subr.bf16.mxu0 0
  %10334 = vmatpush1.bf16.msra.mxu0 0
  %10335 = vmatprep.subr.bf16.mxu0 0
  %10336 = vmatpush1.bf16.msra.mxu0 0
  %10337 = vmatprep.subr.bf16.mxu0 0
  %10338 = vmatpush1.bf16.msra.mxu0 0
  %10339 = vmatprep.subr.bf16.mxu0 0
  %10340 = vmatpush1.bf16.msra.mxu0 0
  %10341 = vmatprep.subr.bf16.mxu0 0
  %10342 = vmatpush1.bf16.msra.mxu0 0
  %10343 = vmatprep.subr.bf16.mxu0 0
  %10344 = vmatpush1.bf16.msra.mxu0 0
  %10345 = vmatprep.subr.bf16.mxu0 0
  %10346 = vmatpush1.bf16.msra.mxu0 0
  %10347 = vmatprep.subr.bf16.mxu0 0
  %10348 = vmatpush1.bf16.msra.mxu0 0
  %10349 = vmatprep.subr.bf16.mxu0 0
  %10350 = vmatpush1.bf16.msra.mxu0 0
  %10351 = vmatprep.subr.bf16.mxu0 0
  %10352 = vmatpush1.bf16.msra.mxu0 0
  %10353 = vmatprep.subr.bf16.mxu0 0
  %10354 = vmatpush1.bf16.msra.mxu0 0
  %10355 = vmatprep.subr.bf16.mxu0 0
  %10356 = vmatpush1.bf16.msra.mxu0 0
  %10357 = vmatprep.mubr.bf16.mxu0 0
  %10358 = vmatmul.mubr.bf16.gmra.mrb[0].mxu0 %v10323
  %v10359 = vpop.f32.mrb[0].mxu0
  %v10360 = vadd.f32 0.0, %v10359
  %v10361 = vpop.f32.mrb[0].mxu0
  %v10362 = vadd.f32 0.0, %v10361
  %v10363 = vpop.f32.mrb[0].mxu0
  %v10364 = vadd.f32 0.0, %v10363
  %v10365 = vpop.f32.mrb[0].mxu0
  %v10366 = vadd.f32 0.0, %v10365
  %10367 = vdwg.mxu0
  %10368 = vmatprep.subr.bf16.mxu0 %v10316
  %10369 = vmatpush1.bf16.msra.mxu0 %v10315
  %10370 = vmatprep.subr.bf16.mxu0 0
  %10371 = vmatpush1.bf16.msra.mxu0 0
  %10372 = vmatprep.subr.bf16.mxu0 0
  %10373 = vmatpush1.bf16.msra.mxu0 0
  %10374 = vmatprep.subr.bf16.mxu0 0
  %10375 = vmatpush1.bf16.msra.mxu0 0
  %10376 = vmatprep.subr.bf16.mxu0 0
  %10377 = vmatpush1.bf16.msra.mxu0 0
  %10378 = vmatprep.subr.bf16.mxu0 0
  %10379 = vmatpush1.bf16.msra.mxu0 0
  %10380 = vmatprep.subr.bf16.mxu0 0
  %10381 = vmatpush1.bf16.msra.mxu0 0
  %10382 = vmatprep.subr.bf16.mxu0 0
  %10383 = vmatpush1.bf16.msra.mxu0 0
  %10384 = vmatprep.subr.bf16.mxu0 0
  %10385 = vmatpush1.bf16.msra.mxu0 0
  %10386 = vmatprep.subr.bf16.mxu0 0
  %10387 = vmatpush1.bf16.msra.mxu0 0
  %10388 = vmatprep.subr.bf16.mxu0 0
  %10389 = vmatpush1.bf16.msra.mxu0 0
  %10390 = vmatprep.subr.bf16.mxu0 0
  %10391 = vmatpush1.bf16.msra.mxu0 0
  %10392 = vmatprep.subr.bf16.mxu0 0
  %10393 = vmatpush1.bf16.msra.mxu0 0
  %10394 = vmatprep.subr.bf16.mxu0 0
  %10395 = vmatpush1.bf16.msra.mxu0 0
  %10396 = vmatprep.subr.bf16.mxu0 0
  %10397 = vmatpush1.bf16.msra.mxu0 0
  %10398 = vmatprep.subr.bf16.mxu0 0
  %10399 = vmatpush1.bf16.msra.mxu0 0
  %10400 = vmatprep.mubr.bf16.mxu0 0
  %10401 = vmatmul.mubr.bf16.gmra.mrb[0].mxu0 %v10323
  %v10402 = vpop.f32.mrb[0].mxu0
  %v10403 = vadd.f32 0.0, %v10402
  %v10404 = vpop.f32.mrb[0].mxu0
  %v10405 = vadd.f32 0.0, %v10404
  %v10406 = vpop.f32.mrb[0].mxu0
  %v10407 = vadd.f32 0.0, %v10406
  %v10408 = vpop.f32.mrb[0].mxu0
  %v10409 = vadd.f32 0.0, %v10408
  %10410 = vdwg.mxu0
  %10411 = vmatprep.subr.bf16.mxu0 0
  %10412 = vmatpush1.bf16.msra.mxu0 %v10312
  %10413 = vmatprep.subr.bf16.mxu0 0
  %10414 = vmatpush1.bf16.msra.mxu0 0
  %10415 = vmatprep.subr.bf16.mxu0 0
  %10416 = vmatpush1.bf16.msra.mxu0 0
  %10417 = vmatprep.subr.bf16.mxu0 0
  %10418 = vmatpush1.bf16.msra.mxu0 0
  %10419 = vmatprep.subr.bf16.mxu0 0
  %10420 = vmatpush1.bf16.msra.mxu0 0
  %10421 = vmatprep.subr.bf16.mxu0 0
  %10422 = vmatpush1.bf16.msra.mxu0 0
  %10423 = vmatprep.subr.bf16.mxu0 0
  %10424 = vmatpush1.bf16.msra.mxu0 0
  %10425 = vmatprep.subr.bf16.mxu0 0
  %10426 = vmatpush1.bf16.msra.mxu0 0
  %10427 = vmatprep.subr.bf16.mxu0 0
  %10428 = vmatpush1.bf16.msra.mxu0 0
  %10429 = vmatprep.subr.bf16.mxu0 0
  %10430 = vmatpush1.bf16.msra.mxu0 0
  %10431 = vmatprep.subr.bf16.mxu0 0
  %10432 = vmatpush1.bf16.msra.mxu0 0
  %10433 = vmatprep.subr.bf16.mxu0 0
  %10434 = vmatpush1.bf16.msra.mxu0 0
  %10435 = vmatprep.subr.bf16.mxu0 0
  %10436 = vmatpush1.bf16.msra.mxu0 0
  %10437 = vmatprep.subr.bf16.mxu0 0
  %10438 = vmatpush1.bf16.msra.mxu0 0
  %10439 = vmatprep.subr.bf16.mxu0 0
  %10440 = vmatpush1.bf16.msra.mxu0 0
  %10441 = vmatprep.subr.bf16.mxu0 0
  %10442 = vmatpush1.bf16.msra.mxu0 0
  %10443 = vmatprep.mubr.bf16.mxu0 0
  %10444 = vmatmul.mubr.bf16.gmra.mrb[0].mxu0 %v10323
  %v10445 = vpop.f32.mrb[0].mxu0
  %v10446 = vadd.f32 0.0, %v10445
  %v10447 = vpop.f32.mrb[0].mxu0
  %v10448 = vpop.f32.mrb[0].mxu0
  %v10449 = vadd.f32 0.0, %v10448
  %v10450 = vpop.f32.mrb[0].mxu0
  %10451 = vdwg.mxu0
  %v10452 = vadd.f32 %v10285, %v10360
  %v10453 = vadd.f32 %v10286, %v10362
  %v10454 = vadd.f32 %v10287, %v10403
  %v10455 = vadd.f32 %v10288, %v10405
  %v10456 = vadd.f32 %v10289, %v10446
  %v10457 = vadd.f32 %v10290, %v10364
  %v10458 = vadd.f32 %v10291, %v10366
  %v10459 = vadd.f32 %v10292, %v10407
  %v10460 = vadd.f32 %v10293, %v10409
  %v10461 = vadd.f32 %v10294, %v10449
  %s10462 = scalar_lea.vmem %s1, 704
  %v10463 = vld [vmem:[%s10462] sm:$0xf]
  %v10464 = vld [vmem:[%s10462 + $0x4] sm:$0xf]
  %v10467 = vunpack.c.l.b16 %v10463
  %v10468 = vunpack.c.l.b16 %v10464
  %v10469 = vpack.c.b16 %v10468, %v10467
  %10470 = vrot.lane.b32.xlu0 %v9309, 111
  %v10471 = vpop.permute.xlu0 %10470
  %10472 = vrot.lane.b32.xlu0 %v9310, 111
  %v10473 = vpop.permute.xlu0 %10472
  %10474 = vrot.lane.b32.xlu0 %v9311, 111
  %v10475 = vpop.permute.xlu0 %10474
  %10476 = vrot.lane.b32.xlu0 %v9312, 111
  %v10477 = vpop.permute.xlu0 %10476
  %10478 = vrot.lane.b32.xlu0 %v9313, 111
  %v10479 = vpop.permute.xlu0 %10478
  %v10480 = vsel %vm1267, %v10471, %v10473
  %v10481 = vsel %vm1267, %v10473, %v10475
  %v10482 = vsel %vm1267, %v10475, %v10477
  %v10483 = vsel %vm1267, %v10477, %v10479
  %v10490 = vsel %vm134, %v10469, 0
  %10492 = vmatprep.subr.bf16.mxu0 %v10481
  %10493 = vmatpush1.bf16.msra.mxu0 %v10480
  %10494 = vmatprep.subr.bf16.mxu0 0
  %10495 = vmatpush1.bf16.msra.mxu0 0
  %10496 = vmatprep.subr.bf16.mxu0 0
  %10497 = vmatpush1.bf16.msra.mxu0 0
  %10498 = vmatprep.subr.bf16.mxu0 0
  %10499 = vmatpush1.bf16.msra.mxu0 0
  %10500 = vmatprep.subr.bf16.mxu0 0
  %10501 = vmatpush1.bf16.msra.mxu0 0
  %10502 = vmatprep.subr.bf16.mxu0 0
  %10503 = vmatpush1.bf16.msra.mxu0 0
  %10504 = vmatprep.subr.bf16.mxu0 0
  %10505 = vmatpush1.bf16.msra.mxu0 0
  %10506 = vmatprep.subr.bf16.mxu0 0
  %10507 = vmatpush1.bf16.msra.mxu0 0
  %10508 = vmatprep.subr.bf16.mxu0 0
  %10509 = vmatpush1.bf16.msra.mxu0 0
  %10510 = vmatprep.subr.bf16.mxu0 0
  %10511 = vmatpush1.bf16.msra.mxu0 0
  %10512 = vmatprep.subr.bf16.mxu0 0
  %10513 = vmatpush1.bf16.msra.mxu0 0
  %10514 = vmatprep.subr.bf16.mxu0 0
  %10515 = vmatpush1.bf16.msra.mxu0 0
  %10516 = vmatprep.subr.bf16.mxu0 0
  %10517 = vmatpush1.bf16.msra.mxu0 0
  %10518 = vmatprep.subr.bf16.mxu0 0
  %10519 = vmatpush1.bf16.msra.mxu0 0
  %10520 = vmatprep.subr.bf16.mxu0 0
  %10521 = vmatpush1.bf16.msra.mxu0 0
  %10522 = vmatprep.subr.bf16.mxu0 0
  %10523 = vmatpush1.bf16.msra.mxu0 0
  %10524 = vmatprep.mubr.bf16.mxu0 0
  %10525 = vmatmul.mubr.bf16.gmra.mrb[0].mxu0 %v10490
  %v10526 = vpop.f32.mrb[0].mxu0
  %v10527 = vadd.f32 0.0, %v10526
  %v10528 = vpop.f32.mrb[0].mxu0
  %v10529 = vadd.f32 0.0, %v10528
  %v10530 = vpop.f32.mrb[0].mxu0
  %v10531 = vadd.f32 0.0, %v10530
  %v10532 = vpop.f32.mrb[0].mxu0
  %v10533 = vadd.f32 0.0, %v10532
  %10534 = vdwg.mxu0
  %10535 = vmatprep.subr.bf16.mxu0 %v10483
  %10536 = vmatpush1.bf16.msra.mxu0 %v10482
  %10537 = vmatprep.subr.bf16.mxu0 0
  %10538 = vmatpush1.bf16.msra.mxu0 0
  %10539 = vmatprep.subr.bf16.mxu0 0
  %10540 = vmatpush1.bf16.msra.mxu0 0
  %10541 = vmatprep.subr.bf16.mxu0 0
  %10542 = vmatpush1.bf16.msra.mxu0 0
  %10543 = vmatprep.subr.bf16.mxu0 0
  %10544 = vmatpush1.bf16.msra.mxu0 0
  %10545 = vmatprep.subr.bf16.mxu0 0
  %10546 = vmatpush1.bf16.msra.mxu0 0
  %10547 = vmatprep.subr.bf16.mxu0 0
  %10548 = vmatpush1.bf16.msra.mxu0 0
  %10549 = vmatprep.subr.bf16.mxu0 0
  %10550 = vmatpush1.bf16.msra.mxu0 0
  %10551 = vmatprep.subr.bf16.mxu0 0
  %10552 = vmatpush1.bf16.msra.mxu0 0
  %10553 = vmatprep.subr.bf16.mxu0 0
  %10554 = vmatpush1.bf16.msra.mxu0 0
  %10555 = vmatprep.subr.bf16.mxu0 0
  %10556 = vmatpush1.bf16.msra.mxu0 0
  %10557 = vmatprep.subr.bf16.mxu0 0
  %10558 = vmatpush1.bf16.msra.mxu0 0
  %10559 = vmatprep.subr.bf16.mxu0 0
  %10560 = vmatpush1.bf16.msra.mxu0 0
  %10561 = vmatprep.subr.bf16.mxu0 0
  %10562 = vmatpush1.bf16.msra.mxu0 0
  %10563 = vmatprep.subr.bf16.mxu0 0
  %10564 = vmatpush1.bf16.msra.mxu0 0
  %10565 = vmatprep.subr.bf16.mxu0 0
  %10566 = vmatpush1.bf16.msra.mxu0 0
  %10567 = vmatprep.mubr.bf16.mxu0 0
  %10568 = vmatmul.mubr.bf16.gmra.mrb[0].mxu0 %v10490
  %v10569 = vpop.f32.mrb[0].mxu0
  %v10570 = vadd.f32 0.0, %v10569
  %v10571 = vpop.f32.mrb[0].mxu0
  %v10572 = vadd.f32 0.0, %v10571
  %v10573 = vpop.f32.mrb[0].mxu0
  %v10574 = vadd.f32 0.0, %v10573
  %v10575 = vpop.f32.mrb[0].mxu0
  %v10576 = vadd.f32 0.0, %v10575
  %10577 = vdwg.mxu0
  %10578 = vmatprep.subr.bf16.mxu0 0
  %10579 = vmatpush1.bf16.msra.mxu0 %v10479
  %10580 = vmatprep.subr.bf16.mxu0 0
  %10581 = vmatpush1.bf16.msra.mxu0 0
  %10582 = vmatprep.subr.bf16.mxu0 0
  %10583 = vmatpush1.bf16.msra.mxu0 0
  %10584 = vmatprep.subr.bf16.mxu0 0
  %10585 = vmatpush1.bf16.msra.mxu0 0
  %10586 = vmatprep.subr.bf16.mxu0 0
  %10587 = vmatpush1.bf16.msra.mxu0 0
  %10588 = vmatprep.subr.bf16.mxu0 0
  %10589 = vmatpush1.bf16.msra.mxu0 0
  %10590 = vmatprep.subr.bf16.mxu0 0
  %10591 = vmatpush1.bf16.msra.mxu0 0
  %10592 = vmatprep.subr.bf16.mxu0 0
  %10593 = vmatpush1.bf16.msra.mxu0 0
  %10594 = vmatprep.subr.bf16.mxu0 0
  %10595 = vmatpush1.bf16.msra.mxu0 0
  %10596 = vmatprep.subr.bf16.mxu0 0
  %10597 = vmatpush1.bf16.msra.mxu0 0
  %10598 = vmatprep.subr.bf16.mxu0 0
  %10599 = vmatpush1.bf16.msra.mxu0 0
  %10600 = vmatprep.subr.bf16.mxu0 0
  %10601 = vmatpush1.bf16.msra.mxu0 0
  %10602 = vmatprep.subr.bf16.mxu0 0
  %10603 = vmatpush1.bf16.msra.mxu0 0
  %10604 = vmatprep.subr.bf16.mxu0 0
  %10605 = vmatpush1.bf16.msra.mxu0 0
  %10606 = vmatprep.subr.bf16.mxu0 0
  %10607 = vmatpush1.bf16.msra.mxu0 0
  %10608 = vmatprep.subr.bf16.mxu0 0
  %10609 = vmatpush1.bf16.msra.mxu0 0
  %10610 = vmatprep.mubr.bf16.mxu0 0
  %10611 = vmatmul.mubr.bf16.gmra.mrb[0].mxu0 %v10490
  %v10612 = vpop.f32.mrb[0].mxu0
  %v10613 = vadd.f32 0.0, %v10612
  %v10614 = vpop.f32.mrb[0].mxu0
  %v10615 = vpop.f32.mrb[0].mxu0
  %v10616 = vadd.f32 0.0, %v10615
  %v10617 = vpop.f32.mrb[0].mxu0
  %10618 = vdwg.mxu0
  %v10619 = vadd.f32 %v10452, %v10527
  %v10620 = vadd.f32 %v10453, %v10529
  %v10621 = vadd.f32 %v10454, %v10570
  %v10622 = vadd.f32 %v10455, %v10572
  %v10623 = vadd.f32 %v10456, %v10613
  %v10624 = vadd.f32 %v10457, %v10531
  %v10625 = vadd.f32 %v10458, %v10533
  %v10626 = vadd.f32 %v10459, %v10574
  %v10627 = vadd.f32 %v10460, %v10576
  %v10628 = vadd.f32 %v10461, %v10616
  %s10629 = scalar_lea.vmem %s1, 712
  %v10630 = vld [vmem:[%s10629] sm:$0xf]
  %v10631 = vld [vmem:[%s10629 + $0x4] sm:$0xf]
  %v10634 = vunpack.c.l.b16 %v10630
  %v10635 = vunpack.c.l.b16 %v10631
  %v10636 = vpack.c.b16 %v10635, %v10634
  %10637 = vrot.lane.b32.xlu0 %v9309, 110
  %v10638 = vpop.permute.xlu0 %10637
  %10639 = vrot.lane.b32.xlu0 %v9310, 110
  %v10640 = vpop.permute.xlu0 %10639
  %10641 = vrot.lane.b32.xlu0 %v9311, 110
  %v10642 = vpop.permute.xlu0 %10641
  %10643 = vrot.lane.b32.xlu0 %v9312, 110
  %v10644 = vpop.permute.xlu0 %10643
  %10645 = vrot.lane.b32.xlu0 %v9313, 110
  %v10646 = vpop.permute.xlu0 %10645
  %v10647 = vsel %vm1435, %v10638, %v10640
  %v10648 = vsel %vm1435, %v10640, %v10642
  %v10649 = vsel %vm1435, %v10642, %v10644
  %v10650 = vsel %vm1435, %v10644, %v10646
  %v10657 = vsel %vm134, %v10636, 0
  %10659 = vmatprep.subr.bf16.mxu0 %v10648
  %10660 = vmatpush1.bf16.msra.mxu0 %v10647
  %10661 = vmatprep.subr.bf16.mxu0 0
  %10662 = vmatpush1.bf16.msra.mxu0 0
  %10663 = vmatprep.subr.bf16.mxu0 0
  %10664 = vmatpush1.bf16.msra.mxu0 0
  %10665 = vmatprep.subr.bf16.mxu0 0
  %10666 = vmatpush1.bf16.msra.mxu0 0
  %10667 = vmatprep.subr.bf16.mxu0 0
  %10668 = vmatpush1.bf16.msra.mxu0 0
  %10669 = vmatprep.subr.bf16.mxu0 0
  %10670 = vmatpush1.bf16.msra.mxu0 0
  %10671 = vmatprep.subr.bf16.mxu0 0
  %10672 = vmatpush1.bf16.msra.mxu0 0
  %10673 = vmatprep.subr.bf16.mxu0 0
  %10674 = vmatpush1.bf16.msra.mxu0 0
  %10675 = vmatprep.subr.bf16.mxu0 0
  %10676 = vmatpush1.bf16.msra.mxu0 0
  %10677 = vmatprep.subr.bf16.mxu0 0
  %10678 = vmatpush1.bf16.msra.mxu0 0
  %10679 = vmatprep.subr.bf16.mxu0 0
  %10680 = vmatpush1.bf16.msra.mxu0 0
  %10681 = vmatprep.subr.bf16.mxu0 0
  %10682 = vmatpush1.bf16.msra.mxu0 0
  %10683 = vmatprep.subr.bf16.mxu0 0
  %10684 = vmatpush1.bf16.msra.mxu0 0
  %10685 = vmatprep.subr.bf16.mxu0 0
  %10686 = vmatpush1.bf16.msra.mxu0 0
  %10687 = vmatprep.subr.bf16.mxu0 0
  %10688 = vmatpush1.bf16.msra.mxu0 0
  %10689 = vmatprep.subr.bf16.mxu0 0
  %10690 = vmatpush1.bf16.msra.mxu0 0
  %10691 = vmatprep.mubr.bf16.mxu0 0
  %10692 = vmatmul.mubr.bf16.gmra.mrb[0].mxu0 %v10657
  %v10693 = vpop.f32.mrb[0].mxu0
  %v10694 = vadd.f32 0.0, %v10693
  %v10695 = vpop.f32.mrb[0].mxu0
  %v10696 = vadd.f32 0.0, %v10695
  %v10697 = vpop.f32.mrb[0].mxu0
  %v10698 = vadd.f32 0.0, %v10697
  %v10699 = vpop.f32.mrb[0].mxu0
  %v10700 = vadd.f32 0.0, %v10699
  %10701 = vdwg.mxu0
  %10702 = vmatprep.subr.bf16.mxu0 %v10650
  %10703 = vmatpush1.bf16.msra.mxu0 %v10649
  %10704 = vmatprep.subr.bf16.mxu0 0
  %10705 = vmatpush1.bf16.msra.mxu0 0
  %10706 = vmatprep.subr.bf16.mxu0 0
  %10707 = vmatpush1.bf16.msra.mxu0 0
  %10708 = vmatprep.subr.bf16.mxu0 0
  %10709 = vmatpush1.bf16.msra.mxu0 0
  %10710 = vmatprep.subr.bf16.mxu0 0
  %10711 = vmatpush1.bf16.msra.mxu0 0
  %10712 = vmatprep.subr.bf16.mxu0 0
  %10713 = vmatpush1.bf16.msra.mxu0 0
  %10714 = vmatprep.subr.bf16.mxu0 0
  %10715 = vmatpush1.bf16.msra.mxu0 0
  %10716 = vmatprep.subr.bf16.mxu0 0
  %10717 = vmatpush1.bf16.msra.mxu0 0
  %10718 = vmatprep.subr.bf16.mxu0 0
  %10719 = vmatpush1.bf16.msra.mxu0 0
  %10720 = vmatprep.subr.bf16.mxu0 0
  %10721 = vmatpush1.bf16.msra.mxu0 0
  %10722 = vmatprep.subr.bf16.mxu0 0
  %10723 = vmatpush1.bf16.msra.mxu0 0
  %10724 = vmatprep.subr.bf16.mxu0 0
  %10725 = vmatpush1.bf16.msra.mxu0 0
  %10726 = vmatprep.subr.bf16.mxu0 0
  %10727 = vmatpush1.bf16.msra.mxu0 0
  %10728 = vmatprep.subr.bf16.mxu0 0
  %10729 = vmatpush1.bf16.msra.mxu0 0
  %10730 = vmatprep.subr.bf16.mxu0 0
  %10731 = vmatpush1.bf16.msra.mxu0 0
  %10732 = vmatprep.subr.bf16.mxu0 0
  %10733 = vmatpush1.bf16.msra.mxu0 0
  %10734 = vmatprep.mubr.bf16.mxu0 0
  %10735 = vmatmul.mubr.bf16.gmra.mrb[0].mxu0 %v10657
  %v10736 = vpop.f32.mrb[0].mxu0
  %v10737 = vadd.f32 0.0, %v10736
  %v10738 = vpop.f32.mrb[0].mxu0
  %v10739 = vadd.f32 0.0, %v10738
  %v10740 = vpop.f32.mrb[0].mxu0
  %v10741 = vadd.f32 0.0, %v10740
  %v10742 = vpop.f32.mrb[0].mxu0
  %v10743 = vadd.f32 0.0, %v10742
  %10744 = vdwg.mxu0
  %10745 = vmatprep.subr.bf16.mxu0 0
  %10746 = vmatpush1.bf16.msra.mxu0 %v10646
  %10747 = vmatprep.subr.bf16.mxu0 0
  %10748 = vmatpush1.bf16.msra.mxu0 0
  %10749 = vmatprep.subr.bf16.mxu0 0
  %10750 = vmatpush1.bf16.msra.mxu0 0
  %10751 = vmatprep.subr.bf16.mxu0 0
  %10752 = vmatpush1.bf16.msra.mxu0 0
  %10753 = vmatprep.subr.bf16.mxu0 0
  %10754 = vmatpush1.bf16.msra.mxu0 0
  %10755 = vmatprep.subr.bf16.mxu0 0
  %10756 = vmatpush1.bf16.msra.mxu0 0
  %10757 = vmatprep.subr.bf16.mxu0 0
  %10758 = vmatpush1.bf16.msra.mxu0 0
  %10759 = vmatprep.subr.bf16.mxu0 0
  %10760 = vmatpush1.bf16.msra.mxu0 0
  %10761 = vmatprep.subr.bf16.mxu0 0
  %10762 = vmatpush1.bf16.msra.mxu0 0
  %10763 = vmatprep.subr.bf16.mxu0 0
  %10764 = vmatpush1.bf16.msra.mxu0 0
  %10765 = vmatprep.subr.bf16.mxu0 0
  %10766 = vmatpush1.bf16.msra.mxu0 0
  %10767 = vmatprep.subr.bf16.mxu0 0
  %10768 = vmatpush1.bf16.msra.mxu0 0
  %10769 = vmatprep.subr.bf16.mxu0 0
  %10770 = vmatpush1.bf16.msra.mxu0 0
  %10771 = vmatprep.subr.bf16.mxu0 0
  %10772 = vmatpush1.bf16.msra.mxu0 0
  %10773 = vmatprep.subr.bf16.mxu0 0
  %10774 = vmatpush1.bf16.msra.mxu0 0
  %10775 = vmatprep.subr.bf16.mxu0 0
  %10776 = vmatpush1.bf16.msra.mxu0 0
  %10777 = vmatprep.mubr.bf16.mxu0 0
  %10778 = vmatmul.mubr.bf16.gmra.mrb[0].mxu0 %v10657
  %v10779 = vpop.f32.mrb[0].mxu0
  %v10780 = vadd.f32 0.0, %v10779
  %v10781 = vpop.f32.mrb[0].mxu0
  %v10782 = vpop.f32.mrb[0].mxu0
  %v10783 = vadd.f32 0.0, %v10782
  %v10784 = vpop.f32.mrb[0].mxu0
  %10785 = vdwg.mxu0
  %v10786 = vadd.f32 %v10619, %v10694
  %v10787 = vadd.f32 %v10620, %v10696
  %v10788 = vadd.f32 %v10621, %v10737
  %v10789 = vadd.f32 %v10622, %v10739
  %v10790 = vadd.f32 %v10623, %v10780
  %v10791 = vadd.f32 %v10624, %v10698
  %v10792 = vadd.f32 %v10625, %v10700
  %v10793 = vadd.f32 %v10626, %v10741
  %v10794 = vadd.f32 %v10627, %v10743
  %v10795 = vadd.f32 %v10628, %v10783
  %v10796 = vld [vmem:[%s2] sm:$0xff]
  %v10797 = vld [vmem:[%s2 + $0x8] sm:$0xff]
  %10799 = vset.pattern.permute.xlu0 9
  %10800 = vperm.xlu0 %10799, %v10796
  %v10801 = vpop.permute.xlu0 %10800
  %10804 = vset.pattern.permute.xlu0 9
  %10805 = vperm.xlu0 %10804, %v10797
  %v10806 = vpop.permute.xlu0 %10805
  %v10808 = vadd.f32 %v10786, %v10801
  %v10809 = vadd.f32 %v10787, %v10801
  %v10810 = vadd.f32 %v10788, %v10801
  %v10811 = vadd.f32 %v10789, %v10801
  %v10812 = vadd.f32 %v10790, %v10801
  %v10813 = vadd.f32 %v10791, %v10806
  %v10814 = vadd.f32 %v10792, %v10806
  %v10815 = vadd.f32 %v10793, %v10806
  %v10816 = vadd.f32 %v10794, %v10806
  %v10817 = vadd.f32 %v10795, %v10806
  %v10818 = vmul.f32 %v10808, %v1611
  %v10819 = vmul.f32 %v10809, %v1615
  %v10820 = vmul.f32 %v10810, %v1619
  %v10821 = vmul.f32 %v10811, %v1623
  %v10822 = vmul.f32 %v10812, %v1627
  %v10823 = vmul.f32 %v10813, %v1611
  %v10824 = vmul.f32 %v10814, %v1615
  %v10825 = vmul.f32 %v10815, %v1619
  %v10826 = vmul.f32 %v10816, %v1623
  %v10827 = vmul.f32 %v10817, %v1627
  %v10828 = vmax.f32 %v10818, 0.0
  %v10829 = vmax.f32 %v10819, 0.0
  %v10830 = vmax.f32 %v10820, 0.0
  %v10831 = vmax.f32 %v10821, 0.0
  %v10832 = vmax.f32 %v10822, 0.0
  %v10833 = vmax.f32 %v10823, 0.0
  %v10834 = vmax.f32 %v10824, 0.0
  %v10835 = vmax.f32 %v10825, 0.0
  %v10836 = vmax.f32 %v10826, 0.0
  %v10837 = vmax.f32 %v10827, 0.0
  %v10838 = vld [vmem:[%s3] sm:$0xf]
  %v10839 = vpack.c.bf16 %v10833, %v10828
  %v10840 = vpack.c.bf16 %v10834, %v10829
  %v10841 = vpack.c.bf16 %v10835, %v10830
  %v10842 = vpack.c.bf16 %v10836, %v10831
  %v10843 = vpack.c.bf16 %v10837, %v10832
  %v10844 = vld [vmem:[%s4] sm:$0xff]
  %10846 = vset.pattern.permute.xlu0 0
  %10847 = vperm.xlu0 %10846, %v10844
  %v10848 = vpop.permute.xlu0 %10847
  %v10851 = vsel %vm134, %v10838, 0
  %10853 = vmatprep.subr.bf16.mxu0 %v10840
  %10854 = vmatpush1.bf16.msra.mxu0 %v10839
  %10855 = vmatprep.subr.bf16.mxu0 0
  %10856 = vmatpush1.bf16.msra.mxu0 0
  %10857 = vmatprep.subr.bf16.mxu0 0
  %10858 = vmatpush1.bf16.msra.mxu0 0
  %10859 = vmatprep.subr.bf16.mxu0 0
  %10860 = vmatpush1.bf16.msra.mxu0 0
  %10861 = vmatprep.subr.bf16.mxu0 0
  %10862 = vmatpush1.bf16.msra.mxu0 0
  %10863 = vmatprep.subr.bf16.mxu0 0
  %10864 = vmatpush1.bf16.msra.mxu0 0
  %10865 = vmatprep.subr.bf16.mxu0 0
  %10866 = vmatpush1.bf16.msra.mxu0 0
  %10867 = vmatprep.subr.bf16.mxu0 0
  %10868 = vmatpush1.bf16.msra.mxu0 0
  %10869 = vmatprep.subr.bf16.mxu0 0
  %10870 = vmatpush1.bf16.msra.mxu0 0
  %10871 = vmatprep.subr.bf16.mxu0 0
  %10872 = vmatpush1.bf16.msra.mxu0 0
  %10873 = vmatprep.subr.bf16.mxu0 0
  %10874 = vmatpush1.bf16.msra.mxu0 0
  %10875 = vmatprep.subr.bf16.mxu0 0
  %10876 = vmatpush1.bf16.msra.mxu0 0
  %10877 = vmatprep.subr.bf16.mxu0 0
  %10878 = vmatpush1.bf16.msra.mxu0 0
  %10879 = vmatprep.subr.bf16.mxu0 0
  %10880 = vmatpush1.bf16.msra.mxu0 0
  %10881 = vmatprep.subr.bf16.mxu0 0
  %10882 = vmatpush1.bf16.msra.mxu0 0
  %10883 = vmatprep.subr.bf16.mxu0 0
  %10884 = vmatpush1.bf16.msra.mxu0 0
  %10885 = vmatprep.mubr.bf16.mxu0 0
  %10886 = vmatmul.mubr.bf16.gmra.mrb[0].mxu0 %v10851
  %v10887 = vpop.f32.mrb[0].mxu0
  %v10888 = vadd.f32 %v10848, %v10887
  %v10889 = vpop.f32.mrb[0].mxu0
  %v10890 = vadd.f32 %v10848, %v10889
  %v10891 = vpop.f32.mrb[0].mxu0
  %v10892 = vpop.f32.mrb[0].mxu0
  %10893 = vdwg.mxu0
  %10894 = vmatprep.subr.bf16.mxu0 %v10842
  %10895 = vmatpush1.bf16.msra.mxu0 %v10841
  %10896 = vmatprep.subr.bf16.mxu0 0
  %10897 = vmatpush1.bf16.msra.mxu0 0
  %10898 = vmatprep.subr.bf16.mxu0 0
  %10899 = vmatpush1.bf16.msra.mxu0 0
  %10900 = vmatprep.subr.bf16.mxu0 0
  %10901 = vmatpush1.bf16.msra.mxu0 0
  %10902 = vmatprep.subr.bf16.mxu0 0
  %10903 = vmatpush1.bf16.msra.mxu0 0
  %10904 = vmatprep.subr.bf16.mxu0 0
  %10905 = vmatpush1.bf16.msra.mxu0 0
  %10906 = vmatprep.subr.bf16.mxu0 0
  %10907 = vmatpush1.bf16.msra.mxu0 0
  %10908 = vmatprep.subr.bf16.mxu0 0
  %10909 = vmatpush1.bf16.msra.mxu0 0
  %10910 = vmatprep.subr.bf16.mxu0 0
  %10911 = vmatpush1.bf16.msra.mxu0 0
  %10912 = vmatprep.subr.bf16.mxu0 0
  %10913 = vmatpush1.bf16.msra.mxu0 0
  %10914 = vmatprep.subr.bf16.mxu0 0
  %10915 = vmatpush1.bf16.msra.mxu0 0
  %10916 = vmatprep.subr.bf16.mxu0 0
  %10917 = vmatpush1.bf16.msra.mxu0 0
  %10918 = vmatprep.subr.bf16.mxu0 0
  %10919 = vmatpush1.bf16.msra.mxu0 0
  %10920 = vmatprep.subr.bf16.mxu0 0
  %10921 = vmatpush1.bf16.msra.mxu0 0
  %10922 = vmatprep.subr.bf16.mxu0 0
  %10923 = vmatpush1.bf16.msra.mxu0 0
  %10924 = vmatprep.subr.bf16.mxu0 0
  %10925 = vmatpush1.bf16.msra.mxu0 0
  %10926 = vmatprep.mubr.bf16.mxu0 0
  %10927 = vmatmul.mubr.bf16.gmra.mrb[0].mxu0 %v10851
  %v10928 = vpop.f32.mrb[0].mxu0
  %v10929 = vadd.f32 %v10848, %v10928
  %v10930 = vpop.f32.mrb[0].mxu0
  %v10931 = vadd.f32 %v10848, %v10930
  %v10932 = vpop.f32.mrb[0].mxu0
  %v10933 = vpop.f32.mrb[0].mxu0
  %10934 = vdwg.mxu0
  %10935 = vmatprep.subr.bf16.mxu0 0
  %10936 = vmatpush1.bf16.msra.mxu0 %v10843
  %10937 = vmatprep.subr.bf16.mxu0 0
  %10938 = vmatpush1.bf16.msra.mxu0 0
  %10939 = vmatprep.subr.bf16.mxu0 0
  %10940 = vmatpush1.bf16.msra.mxu0 0
  %10941 = vmatprep.subr.bf16.mxu0 0
  %10942 = vmatpush1.bf16.msra.mxu0 0
  %10943 = vmatprep.subr.bf16.mxu0 0
  %10944 = vmatpush1.bf16.msra.mxu0 0
  %10945 = vmatprep.subr.bf16.mxu0 0
  %10946 = vmatpush1.bf16.msra.mxu0 0
  %10947 = vmatprep.subr.bf16.mxu0 0
  %10948 = vmatpush1.bf16.msra.mxu0 0
  %10949 = vmatprep.subr.bf16.mxu0 0
  %10950 = vmatpush1.bf16.msra.mxu0 0
  %10951 = vmatprep.subr.bf16.mxu0 0
  %10952 = vmatpush1.bf16.msra.mxu0 0
  %10953 = vmatprep.subr.bf16.mxu0 0
  %10954 = vmatpush1.bf16.msra.mxu0 0
  %10955 = vmatprep.subr.bf16.mxu0 0
  %10956 = vmatpush1.bf16.msra.mxu0 0
  %10957 = vmatprep.subr.bf16.mxu0 0
  %10958 = vmatpush1.bf16.msra.mxu0 0
  %10959 = vmatprep.subr.bf16.mxu0 0
  %10960 = vmatpush1.bf16.msra.mxu0 0
  %10961 = vmatprep.subr.bf16.mxu0 0
  %10962 = vmatpush1.bf16.msra.mxu0 0
  %10963 = vmatprep.subr.bf16.mxu0 0
  %10964 = vmatpush1.bf16.msra.mxu0 0
  %10965 = vmatprep.subr.bf16.mxu0 0
  %10966 = vmatpush1.bf16.msra.mxu0 0
  %10967 = vmatprep.mubr.bf16.mxu0 0
  %10968 = vmatmul.mubr.bf16.gmra.mrb[0].mxu0 %v10851
  %v10969 = vpop.f32.mrb[0].mxu0
  %v10970 = vadd.f32 %v10848, %v10969
  %v10971 = vpop.f32.mrb[0].mxu0
  %v10972 = vpop.f32.mrb[0].mxu0
  %v10973 = vpop.f32.mrb[0].mxu0
  %10974 = vdwg.mxu0
  %10975 = vst [vmem:[%s12] sm:$0xff] %v10888
  %10976 = vst [vmem:[%s12 + $0x8] sm:$0xff] %v10890
  %10977 = vst [vmem:[%s12 + $0x10] sm:$0xff] %v10929
  %10978 = vst [vmem:[%s12 + $0x18] sm:$0xff] %v10931
  %10979 = vst.msk [vmem:[%s12 + $0x20] sm:$0xff] %vm87, %v10970
  %vm10980 = vcmask 1048080
  %10981 = vst.msk [vmem:[%s12 + $0x20] sm:$0xff] %vm10980, 0.0
  // Predicated region
  $region50: #{_lambda_.1} parent=0 // pred_check
    _
  $region51: #{_lambda_.1} parent=0 // pred_check_branch
    %10983 = sbr.rel (0) target = $region53
  $region52: #{_lambda_.1} parent=0 // pred_region
    _
  $region53: #{_lambda_.1} parent=0 // pred_fallthru
    _
  // Predicated region
  $region54: #{_lambda_.1} parent=0 // pred_check
    _
  $region55: #{_lambda_.1} parent=0 // pred_check_branch
    %10985 = sbr.rel (0) target = $region57
  $region56: #{_lambda_.1} parent=0 // pred_region
    _
  $region57: #{_lambda_.1} parent=0 // pred_fallthru
    _

</llo_original>
